<compile_context>
chip_gen: v5e
topology: v5e:2x2
jax: 0.10.0
libtpu: 0.0.40
codegen_flags: <defaults>
</compile_context>

<pallas_src>
import functools
import numpy as np

import jax
import jax.numpy as jnp
from jax import lax
from jax.experimental import pallas as pl
from jax.experimental.pallas import tpu as pltpu


def _round_up(x, m):
    return ((x + m - 1) // m) * m


def _cdiv(a, b):
    return -(-a // b)


# ---------------------------------------------------------------------------
# Kernel factory.  Activations are row-flattened per image (flat row index
# q = h * padded_width + w) and all 2*TB images of a grid step are stacked
# along the row (sublane / matmul-M) axis.
# ---------------------------------------------------------------------------
def _make_kernel(*, tb, tb2, n1, wp1, wp2, k1, l1, l1m, l2, l2m, mm_dtype):
    sh1 = (0, 1, wp1, wp1 + 1)          # 2x2 tap offsets, stage 1
    sh2 = (0, 1, wp2, wp2 + 1)          # 2x2 tap offsets, stage 2
    f32 = jnp.float32

    def kernel(x_ref, w1_ref, b1_ref, p1_ref, w2_ref, b2_ref, p2_ref,
               wfc_ref, bfc_ref, wh_ref, bh_ref, o_ref):
        # --- conv1 + ReLU: taps read from the ref at static row offsets and
        #     concatenated along lanes -> ONE (l1, 4*cin)@(4*cin, c1) matmul.
        xc1 = jnp.concatenate(
            [x_ref[pl.ds(s, l1), :].astype(mm_dtype) for s in sh1], axis=-1)
        o1 = jnp.maximum(
            jnp.dot(xc1, w1_ref[...], preferred_element_type=f32) + b1_ref[...],
            0.0)                                                     # (l1, c1)

        # --- MaxPool2d(2,2) step A: 2x2 window max.  Row counts shrink each
        #     stage, so shifted reads are plain static slices (no zero re-pad).
        m1 = jnp.maximum(
            jnp.maximum(o1[0:l1m], o1[1:1 + l1m]),
            jnp.maximum(o1[wp1:wp1 + l1m], o1[wp1 + 1:wp1 + 1 + l1m]))
        m1 = m1.astype(mm_dtype)

        # --- MaxPool2d(2,2) step B: gather the window max anchored at even
        #     (h, w) and re-emit it in the zero-padded, row-flattened layout
        #     conv2 expects.  Selection matrix trimmed to the live K range and
        #     applied per image (the selection cannot cross images).
        p1 = p1_ref[...]
        x2 = jnp.concatenate(
            [jnp.dot(p1, m1[i * n1:i * n1 + k1], preferred_element_type=f32)
             for i in range(tb2)], axis=0)                           # (tb2*n2, c1)

        # --- conv2 + ReLU: single K = 4*c1 (= 256) matmul.
        xc2 = jnp.concatenate(
            [x2[s:s + l2].astype(mm_dtype) for s in sh2], axis=-1)
        o2 = jnp.maximum(
            jnp.dot(xc2, w2_ref[...], preferred_element_type=f32) + b2_ref[...],
            0.0)                                                     # (l2, c2)

        m2 = jnp.maximum(
            jnp.maximum(o2[0:l2m], o2[1:1 + l2m]),
            jnp.maximum(o2[wp2:wp2 + l2m], o2[wp2 + 1:wp2 + 1 + l2m]))

        # --- MaxPool2d(2,2) + AdaptiveAvgPool2d(1) for every image of the step
        #     in one block-diagonal selection/averaging matmul, then the fc.
        g = jnp.dot(p2_ref[...], m2.astype(mm_dtype),
                    preferred_element_type=f32)                      # (tb2, c2)
        feats = (jnp.dot(g.astype(mm_dtype), wfc_ref[...],
                         preferred_element_type=f32) + bfc_ref[...])  # (tb2, E)

        # --- head: F.pairwise_distance (eps on the difference) -> Linear(1,1)
        #     -> sigmoid.  Images are branch-major: [0:tb]=A, [tb:2tb]=B.
        diff = feats[:tb] - feats[tb:] + 1e-6
        dist = jnp.sqrt(jnp.sum(diff * diff, axis=-1, keepdims=True))  # (tb, 1)
        z = dist * wh_ref[...] + bh_ref[...]
        sig = 1.0 / (1.0 + jnp.exp(-z))                              # (tb, 1)

        # Lane-dense writeback: turn the (tb, 1) column into a (1, tb) row via
        # broadcast-multiply with an iota-identity + sublane reduce (plain
        # VPU/XLU ops, always lowerable).
        row = lax.broadcasted_iota(jnp.int32, (tb, tb), 0)
        col = lax.broadcasted_iota(jnp.int32, (tb, tb), 1)
        eye = (row == col).astype(f32)
        o_ref[...] = jnp.sum(sig * eye, axis=0, keepdims=True)       # (1, tb)

    return kernel


# ---------------------------------------------------------------------------
# Builder: hoists weight layout transforms + constant selection matrices, and
# returns a jit-able forward(inputA, inputB).
# ---------------------------------------------------------------------------
def build_siamese_forward(params, height, width, *, tb=None, use_bf16=False):
    cin = params["conv1_w"].shape[1]
    c1 = params["conv1_w"].shape[0]
    c2 = params["conv2_w"].shape[0]
    emb = params["fc_w"].shape[0]
    mm_dtype = jnp.bfloat16 if use_bf16 else jnp.float32

    # ---- geometry: Conv2d(k=2, pad=1) -> H+1 ; MaxPool2d(2,2) floor mode ----
    oh1, ow1 = height + 1, width + 1
    wp1 = width + 2                              # stage-1 row stride (padded W)
    n1 = _round_up((height + 2) * (width + 2), 8)
    ph1, pw1 = oh1 // 2, ow1 // 2                # pool1 output spatial
    oh2, ow2 = ph1 + 1, pw1 + 1
    wp2 = pw1 + 2                                # stage-2 row stride
    n2 = _round_up((ph1 + 2) * (pw1 + 2), 8)
    ph2, pw2 = oh2 // 2, ow2 // 2                # pool2 output spatial (GAP in)

    s1 = _round_up(wp1 + 1, 8)                   # per-stage row shrink >= max shift
    s2 = _round_up(wp2 + 1, 8)
    k1 = _round_up(2 * (ph1 - 1) * wp1 + 2 * (pw1 - 1) + 1, 8)  # pool1 live K
    a2max = 2 * (ph2 - 1) * wp2 + 2 * (pw2 - 1)                 # last pool2 anchor

    # Live-range checks: every row the pool selections read must survive the
    # per-stage row-count shrinks (geometry is fragile to H/W/kernel parity).
    assert k1 + wp1 + 1 <= n1 - s1, "conv1 rows needed by pool1 not covered"
    assert k1 <= n1 - 2 * s1, "window-max rows needed by pool1 not covered"
    assert a2max + wp2 + 2 <= n2 - s2, "conv2 rows needed by pool2 not covered"
    assert a2max + 1 <= n2 - 2 * s2, "window-max rows needed by pool2 not covered"

    # ---- constant selection matrices (host side, built once) ----
    pool1_mat = np.zeros((n2, k1), np.float32)
    for ph in range(ph1):
        for pw in range(pw1):
            pool1_mat[(ph + 1) * wp2 + (pw + 1), 2 * ph * wp1 + 2 * pw] = 1.0

    @functools.lru_cache(maxsize=None)
    def _pool2_block(tb2, l2m):
        # Block-diagonal MaxPool2-anchor + global-average-pool matrix.
        p = np.zeros((tb2, l2m), np.float32)
        inv = 1.0 / (ph2 * pw2)
        for i in range(tb2):
            for ph in range(ph2):
                for pw in range(pw2):
                    p[i, i * n2 + 2 * ph * wp2 + 2 * pw] = inv
        return p

    # ---- hoisted weight layout transforms (done once, not per forward) ----
    def conv_taps_cat(w):   # torch OIHW (Cout,Cin,2,2) -> (4*Cin, Cout)
        kh, kw, ci, co = w.shape[2], w.shape[3], w.shape[1], w.shape[0]
        return jnp.transpose(w, (2, 3, 1, 0)).reshape(kh * kw * ci, co).astype(mm_dtype)

    w1cat = conv_taps_cat(params["conv1_w"])
    b1 = params["conv1_b"].reshape(1, c1).astype(jnp.float32)
    p1c = jnp.asarray(pool1_mat, mm_dtype)
    w2cat = conv_taps_cat(params["conv2_w"])
    b2 = params["conv2_b"].reshape(1, c2).astype(jnp.float32)
    wfcT = jnp.transpose(params["fc_w"]).astype(mm_dtype)
    bfc = params["fc_b"].reshape(1, emb).astype(jnp.float32)
    wh = params["head_w"].reshape(1, 1).astype(jnp.float32)
    bh = params["head_b"].reshape(1, 1).astype(jnp.float32)

    raw_rows = (height + 2) * (width + 2)

    def flatten_pad(x_nchw):
        b = x_nchw.shape[0]
        x = jnp.transpose(x_nchw, (0, 2, 3, 1))               # NCHW -> NHWC
        x = jnp.pad(x, ((0, 0), (1, 1), (1, 1), (0, 0)))      # conv padding=1
        x = x.reshape(b, raw_rows, cin)
        return jnp.pad(x, ((0, 0), (0, n1 - raw_rows), (0, 0)))

    def full_block(arr):
        nd = arr.ndim
        return pl.BlockSpec(arr.shape, lambda i, _nd=nd: (0,) * _nd)

    def forward(input_a, input_b):
        batch = input_a.shape[0]
        # TB pairs (= 2*TB images) per grid step; keep >= 2 steps when B >= 2
        # so the grid can still be sharded across the two TensorCores on v7x.
        tb_step = tb if tb is not None else max(1, min(8, _cdiv(batch, 2)))
        nsteps = _cdiv(batch, tb_step)
        bp = nsteps * tb_step
        tb2 = 2 * tb_step
        rows1, rows2 = tb2 * n1, tb2 * n2
        l1, l1m = rows1 - s1, rows1 - 2 * s1
        l2, l2m = rows2 - s2, rows2 - 2 * s2

        p2blk = jnp.asarray(_pool2_block(tb2, l2m), mm_dtype)
        weights = (w1cat, b1, p1c, w2cat, b2, p2blk, wfcT, bfc, wh, bh)

        kernel = _make_kernel(tb=tb_step, tb2=tb2, n1=n1, wp1=wp1, wp2=wp2,
                              k1=k1, l1=l1, l1m=l1m, l2=l2, l2m=l2m,
                              mm_dtype=mm_dtype)

        xa, xb = flatten_pad(input_a), flatten_pad(input_b)
        if bp != batch:
            pad = ((0, bp - batch), (0, 0), (0, 0))
            xa, xb = jnp.pad(xa, pad), jnp.pad(xb, pad)
        xa = xa.reshape(nsteps, tb_step, n1, cin)
        xb = xb.reshape(nsteps, tb_step, n1, cin)
        # Branch-major within a step: images [0:tb] = branch A, [tb:2tb] = B.
        x = jnp.concatenate([xa, xb], axis=1).reshape(nsteps, tb2 * n1, cin)

        out = pl.pallas_call(
            kernel,
            out_shape=jax.ShapeDtypeStruct((nsteps, 1, tb_step), jnp.float32),
            grid=(nsteps,),
            in_specs=[pl.BlockSpec((None, tb2 * n1, cin), lambda i: (i, 0, 0))]
                     + [full_block(w) for w in weights],
            out_specs=pl.BlockSpec((None, 1, tb_step), lambda i: (i, 0, 0)),
            compiler_params=pltpu.CompilerParams(
                dimension_semantics=("parallel",),
                vmem_limit_bytes=32 * 1024 * 1024),
        )(x, *weights)
        return out.reshape(bp, 1)[:batch]

    return forward


# ---------------------------------------------------------------------------
# Deterministic parameter init (shapes match the PyTorch module's __init__).
# ---------------------------------------------------------------------------
def init_params(key, embedding_dim=48):
    ks = jax.random.split(key, 8)
    f32 = jnp.float32
    return {
        "conv1_w": 0.10 * jax.random.normal(ks[0], (64, 3, 2, 2), f32),
        "conv1_b": 0.10 * jax.random.normal(ks[1], (64,), f32),
        "conv2_w": 0.05 * jax.random.normal(ks[2], (64, 64, 2, 2), f32),
        "conv2_b": 0.05 * jax.random.normal(ks[3], (64,), f32),
        "fc_w":    0.10 * jax.random.normal(ks[4], (embedding_dim, 64), f32),
        "fc_b":    0.10 * jax.random.normal(ks[5], (embedding_dim,), f32),
        "head_w":  jax.random.normal(ks[6], (1, 1), f32),
        "head_b":  jax.random.normal(ks[7], (1, 1), f32),
    }


# ---------------------------------------------------------------------------
# Pure-JAX/XLA reference (eval mode) for a correctness self-check.
# ---------------------------------------------------------------------------
def reference_model(input_a, input_b, params):
    hp = lax.Precision.HIGHEST

    def conv_relu(x, w, b):
        y = lax.conv_general_dilated(
            x, w, window_strides=(1, 1), padding=((1, 1), (1, 1)),
            dimension_numbers=("NCHW", "OIHW", "NCHW"), precision=hp)
        return jnp.maximum(y + b[None, :, None, None], 0.0)

    def maxpool(x):
        return lax.reduce_window(x, -jnp.inf, lax.max,
                                 (1, 1, 2, 2), (1, 1, 2, 2), "VALID")

    def feats(x):
        x = maxpool(conv_relu(x, params["conv1_w"], params["conv1_b"]))
        x = maxpool(conv_relu(x, params["conv2_w"], params["conv2_b"]))
        g = jnp.mean(x, axis=(2, 3))
        return jnp.dot(g, params["fc_w"].T, precision=hp) + params["fc_b"]

    fa, fb = feats(input_a), feats(input_b)
    dist = jnp.sqrt(jnp.sum(jnp.square(fa - fb + 1e-6), axis=-1, keepdims=True))
    z = dist * params["head_w"][0, 0] + params["head_b"][0, 0]
    return 1.0 / (1.0 + jnp.exp(-z))


if __name__ == "__main__":
    key = jax.random.PRNGKey(0)
    k_a, k_b, k_p = jax.random.split(key, 3)

    # B=3 exercises the batched per-step path (TB=2), batch padding, and the
    # lane-dense (1, TB) writeback.  conv1 expects 3 input channels.
    B, C, H, W = 3, 3, 16, 16
    inputA = jax.random.normal(k_a, (B, C, H, W), jnp.float32)
    inputB = jax.random.normal(k_b, (B, C, H, W), jnp.float32)
    params = init_params(k_p, embedding_dim=48)

    forward = jax.jit(build_siamese_forward(params, H, W))
    out = forward(inputA, inputB)
    jax.block_until_ready(out)
    assert out.shape == (B, 1) and out.dtype == jnp.float32

    ref = reference_model(inputA, inputB, params)
    max_err = float(jnp.max(jnp.abs(out - ref)))
    assert max_err < 1e-2, f"kernel/reference mismatch: max abs err {max_err}"
    print("KERNEL_OK")
</pallas_src>

<mosaic_0001>
module attributes {stable_mosaic.version = 11 : i64} {
  func.func @kernel(%arg0: i32, %arg1: memref<1x1312x3xf32, #tpu.memory_space<vmem>>, %arg2: memref<12x64xf32, #tpu.memory_space<vmem>>, %arg3: memref<1x64xf32, #tpu.memory_space<vmem>>, %arg4: memref<104x272xf32, #tpu.memory_space<vmem>>, %arg5: memref<256x64xf32, #tpu.memory_space<vmem>>, %arg6: memref<1x64xf32, #tpu.memory_space<vmem>>, %arg7: memref<4x384xf32, #tpu.memory_space<vmem>>, %arg8: memref<64x48xf32, #tpu.memory_space<vmem>>, %arg9: memref<1x48xf32, #tpu.memory_space<vmem>>, %arg10: memref<1x1xf32, #tpu.memory_space<vmem>>, %arg11: memref<1x1xf32, #tpu.memory_space<vmem>>, %arg12: memref<1x1x2xf32, #tpu.memory_space<vmem>>) attributes {dimension_semantics = [#tpu.dimension_semantics<parallel>], iteration_bounds = array<i64: 2>, scalar_prefetch = 0 : i64, scratch_operands = 0 : i64, tpu.core_type = #tpu.core_type<tc>, window_params = [{transform_indices = @transform_0, window_bounds = array<i64: 1, 1312, 3>}, {pipeline_mode = #tpu.pipeline_mode<synchronous>, transform_indices = @transform_1, window_bounds = array<i64: 12, 64>}, {pipeline_mode = #tpu.pipeline_mode<synchronous>, transform_indices = @transform_2, window_bounds = array<i64: 1, 64>}, {pipeline_mode = #tpu.pipeline_mode<synchronous>, transform_indices = @transform_3, window_bounds = array<i64: 104, 272>}, {pipeline_mode = #tpu.pipeline_mode<synchronous>, transform_indices = @transform_4, window_bounds = array<i64: 256, 64>}, {pipeline_mode = #tpu.pipeline_mode<synchronous>, transform_indices = @transform_5, window_bounds = array<i64: 1, 64>}, {pipeline_mode = #tpu.pipeline_mode<synchronous>, transform_indices = @transform_6, window_bounds = array<i64: 4, 384>}, {pipeline_mode = #tpu.pipeline_mode<synchronous>, transform_indices = @transform_7, window_bounds = array<i64: 64, 48>}, {pipeline_mode = #tpu.pipeline_mode<synchronous>, transform_indices = @transform_8, window_bounds = array<i64: 1, 48>}, {pipeline_mode = #tpu.pipeline_mode<synchronous>, transform_indices = @transform_9, window_bounds = array<i64: 1, 1>}, {pipeline_mode = #tpu.pipeline_mode<synchronous>, transform_indices = @transform_10, window_bounds = array<i64: 1, 1>}, {transform_indices = @transform_11, window_bounds = array<i64: 1, 1, 2>}]} {
    %c0 = arith.constant 0 : index
    %c0_0 = arith.constant 0 : index
    %c0_1 = arith.constant 0 : index
    %0 = vector.load %arg1[%c0, %c0_0, %c0_1] : memref<1x1312x3xf32, #tpu.memory_space<vmem>>, vector<1x1288x3xf32>
    %1 = vector.shape_cast %0 : vector<1x1288x3xf32> to vector<1288x3xf32>
    %c0_2 = arith.constant 0 : index
    %c1 = arith.constant 1 : index
    %c0_3 = arith.constant 0 : index
    %2 = vector.load %arg1[%c0_2, %c1, %c0_3] : memref<1x1312x3xf32, #tpu.memory_space<vmem>>, vector<1x1288x3xf32>
    %3 = vector.shape_cast %2 : vector<1x1288x3xf32> to vector<1288x3xf32>
    %c0_4 = arith.constant 0 : index
    %c18 = arith.constant 18 : index
    %c0_5 = arith.constant 0 : index
    %4 = vector.load %arg1[%c0_4, %c18, %c0_5] : memref<1x1312x3xf32, #tpu.memory_space<vmem>>, vector<1x1288x3xf32>
    %5 = vector.shape_cast %4 : vector<1x1288x3xf32> to vector<1288x3xf32>
    %c0_6 = arith.constant 0 : index
    %c19 = arith.constant 19 : index
    %c0_7 = arith.constant 0 : index
    %6 = vector.load %arg1[%c0_6, %c19, %c0_7] : memref<1x1312x3xf32, #tpu.memory_space<vmem>>, vector<1x1288x3xf32>
    %7 = vector.shape_cast %6 : vector<1x1288x3xf32> to vector<1288x3xf32>
    %8 = tpu.concatenate %1, %3, %5, %7 in 1 : vector<1288x3xf32>, vector<1288x3xf32>, vector<1288x3xf32>, vector<1288x3xf32> -> vector<1288x12xf32>
    %c0_8 = arith.constant 0 : index
    %c0_9 = arith.constant 0 : index
    %9 = vector.load %arg2[%c0_8, %c0_9] : memref<12x64xf32, #tpu.memory_space<vmem>>, vector<12x64xf32>
    %cst = arith.constant dense<0.000000e+00> : vector<1288x64xf32>
    %10 = tpu.matmul %8, %9, %cst {dimension_numbers = #tpu.dot_dimension_numbers<[1], [0], [0], [1], [0, 0, 1, 1], [], []>} : vector<1288x12xf32>, vector<12x64xf32>, vector<1288x64xf32> -> vector<1288x64xf32>
    %c0_10 = arith.constant 0 : index
    %c0_11 = arith.constant 0 : index
    %11 = vector.load %arg3[%c0_10, %c0_11] : memref<1x64xf32, #tpu.memory_space<vmem>>, vector<1x64xf32>
    %12 = vector.broadcast %11 : vector<1x64xf32> to vector<1288x64xf32>
    %13 = arith.addf %10, %12 : vector<1288x64xf32>
    %cst_12 = arith.constant 0.000000e+00 : f32
    %14 = vector.broadcast %cst_12 : f32 to vector<1288x64xf32>
    %15 = arith.maximumf %13, %14 : vector<1288x64xf32>
    %16 = vector.extract_strided_slice %15 {offsets = [0, 0], sizes = [1264, 64], strides = [1, 1]} : vector<1288x64xf32> to vector<1264x64xf32>
    %17 = vector.extract_strided_slice %15 {offsets = [1, 0], sizes = [1264, 64], strides = [1, 1]} : vector<1288x64xf32> to vector<1264x64xf32>
    %18 = arith.maximumf %16, %17 : vector<1264x64xf32>
    %19 = vector.extract_strided_slice %15 {offsets = [18, 0], sizes = [1264, 64], strides = [1, 1]} : vector<1288x64xf32> to vector<1264x64xf32>
    %20 = vector.extract_strided_slice %15 {offsets = [19, 0], sizes = [1264, 64], strides = [1, 1]} : vector<1288x64xf32> to vector<1264x64xf32>
    %21 = arith.maximumf %19, %20 : vector<1264x64xf32>
    %22 = arith.maximumf %18, %21 : vector<1264x64xf32>
    %c0_13 = arith.constant 0 : index
    %c0_14 = arith.constant 0 : index
    %23 = vector.load %arg4[%c0_13, %c0_14] : memref<104x272xf32, #tpu.memory_space<vmem>>, vector<104x272xf32>
    %24 = vector.extract_strided_slice %22 {offsets = [0, 0], sizes = [272, 64], strides = [1, 1]} : vector<1264x64xf32> to vector<272x64xf32>
    %cst_15 = arith.constant dense<0.000000e+00> : vector<104x64xf32>
    %25 = tpu.matmul %23, %24, %cst_15 {dimension_numbers = #tpu.dot_dimension_numbers<[1], [0], [0], [1], [0, 0, 1, 1], [], []>} : vector<104x272xf32>, vector<272x64xf32>, vector<104x64xf32> -> vector<104x64xf32>
    %26 = vector.extract_strided_slice %22 {offsets = [328, 0], sizes = [272, 64], strides = [1, 1]} : vector<1264x64xf32> to vector<272x64xf32>
    %cst_16 = arith.constant dense<0.000000e+00> : vector<104x64xf32>
    %27 = tpu.matmul %23, %26, %cst_16 {dimension_numbers = #tpu.dot_dimension_numbers<[1], [0], [0], [1], [0, 0, 1, 1], [], []>} : vector<104x272xf32>, vector<272x64xf32>, vector<104x64xf32> -> vector<104x64xf32>
    %28 = vector.extract_strided_slice %22 {offsets = [656, 0], sizes = [272, 64], strides = [1, 1]} : vector<1264x64xf32> to vector<272x64xf32>
    %cst_17 = arith.constant dense<0.000000e+00> : vector<104x64xf32>
    %29 = tpu.matmul %23, %28, %cst_17 {dimension_numbers = #tpu.dot_dimension_numbers<[1], [0], [0], [1], [0, 0, 1, 1], [], []>} : vector<104x272xf32>, vector<272x64xf32>, vector<104x64xf32> -> vector<104x64xf32>
    %30 = vector.extract_strided_slice %22 {offsets = [984, 0], sizes = [272, 64], strides = [1, 1]} : vector<1264x64xf32> to vector<272x64xf32>
    %cst_18 = arith.constant dense<0.000000e+00> : vector<104x64xf32>
    %31 = tpu.matmul %23, %30, %cst_18 {dimension_numbers = #tpu.dot_dimension_numbers<[1], [0], [0], [1], [0, 0, 1, 1], [], []>} : vector<104x272xf32>, vector<272x64xf32>, vector<104x64xf32> -> vector<104x64xf32>
    %32 = tpu.concatenate %25, %27, %29, %31 in 0 : vector<104x64xf32>, vector<104x64xf32>, vector<104x64xf32>, vector<104x64xf32> -> vector<416x64xf32>
    %33 = vector.extract_strided_slice %32 {offsets = [0, 0], sizes = [400, 64], strides = [1, 1]} : vector<416x64xf32> to vector<400x64xf32>
    %34 = vector.extract_strided_slice %32 {offsets = [1, 0], sizes = [400, 64], strides = [1, 1]} : vector<416x64xf32> to vector<400x64xf32>
    %35 = vector.extract_strided_slice %32 {offsets = [10, 0], sizes = [400, 64], strides = [1, 1]} : vector<416x64xf32> to vector<400x64xf32>
    %36 = vector.extract_strided_slice %32 {offsets = [11, 0], sizes = [400, 64], strides = [1, 1]} : vector<416x64xf32> to vector<400x64xf32>
    %37 = tpu.concatenate %33, %34, %35, %36 in 1 : vector<400x64xf32>, vector<400x64xf32>, vector<400x64xf32>, vector<400x64xf32> -> vector<400x256xf32>
    %c0_19 = arith.constant 0 : index
    %c0_20 = arith.constant 0 : index
    %38 = vector.load %arg5[%c0_19, %c0_20] : memref<256x64xf32, #tpu.memory_space<vmem>>, vector<256x64xf32>
    %cst_21 = arith.constant dense<0.000000e+00> : vector<400x64xf32>
    %39 = tpu.matmul %37, %38, %cst_21 {dimension_numbers = #tpu.dot_dimension_numbers<[1], [0], [0], [1], [0, 0, 1, 1], [], []>} : vector<400x256xf32>, vector<256x64xf32>, vector<400x64xf32> -> vector<400x64xf32>
    %c0_22 = arith.constant 0 : index
    %c0_23 = arith.constant 0 : index
    %40 = vector.load %arg6[%c0_22, %c0_23] : memref<1x64xf32, #tpu.memory_space<vmem>>, vector<1x64xf32>
    %41 = vector.broadcast %40 : vector<1x64xf32> to vector<400x64xf32>
    %42 = arith.addf %39, %41 : vector<400x64xf32>
    %cst_24 = arith.constant 0.000000e+00 : f32
    %43 = vector.broadcast %cst_24 : f32 to vector<400x64xf32>
    %44 = arith.maximumf %42, %43 : vector<400x64xf32>
    %45 = vector.extract_strided_slice %44 {offsets = [0, 0], sizes = [384, 64], strides = [1, 1]} : vector<400x64xf32> to vector<384x64xf32>
    %46 = vector.extract_strided_slice %44 {offsets = [1, 0], sizes = [384, 64], strides = [1, 1]} : vector<400x64xf32> to vector<384x64xf32>
    %47 = arith.maximumf %45, %46 : vector<384x64xf32>
    %48 = vector.extract_strided_slice %44 {offsets = [10, 0], sizes = [384, 64], strides = [1, 1]} : vector<400x64xf32> to vector<384x64xf32>
    %49 = vector.extract_strided_slice %44 {offsets = [11, 0], sizes = [384, 64], strides = [1, 1]} : vector<400x64xf32> to vector<384x64xf32>
    %50 = arith.maximumf %48, %49 : vector<384x64xf32>
    %51 = arith.maximumf %47, %50 : vector<384x64xf32>
    %c0_25 = arith.constant 0 : index
    %c0_26 = arith.constant 0 : index
    %52 = vector.load %arg7[%c0_25, %c0_26] : memref<4x384xf32, #tpu.memory_space<vmem>>, vector<4x384xf32>
    %cst_27 = arith.constant dense<0.000000e+00> : vector<4x64xf32>
    %53 = tpu.matmul %52, %51, %cst_27 {dimension_numbers = #tpu.dot_dimension_numbers<[1], [0], [0], [1], [0, 0, 1, 1], [], []>} : vector<4x384xf32>, vector<384x64xf32>, vector<4x64xf32> -> vector<4x64xf32>
    %c0_28 = arith.constant 0 : index
    %c0_29 = arith.constant 0 : index
    %54 = vector.load %arg8[%c0_28, %c0_29] : memref<64x48xf32, #tpu.memory_space<vmem>>, vector<64x48xf32>
    %cst_30 = arith.constant dense<0.000000e+00> : vector<4x48xf32>
    %55 = tpu.matmul %53, %54, %cst_30 {dimension_numbers = #tpu.dot_dimension_numbers<[1], [0], [0], [1], [0, 0, 1, 1], [], []>} : vector<4x64xf32>, vector<64x48xf32>, vector<4x48xf32> -> vector<4x48xf32>
    %c0_31 = arith.constant 0 : index
    %c0_32 = arith.constant 0 : index
    %56 = vector.load %arg9[%c0_31, %c0_32] : memref<1x48xf32, #tpu.memory_space<vmem>>, vector<1x48xf32>
    %57 = vector.broadcast %56 : vector<1x48xf32> to vector<4x48xf32>
    %58 = arith.addf %55, %57 : vector<4x48xf32>
    %59 = vector.extract_strided_slice %58 {offsets = [0, 0], sizes = [2, 48], strides = [1, 1]} : vector<4x48xf32> to vector<2x48xf32>
    %60 = vector.extract_strided_slice %58 {offsets = [2, 0], sizes = [2, 48], strides = [1, 1]} : vector<4x48xf32> to vector<2x48xf32>
    %61 = arith.subf %59, %60 : vector<2x48xf32>
    %cst_33 = arith.constant 9.99999997E-7 : f32
    %62 = vector.broadcast %cst_33 : f32 to vector<2x48xf32>
    %63 = arith.addf %61, %62 : vector<2x48xf32>
    %64 = arith.mulf %63, %63 : vector<2x48xf32>
    %cst_34 = arith.constant dense<0.000000e+00> : vector<2xf32>
    %65 = vector.multi_reduction <add>, %64, %cst_34 [1] : vector<2x48xf32> to vector<2xf32>
    %66 = vector.shape_cast %65 : vector<2xf32> to vector<2x1xf32>
    %67 = math.sqrt %66 : vector<2x1xf32>
    %c0_35 = arith.constant 0 : index
    %c0_36 = arith.constant 0 : index
    %68 = vector.load %arg10[%c0_35, %c0_36] : memref<1x1xf32, #tpu.memory_space<vmem>>, vector<1x1xf32>
    %69 = vector.broadcast %68 : vector<1x1xf32> to vector<2x1xf32>
    %70 = arith.mulf %67, %69 : vector<2x1xf32>
    %c0_37 = arith.constant 0 : index
    %c0_38 = arith.constant 0 : index
    %71 = vector.load %arg11[%c0_37, %c0_38] : memref<1x1xf32, #tpu.memory_space<vmem>>, vector<1x1xf32>
    %72 = vector.broadcast %71 : vector<1x1xf32> to vector<2x1xf32>
    %73 = arith.addf %70, %72 : vector<2x1xf32>
    %cst_39 = arith.constant 0.000000e+00 : f32
    %74 = vector.broadcast %cst_39 : f32 to vector<2x1xf32>
    %75 = arith.subf %74, %73 : vector<2x1xf32>
    %76 = math.exp %75 : vector<2x1xf32>
    %cst_40 = arith.constant 1.000000e+00 : f32
    %77 = vector.broadcast %cst_40 : f32 to vector<2x1xf32>
    %78 = arith.addf %77, %76 : vector<2x1xf32>
    %cst_41 = arith.constant 1.000000e+00 : f32
    %79 = vector.broadcast %cst_41 : f32 to vector<2x1xf32>
    %80 = arith.divf %79, %78 : vector<2x1xf32>
    %81 = tpu.iota {dimensions = array<i32: 0>} : vector<2x2xi32>
    %82 = tpu.iota {dimensions = array<i32: 1>} : vector<2x2xi32>
    %83 = arith.cmpi eq, %81, %82 : vector<2x2xi32>
    %84 = arith.extui %83 : vector<2x2xi1> to vector<2x2xi32>
    %85 = arith.sitofp %84 : vector<2x2xi32> to vector<2x2xf32>
    %86 = vector.broadcast %80 : vector<2x1xf32> to vector<2x2xf32>
    %87 = arith.mulf %86, %85 : vector<2x2xf32>
    %cst_42 = arith.constant dense<0.000000e+00> : vector<2xf32>
    %88 = vector.multi_reduction <add>, %87, %cst_42 [0] : vector<2x2xf32> to vector<2xf32>
    %89 = vector.shape_cast %88 : vector<2xf32> to vector<1x2xf32>
    %c0_43 = arith.constant 0 : index
    %c0_44 = arith.constant 0 : index
    %c0_45 = arith.constant 0 : index
    %90 = vector.load %arg12[%c0_43, %c0_44, %c0_45] : memref<1x1x2xf32, #tpu.memory_space<vmem>>, vector<1x1x2xf32>
    %91 = vector.shape_cast %90 : vector<1x1x2xf32> to vector<1x2xf32>
    %92 = vector.shape_cast %89 : vector<1x2xf32> to vector<1x1x2xf32>
    tpu.vector_store %arg12[%c0_43, %c0_44, %c0_45], %92 {strides = array<i32>} : memref<1x1x2xf32, #tpu.memory_space<vmem>>, vector<1x1x2xf32>,
    return
  }
  func.func @transform_0(%arg0: i32) -> (i32, i32, i32) {
    %c0_i32 = arith.constant 0 : i32
    %c0_i32_0 = arith.constant 0 : i32
    %c0_i32_1 = arith.constant 0 : i32
    return %arg0, %c0_i32, %c0_i32_0 : i32, i32, i32
  }
  func.func @transform_1(%arg0: i32) -> (i32, i32) {
    %c0_i32 = arith.constant 0 : i32
    %c0_i32_0 = arith.constant 0 : i32
    %c0_i32_1 = arith.constant 0 : i32
    return %c0_i32, %c0_i32_0 : i32, i32
  }
  func.func @transform_2(%arg0: i32) -> (i32, i32) {
    %c0_i32 = arith.constant 0 : i32
    %c0_i32_0 = arith.constant 0 : i32
    %c0_i32_1 = arith.constant 0 : i32
    return %c0_i32, %c0_i32_0 : i32, i32
  }
  func.func @transform_3(%arg0: i32) -> (i32, i32) {
    %c0_i32 = arith.constant 0 : i32
    %c0_i32_0 = arith.constant 0 : i32
    %c0_i32_1 = arith.constant 0 : i32
    return %c0_i32, %c0_i32_0 : i32, i32
  }
  func.func @transform_4(%arg0: i32) -> (i32, i32) {
    %c0_i32 = arith.constant 0 : i32
    %c0_i32_0 = arith.constant 0 : i32
    %c0_i32_1 = arith.constant 0 : i32
    return %c0_i32, %c0_i32_0 : i32, i32
  }
  func.func @transform_5(%arg0: i32) -> (i32, i32) {
    %c0_i32 = arith.constant 0 : i32
    %c0_i32_0 = arith.constant 0 : i32
    %c0_i32_1 = arith.constant 0 : i32
    return %c0_i32, %c0_i32_0 : i32, i32
  }
  func.func @transform_6(%arg0: i32) -> (i32, i32) {
    %c0_i32 = arith.constant 0 : i32
    %c0_i32_0 = arith.constant 0 : i32
    %c0_i32_1 = arith.constant 0 : i32
    return %c0_i32, %c0_i32_0 : i32, i32
  }
  func.func @transform_7(%arg0: i32) -> (i32, i32) {
    %c0_i32 = arith.constant 0 : i32
    %c0_i32_0 = arith.constant 0 : i32
    %c0_i32_1 = arith.constant 0 : i32
    return %c0_i32, %c0_i32_0 : i32, i32
  }
  func.func @transform_8(%arg0: i32) -> (i32, i32) {
    %c0_i32 = arith.constant 0 : i32
    %c0_i32_0 = arith.constant 0 : i32
    %c0_i32_1 = arith.constant 0 : i32
    return %c0_i32, %c0_i32_0 : i32, i32
  }
  func.func @transform_9(%arg0: i32) -> (i32, i32) {
    %c0_i32 = arith.constant 0 : i32
    %c0_i32_0 = arith.constant 0 : i32
    %c0_i32_1 = arith.constant 0 : i32
    return %c0_i32, %c0_i32_0 : i32, i32
  }
  func.func @transform_10(%arg0: i32) -> (i32, i32) {
    %c0_i32 = arith.constant 0 : i32
    %c0_i32_0 = arith.constant 0 : i32
    %c0_i32_1 = arith.constant 0 : i32
    return %c0_i32, %c0_i32_0 : i32, i32
  }
  func.func @transform_11(%arg0: i32) -> (i32, i32, i32) {
    %c0_i32 = arith.constant 0 : i32
    %c0_i32_0 = arith.constant 0 : i32
    %c0_i32_1 = arith.constant 0 : i32
    return %arg0, %c0_i32, %c0_i32_0 : i32, i32, i32
  }
}

</mosaic_0001>

<llo_original>
// kernel: forward.1
$region0: #{forward.1}
  #allocation0 [shape = 'u32[]', space=smem, size = 0x4, offset = 0x4, fixed_abs, tag = 'smem constant byte address 0x4 - core index']
  #allocation1 [shape = 'u32[72,128]{1,0:T(1,128)}', space=vmem, size = 0x9000, scoped, tag = 'internal scratch']
  #allocation2 [shape = 'f32[1,1]{1,0:T(1,128)S(1)}', space=vmem, size = 0x200, scoped, tag = 'scoped memory for forward.1']
  #allocation3 [shape = 'f32[1,1]{1,0:T(1,128)S(1)}', space=vmem, size = 0x200, scoped, tag = 'scoped memory for forward.1']
  %s0 = inlined_call_operand.vmem [shape: f32[2,1312,3], index: 0, kind: input, shape index: {}]
  %s1 = inlined_call_operand.vmem [shape: f32[12,64], index: 1, kind: input, shape index: {}]
  %s2 = inlined_call_operand.vmem [shape: f32[1,64], index: 2, kind: input, shape index: {}]
  %s3 = inlined_call_operand.vmem [shape: f32[104,272], index: 3, kind: input, shape index: {}]
  %s4 = inlined_call_operand.vmem [shape: f32[256,64], index: 4, kind: input, shape index: {}]
  %s5 = inlined_call_operand.vmem [shape: f32[1,64], index: 5, kind: input, shape index: {}]
  %s6 = inlined_call_operand.vmem [shape: f32[4,384], index: 6, kind: input, shape index: {}]
  %s7 = inlined_call_operand.vmem [shape: f32[64,48], index: 7, kind: input, shape index: {}]
  %s8 = inlined_call_operand.vmem [shape: f32[1,48], index: 8, kind: input, shape index: {}]
  %s9 = inlined_call_operand.<no memory space> [shape: f32[1,1], index: 9, kind: input, shape index: {}]
  %s10 = inlined_call_operand.<no memory space> [shape: f32[1,1], index: 10, kind: input, shape index: {}]
  %s11 = inlined_call_operand.vmem [shape: f32[2,1,2], index: 11, kind: output, shape index: {}]
  %s12 = sld [smem:[#allocation0]]
  $region77: #{forward.1} parent=0
    _
  %s14 = ssub.s32 1, %s12
  %s15 = scalar_select 0, %s14, %s12
  %v16 = vstv %s9
  %17 = vst [vmem:[#allocation2] sm:$0x1] %v16
  %v18 = vstv %s10
  %19 = vst [vmem:[#allocation3] sm:$0x1] %v18
  loop: start=0, step=1, limit=4
  $region2: #{forward.1} parent=0 // loop_pre_header
    _
  $region3: #{forward.1} parent=0 // loop_header
    %s21 = sphi 0, %s25
    %p22 = scmp.ge.s32.totalorder %s21, 4
    %s31 = sphi 0, %s33
    %s34 = sphi 0, %s31
    %s35 = sphi 0, %s34
    %s51 = sphi 0, %s35
    %s55 = sphi 0, %s55
    %s57 = sphi 0, %s55
    %s58 = sphi 0, %s57
    %s72 = sphi 0, %s58
    %s76 = sphi 0, %s76
    %s78 = sphi 0, %s76
    %s79 = sphi 0, %s78
    %s93 = sphi 0, %s79
    %s97 = sphi 0, %s97
    %s99 = sphi 0, %s97
    %s100 = sphi 0, %s99
    %s114 = sphi 0, %s100
    %s118 = sphi 0, %s118
    %s120 = sphi 0, %s118
    %s121 = sphi 0, %s120
    %s135 = sphi 0, %s121
    %s139 = sphi 0, %s139
    %s141 = sphi 0, %s139
    %s142 = sphi 0, %s141
    %s156 = sphi 0, %s142
    %s160 = sphi 0, %s160
    %s162 = sphi 0, %s160
    %s163 = sphi 0, %s162
    %s177 = sphi 0, %s163
    %s181 = sphi 0, %s181
    %s183 = sphi 0, %s181
    %s184 = sphi 0, %s183
    %s198 = sphi 0, %s184
    %s202 = sphi 0, %s202
    %s204 = sphi 0, %s202
    %s205 = sphi 0, %s204
    %s219 = sphi 0, %s205
    %s223 = sphi 0, %s223
    %s225 = sphi 0, %s223
    %s226 = sphi 0, %s225
    %s240 = sphi 0, %s226
    %s244 = sphi 0, %s244
    %s246 = sphi 0, %s244
    %s247 = sphi 0, %s246
    %s261 = sphi 0, %s247
    %s267 = sphi 0, %s269
    %s270 = sphi 0, %s267
    %s271 = sphi 0, %s270
    %s287 = sphi 0, %s271
  $region4: #{forward.1} parent=0 // loop_header_branch
    %24 = sbr.rel (%p22) target = $region8
  $region5: #{forward.1} parent=0 // loop_body
    %s26 = ssub.s32 %s21, 1
    %s27 = ssub.s32 %s21, 2
    %s28 = sadd.s32 %s21, 1
    %s29 = ssub.s32 %s21, %s28
    %p30 = scmp.eq.s32.totalorder %s29, 0
    %s32 = sadd.s32 %s31, 1
    %s33 = scalar_select %p30, %s31, %s32
    %p36 = pneg %p30
    %p37 = scmp.eq.s32.totalorder %s21, 1
    %p38 = por %p36, %p37
    %p39 = scmp.ne.s32.totalorder %s31, %s34
    %p40 = scmp.eq.s32.totalorder %s21, 0
    %p41 = por %p39, %p40
    %p42 = scmp.ne.s32.totalorder %s31, %s34
    %p43 = scmp.eq.s32.totalorder %s26, 1
    %p44 = por %p42, %p43
    %p45 = scmp.ne.s32.totalorder %s34, %s35
    %p46 = scmp.eq.s32.totalorder %s26, 0
    %p47 = por %p45, %p46
    %p48 = scmp.ne.s32.totalorder %s34, %s35
    %p49 = scmp.eq.s32.totalorder %s27, 1
    %p50 = por %p48, %p49
    %p52 = scmp.ne.s32.totalorder %s35, %s51
    %p53 = scmp.eq.s32.totalorder %s27, 0
    %p54 = por %p52, %p53
    %s56 = sadd.s32 %s55, 1
    %p59 = scmp.eq.s32.totalorder %s21, 1
    %p60 = scmp.ne.s32.totalorder %s55, %s57
    %p61 = scmp.eq.s32.totalorder %s21, 0
    %p62 = por %p60, %p61
    %p63 = scmp.ne.s32.totalorder %s55, %s57
    %p64 = scmp.eq.s32.totalorder %s26, 1
    %p65 = por %p63, %p64
    %p66 = scmp.ne.s32.totalorder %s57, %s58
    %p67 = scmp.eq.s32.totalorder %s26, 0
    %p68 = por %p66, %p67
    %p69 = scmp.ne.s32.totalorder %s57, %s58
    %p70 = scmp.eq.s32.totalorder %s27, 1
    %p71 = por %p69, %p70
    %p73 = scmp.ne.s32.totalorder %s58, %s72
    %p74 = scmp.eq.s32.totalorder %s27, 0
    %p75 = por %p73, %p74
    %s77 = sadd.s32 %s76, 1
    %p80 = scmp.eq.s32.totalorder %s21, 1
    %p81 = scmp.ne.s32.totalorder %s76, %s78
    %p82 = scmp.eq.s32.totalorder %s21, 0
    %p83 = por %p81, %p82
    %p84 = scmp.ne.s32.totalorder %s76, %s78
    %p85 = scmp.eq.s32.totalorder %s26, 1
    %p86 = por %p84, %p85
    %p87 = scmp.ne.s32.totalorder %s78, %s79
    %p88 = scmp.eq.s32.totalorder %s26, 0
    %p89 = por %p87, %p88
    %p90 = scmp.ne.s32.totalorder %s78, %s79
    %p91 = scmp.eq.s32.totalorder %s27, 1
    %p92 = por %p90, %p91
    %p94 = scmp.ne.s32.totalorder %s79, %s93
    %p95 = scmp.eq.s32.totalorder %s27, 0
    %p96 = por %p94, %p95
    %s98 = sadd.s32 %s97, 1
    %p101 = scmp.eq.s32.totalorder %s21, 1
    %p102 = scmp.ne.s32.totalorder %s97, %s99
    %p103 = scmp.eq.s32.totalorder %s21, 0
    %p104 = por %p102, %p103
    %p105 = scmp.ne.s32.totalorder %s97, %s99
    %p106 = scmp.eq.s32.totalorder %s26, 1
    %p107 = por %p105, %p106
    %p108 = scmp.ne.s32.totalorder %s99, %s100
    %p109 = scmp.eq.s32.totalorder %s26, 0
    %p110 = por %p108, %p109
    %p111 = scmp.ne.s32.totalorder %s99, %s100
    %p112 = scmp.eq.s32.totalorder %s27, 1
    %p113 = por %p111, %p112
    %p115 = scmp.ne.s32.totalorder %s100, %s114
    %p116 = scmp.eq.s32.totalorder %s27, 0
    %p117 = por %p115, %p116
    %s119 = sadd.s32 %s118, 1
    %p122 = scmp.eq.s32.totalorder %s21, 1
    %p123 = scmp.ne.s32.totalorder %s118, %s120
    %p124 = scmp.eq.s32.totalorder %s21, 0
    %p125 = por %p123, %p124
    %p126 = scmp.ne.s32.totalorder %s118, %s120
    %p127 = scmp.eq.s32.totalorder %s26, 1
    %p128 = por %p126, %p127
    %p129 = scmp.ne.s32.totalorder %s120, %s121
    %p130 = scmp.eq.s32.totalorder %s26, 0
    %p131 = por %p129, %p130
    %p132 = scmp.ne.s32.totalorder %s120, %s121
    %p133 = scmp.eq.s32.totalorder %s27, 1
    %p134 = por %p132, %p133
    %p136 = scmp.ne.s32.totalorder %s121, %s135
    %p137 = scmp.eq.s32.totalorder %s27, 0
    %p138 = por %p136, %p137
    %s140 = sadd.s32 %s139, 1
    %p143 = scmp.eq.s32.totalorder %s21, 1
    %p144 = scmp.ne.s32.totalorder %s139, %s141
    %p145 = scmp.eq.s32.totalorder %s21, 0
    %p146 = por %p144, %p145
    %p147 = scmp.ne.s32.totalorder %s139, %s141
    %p148 = scmp.eq.s32.totalorder %s26, 1
    %p149 = por %p147, %p148
    %p150 = scmp.ne.s32.totalorder %s141, %s142
    %p151 = scmp.eq.s32.totalorder %s26, 0
    %p152 = por %p150, %p151
    %p153 = scmp.ne.s32.totalorder %s141, %s142
    %p154 = scmp.eq.s32.totalorder %s27, 1
    %p155 = por %p153, %p154
    %p157 = scmp.ne.s32.totalorder %s142, %s156
    %p158 = scmp.eq.s32.totalorder %s27, 0
    %p159 = por %p157, %p158
    %s161 = sadd.s32 %s160, 1
    %p164 = scmp.eq.s32.totalorder %s21, 1
    %p165 = scmp.ne.s32.totalorder %s160, %s162
    %p166 = scmp.eq.s32.totalorder %s21, 0
    %p167 = por %p165, %p166
    %p168 = scmp.ne.s32.totalorder %s160, %s162
    %p169 = scmp.eq.s32.totalorder %s26, 1
    %p170 = por %p168, %p169
    %p171 = scmp.ne.s32.totalorder %s162, %s163
    %p172 = scmp.eq.s32.totalorder %s26, 0
    %p173 = por %p171, %p172
    %p174 = scmp.ne.s32.totalorder %s162, %s163
    %p175 = scmp.eq.s32.totalorder %s27, 1
    %p176 = por %p174, %p175
    %p178 = scmp.ne.s32.totalorder %s163, %s177
    %p179 = scmp.eq.s32.totalorder %s27, 0
    %p180 = por %p178, %p179
    %s182 = sadd.s32 %s181, 1
    %p185 = scmp.eq.s32.totalorder %s21, 1
    %p186 = scmp.ne.s32.totalorder %s181, %s183
    %p187 = scmp.eq.s32.totalorder %s21, 0
    %p188 = por %p186, %p187
    %p189 = scmp.ne.s32.totalorder %s181, %s183
    %p190 = scmp.eq.s32.totalorder %s26, 1
    %p191 = por %p189, %p190
    %p192 = scmp.ne.s32.totalorder %s183, %s184
    %p193 = scmp.eq.s32.totalorder %s26, 0
    %p194 = por %p192, %p193
    %p195 = scmp.ne.s32.totalorder %s183, %s184
    %p196 = scmp.eq.s32.totalorder %s27, 1
    %p197 = por %p195, %p196
    %p199 = scmp.ne.s32.totalorder %s184, %s198
    %p200 = scmp.eq.s32.totalorder %s27, 0
    %p201 = por %p199, %p200
    %s203 = sadd.s32 %s202, 1
    %p206 = scmp.eq.s32.totalorder %s21, 1
    %p207 = scmp.ne.s32.totalorder %s202, %s204
    %p208 = scmp.eq.s32.totalorder %s21, 0
    %p209 = por %p207, %p208
    %p210 = scmp.ne.s32.totalorder %s202, %s204
    %p211 = scmp.eq.s32.totalorder %s26, 1
    %p212 = por %p210, %p211
    %p213 = scmp.ne.s32.totalorder %s204, %s205
    %p214 = scmp.eq.s32.totalorder %s26, 0
    %p215 = por %p213, %p214
    %p216 = scmp.ne.s32.totalorder %s204, %s205
    %p217 = scmp.eq.s32.totalorder %s27, 1
    %p218 = por %p216, %p217
    %p220 = scmp.ne.s32.totalorder %s205, %s219
    %p221 = scmp.eq.s32.totalorder %s27, 0
    %p222 = por %p220, %p221
    %s224 = sadd.s32 %s223, 1
    %p227 = scmp.eq.s32.totalorder %s21, 1
    %p228 = scmp.ne.s32.totalorder %s223, %s225
    %p229 = scmp.eq.s32.totalorder %s21, 0
    %p230 = por %p228, %p229
    %p231 = scmp.ne.s32.totalorder %s223, %s225
    %p232 = scmp.eq.s32.totalorder %s26, 1
    %p233 = por %p231, %p232
    %p234 = scmp.ne.s32.totalorder %s225, %s226
    %p235 = scmp.eq.s32.totalorder %s26, 0
    %p236 = por %p234, %p235
    %p237 = scmp.ne.s32.totalorder %s225, %s226
    %p238 = scmp.eq.s32.totalorder %s27, 1
    %p239 = por %p237, %p238
    %p241 = scmp.ne.s32.totalorder %s226, %s240
    %p242 = scmp.eq.s32.totalorder %s27, 0
    %p243 = por %p241, %p242
    %s245 = sadd.s32 %s244, 1
    %p248 = scmp.eq.s32.totalorder %s21, 1
    %p249 = scmp.ne.s32.totalorder %s244, %s246
    %p250 = scmp.eq.s32.totalorder %s21, 0
    %p251 = por %p249, %p250
    %p252 = scmp.ne.s32.totalorder %s244, %s246
    %p253 = scmp.eq.s32.totalorder %s26, 1
    %p254 = por %p252, %p253
    %p255 = scmp.ne.s32.totalorder %s246, %s247
    %p256 = scmp.eq.s32.totalorder %s26, 0
    %p257 = por %p255, %p256
    %p258 = scmp.ne.s32.totalorder %s246, %s247
    %p259 = scmp.eq.s32.totalorder %s27, 1
    %p260 = por %p258, %p259
    %p262 = scmp.ne.s32.totalorder %s247, %s261
    %p263 = scmp.eq.s32.totalorder %s27, 0
    %p264 = por %p262, %p263
    %s265 = ssub.s32 %s21, %s28
    %p266 = scmp.eq.s32.totalorder %s265, 0
    %s268 = sadd.s32 %s267, 1
    %s269 = scalar_select %p266, %s267, %s268
    %p272 = pneg %p266
    %p273 = scmp.eq.s32.totalorder %s21, 1
    %p274 = por %p272, %p273
    %p275 = scmp.ne.s32.totalorder %s267, %s270
    %p276 = scmp.eq.s32.totalorder %s21, 0
    %p277 = por %p275, %p276
    %p278 = scmp.ne.s32.totalorder %s267, %s270
    %p279 = scmp.eq.s32.totalorder %s26, 1
    %p280 = por %p278, %p279
    %p281 = scmp.ne.s32.totalorder %s270, %s271
    %p282 = scmp.eq.s32.totalorder %s26, 0
    %p283 = por %p281, %p282
    %p284 = scmp.ne.s32.totalorder %s270, %s271
    %p285 = scmp.eq.s32.totalorder %s27, 1
    %p286 = por %p284, %p285
    %p288 = scmp.ne.s32.totalorder %s271, %s287
    %p289 = scmp.eq.s32.totalorder %s27, 0
    %p290 = por %p288, %p289
    %p291 = scmp.le.s32.totalorder 1, %s21
    %p292 = scmp.lt.s32.totalorder %s21, 3
    %p293 = pnand %p291, %p292
    %p294 = pneg %p293
    // Predicated region
    $region9: #{forward.1} parent=5 // pred_check
      _
    $region10: #{forward.1} parent=5 // pred_check_branch
      %296 = sbr.rel (%p293) target = $region12
    $region11: #{forward.1} parent=5 // pred_region
      %s297 = ssub.s32 %s21, 1
      // Predicated region
      $region13: #{forward.1} parent=11 // pred_check
        %p298 = pneg %p68
      $region14: #{forward.1} parent=11 // pred_check_branch
        %300 = sbr.rel (%p298) target = $region16
      $region15: #{forward.1} parent=11 // pred_region
        _
      $region16: #{forward.1} parent=11 // pred_fallthru
        _
      // Predicated region
      $region17: #{forward.1} parent=11 // pred_check
        %p301 = pneg %p89
      $region18: #{forward.1} parent=11 // pred_check_branch
        %303 = sbr.rel (%p301) target = $region20
      $region19: #{forward.1} parent=11 // pred_region
        _
      $region20: #{forward.1} parent=11 // pred_fallthru
        _
      // Predicated region
      $region21: #{forward.1} parent=11 // pred_check
        %p304 = pneg %p110
      $region22: #{forward.1} parent=11 // pred_check_branch
        %306 = sbr.rel (%p304) target = $region24
      $region23: #{forward.1} parent=11 // pred_region
        _
      $region24: #{forward.1} parent=11 // pred_fallthru
        _
      // Predicated region
      $region25: #{forward.1} parent=11 // pred_check
        %p307 = pneg %p131
      $region26: #{forward.1} parent=11 // pred_check_branch
        %309 = sbr.rel (%p307) target = $region28
      $region27: #{forward.1} parent=11 // pred_region
        _
      $region28: #{forward.1} parent=11 // pred_fallthru
        _
      // Predicated region
      $region29: #{forward.1} parent=11 // pred_check
        %p310 = pneg %p152
      $region30: #{forward.1} parent=11 // pred_check_branch
        %312 = sbr.rel (%p310) target = $region32
      $region31: #{forward.1} parent=11 // pred_region
        _
      $region32: #{forward.1} parent=11 // pred_fallthru
        _
      // Predicated region
      $region33: #{forward.1} parent=11 // pred_check
        %p313 = pneg %p173
      $region34: #{forward.1} parent=11 // pred_check_branch
        %315 = sbr.rel (%p313) target = $region36
      $region35: #{forward.1} parent=11 // pred_region
        _
      $region36: #{forward.1} parent=11 // pred_fallthru
        _
      // Predicated region
      $region37: #{forward.1} parent=11 // pred_check
        %p316 = pneg %p194
      $region38: #{forward.1} parent=11 // pred_check_branch
        %318 = sbr.rel (%p316) target = $region40
      $region39: #{forward.1} parent=11 // pred_region
        _
      $region40: #{forward.1} parent=11 // pred_fallthru
        _
      // Predicated region
      $region41: #{forward.1} parent=11 // pred_check
        %p319 = pneg %p215
      $region42: #{forward.1} parent=11 // pred_check_branch
        %321 = sbr.rel (%p319) target = $region44
      $region43: #{forward.1} parent=11 // pred_region
        _
      $region44: #{forward.1} parent=11 // pred_fallthru
        _
      // Predicated region
      $region45: #{forward.1} parent=11 // pred_check
        %p322 = pneg %p236
      $region46: #{forward.1} parent=11 // pred_check_branch
        %324 = sbr.rel (%p322) target = $region48
      $region47: #{forward.1} parent=11 // pred_region
        _
      $region48: #{forward.1} parent=11 // pred_fallthru
        _
      // Predicated region
      $region49: #{forward.1} parent=11 // pred_check
        %p325 = pneg %p257
      $region50: #{forward.1} parent=11 // pred_check_branch
        %327 = sbr.rel (%p325) target = $region52
      $region51: #{forward.1} parent=11 // pred_region
        _
      $region52: #{forward.1} parent=11 // pred_fallthru
        _
    $region12: #{forward.1} parent=5 // pred_fallthru
      _
    %p328 = scmp.lt.s32.totalorder %s21, 2
    // Predicated region
    $region53: #{forward.1} parent=5 // pred_check
      %p329 = pneg %p328
    $region54: #{forward.1} parent=5 // pred_check_branch
      %331 = sbr.rel (%p329) target = $region56
    $region55: #{forward.1} parent=5 // pred_region
      // Predicated region
      $region57: #{forward.1} parent=55 // pred_check
        %p332 = pneg %p41
      $region58: #{forward.1} parent=55 // pred_check_branch
        %334 = sbr.rel (%p332) target = $region60
      $region59: #{forward.1} parent=55 // pred_region
        %p335 = scmp.lt.s32.totalorder %s21, 1
        %s336 = scalar_select %p335, %s21, 1
        %s337 = smul.addr %s336, 164
        %s338 = smul.addr %s337, 8
        %s339 = scalar_lea.vmem %s0, %s338
      $region60: #{forward.1} parent=55 // pred_fallthru
        _
    $region56: #{forward.1} parent=5 // pred_fallthru
      _
    %p340 = scmp.le.s32.totalorder 1, %s21
    %p341 = scmp.lt.s32.totalorder %s21, 3
    %p342 = pnand %p340, %p341
    %p343 = pneg %p342
    // Predicated region
    $region61: #{forward.1} parent=5 // pred_check
      _
    $region62: #{forward.1} parent=5 // pred_check_branch
      %345 = sbr.rel (%p342) target = $region64
    $region63: #{forward.1} parent=5 // pred_region
      %s346 = ssub.s32 %s21, 1
      %p347 = scmp.lt.s32.totalorder %s26, 1
      %s348 = scalar_select %p347, %s26, 1
      %s349 = smul.addr %s348, 164
      %s350 = smul.addr %s349, 8
      %s351 = scalar_lea.vmem %s0, %s350
      %p352 = pneg %p47
      %p353 = pneg %p44
      %p354 = pneg %p68
      %p355 = pneg %p65
      %p356 = pneg %p89
      %p357 = pneg %p86
      %p358 = pneg %p110
      %p359 = pneg %p107
      %p360 = pneg %p131
      %p361 = pneg %p128
      %p362 = pneg %p152
      %p363 = pneg %p149
      %p364 = pneg %p173
      %p365 = pneg %p170
      %p366 = pneg %p194
      %p367 = pneg %p191
      %p368 = pneg %p215
      %p369 = pneg %p212
      %p370 = pneg %p236
      %p371 = pneg %p233
      %p372 = pneg %p257
      %p373 = pneg %p254
      %p374 = pneg %p283
      %p375 = pneg %p280
      %p376 = scmp.lt.s32.totalorder %s26, 1
      %s377 = scalar_select %p376, %s26, 1
      %s378 = scalar_lea.vmem %s11, %s377
      %p379 = scmp.lt.s32.totalorder %s26, 1
      %s380 = scalar_select %p379, %s26, 1
      %s381 = smul.addr %s380, 164
      %s382 = smul.addr %s381, 8
      %s383 = scalar_lea.vmem %s0, %s382
      %p384 = scmp.lt.s32.totalorder %s26, 1
      %s385 = scalar_select %p384, %s26, 1
      %s386 = scalar_lea.vmem %s11, %s385
      %v387 = vld [vmem:[%s383] sm:$0xff]
      %v388 = vld [vmem:[%s383 + $0x8] sm:$0xff]
      %v389 = vld [vmem:[%s383 + $0x10] sm:$0xff]
      %v390 = vld [vmem:[%s383 + $0x18] sm:$0xff]
      %v391 = vld [vmem:[%s383 + $0x20] sm:$0xff]
      %v392 = vld [vmem:[%s383 + $0x28] sm:$0xff]
      %v393 = vld [vmem:[%s383 + $0x30] sm:$0xff]
      %v394 = vld [vmem:[%s383 + $0x38] sm:$0xff]
      %v395 = vld [vmem:[%s383 + $0x40] sm:$0xff]
      %v396 = vld [vmem:[%s383 + $0x48] sm:$0xff]
      %v397 = vld [vmem:[%s383 + $0x50] sm:$0xff]
      %v398 = vld [vmem:[%s383 + $0x58] sm:$0xff]
      %v399 = vld [vmem:[%s383 + $0x60] sm:$0xff]
      %v400 = vld [vmem:[%s383 + $0x68] sm:$0xff]
      %v401 = vld [vmem:[%s383 + $0x70] sm:$0xff]
      %v402 = vld [vmem:[%s383 + $0x78] sm:$0xff]
      %v403 = vld [vmem:[%s383 + $0x80] sm:$0xff]
      %v404 = vld [vmem:[%s383 + $0x88] sm:$0xff]
      %v405 = vld [vmem:[%s383 + $0x90] sm:$0xff]
      %v406 = vld [vmem:[%s383 + $0x98] sm:$0xff]
      %v407 = vld [vmem:[%s383 + $0xa0] sm:$0xff]
      %v408 = vld [vmem:[%s383 + $0xa8] sm:$0xff]
      %v409 = vld [vmem:[%s383 + $0xb0] sm:$0xff]
      %v410 = vld [vmem:[%s383 + $0xb8] sm:$0xff]
      %v411 = vld [vmem:[%s383 + $0xc0] sm:$0xff]
      %v412 = vld [vmem:[%s383 + $0xc8] sm:$0xff]
      %v413 = vld [vmem:[%s383 + $0xd0] sm:$0xff]
      %v414 = vld [vmem:[%s383 + $0xd8] sm:$0xff]
      %v415 = vld [vmem:[%s383 + $0xe0] sm:$0xff]
      %v416 = vld [vmem:[%s383 + $0xe8] sm:$0xff]
      %v417 = vld [vmem:[%s383 + $0xf0] sm:$0xff]
      %v418 = vld [vmem:[%s383 + $0xf8] sm:$0xff]
      %v419 = vld [vmem:[%s383 + $0x100] sm:$0xff]
      %v420 = vld [vmem:[%s383 + $0x108] sm:$0xff]
      %v421 = vld [vmem:[%s383 + $0x110] sm:$0xff]
      %v422 = vld [vmem:[%s383 + $0x118] sm:$0xff]
      %v423 = vld [vmem:[%s383 + $0x120] sm:$0xff]
      %v424 = vld [vmem:[%s383 + $0x128] sm:$0xff]
      %v425 = vld [vmem:[%s383 + $0x130] sm:$0xff]
      %v426 = vld [vmem:[%s383 + $0x138] sm:$0xff]
      %v427 = vld [vmem:[%s383 + $0x140] sm:$0xff]
      %v428 = vld [vmem:[%s383 + $0x148] sm:$0xff]
      %v429 = vld [vmem:[%s383 + $0x150] sm:$0xff]
      %v430 = vld [vmem:[%s383 + $0x158] sm:$0xff]
      %v431 = vld [vmem:[%s383 + $0x160] sm:$0xff]
      %v432 = vld [vmem:[%s383 + $0x168] sm:$0xff]
      %v433 = vld [vmem:[%s383 + $0x170] sm:$0xff]
      %v434 = vld [vmem:[%s383 + $0x178] sm:$0xff]
      %v435 = vld [vmem:[%s383 + $0x180] sm:$0xff]
      %v436 = vld [vmem:[%s383 + $0x188] sm:$0xff]
      %v437 = vld [vmem:[%s383 + $0x190] sm:$0xff]
      %v438 = vld [vmem:[%s383 + $0x198] sm:$0xff]
      %v439 = vld [vmem:[%s383 + $0x1a0] sm:$0xff]
      %v440 = vld [vmem:[%s383 + $0x1a8] sm:$0xff]
      %v441 = vld [vmem:[%s383 + $0x1b0] sm:$0xff]
      %v442 = vld [vmem:[%s383 + $0x1b8] sm:$0xff]
      %v443 = vld [vmem:[%s383 + $0x1c0] sm:$0xff]
      %v444 = vld [vmem:[%s383 + $0x1c8] sm:$0xff]
      %v445 = vld [vmem:[%s383 + $0x1d0] sm:$0xff]
      %v446 = vld [vmem:[%s383 + $0x1d8] sm:$0xff]
      %v447 = vld [vmem:[%s383 + $0x1e0] sm:$0xff]
      %v448 = vld [vmem:[%s383 + $0x1e8] sm:$0xff]
      %v449 = vld [vmem:[%s383 + $0x1f0] sm:$0xff]
      %v450 = vld [vmem:[%s383 + $0x1f8] sm:$0xff]
      %v451 = vld [vmem:[%s383 + $0x200] sm:$0xff]
      %v452 = vld [vmem:[%s383 + $0x208] sm:$0xff]
      %v453 = vld [vmem:[%s383 + $0x210] sm:$0xff]
      %v454 = vld [vmem:[%s383 + $0x218] sm:$0xff]
      %v455 = vld [vmem:[%s383 + $0x220] sm:$0xff]
      %v456 = vld [vmem:[%s383 + $0x228] sm:$0xff]
      %v457 = vld [vmem:[%s383 + $0x230] sm:$0xff]
      %v458 = vld [vmem:[%s383 + $0x238] sm:$0xff]
      %v459 = vld [vmem:[%s383 + $0x240] sm:$0xff]
      %v460 = vld [vmem:[%s383 + $0x248] sm:$0xff]
      %v461 = vld [vmem:[%s383 + $0x250] sm:$0xff]
      %v462 = vld [vmem:[%s383 + $0x258] sm:$0xff]
      %v463 = vld [vmem:[%s383 + $0x260] sm:$0xff]
      %v464 = vld [vmem:[%s383 + $0x268] sm:$0xff]
      %v465 = vld [vmem:[%s383 + $0x270] sm:$0xff]
      %v466 = vld [vmem:[%s383 + $0x278] sm:$0xff]
      %v467 = vld [vmem:[%s383 + $0x280] sm:$0xff]
      %v468 = vld [vmem:[%s383 + $0x288] sm:$0xff]
      %v469 = vld [vmem:[%s383 + $0x290] sm:$0xff]
      %v470 = vld [vmem:[%s383 + $0x298] sm:$0xff]
      %v471 = vld [vmem:[%s383 + $0x2a0] sm:$0xff]
      %v472 = vld [vmem:[%s383 + $0x2a8] sm:$0xff]
      %v473 = vld [vmem:[%s383 + $0x2b0] sm:$0xff]
      %v474 = vld [vmem:[%s383 + $0x2b8] sm:$0xff]
      %v475 = vld [vmem:[%s383 + $0x2c0] sm:$0xff]
      %v476 = vld [vmem:[%s383 + $0x2c8] sm:$0xff]
      %v477 = vld [vmem:[%s383 + $0x2d0] sm:$0xff]
      %v478 = vld [vmem:[%s383 + $0x2d8] sm:$0xff]
      %v479 = vld [vmem:[%s383 + $0x2e0] sm:$0xff]
      %v480 = vld [vmem:[%s383 + $0x2e8] sm:$0xff]
      %v481 = vld [vmem:[%s383 + $0x2f0] sm:$0xff]
      %v482 = vld [vmem:[%s383 + $0x2f8] sm:$0xff]
      %v483 = vld [vmem:[%s383 + $0x300] sm:$0xff]
      %v484 = vld [vmem:[%s383 + $0x308] sm:$0xff]
      %v485 = vld [vmem:[%s383 + $0x310] sm:$0xff]
      %v486 = vld [vmem:[%s383 + $0x318] sm:$0xff]
      %v487 = vld [vmem:[%s383 + $0x320] sm:$0xff]
      %v488 = vld [vmem:[%s383 + $0x328] sm:$0xff]
      %v489 = vld [vmem:[%s383 + $0x330] sm:$0xff]
      %v490 = vld [vmem:[%s383 + $0x338] sm:$0xff]
      %v491 = vld [vmem:[%s383 + $0x340] sm:$0xff]
      %v492 = vld [vmem:[%s383 + $0x348] sm:$0xff]
      %v493 = vld [vmem:[%s383 + $0x350] sm:$0xff]
      %v494 = vld [vmem:[%s383 + $0x358] sm:$0xff]
      %v495 = vld [vmem:[%s383 + $0x360] sm:$0xff]
      %v496 = vld [vmem:[%s383 + $0x368] sm:$0xff]
      %v497 = vld [vmem:[%s383 + $0x370] sm:$0xff]
      %v498 = vld [vmem:[%s383 + $0x378] sm:$0xff]
      %v499 = vld [vmem:[%s383 + $0x380] sm:$0xff]
      %v500 = vld [vmem:[%s383 + $0x388] sm:$0xff]
      %v501 = vld [vmem:[%s383 + $0x390] sm:$0xff]
      %v502 = vld [vmem:[%s383 + $0x398] sm:$0xff]
      %v503 = vld [vmem:[%s383 + $0x3a0] sm:$0xff]
      %v504 = vld [vmem:[%s383 + $0x3a8] sm:$0xff]
      %v505 = vld [vmem:[%s383 + $0x3b0] sm:$0xff]
      %v506 = vld [vmem:[%s383 + $0x3b8] sm:$0xff]
      %v507 = vld [vmem:[%s383 + $0x3c0] sm:$0xff]
      %v508 = vld [vmem:[%s383 + $0x3c8] sm:$0xff]
      %v509 = vld [vmem:[%s383 + $0x3d0] sm:$0xff]
      %v510 = vld [vmem:[%s383 + $0x3d8] sm:$0xff]
      %v511 = vld [vmem:[%s383 + $0x3e0] sm:$0xff]
      %v512 = vld [vmem:[%s383 + $0x3e8] sm:$0xff]
      %v513 = vld [vmem:[%s383 + $0x3f0] sm:$0xff]
      %v514 = vld [vmem:[%s383 + $0x3f8] sm:$0xff]
      %v515 = vld [vmem:[%s383 + $0x400] sm:$0xff]
      %v516 = vld [vmem:[%s383 + $0x408] sm:$0xff]
      %v517 = vld [vmem:[%s383 + $0x410] sm:$0xff]
      %v518 = vld [vmem:[%s383 + $0x418] sm:$0xff]
      %v519 = vld [vmem:[%s383 + $0x420] sm:$0xff]
      %v520 = vld [vmem:[%s383 + $0x428] sm:$0xff]
      %v521 = vld [vmem:[%s383 + $0x430] sm:$0xff]
      %v522 = vld [vmem:[%s383 + $0x438] sm:$0xff]
      %v523 = vld [vmem:[%s383 + $0x440] sm:$0xff]
      %v524 = vld [vmem:[%s383 + $0x448] sm:$0xff]
      %v525 = vld [vmem:[%s383 + $0x450] sm:$0xff]
      %v526 = vld [vmem:[%s383 + $0x458] sm:$0xff]
      %v527 = vld [vmem:[%s383 + $0x460] sm:$0xff]
      %v528 = vld [vmem:[%s383 + $0x468] sm:$0xff]
      %v529 = vld [vmem:[%s383 + $0x470] sm:$0xff]
      %v530 = vld [vmem:[%s383 + $0x478] sm:$0xff]
      %v531 = vld [vmem:[%s383 + $0x480] sm:$0xff]
      %v532 = vld [vmem:[%s383 + $0x488] sm:$0xff]
      %v533 = vld [vmem:[%s383 + $0x490] sm:$0xff]
      %v534 = vld [vmem:[%s383 + $0x498] sm:$0xff]
      %v535 = vld [vmem:[%s383 + $0x4a0] sm:$0xff]
      %v536 = vld [vmem:[%s383 + $0x4a8] sm:$0xff]
      %v537 = vld [vmem:[%s383 + $0x4b0] sm:$0xff]
      %v538 = vld [vmem:[%s383 + $0x4b8] sm:$0xff]
      %v539 = vld [vmem:[%s383 + $0x4c0] sm:$0xff]
      %v540 = vld [vmem:[%s383 + $0x4c8] sm:$0xff]
      %v541 = vld [vmem:[%s383 + $0x4d0] sm:$0xff]
      %v542 = vld [vmem:[%s383 + $0x4d8] sm:$0xff]
      %v543 = vld [vmem:[%s383 + $0x4e0] sm:$0xff]
      %v544 = vld [vmem:[%s383 + $0x4e8] sm:$0xff]
      %v545 = vld [vmem:[%s383 + $0x4f0] sm:$0xff]
      %v546 = vld [vmem:[%s383 + $0x4f8] sm:$0xff]
      %v547 = vld [vmem:[%s383 + $0x500] sm:$0xff]
      %v548 = vld [vmem:[%s383 + $0x1] sm:$0xff]
      %v549 = vld [vmem:[%s383 + $0x9] sm:$0xff]
      %v550 = vld [vmem:[%s383 + $0x11] sm:$0xff]
      %v551 = vld [vmem:[%s383 + $0x19] sm:$0xff]
      %v552 = vld [vmem:[%s383 + $0x21] sm:$0xff]
      %v553 = vld [vmem:[%s383 + $0x29] sm:$0xff]
      %v554 = vld [vmem:[%s383 + $0x31] sm:$0xff]
      %v555 = vld [vmem:[%s383 + $0x39] sm:$0xff]
      %v556 = vld [vmem:[%s383 + $0x41] sm:$0xff]
      %v557 = vld [vmem:[%s383 + $0x49] sm:$0xff]
      %v558 = vld [vmem:[%s383 + $0x51] sm:$0xff]
      %v559 = vld [vmem:[%s383 + $0x59] sm:$0xff]
      %v560 = vld [vmem:[%s383 + $0x61] sm:$0xff]
      %v561 = vld [vmem:[%s383 + $0x69] sm:$0xff]
      %v562 = vld [vmem:[%s383 + $0x71] sm:$0xff]
      %v563 = vld [vmem:[%s383 + $0x79] sm:$0xff]
      %v564 = vld [vmem:[%s383 + $0x81] sm:$0xff]
      %v565 = vld [vmem:[%s383 + $0x89] sm:$0xff]
      %v566 = vld [vmem:[%s383 + $0x91] sm:$0xff]
      %v567 = vld [vmem:[%s383 + $0x99] sm:$0xff]
      %v568 = vld [vmem:[%s383 + $0xa1] sm:$0xff]
      %v569 = vld [vmem:[%s383 + $0xa9] sm:$0xff]
      %v570 = vld [vmem:[%s383 + $0xb1] sm:$0xff]
      %v571 = vld [vmem:[%s383 + $0xb9] sm:$0xff]
      %v572 = vld [vmem:[%s383 + $0xc1] sm:$0xff]
      %v573 = vld [vmem:[%s383 + $0xc9] sm:$0xff]
      %v574 = vld [vmem:[%s383 + $0xd1] sm:$0xff]
      %v575 = vld [vmem:[%s383 + $0xd9] sm:$0xff]
      %v576 = vld [vmem:[%s383 + $0xe1] sm:$0xff]
      %v577 = vld [vmem:[%s383 + $0xe9] sm:$0xff]
      %v578 = vld [vmem:[%s383 + $0xf1] sm:$0xff]
      %v579 = vld [vmem:[%s383 + $0xf9] sm:$0xff]
      %v580 = vld [vmem:[%s383 + $0x101] sm:$0xff]
      %v581 = vld [vmem:[%s383 + $0x109] sm:$0xff]
      %v582 = vld [vmem:[%s383 + $0x111] sm:$0xff]
      %v583 = vld [vmem:[%s383 + $0x119] sm:$0xff]
      %v584 = vld [vmem:[%s383 + $0x121] sm:$0xff]
      %v585 = vld [vmem:[%s383 + $0x129] sm:$0xff]
      %v586 = vld [vmem:[%s383 + $0x131] sm:$0xff]
      %v587 = vld [vmem:[%s383 + $0x139] sm:$0xff]
      %v588 = vld [vmem:[%s383 + $0x141] sm:$0xff]
      %v589 = vld [vmem:[%s383 + $0x149] sm:$0xff]
      %v590 = vld [vmem:[%s383 + $0x151] sm:$0xff]
      %v591 = vld [vmem:[%s383 + $0x159] sm:$0xff]
      %v592 = vld [vmem:[%s383 + $0x161] sm:$0xff]
      %v593 = vld [vmem:[%s383 + $0x169] sm:$0xff]
      %v594 = vld [vmem:[%s383 + $0x171] sm:$0xff]
      %v595 = vld [vmem:[%s383 + $0x179] sm:$0xff]
      %v596 = vld [vmem:[%s383 + $0x181] sm:$0xff]
      %v597 = vld [vmem:[%s383 + $0x189] sm:$0xff]
      %v598 = vld [vmem:[%s383 + $0x191] sm:$0xff]
      %v599 = vld [vmem:[%s383 + $0x199] sm:$0xff]
      %v600 = vld [vmem:[%s383 + $0x1a1] sm:$0xff]
      %v601 = vld [vmem:[%s383 + $0x1a9] sm:$0xff]
      %v602 = vld [vmem:[%s383 + $0x1b1] sm:$0xff]
      %v603 = vld [vmem:[%s383 + $0x1b9] sm:$0xff]
      %v604 = vld [vmem:[%s383 + $0x1c1] sm:$0xff]
      %v605 = vld [vmem:[%s383 + $0x1c9] sm:$0xff]
      %v606 = vld [vmem:[%s383 + $0x1d1] sm:$0xff]
      %v607 = vld [vmem:[%s383 + $0x1d9] sm:$0xff]
      %v608 = vld [vmem:[%s383 + $0x1e1] sm:$0xff]
      %v609 = vld [vmem:[%s383 + $0x1e9] sm:$0xff]
      %v610 = vld [vmem:[%s383 + $0x1f1] sm:$0xff]
      %v611 = vld [vmem:[%s383 + $0x1f9] sm:$0xff]
      %v612 = vld [vmem:[%s383 + $0x201] sm:$0xff]
      %v613 = vld [vmem:[%s383 + $0x209] sm:$0xff]
      %v614 = vld [vmem:[%s383 + $0x211] sm:$0xff]
      %v615 = vld [vmem:[%s383 + $0x219] sm:$0xff]
      %v616 = vld [vmem:[%s383 + $0x221] sm:$0xff]
      %v617 = vld [vmem:[%s383 + $0x229] sm:$0xff]
      %v618 = vld [vmem:[%s383 + $0x231] sm:$0xff]
      %v619 = vld [vmem:[%s383 + $0x239] sm:$0xff]
      %v620 = vld [vmem:[%s383 + $0x241] sm:$0xff]
      %v621 = vld [vmem:[%s383 + $0x249] sm:$0xff]
      %v622 = vld [vmem:[%s383 + $0x251] sm:$0xff]
      %v623 = vld [vmem:[%s383 + $0x259] sm:$0xff]
      %v624 = vld [vmem:[%s383 + $0x261] sm:$0xff]
      %v625 = vld [vmem:[%s383 + $0x269] sm:$0xff]
      %v626 = vld [vmem:[%s383 + $0x271] sm:$0xff]
      %v627 = vld [vmem:[%s383 + $0x279] sm:$0xff]
      %v628 = vld [vmem:[%s383 + $0x281] sm:$0xff]
      %v629 = vld [vmem:[%s383 + $0x289] sm:$0xff]
      %v630 = vld [vmem:[%s383 + $0x291] sm:$0xff]
      %v631 = vld [vmem:[%s383 + $0x299] sm:$0xff]
      %v632 = vld [vmem:[%s383 + $0x2a1] sm:$0xff]
      %v633 = vld [vmem:[%s383 + $0x2a9] sm:$0xff]
      %v634 = vld [vmem:[%s383 + $0x2b1] sm:$0xff]
      %v635 = vld [vmem:[%s383 + $0x2b9] sm:$0xff]
      %v636 = vld [vmem:[%s383 + $0x2c1] sm:$0xff]
      %v637 = vld [vmem:[%s383 + $0x2c9] sm:$0xff]
      %v638 = vld [vmem:[%s383 + $0x2d1] sm:$0xff]
      %v639 = vld [vmem:[%s383 + $0x2d9] sm:$0xff]
      %v640 = vld [vmem:[%s383 + $0x2e1] sm:$0xff]
      %v641 = vld [vmem:[%s383 + $0x2e9] sm:$0xff]
      %v642 = vld [vmem:[%s383 + $0x2f1] sm:$0xff]
      %v643 = vld [vmem:[%s383 + $0x2f9] sm:$0xff]
      %v644 = vld [vmem:[%s383 + $0x301] sm:$0xff]
      %v645 = vld [vmem:[%s383 + $0x309] sm:$0xff]
      %v646 = vld [vmem:[%s383 + $0x311] sm:$0xff]
      %v647 = vld [vmem:[%s383 + $0x319] sm:$0xff]
      %v648 = vld [vmem:[%s383 + $0x321] sm:$0xff]
      %v649 = vld [vmem:[%s383 + $0x329] sm:$0xff]
      %v650 = vld [vmem:[%s383 + $0x331] sm:$0xff]
      %v651 = vld [vmem:[%s383 + $0x339] sm:$0xff]
      %v652 = vld [vmem:[%s383 + $0x341] sm:$0xff]
      %v653 = vld [vmem:[%s383 + $0x349] sm:$0xff]
      %v654 = vld [vmem:[%s383 + $0x351] sm:$0xff]
      %v655 = vld [vmem:[%s383 + $0x359] sm:$0xff]
      %v656 = vld [vmem:[%s383 + $0x361] sm:$0xff]
      %v657 = vld [vmem:[%s383 + $0x369] sm:$0xff]
      %v658 = vld [vmem:[%s383 + $0x371] sm:$0xff]
      %v659 = vld [vmem:[%s383 + $0x379] sm:$0xff]
      %v660 = vld [vmem:[%s383 + $0x381] sm:$0xff]
      %v661 = vld [vmem:[%s383 + $0x389] sm:$0xff]
      %v662 = vld [vmem:[%s383 + $0x391] sm:$0xff]
      %v663 = vld [vmem:[%s383 + $0x399] sm:$0xff]
      %v664 = vld [vmem:[%s383 + $0x3a1] sm:$0xff]
      %v665 = vld [vmem:[%s383 + $0x3a9] sm:$0xff]
      %v666 = vld [vmem:[%s383 + $0x3b1] sm:$0xff]
      %v667 = vld [vmem:[%s383 + $0x3b9] sm:$0xff]
      %v668 = vld [vmem:[%s383 + $0x3c1] sm:$0xff]
      %v669 = vld [vmem:[%s383 + $0x3c9] sm:$0xff]
      %v670 = vld [vmem:[%s383 + $0x3d1] sm:$0xff]
      %v671 = vld [vmem:[%s383 + $0x3d9] sm:$0xff]
      %v672 = vld [vmem:[%s383 + $0x3e1] sm:$0xff]
      %v673 = vld [vmem:[%s383 + $0x3e9] sm:$0xff]
      %v674 = vld [vmem:[%s383 + $0x3f1] sm:$0xff]
      %v675 = vld [vmem:[%s383 + $0x3f9] sm:$0xff]
      %v676 = vld [vmem:[%s383 + $0x401] sm:$0xff]
      %v677 = vld [vmem:[%s383 + $0x409] sm:$0xff]
      %v678 = vld [vmem:[%s383 + $0x411] sm:$0xff]
      %v679 = vld [vmem:[%s383 + $0x419] sm:$0xff]
      %v680 = vld [vmem:[%s383 + $0x421] sm:$0xff]
      %v681 = vld [vmem:[%s383 + $0x429] sm:$0xff]
      %v682 = vld [vmem:[%s383 + $0x431] sm:$0xff]
      %v683 = vld [vmem:[%s383 + $0x439] sm:$0xff]
      %v684 = vld [vmem:[%s383 + $0x441] sm:$0xff]
      %v685 = vld [vmem:[%s383 + $0x449] sm:$0xff]
      %v686 = vld [vmem:[%s383 + $0x451] sm:$0xff]
      %v687 = vld [vmem:[%s383 + $0x459] sm:$0xff]
      %v688 = vld [vmem:[%s383 + $0x461] sm:$0xff]
      %v689 = vld [vmem:[%s383 + $0x469] sm:$0xff]
      %v690 = vld [vmem:[%s383 + $0x471] sm:$0xff]
      %v691 = vld [vmem:[%s383 + $0x479] sm:$0xff]
      %v692 = vld [vmem:[%s383 + $0x481] sm:$0xff]
      %v693 = vld [vmem:[%s383 + $0x489] sm:$0xff]
      %v694 = vld [vmem:[%s383 + $0x491] sm:$0xff]
      %v695 = vld [vmem:[%s383 + $0x499] sm:$0xff]
      %v696 = vld [vmem:[%s383 + $0x4a1] sm:$0xff]
      %v697 = vld [vmem:[%s383 + $0x4a9] sm:$0xff]
      %v698 = vld [vmem:[%s383 + $0x4b1] sm:$0xff]
      %v699 = vld [vmem:[%s383 + $0x4b9] sm:$0xff]
      %v700 = vld [vmem:[%s383 + $0x4c1] sm:$0xff]
      %v701 = vld [vmem:[%s383 + $0x4c9] sm:$0xff]
      %v702 = vld [vmem:[%s383 + $0x4d1] sm:$0xff]
      %v703 = vld [vmem:[%s383 + $0x4d9] sm:$0xff]
      %v704 = vld [vmem:[%s383 + $0x4e1] sm:$0xff]
      %v705 = vld [vmem:[%s383 + $0x4e9] sm:$0xff]
      %v706 = vld [vmem:[%s383 + $0x4f1] sm:$0xff]
      %v707 = vld [vmem:[%s383 + $0x4f9] sm:$0xff]
      %v708 = vld [vmem:[%s383 + $0x501] sm:$0xff]
      %v709 = vld [vmem:[%s383 + $0x12] sm:$0xff]
      %v710 = vld [vmem:[%s383 + $0x1a] sm:$0xff]
      %v711 = vld [vmem:[%s383 + $0x22] sm:$0xff]
      %v712 = vld [vmem:[%s383 + $0x2a] sm:$0xff]
      %v713 = vld [vmem:[%s383 + $0x32] sm:$0xff]
      %v714 = vld [vmem:[%s383 + $0x3a] sm:$0xff]
      %v715 = vld [vmem:[%s383 + $0x42] sm:$0xff]
      %v716 = vld [vmem:[%s383 + $0x4a] sm:$0xff]
      %v717 = vld [vmem:[%s383 + $0x52] sm:$0xff]
      %v718 = vld [vmem:[%s383 + $0x5a] sm:$0xff]
      %v719 = vld [vmem:[%s383 + $0x62] sm:$0xff]
      %v720 = vld [vmem:[%s383 + $0x6a] sm:$0xff]
      %v721 = vld [vmem:[%s383 + $0x72] sm:$0xff]
      %v722 = vld [vmem:[%s383 + $0x7a] sm:$0xff]
      %v723 = vld [vmem:[%s383 + $0x82] sm:$0xff]
      %v724 = vld [vmem:[%s383 + $0x8a] sm:$0xff]
      %v725 = vld [vmem:[%s383 + $0x92] sm:$0xff]
      %v726 = vld [vmem:[%s383 + $0x9a] sm:$0xff]
      %v727 = vld [vmem:[%s383 + $0xa2] sm:$0xff]
      %v728 = vld [vmem:[%s383 + $0xaa] sm:$0xff]
      %v729 = vld [vmem:[%s383 + $0xb2] sm:$0xff]
      %v730 = vld [vmem:[%s383 + $0xba] sm:$0xff]
      %v731 = vld [vmem:[%s383 + $0xc2] sm:$0xff]
      %v732 = vld [vmem:[%s383 + $0xca] sm:$0xff]
      %v733 = vld [vmem:[%s383 + $0xd2] sm:$0xff]
      %v734 = vld [vmem:[%s383 + $0xda] sm:$0xff]
      %v735 = vld [vmem:[%s383 + $0xe2] sm:$0xff]
      %v736 = vld [vmem:[%s383 + $0xea] sm:$0xff]
      %v737 = vld [vmem:[%s383 + $0xf2] sm:$0xff]
      %v738 = vld [vmem:[%s383 + $0xfa] sm:$0xff]
      %v739 = vld [vmem:[%s383 + $0x102] sm:$0xff]
      %v740 = vld [vmem:[%s383 + $0x10a] sm:$0xff]
      %v741 = vld [vmem:[%s383 + $0x112] sm:$0xff]
      %v742 = vld [vmem:[%s383 + $0x11a] sm:$0xff]
      %v743 = vld [vmem:[%s383 + $0x122] sm:$0xff]
      %v744 = vld [vmem:[%s383 + $0x12a] sm:$0xff]
      %v745 = vld [vmem:[%s383 + $0x132] sm:$0xff]
      %v746 = vld [vmem:[%s383 + $0x13a] sm:$0xff]
      %v747 = vld [vmem:[%s383 + $0x142] sm:$0xff]
      %v748 = vld [vmem:[%s383 + $0x14a] sm:$0xff]
      %v749 = vld [vmem:[%s383 + $0x152] sm:$0xff]
      %v750 = vld [vmem:[%s383 + $0x15a] sm:$0xff]
      %v751 = vld [vmem:[%s383 + $0x162] sm:$0xff]
      %v752 = vld [vmem:[%s383 + $0x16a] sm:$0xff]
      %v753 = vld [vmem:[%s383 + $0x172] sm:$0xff]
      %v754 = vld [vmem:[%s383 + $0x17a] sm:$0xff]
      %v755 = vld [vmem:[%s383 + $0x182] sm:$0xff]
      %v756 = vld [vmem:[%s383 + $0x18a] sm:$0xff]
      %v757 = vld [vmem:[%s383 + $0x192] sm:$0xff]
      %v758 = vld [vmem:[%s383 + $0x19a] sm:$0xff]
      %v759 = vld [vmem:[%s383 + $0x1a2] sm:$0xff]
      %v760 = vld [vmem:[%s383 + $0x1aa] sm:$0xff]
      %v761 = vld [vmem:[%s383 + $0x1b2] sm:$0xff]
      %v762 = vld [vmem:[%s383 + $0x1ba] sm:$0xff]
      %v763 = vld [vmem:[%s383 + $0x1c2] sm:$0xff]
      %v764 = vld [vmem:[%s383 + $0x1ca] sm:$0xff]
      %v765 = vld [vmem:[%s383 + $0x1d2] sm:$0xff]
      %v766 = vld [vmem:[%s383 + $0x1da] sm:$0xff]
      %v767 = vld [vmem:[%s383 + $0x1e2] sm:$0xff]
      %v768 = vld [vmem:[%s383 + $0x1ea] sm:$0xff]
      %v769 = vld [vmem:[%s383 + $0x1f2] sm:$0xff]
      %v770 = vld [vmem:[%s383 + $0x1fa] sm:$0xff]
      %v771 = vld [vmem:[%s383 + $0x202] sm:$0xff]
      %v772 = vld [vmem:[%s383 + $0x20a] sm:$0xff]
      %v773 = vld [vmem:[%s383 + $0x212] sm:$0xff]
      %v774 = vld [vmem:[%s383 + $0x21a] sm:$0xff]
      %v775 = vld [vmem:[%s383 + $0x222] sm:$0xff]
      %v776 = vld [vmem:[%s383 + $0x22a] sm:$0xff]
      %v777 = vld [vmem:[%s383 + $0x232] sm:$0xff]
      %v778 = vld [vmem:[%s383 + $0x23a] sm:$0xff]
      %v779 = vld [vmem:[%s383 + $0x242] sm:$0xff]
      %v780 = vld [vmem:[%s383 + $0x24a] sm:$0xff]
      %v781 = vld [vmem:[%s383 + $0x252] sm:$0xff]
      %v782 = vld [vmem:[%s383 + $0x25a] sm:$0xff]
      %v783 = vld [vmem:[%s383 + $0x262] sm:$0xff]
      %v784 = vld [vmem:[%s383 + $0x26a] sm:$0xff]
      %v785 = vld [vmem:[%s383 + $0x272] sm:$0xff]
      %v786 = vld [vmem:[%s383 + $0x27a] sm:$0xff]
      %v787 = vld [vmem:[%s383 + $0x282] sm:$0xff]
      %v788 = vld [vmem:[%s383 + $0x28a] sm:$0xff]
      %v789 = vld [vmem:[%s383 + $0x292] sm:$0xff]
      %v790 = vld [vmem:[%s383 + $0x29a] sm:$0xff]
      %v791 = vld [vmem:[%s383 + $0x2a2] sm:$0xff]
      %v792 = vld [vmem:[%s383 + $0x2aa] sm:$0xff]
      %v793 = vld [vmem:[%s383 + $0x2b2] sm:$0xff]
      %v794 = vld [vmem:[%s383 + $0x2ba] sm:$0xff]
      %v795 = vld [vmem:[%s383 + $0x2c2] sm:$0xff]
      %v796 = vld [vmem:[%s383 + $0x2ca] sm:$0xff]
      %v797 = vld [vmem:[%s383 + $0x2d2] sm:$0xff]
      %v798 = vld [vmem:[%s383 + $0x2da] sm:$0xff]
      %v799 = vld [vmem:[%s383 + $0x2e2] sm:$0xff]
      %v800 = vld [vmem:[%s383 + $0x2ea] sm:$0xff]
      %v801 = vld [vmem:[%s383 + $0x2f2] sm:$0xff]
      %v802 = vld [vmem:[%s383 + $0x2fa] sm:$0xff]
      %v803 = vld [vmem:[%s383 + $0x302] sm:$0xff]
      %v804 = vld [vmem:[%s383 + $0x30a] sm:$0xff]
      %v805 = vld [vmem:[%s383 + $0x312] sm:$0xff]
      %v806 = vld [vmem:[%s383 + $0x31a] sm:$0xff]
      %v807 = vld [vmem:[%s383 + $0x322] sm:$0xff]
      %v808 = vld [vmem:[%s383 + $0x32a] sm:$0xff]
      %v809 = vld [vmem:[%s383 + $0x332] sm:$0xff]
      %v810 = vld [vmem:[%s383 + $0x33a] sm:$0xff]
      %v811 = vld [vmem:[%s383 + $0x342] sm:$0xff]
      %v812 = vld [vmem:[%s383 + $0x34a] sm:$0xff]
      %v813 = vld [vmem:[%s383 + $0x352] sm:$0xff]
      %v814 = vld [vmem:[%s383 + $0x35a] sm:$0xff]
      %v815 = vld [vmem:[%s383 + $0x362] sm:$0xff]
      %v816 = vld [vmem:[%s383 + $0x36a] sm:$0xff]
      %v817 = vld [vmem:[%s383 + $0x372] sm:$0xff]
      %v818 = vld [vmem:[%s383 + $0x37a] sm:$0xff]
      %v819 = vld [vmem:[%s383 + $0x382] sm:$0xff]
      %v820 = vld [vmem:[%s383 + $0x38a] sm:$0xff]
      %v821 = vld [vmem:[%s383 + $0x392] sm:$0xff]
      %v822 = vld [vmem:[%s383 + $0x39a] sm:$0xff]
      %v823 = vld [vmem:[%s383 + $0x3a2] sm:$0xff]
      %v824 = vld [vmem:[%s383 + $0x3aa] sm:$0xff]
      %v825 = vld [vmem:[%s383 + $0x3b2] sm:$0xff]
      %v826 = vld [vmem:[%s383 + $0x3ba] sm:$0xff]
      %v827 = vld [vmem:[%s383 + $0x3c2] sm:$0xff]
      %v828 = vld [vmem:[%s383 + $0x3ca] sm:$0xff]
      %v829 = vld [vmem:[%s383 + $0x3d2] sm:$0xff]
      %v830 = vld [vmem:[%s383 + $0x3da] sm:$0xff]
      %v831 = vld [vmem:[%s383 + $0x3e2] sm:$0xff]
      %v832 = vld [vmem:[%s383 + $0x3ea] sm:$0xff]
      %v833 = vld [vmem:[%s383 + $0x3f2] sm:$0xff]
      %v834 = vld [vmem:[%s383 + $0x3fa] sm:$0xff]
      %v835 = vld [vmem:[%s383 + $0x402] sm:$0xff]
      %v836 = vld [vmem:[%s383 + $0x40a] sm:$0xff]
      %v837 = vld [vmem:[%s383 + $0x412] sm:$0xff]
      %v838 = vld [vmem:[%s383 + $0x41a] sm:$0xff]
      %v839 = vld [vmem:[%s383 + $0x422] sm:$0xff]
      %v840 = vld [vmem:[%s383 + $0x42a] sm:$0xff]
      %v841 = vld [vmem:[%s383 + $0x432] sm:$0xff]
      %v842 = vld [vmem:[%s383 + $0x43a] sm:$0xff]
      %v843 = vld [vmem:[%s383 + $0x442] sm:$0xff]
      %v844 = vld [vmem:[%s383 + $0x44a] sm:$0xff]
      %v845 = vld [vmem:[%s383 + $0x452] sm:$0xff]
      %v846 = vld [vmem:[%s383 + $0x45a] sm:$0xff]
      %v847 = vld [vmem:[%s383 + $0x462] sm:$0xff]
      %v848 = vld [vmem:[%s383 + $0x46a] sm:$0xff]
      %v849 = vld [vmem:[%s383 + $0x472] sm:$0xff]
      %v850 = vld [vmem:[%s383 + $0x47a] sm:$0xff]
      %v851 = vld [vmem:[%s383 + $0x482] sm:$0xff]
      %v852 = vld [vmem:[%s383 + $0x48a] sm:$0xff]
      %v853 = vld [vmem:[%s383 + $0x492] sm:$0xff]
      %v854 = vld [vmem:[%s383 + $0x49a] sm:$0xff]
      %v855 = vld [vmem:[%s383 + $0x4a2] sm:$0xff]
      %v856 = vld [vmem:[%s383 + $0x4aa] sm:$0xff]
      %v857 = vld [vmem:[%s383 + $0x4b2] sm:$0xff]
      %v858 = vld [vmem:[%s383 + $0x4ba] sm:$0xff]
      %v859 = vld [vmem:[%s383 + $0x4c2] sm:$0xff]
      %v860 = vld [vmem:[%s383 + $0x4ca] sm:$0xff]
      %v861 = vld [vmem:[%s383 + $0x4d2] sm:$0xff]
      %v862 = vld [vmem:[%s383 + $0x4da] sm:$0xff]
      %v863 = vld [vmem:[%s383 + $0x4e2] sm:$0xff]
      %v864 = vld [vmem:[%s383 + $0x4ea] sm:$0xff]
      %v865 = vld [vmem:[%s383 + $0x4f2] sm:$0xff]
      %v866 = vld [vmem:[%s383 + $0x4fa] sm:$0xff]
      %v867 = vld [vmem:[%s383 + $0x502] sm:$0xff]
      %v868 = vld [vmem:[%s383 + $0x50a] sm:$0xff]
      %v869 = vld [vmem:[%s383 + $0x512] sm:$0xff]
      %v870 = vld [vmem:[%s383 + $0x13] sm:$0xff]
      %v871 = vld [vmem:[%s383 + $0x1b] sm:$0xff]
      %v872 = vld [vmem:[%s383 + $0x23] sm:$0xff]
      %v873 = vld [vmem:[%s383 + $0x2b] sm:$0xff]
      %v874 = vld [vmem:[%s383 + $0x33] sm:$0xff]
      %v875 = vld [vmem:[%s383 + $0x3b] sm:$0xff]
      %v876 = vld [vmem:[%s383 + $0x43] sm:$0xff]
      %v877 = vld [vmem:[%s383 + $0x4b] sm:$0xff]
      %v878 = vld [vmem:[%s383 + $0x53] sm:$0xff]
      %v879 = vld [vmem:[%s383 + $0x5b] sm:$0xff]
      %v880 = vld [vmem:[%s383 + $0x63] sm:$0xff]
      %v881 = vld [vmem:[%s383 + $0x6b] sm:$0xff]
      %v882 = vld [vmem:[%s383 + $0x73] sm:$0xff]
      %v883 = vld [vmem:[%s383 + $0x7b] sm:$0xff]
      %v884 = vld [vmem:[%s383 + $0x83] sm:$0xff]
      %v885 = vld [vmem:[%s383 + $0x8b] sm:$0xff]
      %v886 = vld [vmem:[%s383 + $0x93] sm:$0xff]
      %v887 = vld [vmem:[%s383 + $0x9b] sm:$0xff]
      %v888 = vld [vmem:[%s383 + $0xa3] sm:$0xff]
      %v889 = vld [vmem:[%s383 + $0xab] sm:$0xff]
      %v890 = vld [vmem:[%s383 + $0xb3] sm:$0xff]
      %v891 = vld [vmem:[%s383 + $0xbb] sm:$0xff]
      %v892 = vld [vmem:[%s383 + $0xc3] sm:$0xff]
      %v893 = vld [vmem:[%s383 + $0xcb] sm:$0xff]
      %v894 = vld [vmem:[%s383 + $0xd3] sm:$0xff]
      %v895 = vld [vmem:[%s383 + $0xdb] sm:$0xff]
      %v896 = vld [vmem:[%s383 + $0xe3] sm:$0xff]
      %v897 = vld [vmem:[%s383 + $0xeb] sm:$0xff]
      %v898 = vld [vmem:[%s383 + $0xf3] sm:$0xff]
      %v899 = vld [vmem:[%s383 + $0xfb] sm:$0xff]
      %v900 = vld [vmem:[%s383 + $0x103] sm:$0xff]
      %v901 = vld [vmem:[%s383 + $0x10b] sm:$0xff]
      %v902 = vld [vmem:[%s383 + $0x113] sm:$0xff]
      %v903 = vld [vmem:[%s383 + $0x11b] sm:$0xff]
      %v904 = vld [vmem:[%s383 + $0x123] sm:$0xff]
      %v905 = vld [vmem:[%s383 + $0x12b] sm:$0xff]
      %v906 = vld [vmem:[%s383 + $0x133] sm:$0xff]
      %v907 = vld [vmem:[%s383 + $0x13b] sm:$0xff]
      %v908 = vld [vmem:[%s383 + $0x143] sm:$0xff]
      %v909 = vld [vmem:[%s383 + $0x14b] sm:$0xff]
      %v910 = vld [vmem:[%s383 + $0x153] sm:$0xff]
      %v911 = vld [vmem:[%s383 + $0x15b] sm:$0xff]
      %v912 = vld [vmem:[%s383 + $0x163] sm:$0xff]
      %v913 = vld [vmem:[%s383 + $0x16b] sm:$0xff]
      %v914 = vld [vmem:[%s383 + $0x173] sm:$0xff]
      %v915 = vld [vmem:[%s383 + $0x17b] sm:$0xff]
      %v916 = vld [vmem:[%s383 + $0x183] sm:$0xff]
      %v917 = vld [vmem:[%s383 + $0x18b] sm:$0xff]
      %v918 = vld [vmem:[%s383 + $0x193] sm:$0xff]
      %v919 = vld [vmem:[%s383 + $0x19b] sm:$0xff]
      %v920 = vld [vmem:[%s383 + $0x1a3] sm:$0xff]
      %v921 = vld [vmem:[%s383 + $0x1ab] sm:$0xff]
      %v922 = vld [vmem:[%s383 + $0x1b3] sm:$0xff]
      %v923 = vld [vmem:[%s383 + $0x1bb] sm:$0xff]
      %v924 = vld [vmem:[%s383 + $0x1c3] sm:$0xff]
      %v925 = vld [vmem:[%s383 + $0x1cb] sm:$0xff]
      %v926 = vld [vmem:[%s383 + $0x1d3] sm:$0xff]
      %v927 = vld [vmem:[%s383 + $0x1db] sm:$0xff]
      %v928 = vld [vmem:[%s383 + $0x1e3] sm:$0xff]
      %v929 = vld [vmem:[%s383 + $0x1eb] sm:$0xff]
      %v930 = vld [vmem:[%s383 + $0x1f3] sm:$0xff]
      %v931 = vld [vmem:[%s383 + $0x1fb] sm:$0xff]
      %v932 = vld [vmem:[%s383 + $0x203] sm:$0xff]
      %v933 = vld [vmem:[%s383 + $0x20b] sm:$0xff]
      %v934 = vld [vmem:[%s383 + $0x213] sm:$0xff]
      %v935 = vld [vmem:[%s383 + $0x21b] sm:$0xff]
      %v936 = vld [vmem:[%s383 + $0x223] sm:$0xff]
      %v937 = vld [vmem:[%s383 + $0x22b] sm:$0xff]
      %v938 = vld [vmem:[%s383 + $0x233] sm:$0xff]
      %v939 = vld [vmem:[%s383 + $0x23b] sm:$0xff]
      %v940 = vld [vmem:[%s383 + $0x243] sm:$0xff]
      %v941 = vld [vmem:[%s383 + $0x24b] sm:$0xff]
      %v942 = vld [vmem:[%s383 + $0x253] sm:$0xff]
      %v943 = vld [vmem:[%s383 + $0x25b] sm:$0xff]
      %v944 = vld [vmem:[%s383 + $0x263] sm:$0xff]
      %v945 = vld [vmem:[%s383 + $0x26b] sm:$0xff]
      %v946 = vld [vmem:[%s383 + $0x273] sm:$0xff]
      %v947 = vld [vmem:[%s383 + $0x27b] sm:$0xff]
      %v948 = vld [vmem:[%s383 + $0x283] sm:$0xff]
      %v949 = vld [vmem:[%s383 + $0x28b] sm:$0xff]
      %v950 = vld [vmem:[%s383 + $0x293] sm:$0xff]
      %v951 = vld [vmem:[%s383 + $0x29b] sm:$0xff]
      %v952 = vld [vmem:[%s383 + $0x2a3] sm:$0xff]
      %v953 = vld [vmem:[%s383 + $0x2ab] sm:$0xff]
      %v954 = vld [vmem:[%s383 + $0x2b3] sm:$0xff]
      %v955 = vld [vmem:[%s383 + $0x2bb] sm:$0xff]
      %v956 = vld [vmem:[%s383 + $0x2c3] sm:$0xff]
      %v957 = vld [vmem:[%s383 + $0x2cb] sm:$0xff]
      %v958 = vld [vmem:[%s383 + $0x2d3] sm:$0xff]
      %v959 = vld [vmem:[%s383 + $0x2db] sm:$0xff]
      %v960 = vld [vmem:[%s383 + $0x2e3] sm:$0xff]
      %v961 = vld [vmem:[%s383 + $0x2eb] sm:$0xff]
      %v962 = vld [vmem:[%s383 + $0x2f3] sm:$0xff]
      %v963 = vld [vmem:[%s383 + $0x2fb] sm:$0xff]
      %v964 = vld [vmem:[%s383 + $0x303] sm:$0xff]
      %v965 = vld [vmem:[%s383 + $0x30b] sm:$0xff]
      %v966 = vld [vmem:[%s383 + $0x313] sm:$0xff]
      %v967 = vld [vmem:[%s383 + $0x31b] sm:$0xff]
      %v968 = vld [vmem:[%s383 + $0x323] sm:$0xff]
      %v969 = vld [vmem:[%s383 + $0x32b] sm:$0xff]
      %v970 = vld [vmem:[%s383 + $0x333] sm:$0xff]
      %v971 = vld [vmem:[%s383 + $0x33b] sm:$0xff]
      %v972 = vld [vmem:[%s383 + $0x343] sm:$0xff]
      %v973 = vld [vmem:[%s383 + $0x34b] sm:$0xff]
      %v974 = vld [vmem:[%s383 + $0x353] sm:$0xff]
      %v975 = vld [vmem:[%s383 + $0x35b] sm:$0xff]
      %v976 = vld [vmem:[%s383 + $0x363] sm:$0xff]
      %v977 = vld [vmem:[%s383 + $0x36b] sm:$0xff]
      %v978 = vld [vmem:[%s383 + $0x373] sm:$0xff]
      %v979 = vld [vmem:[%s383 + $0x37b] sm:$0xff]
      %v980 = vld [vmem:[%s383 + $0x383] sm:$0xff]
      %v981 = vld [vmem:[%s383 + $0x38b] sm:$0xff]
      %v982 = vld [vmem:[%s383 + $0x393] sm:$0xff]
      %v983 = vld [vmem:[%s383 + $0x39b] sm:$0xff]
      %v984 = vld [vmem:[%s383 + $0x3a3] sm:$0xff]
      %v985 = vld [vmem:[%s383 + $0x3ab] sm:$0xff]
      %v986 = vld [vmem:[%s383 + $0x3b3] sm:$0xff]
      %v987 = vld [vmem:[%s383 + $0x3bb] sm:$0xff]
      %v988 = vld [vmem:[%s383 + $0x3c3] sm:$0xff]
      %v989 = vld [vmem:[%s383 + $0x3cb] sm:$0xff]
      %v990 = vld [vmem:[%s383 + $0x3d3] sm:$0xff]
      %v991 = vld [vmem:[%s383 + $0x3db] sm:$0xff]
      %v992 = vld [vmem:[%s383 + $0x3e3] sm:$0xff]
      %v993 = vld [vmem:[%s383 + $0x3eb] sm:$0xff]
      %v994 = vld [vmem:[%s383 + $0x3f3] sm:$0xff]
      %v995 = vld [vmem:[%s383 + $0x3fb] sm:$0xff]
      %v996 = vld [vmem:[%s383 + $0x403] sm:$0xff]
      %v997 = vld [vmem:[%s383 + $0x40b] sm:$0xff]
      %v998 = vld [vmem:[%s383 + $0x413] sm:$0xff]
      %v999 = vld [vmem:[%s383 + $0x41b] sm:$0xff]
      %v1000 = vld [vmem:[%s383 + $0x423] sm:$0xff]
      %v1001 = vld [vmem:[%s383 + $0x42b] sm:$0xff]
      %v1002 = vld [vmem:[%s383 + $0x433] sm:$0xff]
      %v1003 = vld [vmem:[%s383 + $0x43b] sm:$0xff]
      %v1004 = vld [vmem:[%s383 + $0x443] sm:$0xff]
      %v1005 = vld [vmem:[%s383 + $0x44b] sm:$0xff]
      %v1006 = vld [vmem:[%s383 + $0x453] sm:$0xff]
      %v1007 = vld [vmem:[%s383 + $0x45b] sm:$0xff]
      %v1008 = vld [vmem:[%s383 + $0x463] sm:$0xff]
      %v1009 = vld [vmem:[%s383 + $0x46b] sm:$0xff]
      %v1010 = vld [vmem:[%s383 + $0x473] sm:$0xff]
      %v1011 = vld [vmem:[%s383 + $0x47b] sm:$0xff]
      %v1012 = vld [vmem:[%s383 + $0x483] sm:$0xff]
      %v1013 = vld [vmem:[%s383 + $0x48b] sm:$0xff]
      %v1014 = vld [vmem:[%s383 + $0x493] sm:$0xff]
      %v1015 = vld [vmem:[%s383 + $0x49b] sm:$0xff]
      %v1016 = vld [vmem:[%s383 + $0x4a3] sm:$0xff]
      %v1017 = vld [vmem:[%s383 + $0x4ab] sm:$0xff]
      %v1018 = vld [vmem:[%s383 + $0x4b3] sm:$0xff]
      %v1019 = vld [vmem:[%s383 + $0x4bb] sm:$0xff]
      %v1020 = vld [vmem:[%s383 + $0x4c3] sm:$0xff]
      %v1021 = vld [vmem:[%s383 + $0x4cb] sm:$0xff]
      %v1022 = vld [vmem:[%s383 + $0x4d3] sm:$0xff]
      %v1023 = vld [vmem:[%s383 + $0x4db] sm:$0xff]
      %v1024 = vld [vmem:[%s383 + $0x4e3] sm:$0xff]
      %v1025 = vld [vmem:[%s383 + $0x4eb] sm:$0xff]
      %v1026 = vld [vmem:[%s383 + $0x4f3] sm:$0xff]
      %v1027 = vld [vmem:[%s383 + $0x4fb] sm:$0xff]
      %v1028 = vld [vmem:[%s383 + $0x503] sm:$0xff]
      %v1029 = vld [vmem:[%s383 + $0x50b] sm:$0xff]
      %v1030 = vld [vmem:[%s383 + $0x513] sm:$0xff]
      %1192 = vrot.lane.b32.xlu0 %v548, 3
      %v1193 = vpop.permute.xlu0 %1192
      %1194 = vrot.lane.b32.xlu0 %v549, 3
      %v1195 = vpop.permute.xlu0 %1194
      %1196 = vrot.lane.b32.xlu0 %v550, 3
      %v1197 = vpop.permute.xlu0 %1196
      %1198 = vrot.lane.b32.xlu0 %v551, 3
      %v1199 = vpop.permute.xlu0 %1198
      %1200 = vrot.lane.b32.xlu0 %v552, 3
      %v1201 = vpop.permute.xlu0 %1200
      %1202 = vrot.lane.b32.xlu0 %v553, 3
      %v1203 = vpop.permute.xlu0 %1202
      %1204 = vrot.lane.b32.xlu0 %v554, 3
      %v1205 = vpop.permute.xlu0 %1204
      %1206 = vrot.lane.b32.xlu0 %v555, 3
      %v1207 = vpop.permute.xlu0 %1206
      %1208 = vrot.lane.b32.xlu0 %v556, 3
      %v1209 = vpop.permute.xlu0 %1208
      %1210 = vrot.lane.b32.xlu0 %v557, 3
      %v1211 = vpop.permute.xlu0 %1210
      %1212 = vrot.lane.b32.xlu0 %v558, 3
      %v1213 = vpop.permute.xlu0 %1212
      %1214 = vrot.lane.b32.xlu0 %v559, 3
      %v1215 = vpop.permute.xlu0 %1214
      %1216 = vrot.lane.b32.xlu0 %v560, 3
      %v1217 = vpop.permute.xlu0 %1216
      %1218 = vrot.lane.b32.xlu0 %v561, 3
      %v1219 = vpop.permute.xlu0 %1218
      %1220 = vrot.lane.b32.xlu0 %v562, 3
      %v1221 = vpop.permute.xlu0 %1220
      %1222 = vrot.lane.b32.xlu0 %v563, 3
      %v1223 = vpop.permute.xlu0 %1222
      %1224 = vrot.lane.b32.xlu0 %v564, 3
      %v1225 = vpop.permute.xlu0 %1224
      %1226 = vrot.lane.b32.xlu0 %v565, 3
      %v1227 = vpop.permute.xlu0 %1226
      %1228 = vrot.lane.b32.xlu0 %v566, 3
      %v1229 = vpop.permute.xlu0 %1228
      %1230 = vrot.lane.b32.xlu0 %v567, 3
      %v1231 = vpop.permute.xlu0 %1230
      %1232 = vrot.lane.b32.xlu0 %v568, 3
      %v1233 = vpop.permute.xlu0 %1232
      %1234 = vrot.lane.b32.xlu0 %v569, 3
      %v1235 = vpop.permute.xlu0 %1234
      %1236 = vrot.lane.b32.xlu0 %v570, 3
      %v1237 = vpop.permute.xlu0 %1236
      %1238 = vrot.lane.b32.xlu0 %v571, 3
      %v1239 = vpop.permute.xlu0 %1238
      %1240 = vrot.lane.b32.xlu0 %v572, 3
      %v1241 = vpop.permute.xlu0 %1240
      %1242 = vrot.lane.b32.xlu0 %v573, 3
      %v1243 = vpop.permute.xlu0 %1242
      %1244 = vrot.lane.b32.xlu0 %v574, 3
      %v1245 = vpop.permute.xlu0 %1244
      %1246 = vrot.lane.b32.xlu0 %v575, 3
      %v1247 = vpop.permute.xlu0 %1246
      %1248 = vrot.lane.b32.xlu0 %v576, 3
      %v1249 = vpop.permute.xlu0 %1248
      %1250 = vrot.lane.b32.xlu0 %v577, 3
      %v1251 = vpop.permute.xlu0 %1250
      %1252 = vrot.lane.b32.xlu0 %v578, 3
      %v1253 = vpop.permute.xlu0 %1252
      %1254 = vrot.lane.b32.xlu0 %v579, 3
      %v1255 = vpop.permute.xlu0 %1254
      %1256 = vrot.lane.b32.xlu0 %v580, 3
      %v1257 = vpop.permute.xlu0 %1256
      %1258 = vrot.lane.b32.xlu0 %v581, 3
      %v1259 = vpop.permute.xlu0 %1258
      %1260 = vrot.lane.b32.xlu0 %v582, 3
      %v1261 = vpop.permute.xlu0 %1260
      %1262 = vrot.lane.b32.xlu0 %v583, 3
      %v1263 = vpop.permute.xlu0 %1262
      %1264 = vrot.lane.b32.xlu0 %v584, 3
      %v1265 = vpop.permute.xlu0 %1264
      %1266 = vrot.lane.b32.xlu0 %v585, 3
      %v1267 = vpop.permute.xlu0 %1266
      %1268 = vrot.lane.b32.xlu0 %v586, 3
      %v1269 = vpop.permute.xlu0 %1268
      %1270 = vrot.lane.b32.xlu0 %v587, 3
      %v1271 = vpop.permute.xlu0 %1270
      %1272 = vrot.lane.b32.xlu0 %v588, 3
      %v1273 = vpop.permute.xlu0 %1272
      %1274 = vrot.lane.b32.xlu0 %v589, 3
      %v1275 = vpop.permute.xlu0 %1274
      %1276 = vrot.lane.b32.xlu0 %v590, 3
      %v1277 = vpop.permute.xlu0 %1276
      %1278 = vrot.lane.b32.xlu0 %v591, 3
      %v1279 = vpop.permute.xlu0 %1278
      %1280 = vrot.lane.b32.xlu0 %v592, 3
      %v1281 = vpop.permute.xlu0 %1280
      %1282 = vrot.lane.b32.xlu0 %v593, 3
      %v1283 = vpop.permute.xlu0 %1282
      %1284 = vrot.lane.b32.xlu0 %v594, 3
      %v1285 = vpop.permute.xlu0 %1284
      %1286 = vrot.lane.b32.xlu0 %v595, 3
      %v1287 = vpop.permute.xlu0 %1286
      %1288 = vrot.lane.b32.xlu0 %v596, 3
      %v1289 = vpop.permute.xlu0 %1288
      %1290 = vrot.lane.b32.xlu0 %v597, 3
      %v1291 = vpop.permute.xlu0 %1290
      %1292 = vrot.lane.b32.xlu0 %v598, 3
      %v1293 = vpop.permute.xlu0 %1292
      %1294 = vrot.lane.b32.xlu0 %v599, 3
      %v1295 = vpop.permute.xlu0 %1294
      %1296 = vrot.lane.b32.xlu0 %v600, 3
      %v1297 = vpop.permute.xlu0 %1296
      %1298 = vrot.lane.b32.xlu0 %v601, 3
      %v1299 = vpop.permute.xlu0 %1298
      %1300 = vrot.lane.b32.xlu0 %v602, 3
      %v1301 = vpop.permute.xlu0 %1300
      %1302 = vrot.lane.b32.xlu0 %v603, 3
      %v1303 = vpop.permute.xlu0 %1302
      %1304 = vrot.lane.b32.xlu0 %v604, 3
      %v1305 = vpop.permute.xlu0 %1304
      %1306 = vrot.lane.b32.xlu0 %v605, 3
      %v1307 = vpop.permute.xlu0 %1306
      %1308 = vrot.lane.b32.xlu0 %v606, 3
      %v1309 = vpop.permute.xlu0 %1308
      %1310 = vrot.lane.b32.xlu0 %v607, 3
      %v1311 = vpop.permute.xlu0 %1310
      %1312 = vrot.lane.b32.xlu0 %v608, 3
      %v1313 = vpop.permute.xlu0 %1312
      %1314 = vrot.lane.b32.xlu0 %v609, 3
      %v1315 = vpop.permute.xlu0 %1314
      %1316 = vrot.lane.b32.xlu0 %v610, 3
      %v1317 = vpop.permute.xlu0 %1316
      %1318 = vrot.lane.b32.xlu0 %v611, 3
      %v1319 = vpop.permute.xlu0 %1318
      %1320 = vrot.lane.b32.xlu0 %v612, 3
      %v1321 = vpop.permute.xlu0 %1320
      %1322 = vrot.lane.b32.xlu0 %v613, 3
      %v1323 = vpop.permute.xlu0 %1322
      %1324 = vrot.lane.b32.xlu0 %v614, 3
      %v1325 = vpop.permute.xlu0 %1324
      %1326 = vrot.lane.b32.xlu0 %v615, 3
      %v1327 = vpop.permute.xlu0 %1326
      %1328 = vrot.lane.b32.xlu0 %v616, 3
      %v1329 = vpop.permute.xlu0 %1328
      %1330 = vrot.lane.b32.xlu0 %v617, 3
      %v1331 = vpop.permute.xlu0 %1330
      %1332 = vrot.lane.b32.xlu0 %v618, 3
      %v1333 = vpop.permute.xlu0 %1332
      %1334 = vrot.lane.b32.xlu0 %v619, 3
      %v1335 = vpop.permute.xlu0 %1334
      %1336 = vrot.lane.b32.xlu0 %v620, 3
      %v1337 = vpop.permute.xlu0 %1336
      %1338 = vrot.lane.b32.xlu0 %v621, 3
      %v1339 = vpop.permute.xlu0 %1338
      %1340 = vrot.lane.b32.xlu0 %v622, 3
      %v1341 = vpop.permute.xlu0 %1340
      %1342 = vrot.lane.b32.xlu0 %v623, 3
      %v1343 = vpop.permute.xlu0 %1342
      %1344 = vrot.lane.b32.xlu0 %v624, 3
      %v1345 = vpop.permute.xlu0 %1344
      %1346 = vrot.lane.b32.xlu0 %v625, 3
      %v1347 = vpop.permute.xlu0 %1346
      %1348 = vrot.lane.b32.xlu0 %v626, 3
      %v1349 = vpop.permute.xlu0 %1348
      %1350 = vrot.lane.b32.xlu0 %v627, 3
      %v1351 = vpop.permute.xlu0 %1350
      %1352 = vrot.lane.b32.xlu0 %v628, 3
      %v1353 = vpop.permute.xlu0 %1352
      %1354 = vrot.lane.b32.xlu0 %v629, 3
      %v1355 = vpop.permute.xlu0 %1354
      %1356 = vrot.lane.b32.xlu0 %v630, 3
      %v1357 = vpop.permute.xlu0 %1356
      %1358 = vrot.lane.b32.xlu0 %v631, 3
      %v1359 = vpop.permute.xlu0 %1358
      %1360 = vrot.lane.b32.xlu0 %v632, 3
      %v1361 = vpop.permute.xlu0 %1360
      %1362 = vrot.lane.b32.xlu0 %v633, 3
      %v1363 = vpop.permute.xlu0 %1362
      %1364 = vrot.lane.b32.xlu0 %v634, 3
      %v1365 = vpop.permute.xlu0 %1364
      %1366 = vrot.lane.b32.xlu0 %v635, 3
      %v1367 = vpop.permute.xlu0 %1366
      %1368 = vrot.lane.b32.xlu0 %v636, 3
      %v1369 = vpop.permute.xlu0 %1368
      %1370 = vrot.lane.b32.xlu0 %v637, 3
      %v1371 = vpop.permute.xlu0 %1370
      %1372 = vrot.lane.b32.xlu0 %v638, 3
      %v1373 = vpop.permute.xlu0 %1372
      %1374 = vrot.lane.b32.xlu0 %v639, 3
      %v1375 = vpop.permute.xlu0 %1374
      %1376 = vrot.lane.b32.xlu0 %v640, 3
      %v1377 = vpop.permute.xlu0 %1376
      %1378 = vrot.lane.b32.xlu0 %v641, 3
      %v1379 = vpop.permute.xlu0 %1378
      %1380 = vrot.lane.b32.xlu0 %v642, 3
      %v1381 = vpop.permute.xlu0 %1380
      %1382 = vrot.lane.b32.xlu0 %v643, 3
      %v1383 = vpop.permute.xlu0 %1382
      %1384 = vrot.lane.b32.xlu0 %v644, 3
      %v1385 = vpop.permute.xlu0 %1384
      %1386 = vrot.lane.b32.xlu0 %v645, 3
      %v1387 = vpop.permute.xlu0 %1386
      %1388 = vrot.lane.b32.xlu0 %v646, 3
      %v1389 = vpop.permute.xlu0 %1388
      %1390 = vrot.lane.b32.xlu0 %v647, 3
      %v1391 = vpop.permute.xlu0 %1390
      %1392 = vrot.lane.b32.xlu0 %v648, 3
      %v1393 = vpop.permute.xlu0 %1392
      %1394 = vrot.lane.b32.xlu0 %v649, 3
      %v1395 = vpop.permute.xlu0 %1394
      %1396 = vrot.lane.b32.xlu0 %v650, 3
      %v1397 = vpop.permute.xlu0 %1396
      %1398 = vrot.lane.b32.xlu0 %v651, 3
      %v1399 = vpop.permute.xlu0 %1398
      %1400 = vrot.lane.b32.xlu0 %v652, 3
      %v1401 = vpop.permute.xlu0 %1400
      %1402 = vrot.lane.b32.xlu0 %v653, 3
      %v1403 = vpop.permute.xlu0 %1402
      %1404 = vrot.lane.b32.xlu0 %v654, 3
      %v1405 = vpop.permute.xlu0 %1404
      %1406 = vrot.lane.b32.xlu0 %v655, 3
      %v1407 = vpop.permute.xlu0 %1406
      %1408 = vrot.lane.b32.xlu0 %v656, 3
      %v1409 = vpop.permute.xlu0 %1408
      %1410 = vrot.lane.b32.xlu0 %v657, 3
      %v1411 = vpop.permute.xlu0 %1410
      %1412 = vrot.lane.b32.xlu0 %v658, 3
      %v1413 = vpop.permute.xlu0 %1412
      %1414 = vrot.lane.b32.xlu0 %v659, 3
      %v1415 = vpop.permute.xlu0 %1414
      %1416 = vrot.lane.b32.xlu0 %v660, 3
      %v1417 = vpop.permute.xlu0 %1416
      %1418 = vrot.lane.b32.xlu0 %v661, 3
      %v1419 = vpop.permute.xlu0 %1418
      %1420 = vrot.lane.b32.xlu0 %v662, 3
      %v1421 = vpop.permute.xlu0 %1420
      %1422 = vrot.lane.b32.xlu0 %v663, 3
      %v1423 = vpop.permute.xlu0 %1422
      %1424 = vrot.lane.b32.xlu0 %v664, 3
      %v1425 = vpop.permute.xlu0 %1424
      %1426 = vrot.lane.b32.xlu0 %v665, 3
      %v1427 = vpop.permute.xlu0 %1426
      %1428 = vrot.lane.b32.xlu0 %v666, 3
      %v1429 = vpop.permute.xlu0 %1428
      %1430 = vrot.lane.b32.xlu0 %v667, 3
      %v1431 = vpop.permute.xlu0 %1430
      %1432 = vrot.lane.b32.xlu0 %v668, 3
      %v1433 = vpop.permute.xlu0 %1432
      %1434 = vrot.lane.b32.xlu0 %v669, 3
      %v1435 = vpop.permute.xlu0 %1434
      %1436 = vrot.lane.b32.xlu0 %v670, 3
      %v1437 = vpop.permute.xlu0 %1436
      %1438 = vrot.lane.b32.xlu0 %v671, 3
      %v1439 = vpop.permute.xlu0 %1438
      %1440 = vrot.lane.b32.xlu0 %v672, 3
      %v1441 = vpop.permute.xlu0 %1440
      %1442 = vrot.lane.b32.xlu0 %v673, 3
      %v1443 = vpop.permute.xlu0 %1442
      %1444 = vrot.lane.b32.xlu0 %v674, 3
      %v1445 = vpop.permute.xlu0 %1444
      %1446 = vrot.lane.b32.xlu0 %v675, 3
      %v1447 = vpop.permute.xlu0 %1446
      %1448 = vrot.lane.b32.xlu0 %v676, 3
      %v1449 = vpop.permute.xlu0 %1448
      %1450 = vrot.lane.b32.xlu0 %v677, 3
      %v1451 = vpop.permute.xlu0 %1450
      %1452 = vrot.lane.b32.xlu0 %v678, 3
      %v1453 = vpop.permute.xlu0 %1452
      %1454 = vrot.lane.b32.xlu0 %v679, 3
      %v1455 = vpop.permute.xlu0 %1454
      %1456 = vrot.lane.b32.xlu0 %v680, 3
      %v1457 = vpop.permute.xlu0 %1456
      %1458 = vrot.lane.b32.xlu0 %v681, 3
      %v1459 = vpop.permute.xlu0 %1458
      %1460 = vrot.lane.b32.xlu0 %v682, 3
      %v1461 = vpop.permute.xlu0 %1460
      %1462 = vrot.lane.b32.xlu0 %v683, 3
      %v1463 = vpop.permute.xlu0 %1462
      %1464 = vrot.lane.b32.xlu0 %v684, 3
      %v1465 = vpop.permute.xlu0 %1464
      %1466 = vrot.lane.b32.xlu0 %v685, 3
      %v1467 = vpop.permute.xlu0 %1466
      %1468 = vrot.lane.b32.xlu0 %v686, 3
      %v1469 = vpop.permute.xlu0 %1468
      %1470 = vrot.lane.b32.xlu0 %v687, 3
      %v1471 = vpop.permute.xlu0 %1470
      %1472 = vrot.lane.b32.xlu0 %v688, 3
      %v1473 = vpop.permute.xlu0 %1472
      %1474 = vrot.lane.b32.xlu0 %v689, 3
      %v1475 = vpop.permute.xlu0 %1474
      %1476 = vrot.lane.b32.xlu0 %v690, 3
      %v1477 = vpop.permute.xlu0 %1476
      %1478 = vrot.lane.b32.xlu0 %v691, 3
      %v1479 = vpop.permute.xlu0 %1478
      %1480 = vrot.lane.b32.xlu0 %v692, 3
      %v1481 = vpop.permute.xlu0 %1480
      %1482 = vrot.lane.b32.xlu0 %v693, 3
      %v1483 = vpop.permute.xlu0 %1482
      %1484 = vrot.lane.b32.xlu0 %v694, 3
      %v1485 = vpop.permute.xlu0 %1484
      %1486 = vrot.lane.b32.xlu0 %v695, 3
      %v1487 = vpop.permute.xlu0 %1486
      %1488 = vrot.lane.b32.xlu0 %v696, 3
      %v1489 = vpop.permute.xlu0 %1488
      %1490 = vrot.lane.b32.xlu0 %v697, 3
      %v1491 = vpop.permute.xlu0 %1490
      %1492 = vrot.lane.b32.xlu0 %v698, 3
      %v1493 = vpop.permute.xlu0 %1492
      %1494 = vrot.lane.b32.xlu0 %v699, 3
      %v1495 = vpop.permute.xlu0 %1494
      %1496 = vrot.lane.b32.xlu0 %v700, 3
      %v1497 = vpop.permute.xlu0 %1496
      %1498 = vrot.lane.b32.xlu0 %v701, 3
      %v1499 = vpop.permute.xlu0 %1498
      %1500 = vrot.lane.b32.xlu0 %v702, 3
      %v1501 = vpop.permute.xlu0 %1500
      %1502 = vrot.lane.b32.xlu0 %v703, 3
      %v1503 = vpop.permute.xlu0 %1502
      %1504 = vrot.lane.b32.xlu0 %v704, 3
      %v1505 = vpop.permute.xlu0 %1504
      %1506 = vrot.lane.b32.xlu0 %v705, 3
      %v1507 = vpop.permute.xlu0 %1506
      %1508 = vrot.lane.b32.xlu0 %v706, 3
      %v1509 = vpop.permute.xlu0 %1508
      %1510 = vrot.lane.b32.xlu0 %v707, 3
      %v1511 = vpop.permute.xlu0 %1510
      %1512 = vrot.lane.b32.xlu0 %v708, 3
      %v1513 = vpop.permute.xlu0 %1512
      %1836 = vrot.lane.b32.xlu0 %v709, 6
      %v1837 = vpop.permute.xlu0 %1836
      %1838 = vrot.lane.b32.xlu0 %v710, 6
      %v1839 = vpop.permute.xlu0 %1838
      %1840 = vrot.lane.b32.xlu0 %v711, 6
      %v1841 = vpop.permute.xlu0 %1840
      %1842 = vrot.lane.b32.xlu0 %v712, 6
      %v1843 = vpop.permute.xlu0 %1842
      %1844 = vrot.lane.b32.xlu0 %v713, 6
      %v1845 = vpop.permute.xlu0 %1844
      %1846 = vrot.lane.b32.xlu0 %v714, 6
      %v1847 = vpop.permute.xlu0 %1846
      %1848 = vrot.lane.b32.xlu0 %v715, 6
      %v1849 = vpop.permute.xlu0 %1848
      %1850 = vrot.lane.b32.xlu0 %v716, 6
      %v1851 = vpop.permute.xlu0 %1850
      %1852 = vrot.lane.b32.xlu0 %v717, 6
      %v1853 = vpop.permute.xlu0 %1852
      %1854 = vrot.lane.b32.xlu0 %v718, 6
      %v1855 = vpop.permute.xlu0 %1854
      %1856 = vrot.lane.b32.xlu0 %v719, 6
      %v1857 = vpop.permute.xlu0 %1856
      %1858 = vrot.lane.b32.xlu0 %v720, 6
      %v1859 = vpop.permute.xlu0 %1858
      %1860 = vrot.lane.b32.xlu0 %v721, 6
      %v1861 = vpop.permute.xlu0 %1860
      %1862 = vrot.lane.b32.xlu0 %v722, 6
      %v1863 = vpop.permute.xlu0 %1862
      %1864 = vrot.lane.b32.xlu0 %v723, 6
      %v1865 = vpop.permute.xlu0 %1864
      %1866 = vrot.lane.b32.xlu0 %v724, 6
      %v1867 = vpop.permute.xlu0 %1866
      %1868 = vrot.lane.b32.xlu0 %v725, 6
      %v1869 = vpop.permute.xlu0 %1868
      %1870 = vrot.lane.b32.xlu0 %v726, 6
      %v1871 = vpop.permute.xlu0 %1870
      %1872 = vrot.lane.b32.xlu0 %v727, 6
      %v1873 = vpop.permute.xlu0 %1872
      %1874 = vrot.lane.b32.xlu0 %v728, 6
      %v1875 = vpop.permute.xlu0 %1874
      %1876 = vrot.lane.b32.xlu0 %v729, 6
      %v1877 = vpop.permute.xlu0 %1876
      %1878 = vrot.lane.b32.xlu0 %v730, 6
      %v1879 = vpop.permute.xlu0 %1878
      %1880 = vrot.lane.b32.xlu0 %v731, 6
      %v1881 = vpop.permute.xlu0 %1880
      %1882 = vrot.lane.b32.xlu0 %v732, 6
      %v1883 = vpop.permute.xlu0 %1882
      %1884 = vrot.lane.b32.xlu0 %v733, 6
      %v1885 = vpop.permute.xlu0 %1884
      %1886 = vrot.lane.b32.xlu0 %v734, 6
      %v1887 = vpop.permute.xlu0 %1886
      %1888 = vrot.lane.b32.xlu0 %v735, 6
      %v1889 = vpop.permute.xlu0 %1888
      %1890 = vrot.lane.b32.xlu0 %v736, 6
      %v1891 = vpop.permute.xlu0 %1890
      %1892 = vrot.lane.b32.xlu0 %v737, 6
      %v1893 = vpop.permute.xlu0 %1892
      %1894 = vrot.lane.b32.xlu0 %v738, 6
      %v1895 = vpop.permute.xlu0 %1894
      %1896 = vrot.lane.b32.xlu0 %v739, 6
      %v1897 = vpop.permute.xlu0 %1896
      %1898 = vrot.lane.b32.xlu0 %v740, 6
      %v1899 = vpop.permute.xlu0 %1898
      %1900 = vrot.lane.b32.xlu0 %v741, 6
      %v1901 = vpop.permute.xlu0 %1900
      %1902 = vrot.lane.b32.xlu0 %v742, 6
      %v1903 = vpop.permute.xlu0 %1902
      %1904 = vrot.lane.b32.xlu0 %v743, 6
      %v1905 = vpop.permute.xlu0 %1904
      %1906 = vrot.lane.b32.xlu0 %v744, 6
      %v1907 = vpop.permute.xlu0 %1906
      %1908 = vrot.lane.b32.xlu0 %v745, 6
      %v1909 = vpop.permute.xlu0 %1908
      %1910 = vrot.lane.b32.xlu0 %v746, 6
      %v1911 = vpop.permute.xlu0 %1910
      %1912 = vrot.lane.b32.xlu0 %v747, 6
      %v1913 = vpop.permute.xlu0 %1912
      %1914 = vrot.lane.b32.xlu0 %v748, 6
      %v1915 = vpop.permute.xlu0 %1914
      %1916 = vrot.lane.b32.xlu0 %v749, 6
      %v1917 = vpop.permute.xlu0 %1916
      %1918 = vrot.lane.b32.xlu0 %v750, 6
      %v1919 = vpop.permute.xlu0 %1918
      %1920 = vrot.lane.b32.xlu0 %v751, 6
      %v1921 = vpop.permute.xlu0 %1920
      %1922 = vrot.lane.b32.xlu0 %v752, 6
      %v1923 = vpop.permute.xlu0 %1922
      %1924 = vrot.lane.b32.xlu0 %v753, 6
      %v1925 = vpop.permute.xlu0 %1924
      %1926 = vrot.lane.b32.xlu0 %v754, 6
      %v1927 = vpop.permute.xlu0 %1926
      %1928 = vrot.lane.b32.xlu0 %v755, 6
      %v1929 = vpop.permute.xlu0 %1928
      %1930 = vrot.lane.b32.xlu0 %v756, 6
      %v1931 = vpop.permute.xlu0 %1930
      %1932 = vrot.lane.b32.xlu0 %v757, 6
      %v1933 = vpop.permute.xlu0 %1932
      %1934 = vrot.lane.b32.xlu0 %v758, 6
      %v1935 = vpop.permute.xlu0 %1934
      %1936 = vrot.lane.b32.xlu0 %v759, 6
      %v1937 = vpop.permute.xlu0 %1936
      %1938 = vrot.lane.b32.xlu0 %v760, 6
      %v1939 = vpop.permute.xlu0 %1938
      %1940 = vrot.lane.b32.xlu0 %v761, 6
      %v1941 = vpop.permute.xlu0 %1940
      %1942 = vrot.lane.b32.xlu0 %v762, 6
      %v1943 = vpop.permute.xlu0 %1942
      %1944 = vrot.lane.b32.xlu0 %v763, 6
      %v1945 = vpop.permute.xlu0 %1944
      %1946 = vrot.lane.b32.xlu0 %v764, 6
      %v1947 = vpop.permute.xlu0 %1946
      %1948 = vrot.lane.b32.xlu0 %v765, 6
      %v1949 = vpop.permute.xlu0 %1948
      %1950 = vrot.lane.b32.xlu0 %v766, 6
      %v1951 = vpop.permute.xlu0 %1950
      %1952 = vrot.lane.b32.xlu0 %v767, 6
      %v1953 = vpop.permute.xlu0 %1952
      %1954 = vrot.lane.b32.xlu0 %v768, 6
      %v1955 = vpop.permute.xlu0 %1954
      %1956 = vrot.lane.b32.xlu0 %v769, 6
      %v1957 = vpop.permute.xlu0 %1956
      %1958 = vrot.lane.b32.xlu0 %v770, 6
      %v1959 = vpop.permute.xlu0 %1958
      %1960 = vrot.lane.b32.xlu0 %v771, 6
      %v1961 = vpop.permute.xlu0 %1960
      %1962 = vrot.lane.b32.xlu0 %v772, 6
      %v1963 = vpop.permute.xlu0 %1962
      %1964 = vrot.lane.b32.xlu0 %v773, 6
      %v1965 = vpop.permute.xlu0 %1964
      %1966 = vrot.lane.b32.xlu0 %v774, 6
      %v1967 = vpop.permute.xlu0 %1966
      %1968 = vrot.lane.b32.xlu0 %v775, 6
      %v1969 = vpop.permute.xlu0 %1968
      %1970 = vrot.lane.b32.xlu0 %v776, 6
      %v1971 = vpop.permute.xlu0 %1970
      %1972 = vrot.lane.b32.xlu0 %v777, 6
      %v1973 = vpop.permute.xlu0 %1972
      %1974 = vrot.lane.b32.xlu0 %v778, 6
      %v1975 = vpop.permute.xlu0 %1974
      %1976 = vrot.lane.b32.xlu0 %v779, 6
      %v1977 = vpop.permute.xlu0 %1976
      %1978 = vrot.lane.b32.xlu0 %v780, 6
      %v1979 = vpop.permute.xlu0 %1978
      %1980 = vrot.lane.b32.xlu0 %v781, 6
      %v1981 = vpop.permute.xlu0 %1980
      %1982 = vrot.lane.b32.xlu0 %v782, 6
      %v1983 = vpop.permute.xlu0 %1982
      %1984 = vrot.lane.b32.xlu0 %v783, 6
      %v1985 = vpop.permute.xlu0 %1984
      %1986 = vrot.lane.b32.xlu0 %v784, 6
      %v1987 = vpop.permute.xlu0 %1986
      %1988 = vrot.lane.b32.xlu0 %v785, 6
      %v1989 = vpop.permute.xlu0 %1988
      %1990 = vrot.lane.b32.xlu0 %v786, 6
      %v1991 = vpop.permute.xlu0 %1990
      %1992 = vrot.lane.b32.xlu0 %v787, 6
      %v1993 = vpop.permute.xlu0 %1992
      %1994 = vrot.lane.b32.xlu0 %v788, 6
      %v1995 = vpop.permute.xlu0 %1994
      %1996 = vrot.lane.b32.xlu0 %v789, 6
      %v1997 = vpop.permute.xlu0 %1996
      %1998 = vrot.lane.b32.xlu0 %v790, 6
      %v1999 = vpop.permute.xlu0 %1998
      %2000 = vrot.lane.b32.xlu0 %v791, 6
      %v2001 = vpop.permute.xlu0 %2000
      %2002 = vrot.lane.b32.xlu0 %v792, 6
      %v2003 = vpop.permute.xlu0 %2002
      %2004 = vrot.lane.b32.xlu0 %v793, 6
      %v2005 = vpop.permute.xlu0 %2004
      %2006 = vrot.lane.b32.xlu0 %v794, 6
      %v2007 = vpop.permute.xlu0 %2006
      %2008 = vrot.lane.b32.xlu0 %v795, 6
      %v2009 = vpop.permute.xlu0 %2008
      %2010 = vrot.lane.b32.xlu0 %v796, 6
      %v2011 = vpop.permute.xlu0 %2010
      %2012 = vrot.lane.b32.xlu0 %v797, 6
      %v2013 = vpop.permute.xlu0 %2012
      %2014 = vrot.lane.b32.xlu0 %v798, 6
      %v2015 = vpop.permute.xlu0 %2014
      %2016 = vrot.lane.b32.xlu0 %v799, 6
      %v2017 = vpop.permute.xlu0 %2016
      %2018 = vrot.lane.b32.xlu0 %v800, 6
      %v2019 = vpop.permute.xlu0 %2018
      %2020 = vrot.lane.b32.xlu0 %v801, 6
      %v2021 = vpop.permute.xlu0 %2020
      %2022 = vrot.lane.b32.xlu0 %v802, 6
      %v2023 = vpop.permute.xlu0 %2022
      %2024 = vrot.lane.b32.xlu0 %v803, 6
      %v2025 = vpop.permute.xlu0 %2024
      %2026 = vrot.lane.b32.xlu0 %v804, 6
      %v2027 = vpop.permute.xlu0 %2026
      %2028 = vrot.lane.b32.xlu0 %v805, 6
      %v2029 = vpop.permute.xlu0 %2028
      %2030 = vrot.lane.b32.xlu0 %v806, 6
      %v2031 = vpop.permute.xlu0 %2030
      %2032 = vrot.lane.b32.xlu0 %v807, 6
      %v2033 = vpop.permute.xlu0 %2032
      %2034 = vrot.lane.b32.xlu0 %v808, 6
      %v2035 = vpop.permute.xlu0 %2034
      %2036 = vrot.lane.b32.xlu0 %v809, 6
      %v2037 = vpop.permute.xlu0 %2036
      %2038 = vrot.lane.b32.xlu0 %v810, 6
      %v2039 = vpop.permute.xlu0 %2038
      %2040 = vrot.lane.b32.xlu0 %v811, 6
      %v2041 = vpop.permute.xlu0 %2040
      %2042 = vrot.lane.b32.xlu0 %v812, 6
      %v2043 = vpop.permute.xlu0 %2042
      %2044 = vrot.lane.b32.xlu0 %v813, 6
      %v2045 = vpop.permute.xlu0 %2044
      %2046 = vrot.lane.b32.xlu0 %v814, 6
      %v2047 = vpop.permute.xlu0 %2046
      %2048 = vrot.lane.b32.xlu0 %v815, 6
      %v2049 = vpop.permute.xlu0 %2048
      %2050 = vrot.lane.b32.xlu0 %v816, 6
      %v2051 = vpop.permute.xlu0 %2050
      %2052 = vrot.lane.b32.xlu0 %v817, 6
      %v2053 = vpop.permute.xlu0 %2052
      %2054 = vrot.lane.b32.xlu0 %v818, 6
      %v2055 = vpop.permute.xlu0 %2054
      %2056 = vrot.lane.b32.xlu0 %v819, 6
      %v2057 = vpop.permute.xlu0 %2056
      %2058 = vrot.lane.b32.xlu0 %v820, 6
      %v2059 = vpop.permute.xlu0 %2058
      %2060 = vrot.lane.b32.xlu0 %v821, 6
      %v2061 = vpop.permute.xlu0 %2060
      %2062 = vrot.lane.b32.xlu0 %v822, 6
      %v2063 = vpop.permute.xlu0 %2062
      %2064 = vrot.lane.b32.xlu0 %v823, 6
      %v2065 = vpop.permute.xlu0 %2064
      %2066 = vrot.lane.b32.xlu0 %v824, 6
      %v2067 = vpop.permute.xlu0 %2066
      %2068 = vrot.lane.b32.xlu0 %v825, 6
      %v2069 = vpop.permute.xlu0 %2068
      %2070 = vrot.lane.b32.xlu0 %v826, 6
      %v2071 = vpop.permute.xlu0 %2070
      %2072 = vrot.lane.b32.xlu0 %v827, 6
      %v2073 = vpop.permute.xlu0 %2072
      %2074 = vrot.lane.b32.xlu0 %v828, 6
      %v2075 = vpop.permute.xlu0 %2074
      %2076 = vrot.lane.b32.xlu0 %v829, 6
      %v2077 = vpop.permute.xlu0 %2076
      %2078 = vrot.lane.b32.xlu0 %v830, 6
      %v2079 = vpop.permute.xlu0 %2078
      %2080 = vrot.lane.b32.xlu0 %v831, 6
      %v2081 = vpop.permute.xlu0 %2080
      %2082 = vrot.lane.b32.xlu0 %v832, 6
      %v2083 = vpop.permute.xlu0 %2082
      %2084 = vrot.lane.b32.xlu0 %v833, 6
      %v2085 = vpop.permute.xlu0 %2084
      %2086 = vrot.lane.b32.xlu0 %v834, 6
      %v2087 = vpop.permute.xlu0 %2086
      %2088 = vrot.lane.b32.xlu0 %v835, 6
      %v2089 = vpop.permute.xlu0 %2088
      %2090 = vrot.lane.b32.xlu0 %v836, 6
      %v2091 = vpop.permute.xlu0 %2090
      %2092 = vrot.lane.b32.xlu0 %v837, 6
      %v2093 = vpop.permute.xlu0 %2092
      %2094 = vrot.lane.b32.xlu0 %v838, 6
      %v2095 = vpop.permute.xlu0 %2094
      %2096 = vrot.lane.b32.xlu0 %v839, 6
      %v2097 = vpop.permute.xlu0 %2096
      %2098 = vrot.lane.b32.xlu0 %v840, 6
      %v2099 = vpop.permute.xlu0 %2098
      %2100 = vrot.lane.b32.xlu0 %v841, 6
      %v2101 = vpop.permute.xlu0 %2100
      %2102 = vrot.lane.b32.xlu0 %v842, 6
      %v2103 = vpop.permute.xlu0 %2102
      %2104 = vrot.lane.b32.xlu0 %v843, 6
      %v2105 = vpop.permute.xlu0 %2104
      %2106 = vrot.lane.b32.xlu0 %v844, 6
      %v2107 = vpop.permute.xlu0 %2106
      %2108 = vrot.lane.b32.xlu0 %v845, 6
      %v2109 = vpop.permute.xlu0 %2108
      %2110 = vrot.lane.b32.xlu0 %v846, 6
      %v2111 = vpop.permute.xlu0 %2110
      %2112 = vrot.lane.b32.xlu0 %v847, 6
      %v2113 = vpop.permute.xlu0 %2112
      %2114 = vrot.lane.b32.xlu0 %v848, 6
      %v2115 = vpop.permute.xlu0 %2114
      %2116 = vrot.lane.b32.xlu0 %v849, 6
      %v2117 = vpop.permute.xlu0 %2116
      %2118 = vrot.lane.b32.xlu0 %v850, 6
      %v2119 = vpop.permute.xlu0 %2118
      %2120 = vrot.lane.b32.xlu0 %v851, 6
      %v2121 = vpop.permute.xlu0 %2120
      %2122 = vrot.lane.b32.xlu0 %v852, 6
      %v2123 = vpop.permute.xlu0 %2122
      %2124 = vrot.lane.b32.xlu0 %v853, 6
      %v2125 = vpop.permute.xlu0 %2124
      %2126 = vrot.lane.b32.xlu0 %v854, 6
      %v2127 = vpop.permute.xlu0 %2126
      %2128 = vrot.lane.b32.xlu0 %v855, 6
      %v2129 = vpop.permute.xlu0 %2128
      %2130 = vrot.lane.b32.xlu0 %v856, 6
      %v2131 = vpop.permute.xlu0 %2130
      %2132 = vrot.lane.b32.xlu0 %v857, 6
      %v2133 = vpop.permute.xlu0 %2132
      %2134 = vrot.lane.b32.xlu0 %v858, 6
      %v2135 = vpop.permute.xlu0 %2134
      %2136 = vrot.lane.b32.xlu0 %v859, 6
      %v2137 = vpop.permute.xlu0 %2136
      %2138 = vrot.lane.b32.xlu0 %v860, 6
      %v2139 = vpop.permute.xlu0 %2138
      %2140 = vrot.lane.b32.xlu0 %v861, 6
      %v2141 = vpop.permute.xlu0 %2140
      %2142 = vrot.lane.b32.xlu0 %v862, 6
      %v2143 = vpop.permute.xlu0 %2142
      %2144 = vrot.lane.b32.xlu0 %v863, 6
      %v2145 = vpop.permute.xlu0 %2144
      %2146 = vrot.lane.b32.xlu0 %v864, 6
      %v2147 = vpop.permute.xlu0 %2146
      %2148 = vrot.lane.b32.xlu0 %v865, 6
      %v2149 = vpop.permute.xlu0 %2148
      %2150 = vrot.lane.b32.xlu0 %v866, 6
      %v2151 = vpop.permute.xlu0 %2150
      %2152 = vrot.lane.b32.xlu0 %v867, 6
      %v2153 = vpop.permute.xlu0 %2152
      %2154 = vrot.lane.b32.xlu0 %v868, 6
      %v2155 = vpop.permute.xlu0 %2154
      %2156 = vrot.lane.b32.xlu0 %v869, 6
      %v2157 = vpop.permute.xlu0 %2156
      %2480 = vrot.lane.b32.xlu0 %v870, 9
      %v2481 = vpop.permute.xlu0 %2480
      %2482 = vrot.lane.b32.xlu0 %v871, 9
      %v2483 = vpop.permute.xlu0 %2482
      %2484 = vrot.lane.b32.xlu0 %v872, 9
      %v2485 = vpop.permute.xlu0 %2484
      %2486 = vrot.lane.b32.xlu0 %v873, 9
      %v2487 = vpop.permute.xlu0 %2486
      %2488 = vrot.lane.b32.xlu0 %v874, 9
      %v2489 = vpop.permute.xlu0 %2488
      %2490 = vrot.lane.b32.xlu0 %v875, 9
      %v2491 = vpop.permute.xlu0 %2490
      %2492 = vrot.lane.b32.xlu0 %v876, 9
      %v2493 = vpop.permute.xlu0 %2492
      %2494 = vrot.lane.b32.xlu0 %v877, 9
      %v2495 = vpop.permute.xlu0 %2494
      %2496 = vrot.lane.b32.xlu0 %v878, 9
      %v2497 = vpop.permute.xlu0 %2496
      %2498 = vrot.lane.b32.xlu0 %v879, 9
      %v2499 = vpop.permute.xlu0 %2498
      %2500 = vrot.lane.b32.xlu0 %v880, 9
      %v2501 = vpop.permute.xlu0 %2500
      %2502 = vrot.lane.b32.xlu0 %v881, 9
      %v2503 = vpop.permute.xlu0 %2502
      %2504 = vrot.lane.b32.xlu0 %v882, 9
      %v2505 = vpop.permute.xlu0 %2504
      %2506 = vrot.lane.b32.xlu0 %v883, 9
      %v2507 = vpop.permute.xlu0 %2506
      %2508 = vrot.lane.b32.xlu0 %v884, 9
      %v2509 = vpop.permute.xlu0 %2508
      %2510 = vrot.lane.b32.xlu0 %v885, 9
      %v2511 = vpop.permute.xlu0 %2510
      %2512 = vrot.lane.b32.xlu0 %v886, 9
      %v2513 = vpop.permute.xlu0 %2512
      %2514 = vrot.lane.b32.xlu0 %v887, 9
      %v2515 = vpop.permute.xlu0 %2514
      %2516 = vrot.lane.b32.xlu0 %v888, 9
      %v2517 = vpop.permute.xlu0 %2516
      %2518 = vrot.lane.b32.xlu0 %v889, 9
      %v2519 = vpop.permute.xlu0 %2518
      %2520 = vrot.lane.b32.xlu0 %v890, 9
      %v2521 = vpop.permute.xlu0 %2520
      %2522 = vrot.lane.b32.xlu0 %v891, 9
      %v2523 = vpop.permute.xlu0 %2522
      %2524 = vrot.lane.b32.xlu0 %v892, 9
      %v2525 = vpop.permute.xlu0 %2524
      %2526 = vrot.lane.b32.xlu0 %v893, 9
      %v2527 = vpop.permute.xlu0 %2526
      %2528 = vrot.lane.b32.xlu0 %v894, 9
      %v2529 = vpop.permute.xlu0 %2528
      %2530 = vrot.lane.b32.xlu0 %v895, 9
      %v2531 = vpop.permute.xlu0 %2530
      %2532 = vrot.lane.b32.xlu0 %v896, 9
      %v2533 = vpop.permute.xlu0 %2532
      %2534 = vrot.lane.b32.xlu0 %v897, 9
      %v2535 = vpop.permute.xlu0 %2534
      %2536 = vrot.lane.b32.xlu0 %v898, 9
      %v2537 = vpop.permute.xlu0 %2536
      %2538 = vrot.lane.b32.xlu0 %v899, 9
      %v2539 = vpop.permute.xlu0 %2538
      %2540 = vrot.lane.b32.xlu0 %v900, 9
      %v2541 = vpop.permute.xlu0 %2540
      %2542 = vrot.lane.b32.xlu0 %v901, 9
      %v2543 = vpop.permute.xlu0 %2542
      %2544 = vrot.lane.b32.xlu0 %v902, 9
      %v2545 = vpop.permute.xlu0 %2544
      %2546 = vrot.lane.b32.xlu0 %v903, 9
      %v2547 = vpop.permute.xlu0 %2546
      %2548 = vrot.lane.b32.xlu0 %v904, 9
      %v2549 = vpop.permute.xlu0 %2548
      %2550 = vrot.lane.b32.xlu0 %v905, 9
      %v2551 = vpop.permute.xlu0 %2550
      %2552 = vrot.lane.b32.xlu0 %v906, 9
      %v2553 = vpop.permute.xlu0 %2552
      %2554 = vrot.lane.b32.xlu0 %v907, 9
      %v2555 = vpop.permute.xlu0 %2554
      %2556 = vrot.lane.b32.xlu0 %v908, 9
      %v2557 = vpop.permute.xlu0 %2556
      %2558 = vrot.lane.b32.xlu0 %v909, 9
      %v2559 = vpop.permute.xlu0 %2558
      %2560 = vrot.lane.b32.xlu0 %v910, 9
      %v2561 = vpop.permute.xlu0 %2560
      %2562 = vrot.lane.b32.xlu0 %v911, 9
      %v2563 = vpop.permute.xlu0 %2562
      %2564 = vrot.lane.b32.xlu0 %v912, 9
      %v2565 = vpop.permute.xlu0 %2564
      %2566 = vrot.lane.b32.xlu0 %v913, 9
      %v2567 = vpop.permute.xlu0 %2566
      %2568 = vrot.lane.b32.xlu0 %v914, 9
      %v2569 = vpop.permute.xlu0 %2568
      %2570 = vrot.lane.b32.xlu0 %v915, 9
      %v2571 = vpop.permute.xlu0 %2570
      %2572 = vrot.lane.b32.xlu0 %v916, 9
      %v2573 = vpop.permute.xlu0 %2572
      %2574 = vrot.lane.b32.xlu0 %v917, 9
      %v2575 = vpop.permute.xlu0 %2574
      %2576 = vrot.lane.b32.xlu0 %v918, 9
      %v2577 = vpop.permute.xlu0 %2576
      %2578 = vrot.lane.b32.xlu0 %v919, 9
      %v2579 = vpop.permute.xlu0 %2578
      %2580 = vrot.lane.b32.xlu0 %v920, 9
      %v2581 = vpop.permute.xlu0 %2580
      %2582 = vrot.lane.b32.xlu0 %v921, 9
      %v2583 = vpop.permute.xlu0 %2582
      %2584 = vrot.lane.b32.xlu0 %v922, 9
      %v2585 = vpop.permute.xlu0 %2584
      %2586 = vrot.lane.b32.xlu0 %v923, 9
      %v2587 = vpop.permute.xlu0 %2586
      %2588 = vrot.lane.b32.xlu0 %v924, 9
      %v2589 = vpop.permute.xlu0 %2588
      %2590 = vrot.lane.b32.xlu0 %v925, 9
      %v2591 = vpop.permute.xlu0 %2590
      %2592 = vrot.lane.b32.xlu0 %v926, 9
      %v2593 = vpop.permute.xlu0 %2592
      %2594 = vrot.lane.b32.xlu0 %v927, 9
      %v2595 = vpop.permute.xlu0 %2594
      %2596 = vrot.lane.b32.xlu0 %v928, 9
      %v2597 = vpop.permute.xlu0 %2596
      %2598 = vrot.lane.b32.xlu0 %v929, 9
      %v2599 = vpop.permute.xlu0 %2598
      %2600 = vrot.lane.b32.xlu0 %v930, 9
      %v2601 = vpop.permute.xlu0 %2600
      %2602 = vrot.lane.b32.xlu0 %v931, 9
      %v2603 = vpop.permute.xlu0 %2602
      %2604 = vrot.lane.b32.xlu0 %v932, 9
      %v2605 = vpop.permute.xlu0 %2604
      %2606 = vrot.lane.b32.xlu0 %v933, 9
      %v2607 = vpop.permute.xlu0 %2606
      %2608 = vrot.lane.b32.xlu0 %v934, 9
      %v2609 = vpop.permute.xlu0 %2608
      %2610 = vrot.lane.b32.xlu0 %v935, 9
      %v2611 = vpop.permute.xlu0 %2610
      %2612 = vrot.lane.b32.xlu0 %v936, 9
      %v2613 = vpop.permute.xlu0 %2612
      %2614 = vrot.lane.b32.xlu0 %v937, 9
      %v2615 = vpop.permute.xlu0 %2614
      %2616 = vrot.lane.b32.xlu0 %v938, 9
      %v2617 = vpop.permute.xlu0 %2616
      %2618 = vrot.lane.b32.xlu0 %v939, 9
      %v2619 = vpop.permute.xlu0 %2618
      %2620 = vrot.lane.b32.xlu0 %v940, 9
      %v2621 = vpop.permute.xlu0 %2620
      %2622 = vrot.lane.b32.xlu0 %v941, 9
      %v2623 = vpop.permute.xlu0 %2622
      %2624 = vrot.lane.b32.xlu0 %v942, 9
      %v2625 = vpop.permute.xlu0 %2624
      %2626 = vrot.lane.b32.xlu0 %v943, 9
      %v2627 = vpop.permute.xlu0 %2626
      %2628 = vrot.lane.b32.xlu0 %v944, 9
      %v2629 = vpop.permute.xlu0 %2628
      %2630 = vrot.lane.b32.xlu0 %v945, 9
      %v2631 = vpop.permute.xlu0 %2630
      %2632 = vrot.lane.b32.xlu0 %v946, 9
      %v2633 = vpop.permute.xlu0 %2632
      %2634 = vrot.lane.b32.xlu0 %v947, 9
      %v2635 = vpop.permute.xlu0 %2634
      %2636 = vrot.lane.b32.xlu0 %v948, 9
      %v2637 = vpop.permute.xlu0 %2636
      %2638 = vrot.lane.b32.xlu0 %v949, 9
      %v2639 = vpop.permute.xlu0 %2638
      %2640 = vrot.lane.b32.xlu0 %v950, 9
      %v2641 = vpop.permute.xlu0 %2640
      %2642 = vrot.lane.b32.xlu0 %v951, 9
      %v2643 = vpop.permute.xlu0 %2642
      %2644 = vrot.lane.b32.xlu0 %v952, 9
      %v2645 = vpop.permute.xlu0 %2644
      %2646 = vrot.lane.b32.xlu0 %v953, 9
      %v2647 = vpop.permute.xlu0 %2646
      %2648 = vrot.lane.b32.xlu0 %v954, 9
      %v2649 = vpop.permute.xlu0 %2648
      %2650 = vrot.lane.b32.xlu0 %v955, 9
      %v2651 = vpop.permute.xlu0 %2650
      %2652 = vrot.lane.b32.xlu0 %v956, 9
      %v2653 = vpop.permute.xlu0 %2652
      %2654 = vrot.lane.b32.xlu0 %v957, 9
      %v2655 = vpop.permute.xlu0 %2654
      %2656 = vrot.lane.b32.xlu0 %v958, 9
      %v2657 = vpop.permute.xlu0 %2656
      %2658 = vrot.lane.b32.xlu0 %v959, 9
      %v2659 = vpop.permute.xlu0 %2658
      %2660 = vrot.lane.b32.xlu0 %v960, 9
      %v2661 = vpop.permute.xlu0 %2660
      %2662 = vrot.lane.b32.xlu0 %v961, 9
      %v2663 = vpop.permute.xlu0 %2662
      %2664 = vrot.lane.b32.xlu0 %v962, 9
      %v2665 = vpop.permute.xlu0 %2664
      %2666 = vrot.lane.b32.xlu0 %v963, 9
      %v2667 = vpop.permute.xlu0 %2666
      %2668 = vrot.lane.b32.xlu0 %v964, 9
      %v2669 = vpop.permute.xlu0 %2668
      %2670 = vrot.lane.b32.xlu0 %v965, 9
      %v2671 = vpop.permute.xlu0 %2670
      %2672 = vrot.lane.b32.xlu0 %v966, 9
      %v2673 = vpop.permute.xlu0 %2672
      %2674 = vrot.lane.b32.xlu0 %v967, 9
      %v2675 = vpop.permute.xlu0 %2674
      %2676 = vrot.lane.b32.xlu0 %v968, 9
      %v2677 = vpop.permute.xlu0 %2676
      %2678 = vrot.lane.b32.xlu0 %v969, 9
      %v2679 = vpop.permute.xlu0 %2678
      %2680 = vrot.lane.b32.xlu0 %v970, 9
      %v2681 = vpop.permute.xlu0 %2680
      %2682 = vrot.lane.b32.xlu0 %v971, 9
      %v2683 = vpop.permute.xlu0 %2682
      %2684 = vrot.lane.b32.xlu0 %v972, 9
      %v2685 = vpop.permute.xlu0 %2684
      %2686 = vrot.lane.b32.xlu0 %v973, 9
      %v2687 = vpop.permute.xlu0 %2686
      %2688 = vrot.lane.b32.xlu0 %v974, 9
      %v2689 = vpop.permute.xlu0 %2688
      %2690 = vrot.lane.b32.xlu0 %v975, 9
      %v2691 = vpop.permute.xlu0 %2690
      %2692 = vrot.lane.b32.xlu0 %v976, 9
      %v2693 = vpop.permute.xlu0 %2692
      %2694 = vrot.lane.b32.xlu0 %v977, 9
      %v2695 = vpop.permute.xlu0 %2694
      %2696 = vrot.lane.b32.xlu0 %v978, 9
      %v2697 = vpop.permute.xlu0 %2696
      %2698 = vrot.lane.b32.xlu0 %v979, 9
      %v2699 = vpop.permute.xlu0 %2698
      %2700 = vrot.lane.b32.xlu0 %v980, 9
      %v2701 = vpop.permute.xlu0 %2700
      %2702 = vrot.lane.b32.xlu0 %v981, 9
      %v2703 = vpop.permute.xlu0 %2702
      %2704 = vrot.lane.b32.xlu0 %v982, 9
      %v2705 = vpop.permute.xlu0 %2704
      %2706 = vrot.lane.b32.xlu0 %v983, 9
      %v2707 = vpop.permute.xlu0 %2706
      %2708 = vrot.lane.b32.xlu0 %v984, 9
      %v2709 = vpop.permute.xlu0 %2708
      %2710 = vrot.lane.b32.xlu0 %v985, 9
      %v2711 = vpop.permute.xlu0 %2710
      %2712 = vrot.lane.b32.xlu0 %v986, 9
      %v2713 = vpop.permute.xlu0 %2712
      %2714 = vrot.lane.b32.xlu0 %v987, 9
      %v2715 = vpop.permute.xlu0 %2714
      %2716 = vrot.lane.b32.xlu0 %v988, 9
      %v2717 = vpop.permute.xlu0 %2716
      %2718 = vrot.lane.b32.xlu0 %v989, 9
      %v2719 = vpop.permute.xlu0 %2718
      %2720 = vrot.lane.b32.xlu0 %v990, 9
      %v2721 = vpop.permute.xlu0 %2720
      %2722 = vrot.lane.b32.xlu0 %v991, 9
      %v2723 = vpop.permute.xlu0 %2722
      %2724 = vrot.lane.b32.xlu0 %v992, 9
      %v2725 = vpop.permute.xlu0 %2724
      %2726 = vrot.lane.b32.xlu0 %v993, 9
      %v2727 = vpop.permute.xlu0 %2726
      %2728 = vrot.lane.b32.xlu0 %v994, 9
      %v2729 = vpop.permute.xlu0 %2728
      %2730 = vrot.lane.b32.xlu0 %v995, 9
      %v2731 = vpop.permute.xlu0 %2730
      %2732 = vrot.lane.b32.xlu0 %v996, 9
      %v2733 = vpop.permute.xlu0 %2732
      %2734 = vrot.lane.b32.xlu0 %v997, 9
      %v2735 = vpop.permute.xlu0 %2734
      %2736 = vrot.lane.b32.xlu0 %v998, 9
      %v2737 = vpop.permute.xlu0 %2736
      %2738 = vrot.lane.b32.xlu0 %v999, 9
      %v2739 = vpop.permute.xlu0 %2738
      %2740 = vrot.lane.b32.xlu0 %v1000, 9
      %v2741 = vpop.permute.xlu0 %2740
      %2742 = vrot.lane.b32.xlu0 %v1001, 9
      %v2743 = vpop.permute.xlu0 %2742
      %2744 = vrot.lane.b32.xlu0 %v1002, 9
      %v2745 = vpop.permute.xlu0 %2744
      %2746 = vrot.lane.b32.xlu0 %v1003, 9
      %v2747 = vpop.permute.xlu0 %2746
      %2748 = vrot.lane.b32.xlu0 %v1004, 9
      %v2749 = vpop.permute.xlu0 %2748
      %2750 = vrot.lane.b32.xlu0 %v1005, 9
      %v2751 = vpop.permute.xlu0 %2750
      %2752 = vrot.lane.b32.xlu0 %v1006, 9
      %v2753 = vpop.permute.xlu0 %2752
      %2754 = vrot.lane.b32.xlu0 %v1007, 9
      %v2755 = vpop.permute.xlu0 %2754
      %2756 = vrot.lane.b32.xlu0 %v1008, 9
      %v2757 = vpop.permute.xlu0 %2756
      %2758 = vrot.lane.b32.xlu0 %v1009, 9
      %v2759 = vpop.permute.xlu0 %2758
      %2760 = vrot.lane.b32.xlu0 %v1010, 9
      %v2761 = vpop.permute.xlu0 %2760
      %2762 = vrot.lane.b32.xlu0 %v1011, 9
      %v2763 = vpop.permute.xlu0 %2762
      %2764 = vrot.lane.b32.xlu0 %v1012, 9
      %v2765 = vpop.permute.xlu0 %2764
      %2766 = vrot.lane.b32.xlu0 %v1013, 9
      %v2767 = vpop.permute.xlu0 %2766
      %2768 = vrot.lane.b32.xlu0 %v1014, 9
      %v2769 = vpop.permute.xlu0 %2768
      %2770 = vrot.lane.b32.xlu0 %v1015, 9
      %v2771 = vpop.permute.xlu0 %2770
      %2772 = vrot.lane.b32.xlu0 %v1016, 9
      %v2773 = vpop.permute.xlu0 %2772
      %2774 = vrot.lane.b32.xlu0 %v1017, 9
      %v2775 = vpop.permute.xlu0 %2774
      %2776 = vrot.lane.b32.xlu0 %v1018, 9
      %v2777 = vpop.permute.xlu0 %2776
      %2778 = vrot.lane.b32.xlu0 %v1019, 9
      %v2779 = vpop.permute.xlu0 %2778
      %2780 = vrot.lane.b32.xlu0 %v1020, 9
      %v2781 = vpop.permute.xlu0 %2780
      %2782 = vrot.lane.b32.xlu0 %v1021, 9
      %v2783 = vpop.permute.xlu0 %2782
      %2784 = vrot.lane.b32.xlu0 %v1022, 9
      %v2785 = vpop.permute.xlu0 %2784
      %2786 = vrot.lane.b32.xlu0 %v1023, 9
      %v2787 = vpop.permute.xlu0 %2786
      %2788 = vrot.lane.b32.xlu0 %v1024, 9
      %v2789 = vpop.permute.xlu0 %2788
      %2790 = vrot.lane.b32.xlu0 %v1025, 9
      %v2791 = vpop.permute.xlu0 %2790
      %2792 = vrot.lane.b32.xlu0 %v1026, 9
      %v2793 = vpop.permute.xlu0 %2792
      %2794 = vrot.lane.b32.xlu0 %v1027, 9
      %v2795 = vpop.permute.xlu0 %2794
      %2796 = vrot.lane.b32.xlu0 %v1028, 9
      %v2797 = vpop.permute.xlu0 %2796
      %2798 = vrot.lane.b32.xlu0 %v1029, 9
      %v2799 = vpop.permute.xlu0 %2798
      %2800 = vrot.lane.b32.xlu0 %v1030, 9
      %v2801 = vpop.permute.xlu0 %2800
      %vm2963 = vcmask 23552
      %v2964 = vsel %vm2963, %v387, %v1193
      %v2965 = vsel %vm2963, %v388, %v1195
      %v2966 = vsel %vm2963, %v389, %v1197
      %v2967 = vsel %vm2963, %v390, %v1199
      %v2968 = vsel %vm2963, %v391, %v1201
      %v2969 = vsel %vm2963, %v392, %v1203
      %v2970 = vsel %vm2963, %v393, %v1205
      %v2971 = vsel %vm2963, %v394, %v1207
      %v2972 = vsel %vm2963, %v395, %v1209
      %v2973 = vsel %vm2963, %v396, %v1211
      %v2974 = vsel %vm2963, %v397, %v1213
      %v2975 = vsel %vm2963, %v398, %v1215
      %v2976 = vsel %vm2963, %v399, %v1217
      %v2977 = vsel %vm2963, %v400, %v1219
      %v2978 = vsel %vm2963, %v401, %v1221
      %v2979 = vsel %vm2963, %v402, %v1223
      %v2980 = vsel %vm2963, %v403, %v1225
      %v2981 = vsel %vm2963, %v404, %v1227
      %v2982 = vsel %vm2963, %v405, %v1229
      %v2983 = vsel %vm2963, %v406, %v1231
      %v2984 = vsel %vm2963, %v407, %v1233
      %v2985 = vsel %vm2963, %v408, %v1235
      %v2986 = vsel %vm2963, %v409, %v1237
      %v2987 = vsel %vm2963, %v410, %v1239
      %v2988 = vsel %vm2963, %v411, %v1241
      %v2989 = vsel %vm2963, %v412, %v1243
      %v2990 = vsel %vm2963, %v413, %v1245
      %v2991 = vsel %vm2963, %v414, %v1247
      %v2992 = vsel %vm2963, %v415, %v1249
      %v2993 = vsel %vm2963, %v416, %v1251
      %v2994 = vsel %vm2963, %v417, %v1253
      %v2995 = vsel %vm2963, %v418, %v1255
      %v2996 = vsel %vm2963, %v419, %v1257
      %v2997 = vsel %vm2963, %v420, %v1259
      %v2998 = vsel %vm2963, %v421, %v1261
      %v2999 = vsel %vm2963, %v422, %v1263
      %v3000 = vsel %vm2963, %v423, %v1265
      %v3001 = vsel %vm2963, %v424, %v1267
      %v3002 = vsel %vm2963, %v425, %v1269
      %v3003 = vsel %vm2963, %v426, %v1271
      %v3004 = vsel %vm2963, %v427, %v1273
      %v3005 = vsel %vm2963, %v428, %v1275
      %v3006 = vsel %vm2963, %v429, %v1277
      %v3007 = vsel %vm2963, %v430, %v1279
      %v3008 = vsel %vm2963, %v431, %v1281
      %v3009 = vsel %vm2963, %v432, %v1283
      %v3010 = vsel %vm2963, %v433, %v1285
      %v3011 = vsel %vm2963, %v434, %v1287
      %v3012 = vsel %vm2963, %v435, %v1289
      %v3013 = vsel %vm2963, %v436, %v1291
      %v3014 = vsel %vm2963, %v437, %v1293
      %v3015 = vsel %vm2963, %v438, %v1295
      %v3016 = vsel %vm2963, %v439, %v1297
      %v3017 = vsel %vm2963, %v440, %v1299
      %v3018 = vsel %vm2963, %v441, %v1301
      %v3019 = vsel %vm2963, %v442, %v1303
      %v3020 = vsel %vm2963, %v443, %v1305
      %v3021 = vsel %vm2963, %v444, %v1307
      %v3022 = vsel %vm2963, %v445, %v1309
      %v3023 = vsel %vm2963, %v446, %v1311
      %v3024 = vsel %vm2963, %v447, %v1313
      %v3025 = vsel %vm2963, %v448, %v1315
      %v3026 = vsel %vm2963, %v449, %v1317
      %v3027 = vsel %vm2963, %v450, %v1319
      %v3028 = vsel %vm2963, %v451, %v1321
      %v3029 = vsel %vm2963, %v452, %v1323
      %v3030 = vsel %vm2963, %v453, %v1325
      %v3031 = vsel %vm2963, %v454, %v1327
      %v3032 = vsel %vm2963, %v455, %v1329
      %v3033 = vsel %vm2963, %v456, %v1331
      %v3034 = vsel %vm2963, %v457, %v1333
      %v3035 = vsel %vm2963, %v458, %v1335
      %v3036 = vsel %vm2963, %v459, %v1337
      %v3037 = vsel %vm2963, %v460, %v1339
      %v3038 = vsel %vm2963, %v461, %v1341
      %v3039 = vsel %vm2963, %v462, %v1343
      %v3040 = vsel %vm2963, %v463, %v1345
      %v3041 = vsel %vm2963, %v464, %v1347
      %v3042 = vsel %vm2963, %v465, %v1349
      %v3043 = vsel %vm2963, %v466, %v1351
      %v3044 = vsel %vm2963, %v467, %v1353
      %v3045 = vsel %vm2963, %v468, %v1355
      %v3046 = vsel %vm2963, %v469, %v1357
      %v3047 = vsel %vm2963, %v470, %v1359
      %v3048 = vsel %vm2963, %v471, %v1361
      %v3049 = vsel %vm2963, %v472, %v1363
      %v3050 = vsel %vm2963, %v473, %v1365
      %v3051 = vsel %vm2963, %v474, %v1367
      %v3052 = vsel %vm2963, %v475, %v1369
      %v3053 = vsel %vm2963, %v476, %v1371
      %v3054 = vsel %vm2963, %v477, %v1373
      %v3055 = vsel %vm2963, %v478, %v1375
      %v3056 = vsel %vm2963, %v479, %v1377
      %v3057 = vsel %vm2963, %v480, %v1379
      %v3058 = vsel %vm2963, %v481, %v1381
      %v3059 = vsel %vm2963, %v482, %v1383
      %v3060 = vsel %vm2963, %v483, %v1385
      %v3061 = vsel %vm2963, %v484, %v1387
      %v3062 = vsel %vm2963, %v485, %v1389
      %v3063 = vsel %vm2963, %v486, %v1391
      %v3064 = vsel %vm2963, %v487, %v1393
      %v3065 = vsel %vm2963, %v488, %v1395
      %v3066 = vsel %vm2963, %v489, %v1397
      %v3067 = vsel %vm2963, %v490, %v1399
      %v3068 = vsel %vm2963, %v491, %v1401
      %v3069 = vsel %vm2963, %v492, %v1403
      %v3070 = vsel %vm2963, %v493, %v1405
      %v3071 = vsel %vm2963, %v494, %v1407
      %v3072 = vsel %vm2963, %v495, %v1409
      %v3073 = vsel %vm2963, %v496, %v1411
      %v3074 = vsel %vm2963, %v497, %v1413
      %v3075 = vsel %vm2963, %v498, %v1415
      %v3076 = vsel %vm2963, %v499, %v1417
      %v3077 = vsel %vm2963, %v500, %v1419
      %v3078 = vsel %vm2963, %v501, %v1421
      %v3079 = vsel %vm2963, %v502, %v1423
      %v3080 = vsel %vm2963, %v503, %v1425
      %v3081 = vsel %vm2963, %v504, %v1427
      %v3082 = vsel %vm2963, %v505, %v1429
      %v3083 = vsel %vm2963, %v506, %v1431
      %v3084 = vsel %vm2963, %v507, %v1433
      %v3085 = vsel %vm2963, %v508, %v1435
      %v3086 = vsel %vm2963, %v509, %v1437
      %v3087 = vsel %vm2963, %v510, %v1439
      %v3088 = vsel %vm2963, %v511, %v1441
      %v3089 = vsel %vm2963, %v512, %v1443
      %v3090 = vsel %vm2963, %v513, %v1445
      %v3091 = vsel %vm2963, %v514, %v1447
      %v3092 = vsel %vm2963, %v515, %v1449
      %v3093 = vsel %vm2963, %v516, %v1451
      %v3094 = vsel %vm2963, %v517, %v1453
      %v3095 = vsel %vm2963, %v518, %v1455
      %v3096 = vsel %vm2963, %v519, %v1457
      %v3097 = vsel %vm2963, %v520, %v1459
      %v3098 = vsel %vm2963, %v521, %v1461
      %v3099 = vsel %vm2963, %v522, %v1463
      %v3100 = vsel %vm2963, %v523, %v1465
      %v3101 = vsel %vm2963, %v524, %v1467
      %v3102 = vsel %vm2963, %v525, %v1469
      %v3103 = vsel %vm2963, %v526, %v1471
      %v3104 = vsel %vm2963, %v527, %v1473
      %v3105 = vsel %vm2963, %v528, %v1475
      %v3106 = vsel %vm2963, %v529, %v1477
      %v3107 = vsel %vm2963, %v530, %v1479
      %v3108 = vsel %vm2963, %v531, %v1481
      %v3109 = vsel %vm2963, %v532, %v1483
      %v3110 = vsel %vm2963, %v533, %v1485
      %v3111 = vsel %vm2963, %v534, %v1487
      %v3112 = vsel %vm2963, %v535, %v1489
      %v3113 = vsel %vm2963, %v536, %v1491
      %v3114 = vsel %vm2963, %v537, %v1493
      %v3115 = vsel %vm2963, %v538, %v1495
      %v3116 = vsel %vm2963, %v539, %v1497
      %v3117 = vsel %vm2963, %v540, %v1499
      %v3118 = vsel %vm2963, %v541, %v1501
      %v3119 = vsel %vm2963, %v542, %v1503
      %v3120 = vsel %vm2963, %v543, %v1505
      %v3121 = vsel %vm2963, %v544, %v1507
      %v3122 = vsel %vm2963, %v545, %v1509
      %v3123 = vsel %vm2963, %v546, %v1511
      %v3124 = vsel %vm2963, %v547, %v1513
      %vm3125 = vcmask 48128
      %v3126 = vsel %vm3125, %v2964, %v1837
      %v3127 = vsel %vm3125, %v2965, %v1839
      %v3128 = vsel %vm3125, %v2966, %v1841
      %v3129 = vsel %vm3125, %v2967, %v1843
      %v3130 = vsel %vm3125, %v2968, %v1845
      %v3131 = vsel %vm3125, %v2969, %v1847
      %v3132 = vsel %vm3125, %v2970, %v1849
      %v3133 = vsel %vm3125, %v2971, %v1851
      %v3134 = vsel %vm3125, %v2972, %v1853
      %v3135 = vsel %vm3125, %v2973, %v1855
      %v3136 = vsel %vm3125, %v2974, %v1857
      %v3137 = vsel %vm3125, %v2975, %v1859
      %v3138 = vsel %vm3125, %v2976, %v1861
      %v3139 = vsel %vm3125, %v2977, %v1863
      %v3140 = vsel %vm3125, %v2978, %v1865
      %v3141 = vsel %vm3125, %v2979, %v1867
      %v3142 = vsel %vm3125, %v2980, %v1869
      %v3143 = vsel %vm3125, %v2981, %v1871
      %v3144 = vsel %vm3125, %v2982, %v1873
      %v3145 = vsel %vm3125, %v2983, %v1875
      %v3146 = vsel %vm3125, %v2984, %v1877
      %v3147 = vsel %vm3125, %v2985, %v1879
      %v3148 = vsel %vm3125, %v2986, %v1881
      %v3149 = vsel %vm3125, %v2987, %v1883
      %v3150 = vsel %vm3125, %v2988, %v1885
      %v3151 = vsel %vm3125, %v2989, %v1887
      %v3152 = vsel %vm3125, %v2990, %v1889
      %v3153 = vsel %vm3125, %v2991, %v1891
      %v3154 = vsel %vm3125, %v2992, %v1893
      %v3155 = vsel %vm3125, %v2993, %v1895
      %v3156 = vsel %vm3125, %v2994, %v1897
      %v3157 = vsel %vm3125, %v2995, %v1899
      %v3158 = vsel %vm3125, %v2996, %v1901
      %v3159 = vsel %vm3125, %v2997, %v1903
      %v3160 = vsel %vm3125, %v2998, %v1905
      %v3161 = vsel %vm3125, %v2999, %v1907
      %v3162 = vsel %vm3125, %v3000, %v1909
      %v3163 = vsel %vm3125, %v3001, %v1911
      %v3164 = vsel %vm3125, %v3002, %v1913
      %v3165 = vsel %vm3125, %v3003, %v1915
      %v3166 = vsel %vm3125, %v3004, %v1917
      %v3167 = vsel %vm3125, %v3005, %v1919
      %v3168 = vsel %vm3125, %v3006, %v1921
      %v3169 = vsel %vm3125, %v3007, %v1923
      %v3170 = vsel %vm3125, %v3008, %v1925
      %v3171 = vsel %vm3125, %v3009, %v1927
      %v3172 = vsel %vm3125, %v3010, %v1929
      %v3173 = vsel %vm3125, %v3011, %v1931
      %v3174 = vsel %vm3125, %v3012, %v1933
      %v3175 = vsel %vm3125, %v3013, %v1935
      %v3176 = vsel %vm3125, %v3014, %v1937
      %v3177 = vsel %vm3125, %v3015, %v1939
      %v3178 = vsel %vm3125, %v3016, %v1941
      %v3179 = vsel %vm3125, %v3017, %v1943
      %v3180 = vsel %vm3125, %v3018, %v1945
      %v3181 = vsel %vm3125, %v3019, %v1947
      %v3182 = vsel %vm3125, %v3020, %v1949
      %v3183 = vsel %vm3125, %v3021, %v1951
      %v3184 = vsel %vm3125, %v3022, %v1953
      %v3185 = vsel %vm3125, %v3023, %v1955
      %v3186 = vsel %vm3125, %v3024, %v1957
      %v3187 = vsel %vm3125, %v3025, %v1959
      %v3188 = vsel %vm3125, %v3026, %v1961
      %v3189 = vsel %vm3125, %v3027, %v1963
      %v3190 = vsel %vm3125, %v3028, %v1965
      %v3191 = vsel %vm3125, %v3029, %v1967
      %v3192 = vsel %vm3125, %v3030, %v1969
      %v3193 = vsel %vm3125, %v3031, %v1971
      %v3194 = vsel %vm3125, %v3032, %v1973
      %v3195 = vsel %vm3125, %v3033, %v1975
      %v3196 = vsel %vm3125, %v3034, %v1977
      %v3197 = vsel %vm3125, %v3035, %v1979
      %v3198 = vsel %vm3125, %v3036, %v1981
      %v3199 = vsel %vm3125, %v3037, %v1983
      %v3200 = vsel %vm3125, %v3038, %v1985
      %v3201 = vsel %vm3125, %v3039, %v1987
      %v3202 = vsel %vm3125, %v3040, %v1989
      %v3203 = vsel %vm3125, %v3041, %v1991
      %v3204 = vsel %vm3125, %v3042, %v1993
      %v3205 = vsel %vm3125, %v3043, %v1995
      %v3206 = vsel %vm3125, %v3044, %v1997
      %v3207 = vsel %vm3125, %v3045, %v1999
      %v3208 = vsel %vm3125, %v3046, %v2001
      %v3209 = vsel %vm3125, %v3047, %v2003
      %v3210 = vsel %vm3125, %v3048, %v2005
      %v3211 = vsel %vm3125, %v3049, %v2007
      %v3212 = vsel %vm3125, %v3050, %v2009
      %v3213 = vsel %vm3125, %v3051, %v2011
      %v3214 = vsel %vm3125, %v3052, %v2013
      %v3215 = vsel %vm3125, %v3053, %v2015
      %v3216 = vsel %vm3125, %v3054, %v2017
      %v3217 = vsel %vm3125, %v3055, %v2019
      %v3218 = vsel %vm3125, %v3056, %v2021
      %v3219 = vsel %vm3125, %v3057, %v2023
      %v3220 = vsel %vm3125, %v3058, %v2025
      %v3221 = vsel %vm3125, %v3059, %v2027
      %v3222 = vsel %vm3125, %v3060, %v2029
      %v3223 = vsel %vm3125, %v3061, %v2031
      %v3224 = vsel %vm3125, %v3062, %v2033
      %v3225 = vsel %vm3125, %v3063, %v2035
      %v3226 = vsel %vm3125, %v3064, %v2037
      %v3227 = vsel %vm3125, %v3065, %v2039
      %v3228 = vsel %vm3125, %v3066, %v2041
      %v3229 = vsel %vm3125, %v3067, %v2043
      %v3230 = vsel %vm3125, %v3068, %v2045
      %v3231 = vsel %vm3125, %v3069, %v2047
      %v3232 = vsel %vm3125, %v3070, %v2049
      %v3233 = vsel %vm3125, %v3071, %v2051
      %v3234 = vsel %vm3125, %v3072, %v2053
      %v3235 = vsel %vm3125, %v3073, %v2055
      %v3236 = vsel %vm3125, %v3074, %v2057
      %v3237 = vsel %vm3125, %v3075, %v2059
      %v3238 = vsel %vm3125, %v3076, %v2061
      %v3239 = vsel %vm3125, %v3077, %v2063
      %v3240 = vsel %vm3125, %v3078, %v2065
      %v3241 = vsel %vm3125, %v3079, %v2067
      %v3242 = vsel %vm3125, %v3080, %v2069
      %v3243 = vsel %vm3125, %v3081, %v2071
      %v3244 = vsel %vm3125, %v3082, %v2073
      %v3245 = vsel %vm3125, %v3083, %v2075
      %v3246 = vsel %vm3125, %v3084, %v2077
      %v3247 = vsel %vm3125, %v3085, %v2079
      %v3248 = vsel %vm3125, %v3086, %v2081
      %v3249 = vsel %vm3125, %v3087, %v2083
      %v3250 = vsel %vm3125, %v3088, %v2085
      %v3251 = vsel %vm3125, %v3089, %v2087
      %v3252 = vsel %vm3125, %v3090, %v2089
      %v3253 = vsel %vm3125, %v3091, %v2091
      %v3254 = vsel %vm3125, %v3092, %v2093
      %v3255 = vsel %vm3125, %v3093, %v2095
      %v3256 = vsel %vm3125, %v3094, %v2097
      %v3257 = vsel %vm3125, %v3095, %v2099
      %v3258 = vsel %vm3125, %v3096, %v2101
      %v3259 = vsel %vm3125, %v3097, %v2103
      %v3260 = vsel %vm3125, %v3098, %v2105
      %v3261 = vsel %vm3125, %v3099, %v2107
      %v3262 = vsel %vm3125, %v3100, %v2109
      %v3263 = vsel %vm3125, %v3101, %v2111
      %v3264 = vsel %vm3125, %v3102, %v2113
      %v3265 = vsel %vm3125, %v3103, %v2115
      %v3266 = vsel %vm3125, %v3104, %v2117
      %v3267 = vsel %vm3125, %v3105, %v2119
      %v3268 = vsel %vm3125, %v3106, %v2121
      %v3269 = vsel %vm3125, %v3107, %v2123
      %v3270 = vsel %vm3125, %v3108, %v2125
      %v3271 = vsel %vm3125, %v3109, %v2127
      %v3272 = vsel %vm3125, %v3110, %v2129
      %v3273 = vsel %vm3125, %v3111, %v2131
      %v3274 = vsel %vm3125, %v3112, %v2133
      %v3275 = vsel %vm3125, %v3113, %v2135
      %v3276 = vsel %vm3125, %v3114, %v2137
      %v3277 = vsel %vm3125, %v3115, %v2139
      %v3278 = vsel %vm3125, %v3116, %v2141
      %v3279 = vsel %vm3125, %v3117, %v2143
      %v3280 = vsel %vm3125, %v3118, %v2145
      %v3281 = vsel %vm3125, %v3119, %v2147
      %v3282 = vsel %vm3125, %v3120, %v2149
      %v3283 = vsel %vm3125, %v3121, %v2151
      %v3284 = vsel %vm3125, %v3122, %v2153
      %v3285 = vsel %vm3125, %v3123, %v2155
      %v3286 = vsel %vm3125, %v3124, %v2157
      %vm3287 = vcmask 72704
      %v3288 = vsel %vm3287, %v3126, %v2481
      %v3289 = vsel %vm3287, %v3127, %v2483
      %v3290 = vsel %vm3287, %v3128, %v2485
      %v3291 = vsel %vm3287, %v3129, %v2487
      %v3292 = vsel %vm3287, %v3130, %v2489
      %v3293 = vsel %vm3287, %v3131, %v2491
      %v3294 = vsel %vm3287, %v3132, %v2493
      %v3295 = vsel %vm3287, %v3133, %v2495
      %v3296 = vsel %vm3287, %v3134, %v2497
      %v3297 = vsel %vm3287, %v3135, %v2499
      %v3298 = vsel %vm3287, %v3136, %v2501
      %v3299 = vsel %vm3287, %v3137, %v2503
      %v3300 = vsel %vm3287, %v3138, %v2505
      %v3301 = vsel %vm3287, %v3139, %v2507
      %v3302 = vsel %vm3287, %v3140, %v2509
      %v3303 = vsel %vm3287, %v3141, %v2511
      %v3304 = vsel %vm3287, %v3142, %v2513
      %v3305 = vsel %vm3287, %v3143, %v2515
      %v3306 = vsel %vm3287, %v3144, %v2517
      %v3307 = vsel %vm3287, %v3145, %v2519
      %v3308 = vsel %vm3287, %v3146, %v2521
      %v3309 = vsel %vm3287, %v3147, %v2523
      %v3310 = vsel %vm3287, %v3148, %v2525
      %v3311 = vsel %vm3287, %v3149, %v2527
      %v3312 = vsel %vm3287, %v3150, %v2529
      %v3313 = vsel %vm3287, %v3151, %v2531
      %v3314 = vsel %vm3287, %v3152, %v2533
      %v3315 = vsel %vm3287, %v3153, %v2535
      %v3316 = vsel %vm3287, %v3154, %v2537
      %v3317 = vsel %vm3287, %v3155, %v2539
      %v3318 = vsel %vm3287, %v3156, %v2541
      %v3319 = vsel %vm3287, %v3157, %v2543
      %v3320 = vsel %vm3287, %v3158, %v2545
      %v3321 = vsel %vm3287, %v3159, %v2547
      %v3322 = vsel %vm3287, %v3160, %v2549
      %v3323 = vsel %vm3287, %v3161, %v2551
      %v3324 = vsel %vm3287, %v3162, %v2553
      %v3325 = vsel %vm3287, %v3163, %v2555
      %v3326 = vsel %vm3287, %v3164, %v2557
      %v3327 = vsel %vm3287, %v3165, %v2559
      %v3328 = vsel %vm3287, %v3166, %v2561
      %v3329 = vsel %vm3287, %v3167, %v2563
      %v3330 = vsel %vm3287, %v3168, %v2565
      %v3331 = vsel %vm3287, %v3169, %v2567
      %v3332 = vsel %vm3287, %v3170, %v2569
      %v3333 = vsel %vm3287, %v3171, %v2571
      %v3334 = vsel %vm3287, %v3172, %v2573
      %v3335 = vsel %vm3287, %v3173, %v2575
      %v3336 = vsel %vm3287, %v3174, %v2577
      %v3337 = vsel %vm3287, %v3175, %v2579
      %v3338 = vsel %vm3287, %v3176, %v2581
      %v3339 = vsel %vm3287, %v3177, %v2583
      %v3340 = vsel %vm3287, %v3178, %v2585
      %v3341 = vsel %vm3287, %v3179, %v2587
      %v3342 = vsel %vm3287, %v3180, %v2589
      %v3343 = vsel %vm3287, %v3181, %v2591
      %v3344 = vsel %vm3287, %v3182, %v2593
      %v3345 = vsel %vm3287, %v3183, %v2595
      %v3346 = vsel %vm3287, %v3184, %v2597
      %v3347 = vsel %vm3287, %v3185, %v2599
      %v3348 = vsel %vm3287, %v3186, %v2601
      %v3349 = vsel %vm3287, %v3187, %v2603
      %v3350 = vsel %vm3287, %v3188, %v2605
      %v3351 = vsel %vm3287, %v3189, %v2607
      %v3352 = vsel %vm3287, %v3190, %v2609
      %v3353 = vsel %vm3287, %v3191, %v2611
      %v3354 = vsel %vm3287, %v3192, %v2613
      %v3355 = vsel %vm3287, %v3193, %v2615
      %v3356 = vsel %vm3287, %v3194, %v2617
      %v3357 = vsel %vm3287, %v3195, %v2619
      %v3358 = vsel %vm3287, %v3196, %v2621
      %v3359 = vsel %vm3287, %v3197, %v2623
      %v3360 = vsel %vm3287, %v3198, %v2625
      %v3361 = vsel %vm3287, %v3199, %v2627
      %v3362 = vsel %vm3287, %v3200, %v2629
      %v3363 = vsel %vm3287, %v3201, %v2631
      %v3364 = vsel %vm3287, %v3202, %v2633
      %v3365 = vsel %vm3287, %v3203, %v2635
      %v3366 = vsel %vm3287, %v3204, %v2637
      %v3367 = vsel %vm3287, %v3205, %v2639
      %v3368 = vsel %vm3287, %v3206, %v2641
      %v3369 = vsel %vm3287, %v3207, %v2643
      %v3370 = vsel %vm3287, %v3208, %v2645
      %v3371 = vsel %vm3287, %v3209, %v2647
      %v3372 = vsel %vm3287, %v3210, %v2649
      %v3373 = vsel %vm3287, %v3211, %v2651
      %v3374 = vsel %vm3287, %v3212, %v2653
      %v3375 = vsel %vm3287, %v3213, %v2655
      %v3376 = vsel %vm3287, %v3214, %v2657
      %v3377 = vsel %vm3287, %v3215, %v2659
      %v3378 = vsel %vm3287, %v3216, %v2661
      %v3379 = vsel %vm3287, %v3217, %v2663
      %v3380 = vsel %vm3287, %v3218, %v2665
      %v3381 = vsel %vm3287, %v3219, %v2667
      %v3382 = vsel %vm3287, %v3220, %v2669
      %v3383 = vsel %vm3287, %v3221, %v2671
      %v3384 = vsel %vm3287, %v3222, %v2673
      %v3385 = vsel %vm3287, %v3223, %v2675
      %v3386 = vsel %vm3287, %v3224, %v2677
      %v3387 = vsel %vm3287, %v3225, %v2679
      %v3388 = vsel %vm3287, %v3226, %v2681
      %v3389 = vsel %vm3287, %v3227, %v2683
      %v3390 = vsel %vm3287, %v3228, %v2685
      %v3391 = vsel %vm3287, %v3229, %v2687
      %v3392 = vsel %vm3287, %v3230, %v2689
      %v3393 = vsel %vm3287, %v3231, %v2691
      %v3394 = vsel %vm3287, %v3232, %v2693
      %v3395 = vsel %vm3287, %v3233, %v2695
      %v3396 = vsel %vm3287, %v3234, %v2697
      %v3397 = vsel %vm3287, %v3235, %v2699
      %v3398 = vsel %vm3287, %v3236, %v2701
      %v3399 = vsel %vm3287, %v3237, %v2703
      %v3400 = vsel %vm3287, %v3238, %v2705
      %v3401 = vsel %vm3287, %v3239, %v2707
      %v3402 = vsel %vm3287, %v3240, %v2709
      %v3403 = vsel %vm3287, %v3241, %v2711
      %v3404 = vsel %vm3287, %v3242, %v2713
      %v3405 = vsel %vm3287, %v3243, %v2715
      %v3406 = vsel %vm3287, %v3244, %v2717
      %v3407 = vsel %vm3287, %v3245, %v2719
      %v3408 = vsel %vm3287, %v3246, %v2721
      %v3409 = vsel %vm3287, %v3247, %v2723
      %v3410 = vsel %vm3287, %v3248, %v2725
      %v3411 = vsel %vm3287, %v3249, %v2727
      %v3412 = vsel %vm3287, %v3250, %v2729
      %v3413 = vsel %vm3287, %v3251, %v2731
      %v3414 = vsel %vm3287, %v3252, %v2733
      %v3415 = vsel %vm3287, %v3253, %v2735
      %v3416 = vsel %vm3287, %v3254, %v2737
      %v3417 = vsel %vm3287, %v3255, %v2739
      %v3418 = vsel %vm3287, %v3256, %v2741
      %v3419 = vsel %vm3287, %v3257, %v2743
      %v3420 = vsel %vm3287, %v3258, %v2745
      %v3421 = vsel %vm3287, %v3259, %v2747
      %v3422 = vsel %vm3287, %v3260, %v2749
      %v3423 = vsel %vm3287, %v3261, %v2751
      %v3424 = vsel %vm3287, %v3262, %v2753
      %v3425 = vsel %vm3287, %v3263, %v2755
      %v3426 = vsel %vm3287, %v3264, %v2757
      %v3427 = vsel %vm3287, %v3265, %v2759
      %v3428 = vsel %vm3287, %v3266, %v2761
      %v3429 = vsel %vm3287, %v3267, %v2763
      %v3430 = vsel %vm3287, %v3268, %v2765
      %v3431 = vsel %vm3287, %v3269, %v2767
      %v3432 = vsel %vm3287, %v3270, %v2769
      %v3433 = vsel %vm3287, %v3271, %v2771
      %v3434 = vsel %vm3287, %v3272, %v2773
      %v3435 = vsel %vm3287, %v3273, %v2775
      %v3436 = vsel %vm3287, %v3274, %v2777
      %v3437 = vsel %vm3287, %v3275, %v2779
      %v3438 = vsel %vm3287, %v3276, %v2781
      %v3439 = vsel %vm3287, %v3277, %v2783
      %v3440 = vsel %vm3287, %v3278, %v2785
      %v3441 = vsel %vm3287, %v3279, %v2787
      %v3442 = vsel %vm3287, %v3280, %v2789
      %v3443 = vsel %vm3287, %v3281, %v2791
      %v3444 = vsel %vm3287, %v3282, %v2793
      %v3445 = vsel %vm3287, %v3283, %v2795
      %v3446 = vsel %vm3287, %v3284, %v2797
      %v3447 = vsel %vm3287, %v3285, %v2799
      %v3448 = vsel %vm3287, %v3286, %v2801
      %v3449 = vld [vmem:[%s1] sm:$0xff]
      %v3450 = vld [vmem:[%s1 + $0x8] sm:$0xf]
      %v3451 = vld [vmem:[%s2] sm:$0x1]
      %v3453 = vperm.slane %v3451, 0
      %vm3455 = vcmask 97280
      %v3457 = vsel %vm3455, %v3288, 0
      %v3460 = vsel %vm3455, %v3289, 0
      %v3463 = vsel %vm3455, %v3290, 0
      %v3466 = vsel %vm3455, %v3291, 0
      %v3469 = vsel %vm3455, %v3292, 0
      %v3472 = vsel %vm3455, %v3293, 0
      %v3475 = vsel %vm3455, %v3294, 0
      %v3478 = vsel %vm3455, %v3295, 0
      %v3481 = vsel %vm3455, %v3296, 0
      %v3484 = vsel %vm3455, %v3297, 0
      %v3487 = vsel %vm3455, %v3298, 0
      %v3490 = vsel %vm3455, %v3299, 0
      %v3493 = vsel %vm3455, %v3300, 0
      %v3496 = vsel %vm3455, %v3301, 0
      %v3499 = vsel %vm3455, %v3302, 0
      %v3502 = vsel %vm3455, %v3303, 0
      %v3505 = vsel %vm3455, %v3304, 0
      %v3508 = vsel %vm3455, %v3305, 0
      %v3511 = vsel %vm3455, %v3306, 0
      %v3514 = vsel %vm3455, %v3307, 0
      %v3517 = vsel %vm3455, %v3308, 0
      %v3520 = vsel %vm3455, %v3309, 0
      %v3523 = vsel %vm3455, %v3310, 0
      %v3526 = vsel %vm3455, %v3311, 0
      %v3529 = vsel %vm3455, %v3312, 0
      %v3532 = vsel %vm3455, %v3313, 0
      %v3535 = vsel %vm3455, %v3314, 0
      %v3538 = vsel %vm3455, %v3315, 0
      %v3541 = vsel %vm3455, %v3316, 0
      %v3544 = vsel %vm3455, %v3317, 0
      %v3547 = vsel %vm3455, %v3318, 0
      %v3550 = vsel %vm3455, %v3319, 0
      %v3553 = vsel %vm3455, %v3320, 0
      %v3556 = vsel %vm3455, %v3321, 0
      %v3559 = vsel %vm3455, %v3322, 0
      %v3562 = vsel %vm3455, %v3323, 0
      %v3565 = vsel %vm3455, %v3324, 0
      %v3568 = vsel %vm3455, %v3325, 0
      %v3571 = vsel %vm3455, %v3326, 0
      %v3574 = vsel %vm3455, %v3327, 0
      %v3577 = vsel %vm3455, %v3328, 0
      %v3580 = vsel %vm3455, %v3329, 0
      %v3583 = vsel %vm3455, %v3330, 0
      %v3586 = vsel %vm3455, %v3331, 0
      %v3589 = vsel %vm3455, %v3332, 0
      %v3592 = vsel %vm3455, %v3333, 0
      %v3595 = vsel %vm3455, %v3334, 0
      %v3598 = vsel %vm3455, %v3335, 0
      %v3601 = vsel %vm3455, %v3336, 0
      %v3604 = vsel %vm3455, %v3337, 0
      %v3607 = vsel %vm3455, %v3338, 0
      %v3610 = vsel %vm3455, %v3339, 0
      %v3613 = vsel %vm3455, %v3340, 0
      %v3616 = vsel %vm3455, %v3341, 0
      %v3619 = vsel %vm3455, %v3342, 0
      %v3622 = vsel %vm3455, %v3343, 0
      %v3625 = vsel %vm3455, %v3344, 0
      %v3628 = vsel %vm3455, %v3345, 0
      %v3631 = vsel %vm3455, %v3346, 0
      %v3634 = vsel %vm3455, %v3347, 0
      %v3637 = vsel %vm3455, %v3348, 0
      %v3640 = vsel %vm3455, %v3349, 0
      %v3643 = vsel %vm3455, %v3350, 0
      %v3646 = vsel %vm3455, %v3351, 0
      %v3649 = vsel %vm3455, %v3352, 0
      %v3652 = vsel %vm3455, %v3353, 0
      %v3655 = vsel %vm3455, %v3354, 0
      %v3658 = vsel %vm3455, %v3355, 0
      %v3661 = vsel %vm3455, %v3356, 0
      %v3664 = vsel %vm3455, %v3357, 0
      %v3667 = vsel %vm3455, %v3358, 0
      %v3670 = vsel %vm3455, %v3359, 0
      %v3673 = vsel %vm3455, %v3360, 0
      %v3676 = vsel %vm3455, %v3361, 0
      %v3679 = vsel %vm3455, %v3362, 0
      %v3682 = vsel %vm3455, %v3363, 0
      %v3685 = vsel %vm3455, %v3364, 0
      %v3688 = vsel %vm3455, %v3365, 0
      %v3691 = vsel %vm3455, %v3366, 0
      %v3694 = vsel %vm3455, %v3367, 0
      %v3697 = vsel %vm3455, %v3368, 0
      %v3700 = vsel %vm3455, %v3369, 0
      %v3703 = vsel %vm3455, %v3370, 0
      %v3706 = vsel %vm3455, %v3371, 0
      %v3709 = vsel %vm3455, %v3372, 0
      %v3712 = vsel %vm3455, %v3373, 0
      %v3715 = vsel %vm3455, %v3374, 0
      %v3718 = vsel %vm3455, %v3375, 0
      %v3721 = vsel %vm3455, %v3376, 0
      %v3724 = vsel %vm3455, %v3377, 0
      %v3727 = vsel %vm3455, %v3378, 0
      %v3730 = vsel %vm3455, %v3379, 0
      %v3733 = vsel %vm3455, %v3380, 0
      %v3736 = vsel %vm3455, %v3381, 0
      %v3739 = vsel %vm3455, %v3382, 0
      %v3742 = vsel %vm3455, %v3383, 0
      %v3745 = vsel %vm3455, %v3384, 0
      %v3748 = vsel %vm3455, %v3385, 0
      %v3751 = vsel %vm3455, %v3386, 0
      %v3754 = vsel %vm3455, %v3387, 0
      %v3757 = vsel %vm3455, %v3388, 0
      %v3760 = vsel %vm3455, %v3389, 0
      %v3763 = vsel %vm3455, %v3390, 0
      %v3766 = vsel %vm3455, %v3391, 0
      %v3769 = vsel %vm3455, %v3392, 0
      %v3772 = vsel %vm3455, %v3393, 0
      %v3775 = vsel %vm3455, %v3394, 0
      %v3778 = vsel %vm3455, %v3395, 0
      %v3781 = vsel %vm3455, %v3396, 0
      %v3784 = vsel %vm3455, %v3397, 0
      %v3787 = vsel %vm3455, %v3398, 0
      %v3790 = vsel %vm3455, %v3399, 0
      %v3793 = vsel %vm3455, %v3400, 0
      %v3796 = vsel %vm3455, %v3401, 0
      %v3799 = vsel %vm3455, %v3402, 0
      %v3802 = vsel %vm3455, %v3403, 0
      %v3805 = vsel %vm3455, %v3404, 0
      %v3808 = vsel %vm3455, %v3405, 0
      %v3811 = vsel %vm3455, %v3406, 0
      %v3814 = vsel %vm3455, %v3407, 0
      %v3817 = vsel %vm3455, %v3408, 0
      %v3820 = vsel %vm3455, %v3409, 0
      %v3823 = vsel %vm3455, %v3410, 0
      %v3826 = vsel %vm3455, %v3411, 0
      %v3829 = vsel %vm3455, %v3412, 0
      %v3832 = vsel %vm3455, %v3413, 0
      %v3835 = vsel %vm3455, %v3414, 0
      %v3838 = vsel %vm3455, %v3415, 0
      %v3841 = vsel %vm3455, %v3416, 0
      %v3844 = vsel %vm3455, %v3417, 0
      %v3847 = vsel %vm3455, %v3418, 0
      %v3850 = vsel %vm3455, %v3419, 0
      %v3853 = vsel %vm3455, %v3420, 0
      %v3856 = vsel %vm3455, %v3421, 0
      %v3859 = vsel %vm3455, %v3422, 0
      %v3862 = vsel %vm3455, %v3423, 0
      %v3865 = vsel %vm3455, %v3424, 0
      %v3868 = vsel %vm3455, %v3425, 0
      %v3871 = vsel %vm3455, %v3426, 0
      %v3874 = vsel %vm3455, %v3427, 0
      %v3877 = vsel %vm3455, %v3428, 0
      %v3880 = vsel %vm3455, %v3429, 0
      %v3883 = vsel %vm3455, %v3430, 0
      %v3886 = vsel %vm3455, %v3431, 0
      %v3889 = vsel %vm3455, %v3432, 0
      %v3892 = vsel %vm3455, %v3433, 0
      %v3895 = vsel %vm3455, %v3434, 0
      %v3898 = vsel %vm3455, %v3435, 0
      %v3901 = vsel %vm3455, %v3436, 0
      %v3904 = vsel %vm3455, %v3437, 0
      %v3907 = vsel %vm3455, %v3438, 0
      %v3910 = vsel %vm3455, %v3439, 0
      %v3913 = vsel %vm3455, %v3440, 0
      %v3916 = vsel %vm3455, %v3441, 0
      %v3919 = vsel %vm3455, %v3442, 0
      %v3922 = vsel %vm3455, %v3443, 0
      %v3925 = vsel %vm3455, %v3444, 0
      %v3928 = vsel %vm3455, %v3445, 0
      %v3931 = vsel %vm3455, %v3446, 0
      %v3934 = vsel %vm3455, %v3447, 0
      %v3937 = vsel %vm3455, %v3448, 0
      %vm3939 = vcmask 1043456
      %v3941 = vsel %vm3939, %v3450, 0
      %3943 = vmatpush.msra.mxu0 0.0
      %3944 = vmatpush.msra.mxu0 0.0
      %3945 = vmatpush.msra.mxu0 0.0
      %3946 = vmatpush.msra.mxu0 0.0
      %3947 = vmatpush.msra.mxu0 0.0
      %3948 = vmatpush.msra.mxu0 0.0
      %3949 = vmatpush.msra.mxu0 0.0
      %3950 = vmatpush.msra.mxu0 0.0
      %3951 = vmatpush.msra.mxu0 0.0
      %3952 = vmatpush.msra.mxu0 0.0
      %3953 = vmatpush.msra.mxu0 0.0
      %3954 = vmatpush.msra.mxu0 0.0
      %3955 = vmatpush.msra.mxu0 0.0
      %3956 = vmatpush.msra.mxu0 0.0
      %3957 = vmatpush.msra.mxu0 %v3941
      %3958 = vmatpush.msra.mxu0 %v3449
      %3959 = vmatmul.f32.gmra.mxu0 %v3457
      %v3960 = vpop.f32.mrf.mxu0
      %v3961 = vadd.f32 %v3453, %v3960
      %3962 = vmatmul.f32.gmra.mxu0 %v3460
      %v3963 = vpop.f32.mrf.mxu0
      %v3964 = vadd.f32 %v3453, %v3963
      %3965 = vmatmul.f32.gmra.mxu0 %v3463
      %v3966 = vpop.f32.mrf.mxu0
      %v3967 = vadd.f32 %v3453, %v3966
      %3968 = vmatmul.f32.gmra.mxu0 %v3466
      %v3969 = vpop.f32.mrf.mxu0
      %v3970 = vadd.f32 %v3453, %v3969
      %3971 = vmatmul.f32.gmra.mxu0 %v3469
      %v3972 = vpop.f32.mrf.mxu0
      %v3973 = vadd.f32 %v3453, %v3972
      %3974 = vmatmul.f32.gmra.mxu0 %v3472
      %v3975 = vpop.f32.mrf.mxu0
      %v3976 = vadd.f32 %v3453, %v3975
      %3977 = vmatmul.f32.gmra.mxu0 %v3475
      %v3978 = vpop.f32.mrf.mxu0
      %v3979 = vadd.f32 %v3453, %v3978
      %3980 = vmatmul.f32.gmra.mxu0 %v3478
      %v3981 = vpop.f32.mrf.mxu0
      %v3982 = vadd.f32 %v3453, %v3981
      %3983 = vmatmul.f32.gmra.mxu0 %v3481
      %v3984 = vpop.f32.mrf.mxu0
      %v3985 = vadd.f32 %v3453, %v3984
      %3986 = vmatmul.f32.gmra.mxu0 %v3484
      %v3987 = vpop.f32.mrf.mxu0
      %v3988 = vadd.f32 %v3453, %v3987
      %3989 = vmatmul.f32.gmra.mxu0 %v3487
      %v3990 = vpop.f32.mrf.mxu0
      %v3991 = vadd.f32 %v3453, %v3990
      %3992 = vmatmul.f32.gmra.mxu0 %v3490
      %v3993 = vpop.f32.mrf.mxu0
      %v3994 = vadd.f32 %v3453, %v3993
      %3995 = vmatmul.f32.gmra.mxu0 %v3493
      %v3996 = vpop.f32.mrf.mxu0
      %v3997 = vadd.f32 %v3453, %v3996
      %3998 = vmatmul.f32.gmra.mxu0 %v3496
      %v3999 = vpop.f32.mrf.mxu0
      %v4000 = vadd.f32 %v3453, %v3999
      %4001 = vmatmul.f32.gmra.mxu0 %v3499
      %v4002 = vpop.f32.mrf.mxu0
      %v4003 = vadd.f32 %v3453, %v4002
      %4004 = vmatmul.f32.gmra.mxu0 %v3502
      %v4005 = vpop.f32.mrf.mxu0
      %v4006 = vadd.f32 %v3453, %v4005
      %4007 = vmatmul.f32.gmra.mxu0 %v3505
      %v4008 = vpop.f32.mrf.mxu0
      %v4009 = vadd.f32 %v3453, %v4008
      %4010 = vmatmul.f32.gmra.mxu0 %v3508
      %v4011 = vpop.f32.mrf.mxu0
      %v4012 = vadd.f32 %v3453, %v4011
      %4013 = vmatmul.f32.gmra.mxu0 %v3511
      %v4014 = vpop.f32.mrf.mxu0
      %v4015 = vadd.f32 %v3453, %v4014
      %4016 = vmatmul.f32.gmra.mxu0 %v3514
      %v4017 = vpop.f32.mrf.mxu0
      %v4018 = vadd.f32 %v3453, %v4017
      %4019 = vmatmul.f32.gmra.mxu0 %v3517
      %v4020 = vpop.f32.mrf.mxu0
      %v4021 = vadd.f32 %v3453, %v4020
      %4022 = vmatmul.f32.gmra.mxu0 %v3520
      %v4023 = vpop.f32.mrf.mxu0
      %v4024 = vadd.f32 %v3453, %v4023
      %4025 = vmatmul.f32.gmra.mxu0 %v3523
      %v4026 = vpop.f32.mrf.mxu0
      %v4027 = vadd.f32 %v3453, %v4026
      %4028 = vmatmul.f32.gmra.mxu0 %v3526
      %v4029 = vpop.f32.mrf.mxu0
      %v4030 = vadd.f32 %v3453, %v4029
      %4031 = vmatmul.f32.gmra.mxu0 %v3529
      %v4032 = vpop.f32.mrf.mxu0
      %v4033 = vadd.f32 %v3453, %v4032
      %4034 = vmatmul.f32.gmra.mxu0 %v3532
      %v4035 = vpop.f32.mrf.mxu0
      %v4036 = vadd.f32 %v3453, %v4035
      %4037 = vmatmul.f32.gmra.mxu0 %v3535
      %v4038 = vpop.f32.mrf.mxu0
      %v4039 = vadd.f32 %v3453, %v4038
      %4040 = vmatmul.f32.gmra.mxu0 %v3538
      %v4041 = vpop.f32.mrf.mxu0
      %v4042 = vadd.f32 %v3453, %v4041
      %4043 = vmatmul.f32.gmra.mxu0 %v3541
      %v4044 = vpop.f32.mrf.mxu0
      %v4045 = vadd.f32 %v3453, %v4044
      %4046 = vmatmul.f32.gmra.mxu0 %v3544
      %v4047 = vpop.f32.mrf.mxu0
      %v4048 = vadd.f32 %v3453, %v4047
      %4049 = vmatmul.f32.gmra.mxu0 %v3547
      %v4050 = vpop.f32.mrf.mxu0
      %v4051 = vadd.f32 %v3453, %v4050
      %4052 = vmatmul.f32.gmra.mxu0 %v3550
      %v4053 = vpop.f32.mrf.mxu0
      %v4054 = vadd.f32 %v3453, %v4053
      %4055 = vmatmul.f32.gmra.mxu0 %v3553
      %v4056 = vpop.f32.mrf.mxu0
      %v4057 = vadd.f32 %v3453, %v4056
      %4058 = vmatmul.f32.gmra.mxu0 %v3556
      %v4059 = vpop.f32.mrf.mxu0
      %v4060 = vadd.f32 %v3453, %v4059
      %4061 = vmatmul.f32.gmra.mxu0 %v3559
      %v4062 = vpop.f32.mrf.mxu0
      %v4063 = vadd.f32 %v3453, %v4062
      %4064 = vmatmul.f32.gmra.mxu0 %v3562
      %v4065 = vpop.f32.mrf.mxu0
      %v4066 = vadd.f32 %v3453, %v4065
      %4067 = vmatmul.f32.gmra.mxu0 %v3565
      %v4068 = vpop.f32.mrf.mxu0
      %v4069 = vadd.f32 %v3453, %v4068
      %4070 = vmatmul.f32.gmra.mxu0 %v3568
      %v4071 = vpop.f32.mrf.mxu0
      %v4072 = vadd.f32 %v3453, %v4071
      %4073 = vmatmul.f32.gmra.mxu0 %v3571
      %v4074 = vpop.f32.mrf.mxu0
      %4075 = vmatmul.f32.gmra.mxu0 %v3574
      %v4076 = vpop.f32.mrf.mxu0
      %4077 = vmatmul.f32.gmra.mxu0 %v3577
      %v4078 = vpop.f32.mrf.mxu0
      %4079 = vmatmul.f32.gmra.mxu0 %v3580
      %v4080 = vpop.f32.mrf.mxu0
      %v4081 = vadd.f32 %v3453, %v4080
      %4082 = vmatmul.f32.gmra.mxu0 %v3583
      %v4083 = vpop.f32.mrf.mxu0
      %v4084 = vadd.f32 %v3453, %v4083
      %4085 = vmatmul.f32.gmra.mxu0 %v3586
      %v4086 = vpop.f32.mrf.mxu0
      %v4087 = vadd.f32 %v3453, %v4086
      %4088 = vmatmul.f32.gmra.mxu0 %v3589
      %v4089 = vpop.f32.mrf.mxu0
      %v4090 = vadd.f32 %v3453, %v4089
      %4091 = vmatmul.f32.gmra.mxu0 %v3592
      %v4092 = vpop.f32.mrf.mxu0
      %v4093 = vadd.f32 %v3453, %v4092
      %4094 = vmatmul.f32.gmra.mxu0 %v3595
      %v4095 = vpop.f32.mrf.mxu0
      %v4096 = vadd.f32 %v3453, %v4095
      %4097 = vmatmul.f32.gmra.mxu0 %v3598
      %v4098 = vpop.f32.mrf.mxu0
      %v4099 = vadd.f32 %v3453, %v4098
      %4100 = vmatmul.f32.gmra.mxu0 %v3601
      %v4101 = vpop.f32.mrf.mxu0
      %v4102 = vadd.f32 %v3453, %v4101
      %4103 = vmatmul.f32.gmra.mxu0 %v3604
      %v4104 = vpop.f32.mrf.mxu0
      %v4105 = vadd.f32 %v3453, %v4104
      %4106 = vmatmul.f32.gmra.mxu0 %v3607
      %v4107 = vpop.f32.mrf.mxu0
      %v4108 = vadd.f32 %v3453, %v4107
      %4109 = vmatmul.f32.gmra.mxu0 %v3610
      %v4110 = vpop.f32.mrf.mxu0
      %v4111 = vadd.f32 %v3453, %v4110
      %4112 = vmatmul.f32.gmra.mxu0 %v3613
      %v4113 = vpop.f32.mrf.mxu0
      %v4114 = vadd.f32 %v3453, %v4113
      %4115 = vmatmul.f32.gmra.mxu0 %v3616
      %v4116 = vpop.f32.mrf.mxu0
      %v4117 = vadd.f32 %v3453, %v4116
      %4118 = vmatmul.f32.gmra.mxu0 %v3619
      %v4119 = vpop.f32.mrf.mxu0
      %v4120 = vadd.f32 %v3453, %v4119
      %4121 = vmatmul.f32.gmra.mxu0 %v3622
      %v4122 = vpop.f32.mrf.mxu0
      %v4123 = vadd.f32 %v3453, %v4122
      %4124 = vmatmul.f32.gmra.mxu0 %v3625
      %v4125 = vpop.f32.mrf.mxu0
      %v4126 = vadd.f32 %v3453, %v4125
      %4127 = vmatmul.f32.gmra.mxu0 %v3628
      %v4128 = vpop.f32.mrf.mxu0
      %v4129 = vadd.f32 %v3453, %v4128
      %4130 = vmatmul.f32.gmra.mxu0 %v3631
      %v4131 = vpop.f32.mrf.mxu0
      %v4132 = vadd.f32 %v3453, %v4131
      %4133 = vmatmul.f32.gmra.mxu0 %v3634
      %v4134 = vpop.f32.mrf.mxu0
      %v4135 = vadd.f32 %v3453, %v4134
      %4136 = vmatmul.f32.gmra.mxu0 %v3637
      %v4137 = vpop.f32.mrf.mxu0
      %v4138 = vadd.f32 %v3453, %v4137
      %4139 = vmatmul.f32.gmra.mxu0 %v3640
      %v4140 = vpop.f32.mrf.mxu0
      %v4141 = vadd.f32 %v3453, %v4140
      %4142 = vmatmul.f32.gmra.mxu0 %v3643
      %v4143 = vpop.f32.mrf.mxu0
      %v4144 = vadd.f32 %v3453, %v4143
      %4145 = vmatmul.f32.gmra.mxu0 %v3646
      %v4146 = vpop.f32.mrf.mxu0
      %v4147 = vadd.f32 %v3453, %v4146
      %4148 = vmatmul.f32.gmra.mxu0 %v3649
      %v4149 = vpop.f32.mrf.mxu0
      %v4150 = vadd.f32 %v3453, %v4149
      %4151 = vmatmul.f32.gmra.mxu0 %v3652
      %v4152 = vpop.f32.mrf.mxu0
      %v4153 = vadd.f32 %v3453, %v4152
      %4154 = vmatmul.f32.gmra.mxu0 %v3655
      %v4155 = vpop.f32.mrf.mxu0
      %v4156 = vadd.f32 %v3453, %v4155
      %4157 = vmatmul.f32.gmra.mxu0 %v3658
      %v4158 = vpop.f32.mrf.mxu0
      %v4159 = vadd.f32 %v3453, %v4158
      %4160 = vmatmul.f32.gmra.mxu0 %v3661
      %v4161 = vpop.f32.mrf.mxu0
      %v4162 = vadd.f32 %v3453, %v4161
      %4163 = vmatmul.f32.gmra.mxu0 %v3664
      %v4164 = vpop.f32.mrf.mxu0
      %v4165 = vadd.f32 %v3453, %v4164
      %4166 = vmatmul.f32.gmra.mxu0 %v3667
      %v4167 = vpop.f32.mrf.mxu0
      %v4168 = vadd.f32 %v3453, %v4167
      %4169 = vmatmul.f32.gmra.mxu0 %v3670
      %v4170 = vpop.f32.mrf.mxu0
      %v4171 = vadd.f32 %v3453, %v4170
      %4172 = vmatmul.f32.gmra.mxu0 %v3673
      %v4173 = vpop.f32.mrf.mxu0
      %v4174 = vadd.f32 %v3453, %v4173
      %4175 = vmatmul.f32.gmra.mxu0 %v3676
      %v4176 = vpop.f32.mrf.mxu0
      %v4177 = vadd.f32 %v3453, %v4176
      %4178 = vmatmul.f32.gmra.mxu0 %v3679
      %v4179 = vpop.f32.mrf.mxu0
      %v4180 = vadd.f32 %v3453, %v4179
      %4181 = vmatmul.f32.gmra.mxu0 %v3682
      %v4182 = vpop.f32.mrf.mxu0
      %v4183 = vadd.f32 %v3453, %v4182
      %4184 = vmatmul.f32.gmra.mxu0 %v3685
      %v4185 = vpop.f32.mrf.mxu0
      %v4186 = vadd.f32 %v3453, %v4185
      %4187 = vmatmul.f32.gmra.mxu0 %v3688
      %v4188 = vpop.f32.mrf.mxu0
      %v4189 = vadd.f32 %v3453, %v4188
      %4190 = vmatmul.f32.gmra.mxu0 %v3691
      %v4191 = vpop.f32.mrf.mxu0
      %v4192 = vadd.f32 %v3453, %v4191
      %4193 = vmatmul.f32.gmra.mxu0 %v3694
      %v4194 = vpop.f32.mrf.mxu0
      %4195 = vmatmul.f32.gmra.mxu0 %v3697
      %v4196 = vpop.f32.mrf.mxu0
      %4197 = vmatmul.f32.gmra.mxu0 %v3700
      %v4198 = vpop.f32.mrf.mxu0
      %4199 = vmatmul.f32.gmra.mxu0 %v3703
      %v4200 = vpop.f32.mrf.mxu0
      %v4201 = vadd.f32 %v3453, %v4200
      %4202 = vmatmul.f32.gmra.mxu0 %v3706
      %v4203 = vpop.f32.mrf.mxu0
      %v4204 = vadd.f32 %v3453, %v4203
      %4205 = vmatmul.f32.gmra.mxu0 %v3709
      %v4206 = vpop.f32.mrf.mxu0
      %v4207 = vadd.f32 %v3453, %v4206
      %4208 = vmatmul.f32.gmra.mxu0 %v3712
      %v4209 = vpop.f32.mrf.mxu0
      %v4210 = vadd.f32 %v3453, %v4209
      %4211 = vmatmul.f32.gmra.mxu0 %v3715
      %v4212 = vpop.f32.mrf.mxu0
      %v4213 = vadd.f32 %v3453, %v4212
      %4214 = vmatmul.f32.gmra.mxu0 %v3718
      %v4215 = vpop.f32.mrf.mxu0
      %v4216 = vadd.f32 %v3453, %v4215
      %4217 = vmatmul.f32.gmra.mxu0 %v3721
      %v4218 = vpop.f32.mrf.mxu0
      %v4219 = vadd.f32 %v3453, %v4218
      %4220 = vmatmul.f32.gmra.mxu0 %v3724
      %v4221 = vpop.f32.mrf.mxu0
      %v4222 = vadd.f32 %v3453, %v4221
      %4223 = vmatmul.f32.gmra.mxu0 %v3727
      %v4224 = vpop.f32.mrf.mxu0
      %v4225 = vadd.f32 %v3453, %v4224
      %4226 = vmatmul.f32.gmra.mxu0 %v3730
      %v4227 = vpop.f32.mrf.mxu0
      %v4228 = vadd.f32 %v3453, %v4227
      %4229 = vmatmul.f32.gmra.mxu0 %v3733
      %v4230 = vpop.f32.mrf.mxu0
      %v4231 = vadd.f32 %v3453, %v4230
      %4232 = vmatmul.f32.gmra.mxu0 %v3736
      %v4233 = vpop.f32.mrf.mxu0
      %v4234 = vadd.f32 %v3453, %v4233
      %4235 = vmatmul.f32.gmra.mxu0 %v3739
      %v4236 = vpop.f32.mrf.mxu0
      %v4237 = vadd.f32 %v3453, %v4236
      %4238 = vmatmul.f32.gmra.mxu0 %v3742
      %v4239 = vpop.f32.mrf.mxu0
      %v4240 = vadd.f32 %v3453, %v4239
      %4241 = vmatmul.f32.gmra.mxu0 %v3745
      %v4242 = vpop.f32.mrf.mxu0
      %v4243 = vadd.f32 %v3453, %v4242
      %4244 = vmatmul.f32.gmra.mxu0 %v3748
      %v4245 = vpop.f32.mrf.mxu0
      %v4246 = vadd.f32 %v3453, %v4245
      %4247 = vmatmul.f32.gmra.mxu0 %v3751
      %v4248 = vpop.f32.mrf.mxu0
      %v4249 = vadd.f32 %v3453, %v4248
      %4250 = vmatmul.f32.gmra.mxu0 %v3754
      %v4251 = vpop.f32.mrf.mxu0
      %v4252 = vadd.f32 %v3453, %v4251
      %4253 = vmatmul.f32.gmra.mxu0 %v3757
      %v4254 = vpop.f32.mrf.mxu0
      %v4255 = vadd.f32 %v3453, %v4254
      %4256 = vmatmul.f32.gmra.mxu0 %v3760
      %v4257 = vpop.f32.mrf.mxu0
      %v4258 = vadd.f32 %v3453, %v4257
      %4259 = vmatmul.f32.gmra.mxu0 %v3763
      %v4260 = vpop.f32.mrf.mxu0
      %v4261 = vadd.f32 %v3453, %v4260
      %4262 = vmatmul.f32.gmra.mxu0 %v3766
      %v4263 = vpop.f32.mrf.mxu0
      %v4264 = vadd.f32 %v3453, %v4263
      %4265 = vmatmul.f32.gmra.mxu0 %v3769
      %v4266 = vpop.f32.mrf.mxu0
      %v4267 = vadd.f32 %v3453, %v4266
      %4268 = vmatmul.f32.gmra.mxu0 %v3772
      %v4269 = vpop.f32.mrf.mxu0
      %v4270 = vadd.f32 %v3453, %v4269
      %4271 = vmatmul.f32.gmra.mxu0 %v3775
      %v4272 = vpop.f32.mrf.mxu0
      %v4273 = vadd.f32 %v3453, %v4272
      %4274 = vmatmul.f32.gmra.mxu0 %v3778
      %v4275 = vpop.f32.mrf.mxu0
      %v4276 = vadd.f32 %v3453, %v4275
      %4277 = vmatmul.f32.gmra.mxu0 %v3781
      %v4278 = vpop.f32.mrf.mxu0
      %v4279 = vadd.f32 %v3453, %v4278
      %4280 = vmatmul.f32.gmra.mxu0 %v3784
      %v4281 = vpop.f32.mrf.mxu0
      %v4282 = vadd.f32 %v3453, %v4281
      %4283 = vmatmul.f32.gmra.mxu0 %v3787
      %v4284 = vpop.f32.mrf.mxu0
      %v4285 = vadd.f32 %v3453, %v4284
      %4286 = vmatmul.f32.gmra.mxu0 %v3790
      %v4287 = vpop.f32.mrf.mxu0
      %v4288 = vadd.f32 %v3453, %v4287
      %4289 = vmatmul.f32.gmra.mxu0 %v3793
      %v4290 = vpop.f32.mrf.mxu0
      %v4291 = vadd.f32 %v3453, %v4290
      %4292 = vmatmul.f32.gmra.mxu0 %v3796
      %v4293 = vpop.f32.mrf.mxu0
      %v4294 = vadd.f32 %v3453, %v4293
      %4295 = vmatmul.f32.gmra.mxu0 %v3799
      %v4296 = vpop.f32.mrf.mxu0
      %v4297 = vadd.f32 %v3453, %v4296
      %4298 = vmatmul.f32.gmra.mxu0 %v3802
      %v4299 = vpop.f32.mrf.mxu0
      %v4300 = vadd.f32 %v3453, %v4299
      %4301 = vmatmul.f32.gmra.mxu0 %v3805
      %v4302 = vpop.f32.mrf.mxu0
      %v4303 = vadd.f32 %v3453, %v4302
      %4304 = vmatmul.f32.gmra.mxu0 %v3808
      %v4305 = vpop.f32.mrf.mxu0
      %v4306 = vadd.f32 %v3453, %v4305
      %4307 = vmatmul.f32.gmra.mxu0 %v3811
      %v4308 = vpop.f32.mrf.mxu0
      %v4309 = vadd.f32 %v3453, %v4308
      %4310 = vmatmul.f32.gmra.mxu0 %v3814
      %v4311 = vpop.f32.mrf.mxu0
      %v4312 = vadd.f32 %v3453, %v4311
      %4313 = vmatmul.f32.gmra.mxu0 %v3817
      %v4314 = vpop.f32.mrf.mxu0
      %4315 = vmatmul.f32.gmra.mxu0 %v3820
      %v4316 = vpop.f32.mrf.mxu0
      %4317 = vmatmul.f32.gmra.mxu0 %v3823
      %v4318 = vpop.f32.mrf.mxu0
      %4319 = vmatmul.f32.gmra.mxu0 %v3826
      %v4320 = vpop.f32.mrf.mxu0
      %v4321 = vadd.f32 %v3453, %v4320
      %4322 = vmatmul.f32.gmra.mxu0 %v3829
      %v4323 = vpop.f32.mrf.mxu0
      %v4324 = vadd.f32 %v3453, %v4323
      %4325 = vmatmul.f32.gmra.mxu0 %v3832
      %v4326 = vpop.f32.mrf.mxu0
      %v4327 = vadd.f32 %v3453, %v4326
      %4328 = vmatmul.f32.gmra.mxu0 %v3835
      %v4329 = vpop.f32.mrf.mxu0
      %v4330 = vadd.f32 %v3453, %v4329
      %4331 = vmatmul.f32.gmra.mxu0 %v3838
      %v4332 = vpop.f32.mrf.mxu0
      %v4333 = vadd.f32 %v3453, %v4332
      %4334 = vmatmul.f32.gmra.mxu0 %v3841
      %v4335 = vpop.f32.mrf.mxu0
      %v4336 = vadd.f32 %v3453, %v4335
      %4337 = vmatmul.f32.gmra.mxu0 %v3844
      %v4338 = vpop.f32.mrf.mxu0
      %v4339 = vadd.f32 %v3453, %v4338
      %4340 = vmatmul.f32.gmra.mxu0 %v3847
      %v4341 = vpop.f32.mrf.mxu0
      %v4342 = vadd.f32 %v3453, %v4341
      %4343 = vmatmul.f32.gmra.mxu0 %v3850
      %v4344 = vpop.f32.mrf.mxu0
      %v4345 = vadd.f32 %v3453, %v4344
      %4346 = vmatmul.f32.gmra.mxu0 %v3853
      %v4347 = vpop.f32.mrf.mxu0
      %v4348 = vadd.f32 %v3453, %v4347
      %4349 = vmatmul.f32.gmra.mxu0 %v3856
      %v4350 = vpop.f32.mrf.mxu0
      %v4351 = vadd.f32 %v3453, %v4350
      %4352 = vmatmul.f32.gmra.mxu0 %v3859
      %v4353 = vpop.f32.mrf.mxu0
      %v4354 = vadd.f32 %v3453, %v4353
      %4355 = vmatmul.f32.gmra.mxu0 %v3862
      %v4356 = vpop.f32.mrf.mxu0
      %v4357 = vadd.f32 %v3453, %v4356
      %4358 = vmatmul.f32.gmra.mxu0 %v3865
      %v4359 = vpop.f32.mrf.mxu0
      %v4360 = vadd.f32 %v3453, %v4359
      %4361 = vmatmul.f32.gmra.mxu0 %v3868
      %v4362 = vpop.f32.mrf.mxu0
      %v4363 = vadd.f32 %v3453, %v4362
      %4364 = vmatmul.f32.gmra.mxu0 %v3871
      %v4365 = vpop.f32.mrf.mxu0
      %v4366 = vadd.f32 %v3453, %v4365
      %4367 = vmatmul.f32.gmra.mxu0 %v3874
      %v4368 = vpop.f32.mrf.mxu0
      %v4369 = vadd.f32 %v3453, %v4368
      %4370 = vmatmul.f32.gmra.mxu0 %v3877
      %v4371 = vpop.f32.mrf.mxu0
      %v4372 = vadd.f32 %v3453, %v4371
      %4373 = vmatmul.f32.gmra.mxu0 %v3880
      %v4374 = vpop.f32.mrf.mxu0
      %v4375 = vadd.f32 %v3453, %v4374
      %4376 = vmatmul.f32.gmra.mxu0 %v3883
      %v4377 = vpop.f32.mrf.mxu0
      %v4378 = vadd.f32 %v3453, %v4377
      %4379 = vmatmul.f32.gmra.mxu0 %v3886
      %v4380 = vpop.f32.mrf.mxu0
      %v4381 = vadd.f32 %v3453, %v4380
      %4382 = vmatmul.f32.gmra.mxu0 %v3889
      %v4383 = vpop.f32.mrf.mxu0
      %v4384 = vadd.f32 %v3453, %v4383
      %4385 = vmatmul.f32.gmra.mxu0 %v3892
      %v4386 = vpop.f32.mrf.mxu0
      %v4387 = vadd.f32 %v3453, %v4386
      %4388 = vmatmul.f32.gmra.mxu0 %v3895
      %v4389 = vpop.f32.mrf.mxu0
      %v4390 = vadd.f32 %v3453, %v4389
      %4391 = vmatmul.f32.gmra.mxu0 %v3898
      %v4392 = vpop.f32.mrf.mxu0
      %v4393 = vadd.f32 %v3453, %v4392
      %4394 = vmatmul.f32.gmra.mxu0 %v3901
      %v4395 = vpop.f32.mrf.mxu0
      %v4396 = vadd.f32 %v3453, %v4395
      %4397 = vmatmul.f32.gmra.mxu0 %v3904
      %v4398 = vpop.f32.mrf.mxu0
      %v4399 = vadd.f32 %v3453, %v4398
      %4400 = vmatmul.f32.gmra.mxu0 %v3907
      %v4401 = vpop.f32.mrf.mxu0
      %v4402 = vadd.f32 %v3453, %v4401
      %4403 = vmatmul.f32.gmra.mxu0 %v3910
      %v4404 = vpop.f32.mrf.mxu0
      %v4405 = vadd.f32 %v3453, %v4404
      %4406 = vmatmul.f32.gmra.mxu0 %v3913
      %v4407 = vpop.f32.mrf.mxu0
      %v4408 = vadd.f32 %v3453, %v4407
      %4409 = vmatmul.f32.gmra.mxu0 %v3916
      %v4410 = vpop.f32.mrf.mxu0
      %v4411 = vadd.f32 %v3453, %v4410
      %4412 = vmatmul.f32.gmra.mxu0 %v3919
      %v4413 = vpop.f32.mrf.mxu0
      %v4414 = vadd.f32 %v3453, %v4413
      %4415 = vmatmul.f32.gmra.mxu0 %v3922
      %v4416 = vpop.f32.mrf.mxu0
      %v4417 = vadd.f32 %v3453, %v4416
      %4418 = vmatmul.f32.gmra.mxu0 %v3925
      %v4419 = vpop.f32.mrf.mxu0
      %v4420 = vadd.f32 %v3453, %v4419
      %4421 = vmatmul.f32.gmra.mxu0 %v3928
      %v4422 = vpop.f32.mrf.mxu0
      %v4423 = vadd.f32 %v3453, %v4422
      %4424 = vmatmul.f32.gmra.mxu0 %v3931
      %v4425 = vpop.f32.mrf.mxu0
      %v4426 = vadd.f32 %v3453, %v4425
      %4427 = vmatmul.f32.gmra.mxu0 %v3934
      %v4428 = vpop.f32.mrf.mxu0
      %v4429 = vadd.f32 %v3453, %v4428
      %4430 = vmatmul.f32.gmra.mxu0 %v3937
      %v4431 = vpop.f32.mrf.mxu0
      %v4432 = vadd.f32 %v3453, %v4431
      %4433 = vdwg.mxu0
      %v4434 = vmax.f32 %v3961, 0.0
      %v4435 = vmax.f32 %v3964, 0.0
      %v4436 = vmax.f32 %v3967, 0.0
      %v4437 = vmax.f32 %v3970, 0.0
      %v4438 = vmax.f32 %v3973, 0.0
      %v4439 = vmax.f32 %v3976, 0.0
      %v4440 = vmax.f32 %v3979, 0.0
      %v4441 = vmax.f32 %v3982, 0.0
      %v4442 = vmax.f32 %v3985, 0.0
      %v4443 = vmax.f32 %v3988, 0.0
      %v4444 = vmax.f32 %v3991, 0.0
      %v4445 = vmax.f32 %v3994, 0.0
      %v4446 = vmax.f32 %v3997, 0.0
      %v4447 = vmax.f32 %v4000, 0.0
      %v4448 = vmax.f32 %v4003, 0.0
      %v4449 = vmax.f32 %v4006, 0.0
      %v4450 = vmax.f32 %v4009, 0.0
      %v4451 = vmax.f32 %v4012, 0.0
      %v4452 = vmax.f32 %v4015, 0.0
      %v4453 = vmax.f32 %v4018, 0.0
      %v4454 = vmax.f32 %v4021, 0.0
      %v4455 = vmax.f32 %v4024, 0.0
      %v4456 = vmax.f32 %v4027, 0.0
      %v4457 = vmax.f32 %v4030, 0.0
      %v4458 = vmax.f32 %v4033, 0.0
      %v4459 = vmax.f32 %v4036, 0.0
      %v4460 = vmax.f32 %v4039, 0.0
      %v4461 = vmax.f32 %v4042, 0.0
      %v4462 = vmax.f32 %v4045, 0.0
      %v4463 = vmax.f32 %v4048, 0.0
      %v4464 = vmax.f32 %v4051, 0.0
      %v4465 = vmax.f32 %v4054, 0.0
      %v4466 = vmax.f32 %v4057, 0.0
      %v4467 = vmax.f32 %v4060, 0.0
      %v4468 = vmax.f32 %v4063, 0.0
      %v4469 = vmax.f32 %v4066, 0.0
      %v4470 = vmax.f32 %v4069, 0.0
      %v4471 = vmax.f32 %v4072, 0.0
      %v4472 = vmax.f32 %v4081, 0.0
      %v4473 = vmax.f32 %v4084, 0.0
      %v4474 = vmax.f32 %v4087, 0.0
      %v4475 = vmax.f32 %v4090, 0.0
      %v4476 = vmax.f32 %v4093, 0.0
      %v4477 = vmax.f32 %v4096, 0.0
      %v4478 = vmax.f32 %v4099, 0.0
      %v4479 = vmax.f32 %v4102, 0.0
      %v4480 = vmax.f32 %v4105, 0.0
      %v4481 = vmax.f32 %v4108, 0.0
      %v4482 = vmax.f32 %v4111, 0.0
      %v4483 = vmax.f32 %v4114, 0.0
      %v4484 = vmax.f32 %v4117, 0.0
      %v4485 = vmax.f32 %v4120, 0.0
      %v4486 = vmax.f32 %v4123, 0.0
      %v4487 = vmax.f32 %v4126, 0.0
      %v4488 = vmax.f32 %v4129, 0.0
      %v4489 = vmax.f32 %v4132, 0.0
      %v4490 = vmax.f32 %v4135, 0.0
      %v4491 = vmax.f32 %v4138, 0.0
      %v4492 = vmax.f32 %v4141, 0.0
      %v4493 = vmax.f32 %v4144, 0.0
      %v4494 = vmax.f32 %v4147, 0.0
      %v4495 = vmax.f32 %v4150, 0.0
      %v4496 = vmax.f32 %v4153, 0.0
      %v4497 = vmax.f32 %v4156, 0.0
      %v4498 = vmax.f32 %v4159, 0.0
      %v4499 = vmax.f32 %v4162, 0.0
      %v4500 = vmax.f32 %v4165, 0.0
      %v4501 = vmax.f32 %v4168, 0.0
      %v4502 = vmax.f32 %v4171, 0.0
      %v4503 = vmax.f32 %v4174, 0.0
      %v4504 = vmax.f32 %v4177, 0.0
      %v4505 = vmax.f32 %v4180, 0.0
      %v4506 = vmax.f32 %v4183, 0.0
      %v4507 = vmax.f32 %v4186, 0.0
      %v4508 = vmax.f32 %v4189, 0.0
      %v4509 = vmax.f32 %v4192, 0.0
      %v4510 = vmax.f32 %v4201, 0.0
      %v4511 = vmax.f32 %v4204, 0.0
      %v4512 = vmax.f32 %v4207, 0.0
      %v4513 = vmax.f32 %v4210, 0.0
      %v4514 = vmax.f32 %v4213, 0.0
      %v4515 = vmax.f32 %v4216, 0.0
      %v4516 = vmax.f32 %v4219, 0.0
      %v4517 = vmax.f32 %v4222, 0.0
      %v4518 = vmax.f32 %v4225, 0.0
      %v4519 = vmax.f32 %v4228, 0.0
      %v4520 = vmax.f32 %v4231, 0.0
      %v4521 = vmax.f32 %v4234, 0.0
      %v4522 = vmax.f32 %v4237, 0.0
      %v4523 = vmax.f32 %v4240, 0.0
      %v4524 = vmax.f32 %v4243, 0.0
      %v4525 = vmax.f32 %v4246, 0.0
      %v4526 = vmax.f32 %v4249, 0.0
      %v4527 = vmax.f32 %v4252, 0.0
      %v4528 = vmax.f32 %v4255, 0.0
      %v4529 = vmax.f32 %v4258, 0.0
      %v4530 = vmax.f32 %v4261, 0.0
      %v4531 = vmax.f32 %v4264, 0.0
      %v4532 = vmax.f32 %v4267, 0.0
      %v4533 = vmax.f32 %v4270, 0.0
      %v4534 = vmax.f32 %v4273, 0.0
      %v4535 = vmax.f32 %v4276, 0.0
      %v4536 = vmax.f32 %v4279, 0.0
      %v4537 = vmax.f32 %v4282, 0.0
      %v4538 = vmax.f32 %v4285, 0.0
      %v4539 = vmax.f32 %v4288, 0.0
      %v4540 = vmax.f32 %v4291, 0.0
      %v4541 = vmax.f32 %v4294, 0.0
      %v4542 = vmax.f32 %v4297, 0.0
      %v4543 = vmax.f32 %v4300, 0.0
      %v4544 = vmax.f32 %v4303, 0.0
      %v4545 = vmax.f32 %v4306, 0.0
      %v4546 = vmax.f32 %v4309, 0.0
      %v4547 = vmax.f32 %v4312, 0.0
      %v4548 = vmax.f32 %v4321, 0.0
      %v4549 = vmax.f32 %v4324, 0.0
      %v4550 = vmax.f32 %v4327, 0.0
      %v4551 = vmax.f32 %v4330, 0.0
      %v4552 = vmax.f32 %v4333, 0.0
      %v4553 = vmax.f32 %v4336, 0.0
      %v4554 = vmax.f32 %v4339, 0.0
      %v4555 = vmax.f32 %v4342, 0.0
      %v4556 = vmax.f32 %v4345, 0.0
      %v4557 = vmax.f32 %v4348, 0.0
      %v4558 = vmax.f32 %v4351, 0.0
      %v4559 = vmax.f32 %v4354, 0.0
      %v4560 = vmax.f32 %v4357, 0.0
      %v4561 = vmax.f32 %v4360, 0.0
      %v4562 = vmax.f32 %v4363, 0.0
      %v4563 = vmax.f32 %v4366, 0.0
      %v4564 = vmax.f32 %v4369, 0.0
      %v4565 = vmax.f32 %v4372, 0.0
      %v4566 = vmax.f32 %v4375, 0.0
      %v4567 = vmax.f32 %v4378, 0.0
      %v4568 = vmax.f32 %v4381, 0.0
      %v4569 = vmax.f32 %v4384, 0.0
      %v4570 = vmax.f32 %v4387, 0.0
      %v4571 = vmax.f32 %v4390, 0.0
      %v4572 = vmax.f32 %v4393, 0.0
      %v4573 = vmax.f32 %v4396, 0.0
      %v4574 = vmax.f32 %v4399, 0.0
      %v4575 = vmax.f32 %v4402, 0.0
      %v4576 = vmax.f32 %v4405, 0.0
      %v4577 = vmax.f32 %v4408, 0.0
      %v4578 = vmax.f32 %v4411, 0.0
      %v4579 = vmax.f32 %v4414, 0.0
      %v4580 = vmax.f32 %v4417, 0.0
      %v4581 = vmax.f32 %v4420, 0.0
      %v4582 = vmax.f32 %v4423, 0.0
      %v4583 = vmax.f32 %v4426, 0.0
      %v4584 = vmax.f32 %v4429, 0.0
      %v4585 = vmax.f32 %v4432, 0.0
      %vm4726 = vcmask 1046528
      %v4727 = vrot.slane %v4434, 1
      %v4728 = vrot.slane %v4435, 1
      %v4729 = vsel %vm4726, %v4727, %v4728
      %v4730 = vrot.slane %v4436, 1
      %v4731 = vsel %vm4726, %v4728, %v4730
      %v4732 = vrot.slane %v4437, 1
      %v4733 = vsel %vm4726, %v4730, %v4732
      %v4734 = vrot.slane %v4438, 1
      %v4735 = vsel %vm4726, %v4732, %v4734
      %v4736 = vrot.slane %v4439, 1
      %v4737 = vsel %vm4726, %v4734, %v4736
      %v4738 = vrot.slane %v4440, 1
      %v4739 = vsel %vm4726, %v4736, %v4738
      %v4740 = vrot.slane %v4441, 1
      %v4741 = vsel %vm4726, %v4738, %v4740
      %v4742 = vrot.slane %v4442, 1
      %v4743 = vsel %vm4726, %v4740, %v4742
      %v4744 = vrot.slane %v4443, 1
      %v4745 = vsel %vm4726, %v4742, %v4744
      %v4746 = vrot.slane %v4444, 1
      %v4747 = vsel %vm4726, %v4744, %v4746
      %v4748 = vrot.slane %v4445, 1
      %v4749 = vsel %vm4726, %v4746, %v4748
      %v4750 = vrot.slane %v4446, 1
      %v4751 = vsel %vm4726, %v4748, %v4750
      %v4752 = vrot.slane %v4447, 1
      %v4753 = vsel %vm4726, %v4750, %v4752
      %v4754 = vrot.slane %v4448, 1
      %v4755 = vsel %vm4726, %v4752, %v4754
      %v4756 = vrot.slane %v4449, 1
      %v4757 = vsel %vm4726, %v4754, %v4756
      %v4758 = vrot.slane %v4450, 1
      %v4759 = vsel %vm4726, %v4756, %v4758
      %v4760 = vrot.slane %v4451, 1
      %v4761 = vsel %vm4726, %v4758, %v4760
      %v4762 = vrot.slane %v4452, 1
      %v4763 = vsel %vm4726, %v4760, %v4762
      %v4764 = vrot.slane %v4453, 1
      %v4765 = vsel %vm4726, %v4762, %v4764
      %v4766 = vrot.slane %v4454, 1
      %v4767 = vsel %vm4726, %v4764, %v4766
      %v4768 = vrot.slane %v4455, 1
      %v4769 = vsel %vm4726, %v4766, %v4768
      %v4770 = vrot.slane %v4456, 1
      %v4771 = vsel %vm4726, %v4768, %v4770
      %v4772 = vrot.slane %v4457, 1
      %v4773 = vsel %vm4726, %v4770, %v4772
      %v4774 = vrot.slane %v4458, 1
      %v4775 = vsel %vm4726, %v4772, %v4774
      %v4776 = vrot.slane %v4459, 1
      %v4777 = vsel %vm4726, %v4774, %v4776
      %v4778 = vrot.slane %v4460, 1
      %v4779 = vsel %vm4726, %v4776, %v4778
      %v4780 = vrot.slane %v4461, 1
      %v4781 = vsel %vm4726, %v4778, %v4780
      %v4782 = vrot.slane %v4462, 1
      %v4783 = vsel %vm4726, %v4780, %v4782
      %v4784 = vrot.slane %v4463, 1
      %v4785 = vsel %vm4726, %v4782, %v4784
      %v4786 = vrot.slane %v4464, 1
      %v4787 = vsel %vm4726, %v4784, %v4786
      %v4788 = vrot.slane %v4465, 1
      %v4789 = vsel %vm4726, %v4786, %v4788
      %v4790 = vrot.slane %v4466, 1
      %v4791 = vsel %vm4726, %v4788, %v4790
      %v4792 = vrot.slane %v4467, 1
      %v4793 = vsel %vm4726, %v4790, %v4792
      %v4794 = vrot.slane %v4468, 1
      %v4795 = vsel %vm4726, %v4792, %v4794
      %v4796 = vrot.slane %v4472, 1
      %v4797 = vrot.slane %v4473, 1
      %v4798 = vsel %vm4726, %v4796, %v4797
      %v4799 = vrot.slane %v4474, 1
      %v4800 = vsel %vm4726, %v4797, %v4799
      %v4801 = vrot.slane %v4475, 1
      %v4802 = vsel %vm4726, %v4799, %v4801
      %v4803 = vrot.slane %v4476, 1
      %v4804 = vsel %vm4726, %v4801, %v4803
      %v4805 = vrot.slane %v4477, 1
      %v4806 = vsel %vm4726, %v4803, %v4805
      %v4807 = vrot.slane %v4478, 1
      %v4808 = vsel %vm4726, %v4805, %v4807
      %v4809 = vrot.slane %v4479, 1
      %v4810 = vsel %vm4726, %v4807, %v4809
      %v4811 = vrot.slane %v4480, 1
      %v4812 = vsel %vm4726, %v4809, %v4811
      %v4813 = vrot.slane %v4481, 1
      %v4814 = vsel %vm4726, %v4811, %v4813
      %v4815 = vrot.slane %v4482, 1
      %v4816 = vsel %vm4726, %v4813, %v4815
      %v4817 = vrot.slane %v4483, 1
      %v4818 = vsel %vm4726, %v4815, %v4817
      %v4819 = vrot.slane %v4484, 1
      %v4820 = vsel %vm4726, %v4817, %v4819
      %v4821 = vrot.slane %v4485, 1
      %v4822 = vsel %vm4726, %v4819, %v4821
      %v4823 = vrot.slane %v4486, 1
      %v4824 = vsel %vm4726, %v4821, %v4823
      %v4825 = vrot.slane %v4487, 1
      %v4826 = vsel %vm4726, %v4823, %v4825
      %v4827 = vrot.slane %v4488, 1
      %v4828 = vsel %vm4726, %v4825, %v4827
      %v4829 = vrot.slane %v4489, 1
      %v4830 = vsel %vm4726, %v4827, %v4829
      %v4831 = vrot.slane %v4490, 1
      %v4832 = vsel %vm4726, %v4829, %v4831
      %v4833 = vrot.slane %v4491, 1
      %v4834 = vsel %vm4726, %v4831, %v4833
      %v4835 = vrot.slane %v4492, 1
      %v4836 = vsel %vm4726, %v4833, %v4835
      %v4837 = vrot.slane %v4493, 1
      %v4838 = vsel %vm4726, %v4835, %v4837
      %v4839 = vrot.slane %v4494, 1
      %v4840 = vsel %vm4726, %v4837, %v4839
      %v4841 = vrot.slane %v4495, 1
      %v4842 = vsel %vm4726, %v4839, %v4841
      %v4843 = vrot.slane %v4496, 1
      %v4844 = vsel %vm4726, %v4841, %v4843
      %v4845 = vrot.slane %v4497, 1
      %v4846 = vsel %vm4726, %v4843, %v4845
      %v4847 = vrot.slane %v4498, 1
      %v4848 = vsel %vm4726, %v4845, %v4847
      %v4849 = vrot.slane %v4499, 1
      %v4850 = vsel %vm4726, %v4847, %v4849
      %v4851 = vrot.slane %v4500, 1
      %v4852 = vsel %vm4726, %v4849, %v4851
      %v4853 = vrot.slane %v4501, 1
      %v4854 = vsel %vm4726, %v4851, %v4853
      %v4855 = vrot.slane %v4502, 1
      %v4856 = vsel %vm4726, %v4853, %v4855
      %v4857 = vrot.slane %v4503, 1
      %v4858 = vsel %vm4726, %v4855, %v4857
      %v4859 = vrot.slane %v4504, 1
      %v4860 = vsel %vm4726, %v4857, %v4859
      %v4861 = vrot.slane %v4505, 1
      %v4862 = vsel %vm4726, %v4859, %v4861
      %v4863 = vrot.slane %v4506, 1
      %v4864 = vsel %vm4726, %v4861, %v4863
      %v4865 = vrot.slane %v4510, 1
      %v4866 = vrot.slane %v4511, 1
      %v4867 = vsel %vm4726, %v4865, %v4866
      %v4868 = vrot.slane %v4512, 1
      %v4869 = vsel %vm4726, %v4866, %v4868
      %v4870 = vrot.slane %v4513, 1
      %v4871 = vsel %vm4726, %v4868, %v4870
      %v4872 = vrot.slane %v4514, 1
      %v4873 = vsel %vm4726, %v4870, %v4872
      %v4874 = vrot.slane %v4515, 1
      %v4875 = vsel %vm4726, %v4872, %v4874
      %v4876 = vrot.slane %v4516, 1
      %v4877 = vsel %vm4726, %v4874, %v4876
      %v4878 = vrot.slane %v4517, 1
      %v4879 = vsel %vm4726, %v4876, %v4878
      %v4880 = vrot.slane %v4518, 1
      %v4881 = vsel %vm4726, %v4878, %v4880
      %v4882 = vrot.slane %v4519, 1
      %v4883 = vsel %vm4726, %v4880, %v4882
      %v4884 = vrot.slane %v4520, 1
      %v4885 = vsel %vm4726, %v4882, %v4884
      %v4886 = vrot.slane %v4521, 1
      %v4887 = vsel %vm4726, %v4884, %v4886
      %v4888 = vrot.slane %v4522, 1
      %v4889 = vsel %vm4726, %v4886, %v4888
      %v4890 = vrot.slane %v4523, 1
      %v4891 = vsel %vm4726, %v4888, %v4890
      %v4892 = vrot.slane %v4524, 1
      %v4893 = vsel %vm4726, %v4890, %v4892
      %v4894 = vrot.slane %v4525, 1
      %v4895 = vsel %vm4726, %v4892, %v4894
      %v4896 = vrot.slane %v4526, 1
      %v4897 = vsel %vm4726, %v4894, %v4896
      %v4898 = vrot.slane %v4527, 1
      %v4899 = vsel %vm4726, %v4896, %v4898
      %v4900 = vrot.slane %v4528, 1
      %v4901 = vsel %vm4726, %v4898, %v4900
      %v4902 = vrot.slane %v4529, 1
      %v4903 = vsel %vm4726, %v4900, %v4902
      %v4904 = vrot.slane %v4530, 1
      %v4905 = vsel %vm4726, %v4902, %v4904
      %v4906 = vrot.slane %v4531, 1
      %v4907 = vsel %vm4726, %v4904, %v4906
      %v4908 = vrot.slane %v4532, 1
      %v4909 = vsel %vm4726, %v4906, %v4908
      %v4910 = vrot.slane %v4533, 1
      %v4911 = vsel %vm4726, %v4908, %v4910
      %v4912 = vrot.slane %v4534, 1
      %v4913 = vsel %vm4726, %v4910, %v4912
      %v4914 = vrot.slane %v4535, 1
      %v4915 = vsel %vm4726, %v4912, %v4914
      %v4916 = vrot.slane %v4536, 1
      %v4917 = vsel %vm4726, %v4914, %v4916
      %v4918 = vrot.slane %v4537, 1
      %v4919 = vsel %vm4726, %v4916, %v4918
      %v4920 = vrot.slane %v4538, 1
      %v4921 = vsel %vm4726, %v4918, %v4920
      %v4922 = vrot.slane %v4539, 1
      %v4923 = vsel %vm4726, %v4920, %v4922
      %v4924 = vrot.slane %v4540, 1
      %v4925 = vsel %vm4726, %v4922, %v4924
      %v4926 = vrot.slane %v4541, 1
      %v4927 = vsel %vm4726, %v4924, %v4926
      %v4928 = vrot.slane %v4542, 1
      %v4929 = vsel %vm4726, %v4926, %v4928
      %v4930 = vrot.slane %v4543, 1
      %v4931 = vsel %vm4726, %v4928, %v4930
      %v4932 = vrot.slane %v4544, 1
      %v4933 = vsel %vm4726, %v4930, %v4932
      %v4934 = vrot.slane %v4548, 1
      %v4935 = vrot.slane %v4549, 1
      %v4936 = vsel %vm4726, %v4934, %v4935
      %v4937 = vrot.slane %v4550, 1
      %v4938 = vsel %vm4726, %v4935, %v4937
      %v4939 = vrot.slane %v4551, 1
      %v4940 = vsel %vm4726, %v4937, %v4939
      %v4941 = vrot.slane %v4552, 1
      %v4942 = vsel %vm4726, %v4939, %v4941
      %v4943 = vrot.slane %v4553, 1
      %v4944 = vsel %vm4726, %v4941, %v4943
      %v4945 = vrot.slane %v4554, 1
      %v4946 = vsel %vm4726, %v4943, %v4945
      %v4947 = vrot.slane %v4555, 1
      %v4948 = vsel %vm4726, %v4945, %v4947
      %v4949 = vrot.slane %v4556, 1
      %v4950 = vsel %vm4726, %v4947, %v4949
      %v4951 = vrot.slane %v4557, 1
      %v4952 = vsel %vm4726, %v4949, %v4951
      %v4953 = vrot.slane %v4558, 1
      %v4954 = vsel %vm4726, %v4951, %v4953
      %v4955 = vrot.slane %v4559, 1
      %v4956 = vsel %vm4726, %v4953, %v4955
      %v4957 = vrot.slane %v4560, 1
      %v4958 = vsel %vm4726, %v4955, %v4957
      %v4959 = vrot.slane %v4561, 1
      %v4960 = vsel %vm4726, %v4957, %v4959
      %v4961 = vrot.slane %v4562, 1
      %v4962 = vsel %vm4726, %v4959, %v4961
      %v4963 = vrot.slane %v4563, 1
      %v4964 = vsel %vm4726, %v4961, %v4963
      %v4965 = vrot.slane %v4564, 1
      %v4966 = vsel %vm4726, %v4963, %v4965
      %v4967 = vrot.slane %v4565, 1
      %v4968 = vsel %vm4726, %v4965, %v4967
      %v4969 = vrot.slane %v4566, 1
      %v4970 = vsel %vm4726, %v4967, %v4969
      %v4971 = vrot.slane %v4567, 1
      %v4972 = vsel %vm4726, %v4969, %v4971
      %v4973 = vrot.slane %v4568, 1
      %v4974 = vsel %vm4726, %v4971, %v4973
      %v4975 = vrot.slane %v4569, 1
      %v4976 = vsel %vm4726, %v4973, %v4975
      %v4977 = vrot.slane %v4570, 1
      %v4978 = vsel %vm4726, %v4975, %v4977
      %v4979 = vrot.slane %v4571, 1
      %v4980 = vsel %vm4726, %v4977, %v4979
      %v4981 = vrot.slane %v4572, 1
      %v4982 = vsel %vm4726, %v4979, %v4981
      %v4983 = vrot.slane %v4573, 1
      %v4984 = vsel %vm4726, %v4981, %v4983
      %v4985 = vrot.slane %v4574, 1
      %v4986 = vsel %vm4726, %v4983, %v4985
      %v4987 = vrot.slane %v4575, 1
      %v4988 = vsel %vm4726, %v4985, %v4987
      %v4989 = vrot.slane %v4576, 1
      %v4990 = vsel %vm4726, %v4987, %v4989
      %v4991 = vrot.slane %v4577, 1
      %v4992 = vsel %vm4726, %v4989, %v4991
      %v4993 = vrot.slane %v4578, 1
      %v4994 = vsel %vm4726, %v4991, %v4993
      %v4995 = vrot.slane %v4579, 1
      %v4996 = vsel %vm4726, %v4993, %v4995
      %v4997 = vrot.slane %v4580, 1
      %v4998 = vsel %vm4726, %v4995, %v4997
      %v4999 = vrot.slane %v4581, 1
      %v5000 = vsel %vm4726, %v4997, %v4999
      %v5001 = vrot.slane %v4582, 1
      %v5002 = vsel %vm4726, %v4999, %v5001
      %v5139 = vmax.f32 %v4434, %v4729
      %v5140 = vmax.f32 %v4435, %v4731
      %v5141 = vmax.f32 %v4436, %v4733
      %v5142 = vmax.f32 %v4437, %v4735
      %v5143 = vmax.f32 %v4438, %v4737
      %v5144 = vmax.f32 %v4439, %v4739
      %v5145 = vmax.f32 %v4440, %v4741
      %v5146 = vmax.f32 %v4441, %v4743
      %v5147 = vmax.f32 %v4442, %v4745
      %v5148 = vmax.f32 %v4443, %v4747
      %v5149 = vmax.f32 %v4444, %v4749
      %v5150 = vmax.f32 %v4445, %v4751
      %v5151 = vmax.f32 %v4446, %v4753
      %v5152 = vmax.f32 %v4447, %v4755
      %v5153 = vmax.f32 %v4448, %v4757
      %v5154 = vmax.f32 %v4449, %v4759
      %v5155 = vmax.f32 %v4450, %v4761
      %v5156 = vmax.f32 %v4451, %v4763
      %v5157 = vmax.f32 %v4452, %v4765
      %v5158 = vmax.f32 %v4453, %v4767
      %v5159 = vmax.f32 %v4454, %v4769
      %v5160 = vmax.f32 %v4455, %v4771
      %v5161 = vmax.f32 %v4456, %v4773
      %v5162 = vmax.f32 %v4457, %v4775
      %v5163 = vmax.f32 %v4458, %v4777
      %v5164 = vmax.f32 %v4459, %v4779
      %v5165 = vmax.f32 %v4460, %v4781
      %v5166 = vmax.f32 %v4461, %v4783
      %v5167 = vmax.f32 %v4462, %v4785
      %v5168 = vmax.f32 %v4463, %v4787
      %v5169 = vmax.f32 %v4464, %v4789
      %v5170 = vmax.f32 %v4465, %v4791
      %v5171 = vmax.f32 %v4466, %v4793
      %v5172 = vmax.f32 %v4467, %v4795
      %v5173 = vmax.f32 %v4472, %v4798
      %v5174 = vmax.f32 %v4473, %v4800
      %v5175 = vmax.f32 %v4474, %v4802
      %v5176 = vmax.f32 %v4475, %v4804
      %v5177 = vmax.f32 %v4476, %v4806
      %v5178 = vmax.f32 %v4477, %v4808
      %v5179 = vmax.f32 %v4478, %v4810
      %v5180 = vmax.f32 %v4479, %v4812
      %v5181 = vmax.f32 %v4480, %v4814
      %v5182 = vmax.f32 %v4481, %v4816
      %v5183 = vmax.f32 %v4482, %v4818
      %v5184 = vmax.f32 %v4483, %v4820
      %v5185 = vmax.f32 %v4484, %v4822
      %v5186 = vmax.f32 %v4485, %v4824
      %v5187 = vmax.f32 %v4486, %v4826
      %v5188 = vmax.f32 %v4487, %v4828
      %v5189 = vmax.f32 %v4488, %v4830
      %v5190 = vmax.f32 %v4489, %v4832
      %v5191 = vmax.f32 %v4490, %v4834
      %v5192 = vmax.f32 %v4491, %v4836
      %v5193 = vmax.f32 %v4492, %v4838
      %v5194 = vmax.f32 %v4493, %v4840
      %v5195 = vmax.f32 %v4494, %v4842
      %v5196 = vmax.f32 %v4495, %v4844
      %v5197 = vmax.f32 %v4496, %v4846
      %v5198 = vmax.f32 %v4497, %v4848
      %v5199 = vmax.f32 %v4498, %v4850
      %v5200 = vmax.f32 %v4499, %v4852
      %v5201 = vmax.f32 %v4500, %v4854
      %v5202 = vmax.f32 %v4501, %v4856
      %v5203 = vmax.f32 %v4502, %v4858
      %v5204 = vmax.f32 %v4503, %v4860
      %v5205 = vmax.f32 %v4504, %v4862
      %v5206 = vmax.f32 %v4505, %v4864
      %v5207 = vmax.f32 %v4510, %v4867
      %v5208 = vmax.f32 %v4511, %v4869
      %v5209 = vmax.f32 %v4512, %v4871
      %v5210 = vmax.f32 %v4513, %v4873
      %v5211 = vmax.f32 %v4514, %v4875
      %v5212 = vmax.f32 %v4515, %v4877
      %v5213 = vmax.f32 %v4516, %v4879
      %v5214 = vmax.f32 %v4517, %v4881
      %v5215 = vmax.f32 %v4518, %v4883
      %v5216 = vmax.f32 %v4519, %v4885
      %v5217 = vmax.f32 %v4520, %v4887
      %v5218 = vmax.f32 %v4521, %v4889
      %v5219 = vmax.f32 %v4522, %v4891
      %v5220 = vmax.f32 %v4523, %v4893
      %v5221 = vmax.f32 %v4524, %v4895
      %v5222 = vmax.f32 %v4525, %v4897
      %v5223 = vmax.f32 %v4526, %v4899
      %v5224 = vmax.f32 %v4527, %v4901
      %v5225 = vmax.f32 %v4528, %v4903
      %v5226 = vmax.f32 %v4529, %v4905
      %v5227 = vmax.f32 %v4530, %v4907
      %v5228 = vmax.f32 %v4531, %v4909
      %v5229 = vmax.f32 %v4532, %v4911
      %v5230 = vmax.f32 %v4533, %v4913
      %v5231 = vmax.f32 %v4534, %v4915
      %v5232 = vmax.f32 %v4535, %v4917
      %v5233 = vmax.f32 %v4536, %v4919
      %v5234 = vmax.f32 %v4537, %v4921
      %v5235 = vmax.f32 %v4538, %v4923
      %v5236 = vmax.f32 %v4539, %v4925
      %v5237 = vmax.f32 %v4540, %v4927
      %v5238 = vmax.f32 %v4541, %v4929
      %v5239 = vmax.f32 %v4542, %v4931
      %v5240 = vmax.f32 %v4543, %v4933
      %v5241 = vmax.f32 %v4548, %v4936
      %v5242 = vmax.f32 %v4549, %v4938
      %v5243 = vmax.f32 %v4550, %v4940
      %v5244 = vmax.f32 %v4551, %v4942
      %v5245 = vmax.f32 %v4552, %v4944
      %v5246 = vmax.f32 %v4553, %v4946
      %v5247 = vmax.f32 %v4554, %v4948
      %v5248 = vmax.f32 %v4555, %v4950
      %v5249 = vmax.f32 %v4556, %v4952
      %v5250 = vmax.f32 %v4557, %v4954
      %v5251 = vmax.f32 %v4558, %v4956
      %v5252 = vmax.f32 %v4559, %v4958
      %v5253 = vmax.f32 %v4560, %v4960
      %v5254 = vmax.f32 %v4561, %v4962
      %v5255 = vmax.f32 %v4562, %v4964
      %v5256 = vmax.f32 %v4563, %v4966
      %v5257 = vmax.f32 %v4564, %v4968
      %v5258 = vmax.f32 %v4565, %v4970
      %v5259 = vmax.f32 %v4566, %v4972
      %v5260 = vmax.f32 %v4567, %v4974
      %v5261 = vmax.f32 %v4568, %v4976
      %v5262 = vmax.f32 %v4569, %v4978
      %v5263 = vmax.f32 %v4570, %v4980
      %v5264 = vmax.f32 %v4571, %v4982
      %v5265 = vmax.f32 %v4572, %v4984
      %v5266 = vmax.f32 %v4573, %v4986
      %v5267 = vmax.f32 %v4574, %v4988
      %v5268 = vmax.f32 %v4575, %v4990
      %v5269 = vmax.f32 %v4576, %v4992
      %v5270 = vmax.f32 %v4577, %v4994
      %v5271 = vmax.f32 %v4578, %v4996
      %v5272 = vmax.f32 %v4579, %v4998
      %v5273 = vmax.f32 %v4580, %v5000
      %v5274 = vmax.f32 %v4581, %v5002
      %v5287 = vrot.slane %v4469, 1
      %v5288 = vsel %vm4726, %v4794, %v5287
      %v5289 = vrot.slane %v4470, 1
      %v5290 = vsel %vm4726, %v5287, %v5289
      %v5291 = vrot.slane %v4471, 1
      %v5292 = vsel %vm4726, %v5289, %v5291
      %v5293 = vrot.slane %v4507, 1
      %v5294 = vsel %vm4726, %v4863, %v5293
      %v5295 = vrot.slane %v4508, 1
      %v5296 = vsel %vm4726, %v5293, %v5295
      %v5297 = vrot.slane %v4509, 1
      %v5298 = vsel %vm4726, %v5295, %v5297
      %v5299 = vrot.slane %v4545, 1
      %v5300 = vsel %vm4726, %v4932, %v5299
      %v5301 = vrot.slane %v4546, 1
      %v5302 = vsel %vm4726, %v5299, %v5301
      %v5303 = vrot.slane %v4547, 1
      %v5304 = vsel %vm4726, %v5301, %v5303
      %v5305 = vrot.slane %v4583, 1
      %v5306 = vsel %vm4726, %v5001, %v5305
      %v5307 = vrot.slane %v4584, 1
      %v5308 = vsel %vm4726, %v5305, %v5307
      %v5309 = vrot.slane %v4585, 1
      %v5310 = vsel %vm4726, %v5307, %v5309
      %v5323 = vmax.f32 %v4468, %v5288
      %v5324 = vmax.f32 %v4469, %v5290
      %v5325 = vmax.f32 %v4470, %v5292
      %v5326 = vmax.f32 %v4506, %v5294
      %v5327 = vmax.f32 %v4507, %v5296
      %v5328 = vmax.f32 %v4508, %v5298
      %v5329 = vmax.f32 %v4544, %v5300
      %v5330 = vmax.f32 %v4545, %v5302
      %v5331 = vmax.f32 %v4546, %v5304
      %v5332 = vmax.f32 %v4582, %v5306
      %v5333 = vmax.f32 %v4583, %v5308
      %v5334 = vmax.f32 %v4584, %v5310
      %vm5475 = vcmask 1045504
      %v5476 = vrot.slane %v5141, 2
      %v5477 = vrot.slane %v5142, 2
      %v5478 = vsel %vm5475, %v5476, %v5477
      %v5479 = vrot.slane %v5143, 2
      %v5480 = vsel %vm5475, %v5477, %v5479
      %v5481 = vrot.slane %v5144, 2
      %v5482 = vsel %vm5475, %v5479, %v5481
      %v5483 = vrot.slane %v5145, 2
      %v5484 = vsel %vm5475, %v5481, %v5483
      %v5485 = vrot.slane %v5146, 2
      %v5486 = vsel %vm5475, %v5483, %v5485
      %v5487 = vrot.slane %v5147, 2
      %v5488 = vsel %vm5475, %v5485, %v5487
      %v5489 = vrot.slane %v5148, 2
      %v5490 = vsel %vm5475, %v5487, %v5489
      %v5491 = vrot.slane %v5149, 2
      %v5492 = vsel %vm5475, %v5489, %v5491
      %v5493 = vrot.slane %v5150, 2
      %v5494 = vsel %vm5475, %v5491, %v5493
      %v5495 = vrot.slane %v5151, 2
      %v5496 = vsel %vm5475, %v5493, %v5495
      %v5497 = vrot.slane %v5152, 2
      %v5498 = vsel %vm5475, %v5495, %v5497
      %v5499 = vrot.slane %v5153, 2
      %v5500 = vsel %vm5475, %v5497, %v5499
      %v5501 = vrot.slane %v5154, 2
      %v5502 = vsel %vm5475, %v5499, %v5501
      %v5503 = vrot.slane %v5155, 2
      %v5504 = vsel %vm5475, %v5501, %v5503
      %v5505 = vrot.slane %v5156, 2
      %v5506 = vsel %vm5475, %v5503, %v5505
      %v5507 = vrot.slane %v5157, 2
      %v5508 = vsel %vm5475, %v5505, %v5507
      %v5509 = vrot.slane %v5158, 2
      %v5510 = vsel %vm5475, %v5507, %v5509
      %v5511 = vrot.slane %v5159, 2
      %v5512 = vsel %vm5475, %v5509, %v5511
      %v5513 = vrot.slane %v5160, 2
      %v5514 = vsel %vm5475, %v5511, %v5513
      %v5515 = vrot.slane %v5161, 2
      %v5516 = vsel %vm5475, %v5513, %v5515
      %v5517 = vrot.slane %v5162, 2
      %v5518 = vsel %vm5475, %v5515, %v5517
      %v5519 = vrot.slane %v5163, 2
      %v5520 = vsel %vm5475, %v5517, %v5519
      %v5521 = vrot.slane %v5164, 2
      %v5522 = vsel %vm5475, %v5519, %v5521
      %v5523 = vrot.slane %v5165, 2
      %v5524 = vsel %vm5475, %v5521, %v5523
      %v5525 = vrot.slane %v5166, 2
      %v5526 = vsel %vm5475, %v5523, %v5525
      %v5527 = vrot.slane %v5167, 2
      %v5528 = vsel %vm5475, %v5525, %v5527
      %v5529 = vrot.slane %v5168, 2
      %v5530 = vsel %vm5475, %v5527, %v5529
      %v5531 = vrot.slane %v5169, 2
      %v5532 = vsel %vm5475, %v5529, %v5531
      %v5533 = vrot.slane %v5170, 2
      %v5534 = vsel %vm5475, %v5531, %v5533
      %v5535 = vrot.slane %v5171, 2
      %v5536 = vsel %vm5475, %v5533, %v5535
      %v5537 = vrot.slane %v5172, 2
      %v5538 = vsel %vm5475, %v5535, %v5537
      %v5539 = vrot.slane %v5323, 2
      %v5540 = vsel %vm5475, %v5537, %v5539
      %v5541 = vrot.slane %v5324, 2
      %v5542 = vsel %vm5475, %v5539, %v5541
      %v5543 = vrot.slane %v5325, 2
      %v5544 = vsel %vm5475, %v5541, %v5543
      %v5545 = vrot.slane %v5175, 2
      %v5546 = vrot.slane %v5176, 2
      %v5547 = vsel %vm5475, %v5545, %v5546
      %v5548 = vrot.slane %v5177, 2
      %v5549 = vsel %vm5475, %v5546, %v5548
      %v5550 = vrot.slane %v5178, 2
      %v5551 = vsel %vm5475, %v5548, %v5550
      %v5552 = vrot.slane %v5179, 2
      %v5553 = vsel %vm5475, %v5550, %v5552
      %v5554 = vrot.slane %v5180, 2
      %v5555 = vsel %vm5475, %v5552, %v5554
      %v5556 = vrot.slane %v5181, 2
      %v5557 = vsel %vm5475, %v5554, %v5556
      %v5558 = vrot.slane %v5182, 2
      %v5559 = vsel %vm5475, %v5556, %v5558
      %v5560 = vrot.slane %v5183, 2
      %v5561 = vsel %vm5475, %v5558, %v5560
      %v5562 = vrot.slane %v5184, 2
      %v5563 = vsel %vm5475, %v5560, %v5562
      %v5564 = vrot.slane %v5185, 2
      %v5565 = vsel %vm5475, %v5562, %v5564
      %v5566 = vrot.slane %v5186, 2
      %v5567 = vsel %vm5475, %v5564, %v5566
      %v5568 = vrot.slane %v5187, 2
      %v5569 = vsel %vm5475, %v5566, %v5568
      %v5570 = vrot.slane %v5188, 2
      %v5571 = vsel %vm5475, %v5568, %v5570
      %v5572 = vrot.slane %v5189, 2
      %v5573 = vsel %vm5475, %v5570, %v5572
      %v5574 = vrot.slane %v5190, 2
      %v5575 = vsel %vm5475, %v5572, %v5574
      %v5576 = vrot.slane %v5191, 2
      %v5577 = vsel %vm5475, %v5574, %v5576
      %v5578 = vrot.slane %v5192, 2
      %v5579 = vsel %vm5475, %v5576, %v5578
      %v5580 = vrot.slane %v5193, 2
      %v5581 = vsel %vm5475, %v5578, %v5580
      %v5582 = vrot.slane %v5194, 2
      %v5583 = vsel %vm5475, %v5580, %v5582
      %v5584 = vrot.slane %v5195, 2
      %v5585 = vsel %vm5475, %v5582, %v5584
      %v5586 = vrot.slane %v5196, 2
      %v5587 = vsel %vm5475, %v5584, %v5586
      %v5588 = vrot.slane %v5197, 2
      %v5589 = vsel %vm5475, %v5586, %v5588
      %v5590 = vrot.slane %v5198, 2
      %v5591 = vsel %vm5475, %v5588, %v5590
      %v5592 = vrot.slane %v5199, 2
      %v5593 = vsel %vm5475, %v5590, %v5592
      %v5594 = vrot.slane %v5200, 2
      %v5595 = vsel %vm5475, %v5592, %v5594
      %v5596 = vrot.slane %v5201, 2
      %v5597 = vsel %vm5475, %v5594, %v5596
      %v5598 = vrot.slane %v5202, 2
      %v5599 = vsel %vm5475, %v5596, %v5598
      %v5600 = vrot.slane %v5203, 2
      %v5601 = vsel %vm5475, %v5598, %v5600
      %v5602 = vrot.slane %v5204, 2
      %v5603 = vsel %vm5475, %v5600, %v5602
      %v5604 = vrot.slane %v5205, 2
      %v5605 = vsel %vm5475, %v5602, %v5604
      %v5606 = vrot.slane %v5206, 2
      %v5607 = vsel %vm5475, %v5604, %v5606
      %v5608 = vrot.slane %v5326, 2
      %v5609 = vsel %vm5475, %v5606, %v5608
      %v5610 = vrot.slane %v5327, 2
      %v5611 = vsel %vm5475, %v5608, %v5610
      %v5612 = vrot.slane %v5328, 2
      %v5613 = vsel %vm5475, %v5610, %v5612
      %v5614 = vrot.slane %v5209, 2
      %v5615 = vrot.slane %v5210, 2
      %v5616 = vsel %vm5475, %v5614, %v5615
      %v5617 = vrot.slane %v5211, 2
      %v5618 = vsel %vm5475, %v5615, %v5617
      %v5619 = vrot.slane %v5212, 2
      %v5620 = vsel %vm5475, %v5617, %v5619
      %v5621 = vrot.slane %v5213, 2
      %v5622 = vsel %vm5475, %v5619, %v5621
      %v5623 = vrot.slane %v5214, 2
      %v5624 = vsel %vm5475, %v5621, %v5623
      %v5625 = vrot.slane %v5215, 2
      %v5626 = vsel %vm5475, %v5623, %v5625
      %v5627 = vrot.slane %v5216, 2
      %v5628 = vsel %vm5475, %v5625, %v5627
      %v5629 = vrot.slane %v5217, 2
      %v5630 = vsel %vm5475, %v5627, %v5629
      %v5631 = vrot.slane %v5218, 2
      %v5632 = vsel %vm5475, %v5629, %v5631
      %v5633 = vrot.slane %v5219, 2
      %v5634 = vsel %vm5475, %v5631, %v5633
      %v5635 = vrot.slane %v5220, 2
      %v5636 = vsel %vm5475, %v5633, %v5635
      %v5637 = vrot.slane %v5221, 2
      %v5638 = vsel %vm5475, %v5635, %v5637
      %v5639 = vrot.slane %v5222, 2
      %v5640 = vsel %vm5475, %v5637, %v5639
      %v5641 = vrot.slane %v5223, 2
      %v5642 = vsel %vm5475, %v5639, %v5641
      %v5643 = vrot.slane %v5224, 2
      %v5644 = vsel %vm5475, %v5641, %v5643
      %v5645 = vrot.slane %v5225, 2
      %v5646 = vsel %vm5475, %v5643, %v5645
      %v5647 = vrot.slane %v5226, 2
      %v5648 = vsel %vm5475, %v5645, %v5647
      %v5649 = vrot.slane %v5227, 2
      %v5650 = vsel %vm5475, %v5647, %v5649
      %v5651 = vrot.slane %v5228, 2
      %v5652 = vsel %vm5475, %v5649, %v5651
      %v5653 = vrot.slane %v5229, 2
      %v5654 = vsel %vm5475, %v5651, %v5653
      %v5655 = vrot.slane %v5230, 2
      %v5656 = vsel %vm5475, %v5653, %v5655
      %v5657 = vrot.slane %v5231, 2
      %v5658 = vsel %vm5475, %v5655, %v5657
      %v5659 = vrot.slane %v5232, 2
      %v5660 = vsel %vm5475, %v5657, %v5659
      %v5661 = vrot.slane %v5233, 2
      %v5662 = vsel %vm5475, %v5659, %v5661
      %v5663 = vrot.slane %v5234, 2
      %v5664 = vsel %vm5475, %v5661, %v5663
      %v5665 = vrot.slane %v5235, 2
      %v5666 = vsel %vm5475, %v5663, %v5665
      %v5667 = vrot.slane %v5236, 2
      %v5668 = vsel %vm5475, %v5665, %v5667
      %v5669 = vrot.slane %v5237, 2
      %v5670 = vsel %vm5475, %v5667, %v5669
      %v5671 = vrot.slane %v5238, 2
      %v5672 = vsel %vm5475, %v5669, %v5671
      %v5673 = vrot.slane %v5239, 2
      %v5674 = vsel %vm5475, %v5671, %v5673
      %v5675 = vrot.slane %v5240, 2
      %v5676 = vsel %vm5475, %v5673, %v5675
      %v5677 = vrot.slane %v5329, 2
      %v5678 = vsel %vm5475, %v5675, %v5677
      %v5679 = vrot.slane %v5330, 2
      %v5680 = vsel %vm5475, %v5677, %v5679
      %v5681 = vrot.slane %v5331, 2
      %v5682 = vsel %vm5475, %v5679, %v5681
      %v5683 = vrot.slane %v5243, 2
      %v5684 = vrot.slane %v5244, 2
      %v5685 = vsel %vm5475, %v5683, %v5684
      %v5686 = vrot.slane %v5245, 2
      %v5687 = vsel %vm5475, %v5684, %v5686
      %v5688 = vrot.slane %v5246, 2
      %v5689 = vsel %vm5475, %v5686, %v5688
      %v5690 = vrot.slane %v5247, 2
      %v5691 = vsel %vm5475, %v5688, %v5690
      %v5692 = vrot.slane %v5248, 2
      %v5693 = vsel %vm5475, %v5690, %v5692
      %v5694 = vrot.slane %v5249, 2
      %v5695 = vsel %vm5475, %v5692, %v5694
      %v5696 = vrot.slane %v5250, 2
      %v5697 = vsel %vm5475, %v5694, %v5696
      %v5698 = vrot.slane %v5251, 2
      %v5699 = vsel %vm5475, %v5696, %v5698
      %v5700 = vrot.slane %v5252, 2
      %v5701 = vsel %vm5475, %v5698, %v5700
      %v5702 = vrot.slane %v5253, 2
      %v5703 = vsel %vm5475, %v5700, %v5702
      %v5704 = vrot.slane %v5254, 2
      %v5705 = vsel %vm5475, %v5702, %v5704
      %v5706 = vrot.slane %v5255, 2
      %v5707 = vsel %vm5475, %v5704, %v5706
      %v5708 = vrot.slane %v5256, 2
      %v5709 = vsel %vm5475, %v5706, %v5708
      %v5710 = vrot.slane %v5257, 2
      %v5711 = vsel %vm5475, %v5708, %v5710
      %v5712 = vrot.slane %v5258, 2
      %v5713 = vsel %vm5475, %v5710, %v5712
      %v5714 = vrot.slane %v5259, 2
      %v5715 = vsel %vm5475, %v5712, %v5714
      %v5716 = vrot.slane %v5260, 2
      %v5717 = vsel %vm5475, %v5714, %v5716
      %v5718 = vrot.slane %v5261, 2
      %v5719 = vsel %vm5475, %v5716, %v5718
      %v5720 = vrot.slane %v5262, 2
      %v5721 = vsel %vm5475, %v5718, %v5720
      %v5722 = vrot.slane %v5263, 2
      %v5723 = vsel %vm5475, %v5720, %v5722
      %v5724 = vrot.slane %v5264, 2
      %v5725 = vsel %vm5475, %v5722, %v5724
      %v5726 = vrot.slane %v5265, 2
      %v5727 = vsel %vm5475, %v5724, %v5726
      %v5728 = vrot.slane %v5266, 2
      %v5729 = vsel %vm5475, %v5726, %v5728
      %v5730 = vrot.slane %v5267, 2
      %v5731 = vsel %vm5475, %v5728, %v5730
      %v5732 = vrot.slane %v5268, 2
      %v5733 = vsel %vm5475, %v5730, %v5732
      %v5734 = vrot.slane %v5269, 2
      %v5735 = vsel %vm5475, %v5732, %v5734
      %v5736 = vrot.slane %v5270, 2
      %v5737 = vsel %vm5475, %v5734, %v5736
      %v5738 = vrot.slane %v5271, 2
      %v5739 = vsel %vm5475, %v5736, %v5738
      %v5740 = vrot.slane %v5272, 2
      %v5741 = vsel %vm5475, %v5738, %v5740
      %v5742 = vrot.slane %v5273, 2
      %v5743 = vsel %vm5475, %v5740, %v5742
      %v5744 = vrot.slane %v5274, 2
      %v5745 = vsel %vm5475, %v5742, %v5744
      %v5746 = vrot.slane %v5332, 2
      %v5747 = vsel %vm5475, %v5744, %v5746
      %v5748 = vrot.slane %v5333, 2
      %v5749 = vsel %vm5475, %v5746, %v5748
      %v5750 = vrot.slane %v5334, 2
      %v5751 = vsel %vm5475, %v5748, %v5750
      %v5888 = vmax.f32 %v5139, %v5478
      %v5889 = vmax.f32 %v5140, %v5480
      %v5890 = vmax.f32 %v5141, %v5482
      %v5891 = vmax.f32 %v5142, %v5484
      %v5892 = vmax.f32 %v5143, %v5486
      %v5893 = vmax.f32 %v5144, %v5488
      %v5894 = vmax.f32 %v5145, %v5490
      %v5895 = vmax.f32 %v5146, %v5492
      %v5896 = vmax.f32 %v5147, %v5494
      %v5897 = vmax.f32 %v5148, %v5496
      %v5898 = vmax.f32 %v5149, %v5498
      %v5899 = vmax.f32 %v5150, %v5500
      %v5900 = vmax.f32 %v5151, %v5502
      %v5901 = vmax.f32 %v5152, %v5504
      %v5902 = vmax.f32 %v5153, %v5506
      %v5903 = vmax.f32 %v5154, %v5508
      %v5904 = vmax.f32 %v5155, %v5510
      %v5905 = vmax.f32 %v5156, %v5512
      %v5906 = vmax.f32 %v5157, %v5514
      %v5907 = vmax.f32 %v5158, %v5516
      %v5908 = vmax.f32 %v5159, %v5518
      %v5909 = vmax.f32 %v5160, %v5520
      %v5910 = vmax.f32 %v5161, %v5522
      %v5911 = vmax.f32 %v5162, %v5524
      %v5912 = vmax.f32 %v5163, %v5526
      %v5913 = vmax.f32 %v5164, %v5528
      %v5914 = vmax.f32 %v5165, %v5530
      %v5915 = vmax.f32 %v5166, %v5532
      %v5916 = vmax.f32 %v5167, %v5534
      %v5917 = vmax.f32 %v5168, %v5536
      %v5918 = vmax.f32 %v5169, %v5538
      %v5919 = vmax.f32 %v5170, %v5540
      %v5920 = vmax.f32 %v5171, %v5542
      %v5921 = vmax.f32 %v5172, %v5544
      %v5922 = vmax.f32 %v5173, %v5547
      %v5923 = vmax.f32 %v5174, %v5549
      %v5924 = vmax.f32 %v5175, %v5551
      %v5925 = vmax.f32 %v5176, %v5553
      %v5926 = vmax.f32 %v5177, %v5555
      %v5927 = vmax.f32 %v5178, %v5557
      %v5928 = vmax.f32 %v5179, %v5559
      %v5929 = vmax.f32 %v5180, %v5561
      %v5930 = vmax.f32 %v5181, %v5563
      %v5931 = vmax.f32 %v5182, %v5565
      %v5932 = vmax.f32 %v5183, %v5567
      %v5933 = vmax.f32 %v5184, %v5569
      %v5934 = vmax.f32 %v5185, %v5571
      %v5935 = vmax.f32 %v5186, %v5573
      %v5936 = vmax.f32 %v5187, %v5575
      %v5937 = vmax.f32 %v5188, %v5577
      %v5938 = vmax.f32 %v5189, %v5579
      %v5939 = vmax.f32 %v5190, %v5581
      %v5940 = vmax.f32 %v5191, %v5583
      %v5941 = vmax.f32 %v5192, %v5585
      %v5942 = vmax.f32 %v5193, %v5587
      %v5943 = vmax.f32 %v5194, %v5589
      %v5944 = vmax.f32 %v5195, %v5591
      %v5945 = vmax.f32 %v5196, %v5593
      %v5946 = vmax.f32 %v5197, %v5595
      %v5947 = vmax.f32 %v5198, %v5597
      %v5948 = vmax.f32 %v5199, %v5599
      %v5949 = vmax.f32 %v5200, %v5601
      %v5950 = vmax.f32 %v5201, %v5603
      %v5951 = vmax.f32 %v5202, %v5605
      %v5952 = vmax.f32 %v5203, %v5607
      %v5953 = vmax.f32 %v5204, %v5609
      %v5954 = vmax.f32 %v5205, %v5611
      %v5955 = vmax.f32 %v5206, %v5613
      %v5956 = vmax.f32 %v5207, %v5616
      %v5957 = vmax.f32 %v5208, %v5618
      %v5958 = vmax.f32 %v5209, %v5620
      %v5959 = vmax.f32 %v5210, %v5622
      %v5960 = vmax.f32 %v5211, %v5624
      %v5961 = vmax.f32 %v5212, %v5626
      %v5962 = vmax.f32 %v5213, %v5628
      %v5963 = vmax.f32 %v5214, %v5630
      %v5964 = vmax.f32 %v5215, %v5632
      %v5965 = vmax.f32 %v5216, %v5634
      %v5966 = vmax.f32 %v5217, %v5636
      %v5967 = vmax.f32 %v5218, %v5638
      %v5968 = vmax.f32 %v5219, %v5640
      %v5969 = vmax.f32 %v5220, %v5642
      %v5970 = vmax.f32 %v5221, %v5644
      %v5971 = vmax.f32 %v5222, %v5646
      %v5972 = vmax.f32 %v5223, %v5648
      %v5973 = vmax.f32 %v5224, %v5650
      %v5974 = vmax.f32 %v5225, %v5652
      %v5975 = vmax.f32 %v5226, %v5654
      %v5976 = vmax.f32 %v5227, %v5656
      %v5977 = vmax.f32 %v5228, %v5658
      %v5978 = vmax.f32 %v5229, %v5660
      %v5979 = vmax.f32 %v5230, %v5662
      %v5980 = vmax.f32 %v5231, %v5664
      %v5981 = vmax.f32 %v5232, %v5666
      %v5982 = vmax.f32 %v5233, %v5668
      %v5983 = vmax.f32 %v5234, %v5670
      %v5984 = vmax.f32 %v5235, %v5672
      %v5985 = vmax.f32 %v5236, %v5674
      %v5986 = vmax.f32 %v5237, %v5676
      %v5987 = vmax.f32 %v5238, %v5678
      %v5988 = vmax.f32 %v5239, %v5680
      %v5989 = vmax.f32 %v5240, %v5682
      %v5990 = vmax.f32 %v5241, %v5685
      %v5991 = vmax.f32 %v5242, %v5687
      %v5992 = vmax.f32 %v5243, %v5689
      %v5993 = vmax.f32 %v5244, %v5691
      %v5994 = vmax.f32 %v5245, %v5693
      %v5995 = vmax.f32 %v5246, %v5695
      %v5996 = vmax.f32 %v5247, %v5697
      %v5997 = vmax.f32 %v5248, %v5699
      %v5998 = vmax.f32 %v5249, %v5701
      %v5999 = vmax.f32 %v5250, %v5703
      %v6000 = vmax.f32 %v5251, %v5705
      %v6001 = vmax.f32 %v5252, %v5707
      %v6002 = vmax.f32 %v5253, %v5709
      %v6003 = vmax.f32 %v5254, %v5711
      %v6004 = vmax.f32 %v5255, %v5713
      %v6005 = vmax.f32 %v5256, %v5715
      %v6006 = vmax.f32 %v5257, %v5717
      %v6007 = vmax.f32 %v5258, %v5719
      %v6008 = vmax.f32 %v5259, %v5721
      %v6009 = vmax.f32 %v5260, %v5723
      %v6010 = vmax.f32 %v5261, %v5725
      %v6011 = vmax.f32 %v5262, %v5727
      %v6012 = vmax.f32 %v5263, %v5729
      %v6013 = vmax.f32 %v5264, %v5731
      %v6014 = vmax.f32 %v5265, %v5733
      %v6015 = vmax.f32 %v5266, %v5735
      %v6016 = vmax.f32 %v5267, %v5737
      %v6017 = vmax.f32 %v5268, %v5739
      %v6018 = vmax.f32 %v5269, %v5741
      %v6019 = vmax.f32 %v5270, %v5743
      %v6020 = vmax.f32 %v5271, %v5745
      %v6021 = vmax.f32 %v5272, %v5747
      %v6022 = vmax.f32 %v5273, %v5749
      %v6023 = vmax.f32 %v5274, %v5751
      %v6024 = vld [vmem:[%s3] sm:$0xff]
      %v6025 = vld [vmem:[%s3 + $0x8] sm:$0xff]
      %v6026 = vld [vmem:[%s3 + $0x10] sm:$0xff]
      %v6027 = vld [vmem:[%s3 + $0x18] sm:$0xff]
      %v6028 = vld [vmem:[%s3 + $0x20] sm:$0xff]
      %v6029 = vld [vmem:[%s3 + $0x28] sm:$0xff]
      %v6030 = vld [vmem:[%s3 + $0x30] sm:$0xff]
      %v6031 = vld [vmem:[%s3 + $0x38] sm:$0xff]
      %v6032 = vld [vmem:[%s3 + $0x40] sm:$0xff]
      %v6033 = vld [vmem:[%s3 + $0x48] sm:$0xff]
      %v6034 = vld [vmem:[%s3 + $0x50] sm:$0xff]
      %v6035 = vld [vmem:[%s3 + $0x58] sm:$0xff]
      %v6036 = vld [vmem:[%s3 + $0x60] sm:$0xff]
      %v6037 = vld [vmem:[%s3 + $0x68] sm:$0xff]
      %v6038 = vld [vmem:[%s3 + $0x70] sm:$0xff]
      %v6039 = vld [vmem:[%s3 + $0x78] sm:$0xff]
      %v6040 = vld [vmem:[%s3 + $0x80] sm:$0xff]
      %v6041 = vld [vmem:[%s3 + $0x88] sm:$0xff]
      %v6042 = vld [vmem:[%s3 + $0x90] sm:$0xff]
      %v6043 = vld [vmem:[%s3 + $0x98] sm:$0xff]
      %v6044 = vld [vmem:[%s3 + $0xa0] sm:$0xff]
      %v6045 = vld [vmem:[%s3 + $0xa8] sm:$0xff]
      %v6046 = vld [vmem:[%s3 + $0xb0] sm:$0xff]
      %v6047 = vld [vmem:[%s3 + $0xb8] sm:$0xff]
      %v6048 = vld [vmem:[%s3 + $0xc0] sm:$0xff]
      %v6049 = vld [vmem:[%s3 + $0xc8] sm:$0xff]
      %v6050 = vld [vmem:[%s3 + $0xd0] sm:$0xff]
      %v6051 = vld [vmem:[%s3 + $0xd8] sm:$0xff]
      %v6052 = vld [vmem:[%s3 + $0xe0] sm:$0xff]
      %v6053 = vld [vmem:[%s3 + $0xe8] sm:$0xff]
      %v6054 = vld [vmem:[%s3 + $0xf0] sm:$0xff]
      %v6055 = vld [vmem:[%s3 + $0xf8] sm:$0xff]
      %v6056 = vld [vmem:[%s3 + $0x100] sm:$0xff]
      %v6057 = vld [vmem:[%s3 + $0x108] sm:$0xff]
      %v6058 = vld [vmem:[%s3 + $0x110] sm:$0xff]
      %v6059 = vld [vmem:[%s3 + $0x118] sm:$0xff]
      %v6060 = vld [vmem:[%s3 + $0x120] sm:$0xff]
      %v6061 = vld [vmem:[%s3 + $0x128] sm:$0xff]
      %v6062 = vld [vmem:[%s3 + $0x130] sm:$0xff]
      %vm6063 = vcmask 130048
      %v6065 = vsel %vm6063, %v6026, 0
      %v6068 = vsel %vm6063, %v6029, 0
      %v6071 = vsel %vm6063, %v6032, 0
      %v6074 = vsel %vm6063, %v6035, 0
      %v6077 = vsel %vm6063, %v6038, 0
      %v6080 = vsel %vm6063, %v6041, 0
      %v6083 = vsel %vm6063, %v6044, 0
      %v6086 = vsel %vm6063, %v6047, 0
      %v6089 = vsel %vm6063, %v6050, 0
      %v6092 = vsel %vm6063, %v6053, 0
      %v6095 = vsel %vm6063, %v6056, 0
      %v6098 = vsel %vm6063, %v6059, 0
      %v6101 = vsel %vm6063, %v6062, 0
      %6103 = vmatpush.msra.mxu0 %v5903
      %6104 = vmatpush.msra.mxu0 %v5902
      %6105 = vmatpush.msra.mxu0 %v5901
      %6106 = vmatpush.msra.mxu0 %v5900
      %6107 = vmatpush.msra.mxu0 %v5899
      %6108 = vmatpush.msra.mxu0 %v5898
      %6109 = vmatpush.msra.mxu0 %v5897
      %6110 = vmatpush.msra.mxu0 %v5896
      %6111 = vmatpush.msra.mxu0 %v5895
      %6112 = vmatpush.msra.mxu0 %v5894
      %6113 = vmatpush.msra.mxu0 %v5893
      %6114 = vmatpush.msra.mxu0 %v5892
      %6115 = vmatpush.msra.mxu0 %v5891
      %6116 = vmatpush.msra.mxu0 %v5890
      %6117 = vmatpush.msra.mxu0 %v5889
      %6118 = vmatpush.msra.mxu0 %v5888
      %6119 = vmatmul.f32.gmra.mxu0 %v6024
      %v6120 = vpop.f32.mrf.mxu0
      %v6121 = vadd.f32 0.0, %v6120
      %6122 = vmatmul.f32.gmra.mxu0 %v6027
      %v6123 = vpop.f32.mrf.mxu0
      %v6124 = vadd.f32 0.0, %v6123
      %6125 = vmatmul.f32.gmra.mxu0 %v6030
      %v6126 = vpop.f32.mrf.mxu0
      %v6127 = vadd.f32 0.0, %v6126
      %6128 = vmatmul.f32.gmra.mxu0 %v6033
      %v6129 = vpop.f32.mrf.mxu0
      %v6130 = vadd.f32 0.0, %v6129
      %6131 = vmatmul.f32.gmra.mxu0 %v6036
      %v6132 = vpop.f32.mrf.mxu0
      %v6133 = vadd.f32 0.0, %v6132
      %6134 = vmatmul.f32.gmra.mxu0 %v6039
      %v6135 = vpop.f32.mrf.mxu0
      %v6136 = vadd.f32 0.0, %v6135
      %6137 = vmatmul.f32.gmra.mxu0 %v6042
      %v6138 = vpop.f32.mrf.mxu0
      %v6139 = vadd.f32 0.0, %v6138
      %6140 = vmatmul.f32.gmra.mxu0 %v6045
      %v6141 = vpop.f32.mrf.mxu0
      %v6142 = vadd.f32 0.0, %v6141
      %6143 = vmatmul.f32.gmra.mxu0 %v6048
      %v6144 = vpop.f32.mrf.mxu0
      %v6145 = vadd.f32 0.0, %v6144
      %6146 = vmatmul.f32.gmra.mxu0 %v6051
      %v6147 = vpop.f32.mrf.mxu0
      %v6148 = vadd.f32 0.0, %v6147
      %6149 = vmatmul.f32.gmra.mxu0 %v6054
      %v6150 = vpop.f32.mrf.mxu0
      %v6151 = vadd.f32 0.0, %v6150
      %6152 = vmatmul.f32.gmra.mxu0 %v6057
      %v6153 = vpop.f32.mrf.mxu0
      %v6154 = vadd.f32 0.0, %v6153
      %6155 = vmatmul.f32.gmra.mxu0 %v6060
      %v6156 = vpop.f32.mrf.mxu0
      %v6157 = vadd.f32 0.0, %v6156
      %6158 = vdwg.mxu0
      %6159 = vmatpush.msra.mxu0 %v5919
      %6160 = vmatpush.msra.mxu0 %v5918
      %6161 = vmatpush.msra.mxu0 %v5917
      %6162 = vmatpush.msra.mxu0 %v5916
      %6163 = vmatpush.msra.mxu0 %v5915
      %6164 = vmatpush.msra.mxu0 %v5914
      %6165 = vmatpush.msra.mxu0 %v5913
      %6166 = vmatpush.msra.mxu0 %v5912
      %6167 = vmatpush.msra.mxu0 %v5911
      %6168 = vmatpush.msra.mxu0 %v5910
      %6169 = vmatpush.msra.mxu0 %v5909
      %6170 = vmatpush.msra.mxu0 %v5908
      %6171 = vmatpush.msra.mxu0 %v5907
      %6172 = vmatpush.msra.mxu0 %v5906
      %6173 = vmatpush.msra.mxu0 %v5905
      %6174 = vmatpush.msra.mxu0 %v5904
      %6175 = vmatmul.f32.gmra.mxu0 %v6025
      %v6176 = vpop.f32.mrf.mxu0
      %v6177 = vadd.f32 %v6121, %v6176
      %6178 = vmatmul.f32.gmra.mxu0 %v6028
      %v6179 = vpop.f32.mrf.mxu0
      %v6180 = vadd.f32 %v6124, %v6179
      %6181 = vmatmul.f32.gmra.mxu0 %v6031
      %v6182 = vpop.f32.mrf.mxu0
      %v6183 = vadd.f32 %v6127, %v6182
      %6184 = vmatmul.f32.gmra.mxu0 %v6034
      %v6185 = vpop.f32.mrf.mxu0
      %v6186 = vadd.f32 %v6130, %v6185
      %6187 = vmatmul.f32.gmra.mxu0 %v6037
      %v6188 = vpop.f32.mrf.mxu0
      %v6189 = vadd.f32 %v6133, %v6188
      %6190 = vmatmul.f32.gmra.mxu0 %v6040
      %v6191 = vpop.f32.mrf.mxu0
      %v6192 = vadd.f32 %v6136, %v6191
      %6193 = vmatmul.f32.gmra.mxu0 %v6043
      %v6194 = vpop.f32.mrf.mxu0
      %v6195 = vadd.f32 %v6139, %v6194
      %6196 = vmatmul.f32.gmra.mxu0 %v6046
      %v6197 = vpop.f32.mrf.mxu0
      %v6198 = vadd.f32 %v6142, %v6197
      %6199 = vmatmul.f32.gmra.mxu0 %v6049
      %v6200 = vpop.f32.mrf.mxu0
      %v6201 = vadd.f32 %v6145, %v6200
      %6202 = vmatmul.f32.gmra.mxu0 %v6052
      %v6203 = vpop.f32.mrf.mxu0
      %v6204 = vadd.f32 %v6148, %v6203
      %6205 = vmatmul.f32.gmra.mxu0 %v6055
      %v6206 = vpop.f32.mrf.mxu0
      %v6207 = vadd.f32 %v6151, %v6206
      %6208 = vmatmul.f32.gmra.mxu0 %v6058
      %v6209 = vpop.f32.mrf.mxu0
      %v6210 = vadd.f32 %v6154, %v6209
      %6211 = vmatmul.f32.gmra.mxu0 %v6061
      %v6212 = vpop.f32.mrf.mxu0
      %v6213 = vadd.f32 %v6157, %v6212
      %6214 = vdwg.mxu0
      %6215 = vmatpush.msra.mxu0 0.0
      %6216 = vmatpush.msra.mxu0 0.0
      %6217 = vmatpush.msra.mxu0 0.0
      %6218 = vmatpush.msra.mxu0 0.0
      %6219 = vmatpush.msra.mxu0 0.0
      %6220 = vmatpush.msra.mxu0 0.0
      %6221 = vmatpush.msra.mxu0 0.0
      %6222 = vmatpush.msra.mxu0 0.0
      %6223 = vmatpush.msra.mxu0 0.0
      %6224 = vmatpush.msra.mxu0 0.0
      %6225 = vmatpush.msra.mxu0 0.0
      %6226 = vmatpush.msra.mxu0 0.0
      %6227 = vmatpush.msra.mxu0 0.0
      %6228 = vmatpush.msra.mxu0 0.0
      %6229 = vmatpush.msra.mxu0 %v5921
      %6230 = vmatpush.msra.mxu0 %v5920
      %6231 = vmatmul.f32.gmra.mxu0 %v6065
      %v6232 = vpop.f32.mrf.mxu0
      %v6233 = vadd.f32 %v6177, %v6232
      %6234 = vmatmul.f32.gmra.mxu0 %v6068
      %v6235 = vpop.f32.mrf.mxu0
      %v6236 = vadd.f32 %v6180, %v6235
      %6237 = vmatmul.f32.gmra.mxu0 %v6071
      %v6238 = vpop.f32.mrf.mxu0
      %v6239 = vadd.f32 %v6183, %v6238
      %6240 = vmatmul.f32.gmra.mxu0 %v6074
      %v6241 = vpop.f32.mrf.mxu0
      %v6242 = vadd.f32 %v6186, %v6241
      %6243 = vmatmul.f32.gmra.mxu0 %v6077
      %v6244 = vpop.f32.mrf.mxu0
      %v6245 = vadd.f32 %v6189, %v6244
      %6246 = vmatmul.f32.gmra.mxu0 %v6080
      %v6247 = vpop.f32.mrf.mxu0
      %v6248 = vadd.f32 %v6192, %v6247
      %6249 = vmatmul.f32.gmra.mxu0 %v6083
      %v6250 = vpop.f32.mrf.mxu0
      %v6251 = vadd.f32 %v6195, %v6250
      %6252 = vmatmul.f32.gmra.mxu0 %v6086
      %v6253 = vpop.f32.mrf.mxu0
      %v6254 = vadd.f32 %v6198, %v6253
      %6255 = vmatmul.f32.gmra.mxu0 %v6089
      %v6256 = vpop.f32.mrf.mxu0
      %v6257 = vadd.f32 %v6201, %v6256
      %6258 = vmatmul.f32.gmra.mxu0 %v6092
      %v6259 = vpop.f32.mrf.mxu0
      %v6260 = vadd.f32 %v6204, %v6259
      %6261 = vmatmul.f32.gmra.mxu0 %v6095
      %v6262 = vpop.f32.mrf.mxu0
      %v6263 = vadd.f32 %v6207, %v6262
      %6264 = vmatmul.f32.gmra.mxu0 %v6098
      %v6265 = vpop.f32.mrf.mxu0
      %v6266 = vadd.f32 %v6210, %v6265
      %6267 = vmatmul.f32.gmra.mxu0 %v6101
      %v6268 = vpop.f32.mrf.mxu0
      %v6269 = vadd.f32 %v6213, %v6268
      %6270 = vdwg.mxu0
      %6271 = vmatpush.msra.mxu0 %v5937
      %6272 = vmatpush.msra.mxu0 %v5936
      %6273 = vmatpush.msra.mxu0 %v5935
      %6274 = vmatpush.msra.mxu0 %v5934
      %6275 = vmatpush.msra.mxu0 %v5933
      %6276 = vmatpush.msra.mxu0 %v5932
      %6277 = vmatpush.msra.mxu0 %v5931
      %6278 = vmatpush.msra.mxu0 %v5930
      %6279 = vmatpush.msra.mxu0 %v5929
      %6280 = vmatpush.msra.mxu0 %v5928
      %6281 = vmatpush.msra.mxu0 %v5927
      %6282 = vmatpush.msra.mxu0 %v5926
      %6283 = vmatpush.msra.mxu0 %v5925
      %6284 = vmatpush.msra.mxu0 %v5924
      %6285 = vmatpush.msra.mxu0 %v5923
      %6286 = vmatpush.msra.mxu0 %v5922
      %6287 = vmatmul.f32.gmra.mxu0 %v6024
      %v6288 = vpop.f32.mrf.mxu0
      %v6289 = vadd.f32 0.0, %v6288
      %6290 = vmatmul.f32.gmra.mxu0 %v6027
      %v6291 = vpop.f32.mrf.mxu0
      %v6292 = vadd.f32 0.0, %v6291
      %6293 = vmatmul.f32.gmra.mxu0 %v6030
      %v6294 = vpop.f32.mrf.mxu0
      %v6295 = vadd.f32 0.0, %v6294
      %6296 = vmatmul.f32.gmra.mxu0 %v6033
      %v6297 = vpop.f32.mrf.mxu0
      %v6298 = vadd.f32 0.0, %v6297
      %6299 = vmatmul.f32.gmra.mxu0 %v6036
      %v6300 = vpop.f32.mrf.mxu0
      %v6301 = vadd.f32 0.0, %v6300
      %6302 = vmatmul.f32.gmra.mxu0 %v6039
      %v6303 = vpop.f32.mrf.mxu0
      %v6304 = vadd.f32 0.0, %v6303
      %6305 = vmatmul.f32.gmra.mxu0 %v6042
      %v6306 = vpop.f32.mrf.mxu0
      %v6307 = vadd.f32 0.0, %v6306
      %6308 = vmatmul.f32.gmra.mxu0 %v6045
      %v6309 = vpop.f32.mrf.mxu0
      %v6310 = vadd.f32 0.0, %v6309
      %6311 = vmatmul.f32.gmra.mxu0 %v6048
      %v6312 = vpop.f32.mrf.mxu0
      %v6313 = vadd.f32 0.0, %v6312
      %6314 = vmatmul.f32.gmra.mxu0 %v6051
      %v6315 = vpop.f32.mrf.mxu0
      %v6316 = vadd.f32 0.0, %v6315
      %6317 = vmatmul.f32.gmra.mxu0 %v6054
      %v6318 = vpop.f32.mrf.mxu0
      %v6319 = vadd.f32 0.0, %v6318
      %6320 = vmatmul.f32.gmra.mxu0 %v6057
      %v6321 = vpop.f32.mrf.mxu0
      %v6322 = vadd.f32 0.0, %v6321
      %6323 = vmatmul.f32.gmra.mxu0 %v6060
      %v6324 = vpop.f32.mrf.mxu0
      %v6325 = vadd.f32 0.0, %v6324
      %6326 = vdwg.mxu0
      %6327 = vmatpush.msra.mxu0 %v5953
      %6328 = vmatpush.msra.mxu0 %v5952
      %6329 = vmatpush.msra.mxu0 %v5951
      %6330 = vmatpush.msra.mxu0 %v5950
      %6331 = vmatpush.msra.mxu0 %v5949
      %6332 = vmatpush.msra.mxu0 %v5948
      %6333 = vmatpush.msra.mxu0 %v5947
      %6334 = vmatpush.msra.mxu0 %v5946
      %6335 = vmatpush.msra.mxu0 %v5945
      %6336 = vmatpush.msra.mxu0 %v5944
      %6337 = vmatpush.msra.mxu0 %v5943
      %6338 = vmatpush.msra.mxu0 %v5942
      %6339 = vmatpush.msra.mxu0 %v5941
      %6340 = vmatpush.msra.mxu0 %v5940
      %6341 = vmatpush.msra.mxu0 %v5939
      %6342 = vmatpush.msra.mxu0 %v5938
      %6343 = vmatmul.f32.gmra.mxu0 %v6025
      %v6344 = vpop.f32.mrf.mxu0
      %v6345 = vadd.f32 %v6289, %v6344
      %6346 = vmatmul.f32.gmra.mxu0 %v6028
      %v6347 = vpop.f32.mrf.mxu0
      %v6348 = vadd.f32 %v6292, %v6347
      %6349 = vmatmul.f32.gmra.mxu0 %v6031
      %v6350 = vpop.f32.mrf.mxu0
      %v6351 = vadd.f32 %v6295, %v6350
      %6352 = vmatmul.f32.gmra.mxu0 %v6034
      %v6353 = vpop.f32.mrf.mxu0
      %v6354 = vadd.f32 %v6298, %v6353
      %6355 = vmatmul.f32.gmra.mxu0 %v6037
      %v6356 = vpop.f32.mrf.mxu0
      %v6357 = vadd.f32 %v6301, %v6356
      %6358 = vmatmul.f32.gmra.mxu0 %v6040
      %v6359 = vpop.f32.mrf.mxu0
      %v6360 = vadd.f32 %v6304, %v6359
      %6361 = vmatmul.f32.gmra.mxu0 %v6043
      %v6362 = vpop.f32.mrf.mxu0
      %v6363 = vadd.f32 %v6307, %v6362
      %6364 = vmatmul.f32.gmra.mxu0 %v6046
      %v6365 = vpop.f32.mrf.mxu0
      %v6366 = vadd.f32 %v6310, %v6365
      %6367 = vmatmul.f32.gmra.mxu0 %v6049
      %v6368 = vpop.f32.mrf.mxu0
      %v6369 = vadd.f32 %v6313, %v6368
      %6370 = vmatmul.f32.gmra.mxu0 %v6052
      %v6371 = vpop.f32.mrf.mxu0
      %v6372 = vadd.f32 %v6316, %v6371
      %6373 = vmatmul.f32.gmra.mxu0 %v6055
      %v6374 = vpop.f32.mrf.mxu0
      %v6375 = vadd.f32 %v6319, %v6374
      %6376 = vmatmul.f32.gmra.mxu0 %v6058
      %v6377 = vpop.f32.mrf.mxu0
      %v6378 = vadd.f32 %v6322, %v6377
      %6379 = vmatmul.f32.gmra.mxu0 %v6061
      %v6380 = vpop.f32.mrf.mxu0
      %v6381 = vadd.f32 %v6325, %v6380
      %6382 = vdwg.mxu0
      %6383 = vmatpush.msra.mxu0 0.0
      %6384 = vmatpush.msra.mxu0 0.0
      %6385 = vmatpush.msra.mxu0 0.0
      %6386 = vmatpush.msra.mxu0 0.0
      %6387 = vmatpush.msra.mxu0 0.0
      %6388 = vmatpush.msra.mxu0 0.0
      %6389 = vmatpush.msra.mxu0 0.0
      %6390 = vmatpush.msra.mxu0 0.0
      %6391 = vmatpush.msra.mxu0 0.0
      %6392 = vmatpush.msra.mxu0 0.0
      %6393 = vmatpush.msra.mxu0 0.0
      %6394 = vmatpush.msra.mxu0 0.0
      %6395 = vmatpush.msra.mxu0 0.0
      %6396 = vmatpush.msra.mxu0 0.0
      %6397 = vmatpush.msra.mxu0 %v5955
      %6398 = vmatpush.msra.mxu0 %v5954
      %6399 = vmatmul.f32.gmra.mxu0 %v6065
      %v6400 = vpop.f32.mrf.mxu0
      %v6401 = vadd.f32 %v6345, %v6400
      %6402 = vmatmul.f32.gmra.mxu0 %v6068
      %v6403 = vpop.f32.mrf.mxu0
      %v6404 = vadd.f32 %v6348, %v6403
      %6405 = vmatmul.f32.gmra.mxu0 %v6071
      %v6406 = vpop.f32.mrf.mxu0
      %v6407 = vadd.f32 %v6351, %v6406
      %6408 = vmatmul.f32.gmra.mxu0 %v6074
      %v6409 = vpop.f32.mrf.mxu0
      %v6410 = vadd.f32 %v6354, %v6409
      %6411 = vmatmul.f32.gmra.mxu0 %v6077
      %v6412 = vpop.f32.mrf.mxu0
      %v6413 = vadd.f32 %v6357, %v6412
      %6414 = vmatmul.f32.gmra.mxu0 %v6080
      %v6415 = vpop.f32.mrf.mxu0
      %v6416 = vadd.f32 %v6360, %v6415
      %6417 = vmatmul.f32.gmra.mxu0 %v6083
      %v6418 = vpop.f32.mrf.mxu0
      %v6419 = vadd.f32 %v6363, %v6418
      %6420 = vmatmul.f32.gmra.mxu0 %v6086
      %v6421 = vpop.f32.mrf.mxu0
      %v6422 = vadd.f32 %v6366, %v6421
      %6423 = vmatmul.f32.gmra.mxu0 %v6089
      %v6424 = vpop.f32.mrf.mxu0
      %v6425 = vadd.f32 %v6369, %v6424
      %6426 = vmatmul.f32.gmra.mxu0 %v6092
      %v6427 = vpop.f32.mrf.mxu0
      %v6428 = vadd.f32 %v6372, %v6427
      %6429 = vmatmul.f32.gmra.mxu0 %v6095
      %v6430 = vpop.f32.mrf.mxu0
      %v6431 = vadd.f32 %v6375, %v6430
      %6432 = vmatmul.f32.gmra.mxu0 %v6098
      %v6433 = vpop.f32.mrf.mxu0
      %v6434 = vadd.f32 %v6378, %v6433
      %6435 = vmatmul.f32.gmra.mxu0 %v6101
      %v6436 = vpop.f32.mrf.mxu0
      %v6437 = vadd.f32 %v6381, %v6436
      %6438 = vdwg.mxu0
      %6439 = vmatpush.msra.mxu0 %v5971
      %6440 = vmatpush.msra.mxu0 %v5970
      %6441 = vmatpush.msra.mxu0 %v5969
      %6442 = vmatpush.msra.mxu0 %v5968
      %6443 = vmatpush.msra.mxu0 %v5967
      %6444 = vmatpush.msra.mxu0 %v5966
      %6445 = vmatpush.msra.mxu0 %v5965
      %6446 = vmatpush.msra.mxu0 %v5964
      %6447 = vmatpush.msra.mxu0 %v5963
      %6448 = vmatpush.msra.mxu0 %v5962
      %6449 = vmatpush.msra.mxu0 %v5961
      %6450 = vmatpush.msra.mxu0 %v5960
      %6451 = vmatpush.msra.mxu0 %v5959
      %6452 = vmatpush.msra.mxu0 %v5958
      %6453 = vmatpush.msra.mxu0 %v5957
      %6454 = vmatpush.msra.mxu0 %v5956
      %6455 = vmatmul.f32.gmra.mxu0 %v6024
      %v6456 = vpop.f32.mrf.mxu0
      %v6457 = vadd.f32 0.0, %v6456
      %6458 = vmatmul.f32.gmra.mxu0 %v6027
      %v6459 = vpop.f32.mrf.mxu0
      %v6460 = vadd.f32 0.0, %v6459
      %6461 = vmatmul.f32.gmra.mxu0 %v6030
      %v6462 = vpop.f32.mrf.mxu0
      %v6463 = vadd.f32 0.0, %v6462
      %6464 = vmatmul.f32.gmra.mxu0 %v6033
      %v6465 = vpop.f32.mrf.mxu0
      %v6466 = vadd.f32 0.0, %v6465
      %6467 = vmatmul.f32.gmra.mxu0 %v6036
      %v6468 = vpop.f32.mrf.mxu0
      %v6469 = vadd.f32 0.0, %v6468
      %6470 = vmatmul.f32.gmra.mxu0 %v6039
      %v6471 = vpop.f32.mrf.mxu0
      %v6472 = vadd.f32 0.0, %v6471
      %6473 = vmatmul.f32.gmra.mxu0 %v6042
      %v6474 = vpop.f32.mrf.mxu0
      %v6475 = vadd.f32 0.0, %v6474
      %6476 = vmatmul.f32.gmra.mxu0 %v6045
      %v6477 = vpop.f32.mrf.mxu0
      %v6478 = vadd.f32 0.0, %v6477
      %6479 = vmatmul.f32.gmra.mxu0 %v6048
      %v6480 = vpop.f32.mrf.mxu0
      %v6481 = vadd.f32 0.0, %v6480
      %6482 = vmatmul.f32.gmra.mxu0 %v6051
      %v6483 = vpop.f32.mrf.mxu0
      %v6484 = vadd.f32 0.0, %v6483
      %6485 = vmatmul.f32.gmra.mxu0 %v6054
      %v6486 = vpop.f32.mrf.mxu0
      %v6487 = vadd.f32 0.0, %v6486
      %6488 = vmatmul.f32.gmra.mxu0 %v6057
      %v6489 = vpop.f32.mrf.mxu0
      %v6490 = vadd.f32 0.0, %v6489
      %6491 = vmatmul.f32.gmra.mxu0 %v6060
      %v6492 = vpop.f32.mrf.mxu0
      %v6493 = vadd.f32 0.0, %v6492
      %6494 = vdwg.mxu0
      %6495 = vmatpush.msra.mxu0 %v5987
      %6496 = vmatpush.msra.mxu0 %v5986
      %6497 = vmatpush.msra.mxu0 %v5985
      %6498 = vmatpush.msra.mxu0 %v5984
      %6499 = vmatpush.msra.mxu0 %v5983
      %6500 = vmatpush.msra.mxu0 %v5982
      %6501 = vmatpush.msra.mxu0 %v5981
      %6502 = vmatpush.msra.mxu0 %v5980
      %6503 = vmatpush.msra.mxu0 %v5979
      %6504 = vmatpush.msra.mxu0 %v5978
      %6505 = vmatpush.msra.mxu0 %v5977
      %6506 = vmatpush.msra.mxu0 %v5976
      %6507 = vmatpush.msra.mxu0 %v5975
      %6508 = vmatpush.msra.mxu0 %v5974
      %6509 = vmatpush.msra.mxu0 %v5973
      %6510 = vmatpush.msra.mxu0 %v5972
      %6511 = vmatmul.f32.gmra.mxu0 %v6025
      %v6512 = vpop.f32.mrf.mxu0
      %v6513 = vadd.f32 %v6457, %v6512
      %6514 = vmatmul.f32.gmra.mxu0 %v6028
      %v6515 = vpop.f32.mrf.mxu0
      %v6516 = vadd.f32 %v6460, %v6515
      %6517 = vmatmul.f32.gmra.mxu0 %v6031
      %v6518 = vpop.f32.mrf.mxu0
      %v6519 = vadd.f32 %v6463, %v6518
      %6520 = vmatmul.f32.gmra.mxu0 %v6034
      %v6521 = vpop.f32.mrf.mxu0
      %v6522 = vadd.f32 %v6466, %v6521
      %6523 = vmatmul.f32.gmra.mxu0 %v6037
      %v6524 = vpop.f32.mrf.mxu0
      %v6525 = vadd.f32 %v6469, %v6524
      %6526 = vmatmul.f32.gmra.mxu0 %v6040
      %v6527 = vpop.f32.mrf.mxu0
      %v6528 = vadd.f32 %v6472, %v6527
      %6529 = vmatmul.f32.gmra.mxu0 %v6043
      %v6530 = vpop.f32.mrf.mxu0
      %v6531 = vadd.f32 %v6475, %v6530
      %6532 = vmatmul.f32.gmra.mxu0 %v6046
      %v6533 = vpop.f32.mrf.mxu0
      %v6534 = vadd.f32 %v6478, %v6533
      %6535 = vmatmul.f32.gmra.mxu0 %v6049
      %v6536 = vpop.f32.mrf.mxu0
      %v6537 = vadd.f32 %v6481, %v6536
      %6538 = vmatmul.f32.gmra.mxu0 %v6052
      %v6539 = vpop.f32.mrf.mxu0
      %v6540 = vadd.f32 %v6484, %v6539
      %6541 = vmatmul.f32.gmra.mxu0 %v6055
      %v6542 = vpop.f32.mrf.mxu0
      %v6543 = vadd.f32 %v6487, %v6542
      %6544 = vmatmul.f32.gmra.mxu0 %v6058
      %v6545 = vpop.f32.mrf.mxu0
      %v6546 = vadd.f32 %v6490, %v6545
      %6547 = vmatmul.f32.gmra.mxu0 %v6061
      %v6548 = vpop.f32.mrf.mxu0
      %v6549 = vadd.f32 %v6493, %v6548
      %6550 = vdwg.mxu0
      %6551 = vmatpush.msra.mxu0 0.0
      %6552 = vmatpush.msra.mxu0 0.0
      %6553 = vmatpush.msra.mxu0 0.0
      %6554 = vmatpush.msra.mxu0 0.0
      %6555 = vmatpush.msra.mxu0 0.0
      %6556 = vmatpush.msra.mxu0 0.0
      %6557 = vmatpush.msra.mxu0 0.0
      %6558 = vmatpush.msra.mxu0 0.0
      %6559 = vmatpush.msra.mxu0 0.0
      %6560 = vmatpush.msra.mxu0 0.0
      %6561 = vmatpush.msra.mxu0 0.0
      %6562 = vmatpush.msra.mxu0 0.0
      %6563 = vmatpush.msra.mxu0 0.0
      %6564 = vmatpush.msra.mxu0 0.0
      %6565 = vmatpush.msra.mxu0 %v5989
      %6566 = vmatpush.msra.mxu0 %v5988
      %6567 = vmatmul.f32.gmra.mxu0 %v6065
      %v6568 = vpop.f32.mrf.mxu0
      %v6569 = vadd.f32 %v6513, %v6568
      %6570 = vmatmul.f32.gmra.mxu0 %v6068
      %v6571 = vpop.f32.mrf.mxu0
      %v6572 = vadd.f32 %v6516, %v6571
      %6573 = vmatmul.f32.gmra.mxu0 %v6071
      %v6574 = vpop.f32.mrf.mxu0
      %v6575 = vadd.f32 %v6519, %v6574
      %6576 = vmatmul.f32.gmra.mxu0 %v6074
      %v6577 = vpop.f32.mrf.mxu0
      %v6578 = vadd.f32 %v6522, %v6577
      %6579 = vmatmul.f32.gmra.mxu0 %v6077
      %v6580 = vpop.f32.mrf.mxu0
      %v6581 = vadd.f32 %v6525, %v6580
      %6582 = vmatmul.f32.gmra.mxu0 %v6080
      %v6583 = vpop.f32.mrf.mxu0
      %v6584 = vadd.f32 %v6528, %v6583
      %6585 = vmatmul.f32.gmra.mxu0 %v6083
      %v6586 = vpop.f32.mrf.mxu0
      %v6587 = vadd.f32 %v6531, %v6586
      %6588 = vmatmul.f32.gmra.mxu0 %v6086
      %v6589 = vpop.f32.mrf.mxu0
      %v6590 = vadd.f32 %v6534, %v6589
      %6591 = vmatmul.f32.gmra.mxu0 %v6089
      %v6592 = vpop.f32.mrf.mxu0
      %v6593 = vadd.f32 %v6537, %v6592
      %6594 = vmatmul.f32.gmra.mxu0 %v6092
      %v6595 = vpop.f32.mrf.mxu0
      %v6596 = vadd.f32 %v6540, %v6595
      %6597 = vmatmul.f32.gmra.mxu0 %v6095
      %v6598 = vpop.f32.mrf.mxu0
      %v6599 = vadd.f32 %v6543, %v6598
      %6600 = vmatmul.f32.gmra.mxu0 %v6098
      %v6601 = vpop.f32.mrf.mxu0
      %v6602 = vadd.f32 %v6546, %v6601
      %6603 = vmatmul.f32.gmra.mxu0 %v6101
      %v6604 = vpop.f32.mrf.mxu0
      %v6605 = vadd.f32 %v6549, %v6604
      %6606 = vdwg.mxu0
      %6607 = vmatpush.msra.mxu0 %v6005
      %6608 = vmatpush.msra.mxu0 %v6004
      %6609 = vmatpush.msra.mxu0 %v6003
      %6610 = vmatpush.msra.mxu0 %v6002
      %6611 = vmatpush.msra.mxu0 %v6001
      %6612 = vmatpush.msra.mxu0 %v6000
      %6613 = vmatpush.msra.mxu0 %v5999
      %6614 = vmatpush.msra.mxu0 %v5998
      %6615 = vmatpush.msra.mxu0 %v5997
      %6616 = vmatpush.msra.mxu0 %v5996
      %6617 = vmatpush.msra.mxu0 %v5995
      %6618 = vmatpush.msra.mxu0 %v5994
      %6619 = vmatpush.msra.mxu0 %v5993
      %6620 = vmatpush.msra.mxu0 %v5992
      %6621 = vmatpush.msra.mxu0 %v5991
      %6622 = vmatpush.msra.mxu0 %v5990
      %6623 = vmatmul.f32.gmra.mxu0 %v6024
      %v6624 = vpop.f32.mrf.mxu0
      %v6625 = vadd.f32 0.0, %v6624
      %6626 = vmatmul.f32.gmra.mxu0 %v6027
      %v6627 = vpop.f32.mrf.mxu0
      %v6628 = vadd.f32 0.0, %v6627
      %6629 = vmatmul.f32.gmra.mxu0 %v6030
      %v6630 = vpop.f32.mrf.mxu0
      %v6631 = vadd.f32 0.0, %v6630
      %6632 = vmatmul.f32.gmra.mxu0 %v6033
      %v6633 = vpop.f32.mrf.mxu0
      %v6634 = vadd.f32 0.0, %v6633
      %6635 = vmatmul.f32.gmra.mxu0 %v6036
      %v6636 = vpop.f32.mrf.mxu0
      %v6637 = vadd.f32 0.0, %v6636
      %6638 = vmatmul.f32.gmra.mxu0 %v6039
      %v6639 = vpop.f32.mrf.mxu0
      %v6640 = vadd.f32 0.0, %v6639
      %6641 = vmatmul.f32.gmra.mxu0 %v6042
      %v6642 = vpop.f32.mrf.mxu0
      %v6643 = vadd.f32 0.0, %v6642
      %6644 = vmatmul.f32.gmra.mxu0 %v6045
      %v6645 = vpop.f32.mrf.mxu0
      %v6646 = vadd.f32 0.0, %v6645
      %6647 = vmatmul.f32.gmra.mxu0 %v6048
      %v6648 = vpop.f32.mrf.mxu0
      %v6649 = vadd.f32 0.0, %v6648
      %6650 = vmatmul.f32.gmra.mxu0 %v6051
      %v6651 = vpop.f32.mrf.mxu0
      %v6652 = vadd.f32 0.0, %v6651
      %6653 = vmatmul.f32.gmra.mxu0 %v6054
      %v6654 = vpop.f32.mrf.mxu0
      %v6655 = vadd.f32 0.0, %v6654
      %6656 = vmatmul.f32.gmra.mxu0 %v6057
      %v6657 = vpop.f32.mrf.mxu0
      %v6658 = vadd.f32 0.0, %v6657
      %6659 = vmatmul.f32.gmra.mxu0 %v6060
      %v6660 = vpop.f32.mrf.mxu0
      %v6661 = vadd.f32 0.0, %v6660
      %6662 = vdwg.mxu0
      %6663 = vmatpush.msra.mxu0 %v6021
      %6664 = vmatpush.msra.mxu0 %v6020
      %6665 = vmatpush.msra.mxu0 %v6019
      %6666 = vmatpush.msra.mxu0 %v6018
      %6667 = vmatpush.msra.mxu0 %v6017
      %6668 = vmatpush.msra.mxu0 %v6016
      %6669 = vmatpush.msra.mxu0 %v6015
      %6670 = vmatpush.msra.mxu0 %v6014
      %6671 = vmatpush.msra.mxu0 %v6013
      %6672 = vmatpush.msra.mxu0 %v6012
      %6673 = vmatpush.msra.mxu0 %v6011
      %6674 = vmatpush.msra.mxu0 %v6010
      %6675 = vmatpush.msra.mxu0 %v6009
      %6676 = vmatpush.msra.mxu0 %v6008
      %6677 = vmatpush.msra.mxu0 %v6007
      %6678 = vmatpush.msra.mxu0 %v6006
      %6679 = vmatmul.f32.gmra.mxu0 %v6025
      %v6680 = vpop.f32.mrf.mxu0
      %v6681 = vadd.f32 %v6625, %v6680
      %6682 = vmatmul.f32.gmra.mxu0 %v6028
      %v6683 = vpop.f32.mrf.mxu0
      %v6684 = vadd.f32 %v6628, %v6683
      %6685 = vmatmul.f32.gmra.mxu0 %v6031
      %v6686 = vpop.f32.mrf.mxu0
      %v6687 = vadd.f32 %v6631, %v6686
      %6688 = vmatmul.f32.gmra.mxu0 %v6034
      %v6689 = vpop.f32.mrf.mxu0
      %v6690 = vadd.f32 %v6634, %v6689
      %6691 = vmatmul.f32.gmra.mxu0 %v6037
      %v6692 = vpop.f32.mrf.mxu0
      %v6693 = vadd.f32 %v6637, %v6692
      %6694 = vmatmul.f32.gmra.mxu0 %v6040
      %v6695 = vpop.f32.mrf.mxu0
      %v6696 = vadd.f32 %v6640, %v6695
      %6697 = vmatmul.f32.gmra.mxu0 %v6043
      %v6698 = vpop.f32.mrf.mxu0
      %v6699 = vadd.f32 %v6643, %v6698
      %6700 = vmatmul.f32.gmra.mxu0 %v6046
      %v6701 = vpop.f32.mrf.mxu0
      %v6702 = vadd.f32 %v6646, %v6701
      %6703 = vmatmul.f32.gmra.mxu0 %v6049
      %v6704 = vpop.f32.mrf.mxu0
      %v6705 = vadd.f32 %v6649, %v6704
      %6706 = vmatmul.f32.gmra.mxu0 %v6052
      %v6707 = vpop.f32.mrf.mxu0
      %v6708 = vadd.f32 %v6652, %v6707
      %6709 = vmatmul.f32.gmra.mxu0 %v6055
      %v6710 = vpop.f32.mrf.mxu0
      %v6711 = vadd.f32 %v6655, %v6710
      %6712 = vmatmul.f32.gmra.mxu0 %v6058
      %v6713 = vpop.f32.mrf.mxu0
      %v6714 = vadd.f32 %v6658, %v6713
      %6715 = vmatmul.f32.gmra.mxu0 %v6061
      %v6716 = vpop.f32.mrf.mxu0
      %v6717 = vadd.f32 %v6661, %v6716
      %6718 = vdwg.mxu0
      %6719 = vmatpush.msra.mxu0 0.0
      %6720 = vmatpush.msra.mxu0 0.0
      %6721 = vmatpush.msra.mxu0 0.0
      %6722 = vmatpush.msra.mxu0 0.0
      %6723 = vmatpush.msra.mxu0 0.0
      %6724 = vmatpush.msra.mxu0 0.0
      %6725 = vmatpush.msra.mxu0 0.0
      %6726 = vmatpush.msra.mxu0 0.0
      %6727 = vmatpush.msra.mxu0 0.0
      %6728 = vmatpush.msra.mxu0 0.0
      %6729 = vmatpush.msra.mxu0 0.0
      %6730 = vmatpush.msra.mxu0 0.0
      %6731 = vmatpush.msra.mxu0 0.0
      %6732 = vmatpush.msra.mxu0 0.0
      %6733 = vmatpush.msra.mxu0 %v6023
      %6734 = vmatpush.msra.mxu0 %v6022
      %6735 = vmatmul.f32.gmra.mxu0 %v6065
      %v6736 = vpop.f32.mrf.mxu0
      %v6737 = vadd.f32 %v6681, %v6736
      %6738 = vmatmul.f32.gmra.mxu0 %v6068
      %v6739 = vpop.f32.mrf.mxu0
      %v6740 = vadd.f32 %v6684, %v6739
      %6741 = vmatmul.f32.gmra.mxu0 %v6071
      %v6742 = vpop.f32.mrf.mxu0
      %v6743 = vadd.f32 %v6687, %v6742
      %6744 = vmatmul.f32.gmra.mxu0 %v6074
      %v6745 = vpop.f32.mrf.mxu0
      %v6746 = vadd.f32 %v6690, %v6745
      %6747 = vmatmul.f32.gmra.mxu0 %v6077
      %v6748 = vpop.f32.mrf.mxu0
      %v6749 = vadd.f32 %v6693, %v6748
      %6750 = vmatmul.f32.gmra.mxu0 %v6080
      %v6751 = vpop.f32.mrf.mxu0
      %v6752 = vadd.f32 %v6696, %v6751
      %6753 = vmatmul.f32.gmra.mxu0 %v6083
      %v6754 = vpop.f32.mrf.mxu0
      %v6755 = vadd.f32 %v6699, %v6754
      %6756 = vmatmul.f32.gmra.mxu0 %v6086
      %v6757 = vpop.f32.mrf.mxu0
      %v6758 = vadd.f32 %v6702, %v6757
      %6759 = vmatmul.f32.gmra.mxu0 %v6089
      %v6760 = vpop.f32.mrf.mxu0
      %v6761 = vadd.f32 %v6705, %v6760
      %6762 = vmatmul.f32.gmra.mxu0 %v6092
      %v6763 = vpop.f32.mrf.mxu0
      %v6764 = vadd.f32 %v6708, %v6763
      %6765 = vmatmul.f32.gmra.mxu0 %v6095
      %v6766 = vpop.f32.mrf.mxu0
      %v6767 = vadd.f32 %v6711, %v6766
      %6768 = vmatmul.f32.gmra.mxu0 %v6098
      %v6769 = vpop.f32.mrf.mxu0
      %v6770 = vadd.f32 %v6714, %v6769
      %6771 = vmatmul.f32.gmra.mxu0 %v6101
      %v6772 = vpop.f32.mrf.mxu0
      %v6773 = vadd.f32 %v6717, %v6772
      %6774 = vdwg.mxu0
      %v6826 = vrot.slane %v6233, 1
      %v6827 = vrot.slane %v6236, 1
      %v6828 = vsel %vm4726, %v6826, %v6827
      %v6829 = vrot.slane %v6239, 1
      %v6830 = vsel %vm4726, %v6827, %v6829
      %v6831 = vrot.slane %v6242, 1
      %v6832 = vsel %vm4726, %v6829, %v6831
      %v6833 = vrot.slane %v6245, 1
      %v6834 = vsel %vm4726, %v6831, %v6833
      %v6835 = vrot.slane %v6248, 1
      %v6836 = vsel %vm4726, %v6833, %v6835
      %v6837 = vrot.slane %v6251, 1
      %v6838 = vsel %vm4726, %v6835, %v6837
      %v6839 = vrot.slane %v6254, 1
      %v6840 = vsel %vm4726, %v6837, %v6839
      %v6841 = vrot.slane %v6257, 1
      %v6842 = vsel %vm4726, %v6839, %v6841
      %v6843 = vrot.slane %v6260, 1
      %v6844 = vsel %vm4726, %v6841, %v6843
      %v6845 = vrot.slane %v6263, 1
      %v6846 = vsel %vm4726, %v6843, %v6845
      %v6847 = vrot.slane %v6266, 1
      %v6848 = vsel %vm4726, %v6845, %v6847
      %v6849 = vrot.slane %v6269, 1
      %v6850 = vsel %vm4726, %v6847, %v6849
      %v6851 = vrot.slane %v6401, 1
      %v6852 = vsel %vm4726, %v6849, %v6851
      %v6853 = vrot.slane %v6404, 1
      %v6854 = vsel %vm4726, %v6851, %v6853
      %v6855 = vrot.slane %v6407, 1
      %v6856 = vsel %vm4726, %v6853, %v6855
      %v6857 = vrot.slane %v6410, 1
      %v6858 = vsel %vm4726, %v6855, %v6857
      %v6859 = vrot.slane %v6413, 1
      %v6860 = vsel %vm4726, %v6857, %v6859
      %v6861 = vrot.slane %v6416, 1
      %v6862 = vsel %vm4726, %v6859, %v6861
      %v6863 = vrot.slane %v6419, 1
      %v6864 = vsel %vm4726, %v6861, %v6863
      %v6865 = vrot.slane %v6422, 1
      %v6866 = vsel %vm4726, %v6863, %v6865
      %v6867 = vrot.slane %v6425, 1
      %v6868 = vsel %vm4726, %v6865, %v6867
      %v6869 = vrot.slane %v6428, 1
      %v6870 = vsel %vm4726, %v6867, %v6869
      %v6871 = vrot.slane %v6431, 1
      %v6872 = vsel %vm4726, %v6869, %v6871
      %v6873 = vrot.slane %v6434, 1
      %v6874 = vsel %vm4726, %v6871, %v6873
      %v6875 = vrot.slane %v6437, 1
      %v6876 = vsel %vm4726, %v6873, %v6875
      %v6877 = vrot.slane %v6569, 1
      %v6878 = vsel %vm4726, %v6875, %v6877
      %v6879 = vrot.slane %v6572, 1
      %v6880 = vsel %vm4726, %v6877, %v6879
      %v6881 = vrot.slane %v6575, 1
      %v6882 = vsel %vm4726, %v6879, %v6881
      %v6883 = vrot.slane %v6578, 1
      %v6884 = vsel %vm4726, %v6881, %v6883
      %v6885 = vrot.slane %v6581, 1
      %v6886 = vsel %vm4726, %v6883, %v6885
      %v6887 = vrot.slane %v6584, 1
      %v6888 = vsel %vm4726, %v6885, %v6887
      %v6889 = vrot.slane %v6587, 1
      %v6890 = vsel %vm4726, %v6887, %v6889
      %v6891 = vrot.slane %v6590, 1
      %v6892 = vsel %vm4726, %v6889, %v6891
      %v6893 = vrot.slane %v6593, 1
      %v6894 = vsel %vm4726, %v6891, %v6893
      %v6895 = vrot.slane %v6596, 1
      %v6896 = vsel %vm4726, %v6893, %v6895
      %v6897 = vrot.slane %v6599, 1
      %v6898 = vsel %vm4726, %v6895, %v6897
      %v6899 = vrot.slane %v6602, 1
      %v6900 = vsel %vm4726, %v6897, %v6899
      %v6901 = vrot.slane %v6605, 1
      %v6902 = vsel %vm4726, %v6899, %v6901
      %v6903 = vrot.slane %v6737, 1
      %v6904 = vsel %vm4726, %v6901, %v6903
      %v6905 = vrot.slane %v6740, 1
      %v6906 = vsel %vm4726, %v6903, %v6905
      %v6907 = vrot.slane %v6743, 1
      %v6908 = vsel %vm4726, %v6905, %v6907
      %v6909 = vrot.slane %v6746, 1
      %v6910 = vsel %vm4726, %v6907, %v6909
      %v6911 = vrot.slane %v6749, 1
      %v6912 = vsel %vm4726, %v6909, %v6911
      %v6913 = vrot.slane %v6752, 1
      %v6914 = vsel %vm4726, %v6911, %v6913
      %v6915 = vrot.slane %v6755, 1
      %v6916 = vsel %vm4726, %v6913, %v6915
      %v6917 = vrot.slane %v6758, 1
      %v6918 = vsel %vm4726, %v6915, %v6917
      %v6919 = vrot.slane %v6761, 1
      %v6920 = vsel %vm4726, %v6917, %v6919
      %v6921 = vrot.slane %v6764, 1
      %v6922 = vsel %vm4726, %v6919, %v6921
      %v6923 = vrot.slane %v6767, 1
      %v6924 = vsel %vm4726, %v6921, %v6923
      %v6925 = vrot.slane %v6770, 1
      %v6926 = vsel %vm4726, %v6923, %v6925
      %6927 = vrot.lane.b32.xlu0 %v6828, 64
      %v6928 = vpop.permute.xlu0 %6927
      %6929 = vrot.lane.b32.xlu0 %v6830, 64
      %v6930 = vpop.permute.xlu0 %6929
      %6931 = vrot.lane.b32.xlu0 %v6832, 64
      %v6932 = vpop.permute.xlu0 %6931
      %6933 = vrot.lane.b32.xlu0 %v6834, 64
      %v6934 = vpop.permute.xlu0 %6933
      %6935 = vrot.lane.b32.xlu0 %v6836, 64
      %v6936 = vpop.permute.xlu0 %6935
      %6937 = vrot.lane.b32.xlu0 %v6838, 64
      %v6938 = vpop.permute.xlu0 %6937
      %6939 = vrot.lane.b32.xlu0 %v6840, 64
      %v6940 = vpop.permute.xlu0 %6939
      %6941 = vrot.lane.b32.xlu0 %v6842, 64
      %v6942 = vpop.permute.xlu0 %6941
      %6943 = vrot.lane.b32.xlu0 %v6844, 64
      %v6944 = vpop.permute.xlu0 %6943
      %6945 = vrot.lane.b32.xlu0 %v6846, 64
      %v6946 = vpop.permute.xlu0 %6945
      %6947 = vrot.lane.b32.xlu0 %v6848, 64
      %v6948 = vpop.permute.xlu0 %6947
      %6949 = vrot.lane.b32.xlu0 %v6850, 64
      %v6950 = vpop.permute.xlu0 %6949
      %6951 = vrot.lane.b32.xlu0 %v6852, 64
      %v6952 = vpop.permute.xlu0 %6951
      %6953 = vrot.lane.b32.xlu0 %v6854, 64
      %v6954 = vpop.permute.xlu0 %6953
      %6955 = vrot.lane.b32.xlu0 %v6856, 64
      %v6956 = vpop.permute.xlu0 %6955
      %6957 = vrot.lane.b32.xlu0 %v6858, 64
      %v6958 = vpop.permute.xlu0 %6957
      %6959 = vrot.lane.b32.xlu0 %v6860, 64
      %v6960 = vpop.permute.xlu0 %6959
      %6961 = vrot.lane.b32.xlu0 %v6862, 64
      %v6962 = vpop.permute.xlu0 %6961
      %6963 = vrot.lane.b32.xlu0 %v6864, 64
      %v6964 = vpop.permute.xlu0 %6963
      %6965 = vrot.lane.b32.xlu0 %v6866, 64
      %v6966 = vpop.permute.xlu0 %6965
      %6967 = vrot.lane.b32.xlu0 %v6868, 64
      %v6968 = vpop.permute.xlu0 %6967
      %6969 = vrot.lane.b32.xlu0 %v6870, 64
      %v6970 = vpop.permute.xlu0 %6969
      %6971 = vrot.lane.b32.xlu0 %v6872, 64
      %v6972 = vpop.permute.xlu0 %6971
      %6973 = vrot.lane.b32.xlu0 %v6874, 64
      %v6974 = vpop.permute.xlu0 %6973
      %6975 = vrot.lane.b32.xlu0 %v6876, 64
      %v6976 = vpop.permute.xlu0 %6975
      %6977 = vrot.lane.b32.xlu0 %v6878, 64
      %v6978 = vpop.permute.xlu0 %6977
      %6979 = vrot.lane.b32.xlu0 %v6880, 64
      %v6980 = vpop.permute.xlu0 %6979
      %6981 = vrot.lane.b32.xlu0 %v6882, 64
      %v6982 = vpop.permute.xlu0 %6981
      %6983 = vrot.lane.b32.xlu0 %v6884, 64
      %v6984 = vpop.permute.xlu0 %6983
      %6985 = vrot.lane.b32.xlu0 %v6886, 64
      %v6986 = vpop.permute.xlu0 %6985
      %6987 = vrot.lane.b32.xlu0 %v6888, 64
      %v6988 = vpop.permute.xlu0 %6987
      %6989 = vrot.lane.b32.xlu0 %v6890, 64
      %v6990 = vpop.permute.xlu0 %6989
      %6991 = vrot.lane.b32.xlu0 %v6892, 64
      %v6992 = vpop.permute.xlu0 %6991
      %6993 = vrot.lane.b32.xlu0 %v6894, 64
      %v6994 = vpop.permute.xlu0 %6993
      %6995 = vrot.lane.b32.xlu0 %v6896, 64
      %v6996 = vpop.permute.xlu0 %6995
      %6997 = vrot.lane.b32.xlu0 %v6898, 64
      %v6998 = vpop.permute.xlu0 %6997
      %6999 = vrot.lane.b32.xlu0 %v6900, 64
      %v7000 = vpop.permute.xlu0 %6999
      %7001 = vrot.lane.b32.xlu0 %v6902, 64
      %v7002 = vpop.permute.xlu0 %7001
      %7003 = vrot.lane.b32.xlu0 %v6904, 64
      %v7004 = vpop.permute.xlu0 %7003
      %7005 = vrot.lane.b32.xlu0 %v6906, 64
      %v7006 = vpop.permute.xlu0 %7005
      %7007 = vrot.lane.b32.xlu0 %v6908, 64
      %v7008 = vpop.permute.xlu0 %7007
      %7009 = vrot.lane.b32.xlu0 %v6910, 64
      %v7010 = vpop.permute.xlu0 %7009
      %7011 = vrot.lane.b32.xlu0 %v6912, 64
      %v7012 = vpop.permute.xlu0 %7011
      %7013 = vrot.lane.b32.xlu0 %v6914, 64
      %v7014 = vpop.permute.xlu0 %7013
      %7015 = vrot.lane.b32.xlu0 %v6916, 64
      %v7016 = vpop.permute.xlu0 %7015
      %7017 = vrot.lane.b32.xlu0 %v6918, 64
      %v7018 = vpop.permute.xlu0 %7017
      %7019 = vrot.lane.b32.xlu0 %v6920, 64
      %v7020 = vpop.permute.xlu0 %7019
      %7021 = vrot.lane.b32.xlu0 %v6922, 64
      %v7022 = vpop.permute.xlu0 %7021
      %7023 = vrot.lane.b32.xlu0 %v6924, 64
      %v7024 = vpop.permute.xlu0 %7023
      %7025 = vrot.lane.b32.xlu0 %v6926, 64
      %v7026 = vpop.permute.xlu0 %7025
      %v7078 = vrot.slane %v6236, 2
      %v7079 = vrot.slane %v6239, 2
      %v7080 = vsel %vm5475, %v7078, %v7079
      %v7081 = vrot.slane %v6242, 2
      %v7082 = vsel %vm5475, %v7079, %v7081
      %v7083 = vrot.slane %v6245, 2
      %v7084 = vsel %vm5475, %v7081, %v7083
      %v7085 = vrot.slane %v6248, 2
      %v7086 = vsel %vm5475, %v7083, %v7085
      %v7087 = vrot.slane %v6251, 2
      %v7088 = vsel %vm5475, %v7085, %v7087
      %v7089 = vrot.slane %v6254, 2
      %v7090 = vsel %vm5475, %v7087, %v7089
      %v7091 = vrot.slane %v6257, 2
      %v7092 = vsel %vm5475, %v7089, %v7091
      %v7093 = vrot.slane %v6260, 2
      %v7094 = vsel %vm5475, %v7091, %v7093
      %v7095 = vrot.slane %v6263, 2
      %v7096 = vsel %vm5475, %v7093, %v7095
      %v7097 = vrot.slane %v6266, 2
      %v7098 = vsel %vm5475, %v7095, %v7097
      %v7099 = vrot.slane %v6269, 2
      %v7100 = vsel %vm5475, %v7097, %v7099
      %v7101 = vrot.slane %v6401, 2
      %v7102 = vsel %vm5475, %v7099, %v7101
      %v7103 = vrot.slane %v6404, 2
      %v7104 = vsel %vm5475, %v7101, %v7103
      %v7105 = vrot.slane %v6407, 2
      %v7106 = vsel %vm5475, %v7103, %v7105
      %v7107 = vrot.slane %v6410, 2
      %v7108 = vsel %vm5475, %v7105, %v7107
      %v7109 = vrot.slane %v6413, 2
      %v7110 = vsel %vm5475, %v7107, %v7109
      %v7111 = vrot.slane %v6416, 2
      %v7112 = vsel %vm5475, %v7109, %v7111
      %v7113 = vrot.slane %v6419, 2
      %v7114 = vsel %vm5475, %v7111, %v7113
      %v7115 = vrot.slane %v6422, 2
      %v7116 = vsel %vm5475, %v7113, %v7115
      %v7117 = vrot.slane %v6425, 2
      %v7118 = vsel %vm5475, %v7115, %v7117
      %v7119 = vrot.slane %v6428, 2
      %v7120 = vsel %vm5475, %v7117, %v7119
      %v7121 = vrot.slane %v6431, 2
      %v7122 = vsel %vm5475, %v7119, %v7121
      %v7123 = vrot.slane %v6434, 2
      %v7124 = vsel %vm5475, %v7121, %v7123
      %v7125 = vrot.slane %v6437, 2
      %v7126 = vsel %vm5475, %v7123, %v7125
      %v7127 = vrot.slane %v6569, 2
      %v7128 = vsel %vm5475, %v7125, %v7127
      %v7129 = vrot.slane %v6572, 2
      %v7130 = vsel %vm5475, %v7127, %v7129
      %v7131 = vrot.slane %v6575, 2
      %v7132 = vsel %vm5475, %v7129, %v7131
      %v7133 = vrot.slane %v6578, 2
      %v7134 = vsel %vm5475, %v7131, %v7133
      %v7135 = vrot.slane %v6581, 2
      %v7136 = vsel %vm5475, %v7133, %v7135
      %v7137 = vrot.slane %v6584, 2
      %v7138 = vsel %vm5475, %v7135, %v7137
      %v7139 = vrot.slane %v6587, 2
      %v7140 = vsel %vm5475, %v7137, %v7139
      %v7141 = vrot.slane %v6590, 2
      %v7142 = vsel %vm5475, %v7139, %v7141
      %v7143 = vrot.slane %v6593, 2
      %v7144 = vsel %vm5475, %v7141, %v7143
      %v7145 = vrot.slane %v6596, 2
      %v7146 = vsel %vm5475, %v7143, %v7145
      %v7147 = vrot.slane %v6599, 2
      %v7148 = vsel %vm5475, %v7145, %v7147
      %v7149 = vrot.slane %v6602, 2
      %v7150 = vsel %vm5475, %v7147, %v7149
      %v7151 = vrot.slane %v6605, 2
      %v7152 = vsel %vm5475, %v7149, %v7151
      %v7153 = vrot.slane %v6737, 2
      %v7154 = vsel %vm5475, %v7151, %v7153
      %v7155 = vrot.slane %v6740, 2
      %v7156 = vsel %vm5475, %v7153, %v7155
      %v7157 = vrot.slane %v6743, 2
      %v7158 = vsel %vm5475, %v7155, %v7157
      %v7159 = vrot.slane %v6746, 2
      %v7160 = vsel %vm5475, %v7157, %v7159
      %v7161 = vrot.slane %v6749, 2
      %v7162 = vsel %vm5475, %v7159, %v7161
      %v7163 = vrot.slane %v6752, 2
      %v7164 = vsel %vm5475, %v7161, %v7163
      %v7165 = vrot.slane %v6755, 2
      %v7166 = vsel %vm5475, %v7163, %v7165
      %v7167 = vrot.slane %v6758, 2
      %v7168 = vsel %vm5475, %v7165, %v7167
      %v7169 = vrot.slane %v6761, 2
      %v7170 = vsel %vm5475, %v7167, %v7169
      %v7171 = vrot.slane %v6764, 2
      %v7172 = vsel %vm5475, %v7169, %v7171
      %v7173 = vrot.slane %v6767, 2
      %v7174 = vsel %vm5475, %v7171, %v7173
      %v7175 = vrot.slane %v6770, 2
      %v7176 = vsel %vm5475, %v7173, %v7175
      %v7177 = vrot.slane %v6773, 2
      %v7178 = vsel %vm5475, %v7175, %v7177
      %vm7229 = vcmask 1044480
      %v7230 = vrot.slane %v6236, 3
      %v7231 = vrot.slane %v6239, 3
      %v7232 = vsel %vm7229, %v7230, %v7231
      %v7233 = vrot.slane %v6242, 3
      %v7234 = vsel %vm7229, %v7231, %v7233
      %v7235 = vrot.slane %v6245, 3
      %v7236 = vsel %vm7229, %v7233, %v7235
      %v7237 = vrot.slane %v6248, 3
      %v7238 = vsel %vm7229, %v7235, %v7237
      %v7239 = vrot.slane %v6251, 3
      %v7240 = vsel %vm7229, %v7237, %v7239
      %v7241 = vrot.slane %v6254, 3
      %v7242 = vsel %vm7229, %v7239, %v7241
      %v7243 = vrot.slane %v6257, 3
      %v7244 = vsel %vm7229, %v7241, %v7243
      %v7245 = vrot.slane %v6260, 3
      %v7246 = vsel %vm7229, %v7243, %v7245
      %v7247 = vrot.slane %v6263, 3
      %v7248 = vsel %vm7229, %v7245, %v7247
      %v7249 = vrot.slane %v6266, 3
      %v7250 = vsel %vm7229, %v7247, %v7249
      %v7251 = vrot.slane %v6269, 3
      %v7252 = vsel %vm7229, %v7249, %v7251
      %v7253 = vrot.slane %v6401, 3
      %v7254 = vsel %vm7229, %v7251, %v7253
      %v7255 = vrot.slane %v6404, 3
      %v7256 = vsel %vm7229, %v7253, %v7255
      %v7257 = vrot.slane %v6407, 3
      %v7258 = vsel %vm7229, %v7255, %v7257
      %v7259 = vrot.slane %v6410, 3
      %v7260 = vsel %vm7229, %v7257, %v7259
      %v7261 = vrot.slane %v6413, 3
      %v7262 = vsel %vm7229, %v7259, %v7261
      %v7263 = vrot.slane %v6416, 3
      %v7264 = vsel %vm7229, %v7261, %v7263
      %v7265 = vrot.slane %v6419, 3
      %v7266 = vsel %vm7229, %v7263, %v7265
      %v7267 = vrot.slane %v6422, 3
      %v7268 = vsel %vm7229, %v7265, %v7267
      %v7269 = vrot.slane %v6425, 3
      %v7270 = vsel %vm7229, %v7267, %v7269
      %v7271 = vrot.slane %v6428, 3
      %v7272 = vsel %vm7229, %v7269, %v7271
      %v7273 = vrot.slane %v6431, 3
      %v7274 = vsel %vm7229, %v7271, %v7273
      %v7275 = vrot.slane %v6434, 3
      %v7276 = vsel %vm7229, %v7273, %v7275
      %v7277 = vrot.slane %v6437, 3
      %v7278 = vsel %vm7229, %v7275, %v7277
      %v7279 = vrot.slane %v6569, 3
      %v7280 = vsel %vm7229, %v7277, %v7279
      %v7281 = vrot.slane %v6572, 3
      %v7282 = vsel %vm7229, %v7279, %v7281
      %v7283 = vrot.slane %v6575, 3
      %v7284 = vsel %vm7229, %v7281, %v7283
      %v7285 = vrot.slane %v6578, 3
      %v7286 = vsel %vm7229, %v7283, %v7285
      %v7287 = vrot.slane %v6581, 3
      %v7288 = vsel %vm7229, %v7285, %v7287
      %v7289 = vrot.slane %v6584, 3
      %v7290 = vsel %vm7229, %v7287, %v7289
      %v7291 = vrot.slane %v6587, 3
      %v7292 = vsel %vm7229, %v7289, %v7291
      %v7293 = vrot.slane %v6590, 3
      %v7294 = vsel %vm7229, %v7291, %v7293
      %v7295 = vrot.slane %v6593, 3
      %v7296 = vsel %vm7229, %v7293, %v7295
      %v7297 = vrot.slane %v6596, 3
      %v7298 = vsel %vm7229, %v7295, %v7297
      %v7299 = vrot.slane %v6599, 3
      %v7300 = vsel %vm7229, %v7297, %v7299
      %v7301 = vrot.slane %v6602, 3
      %v7302 = vsel %vm7229, %v7299, %v7301
      %v7303 = vrot.slane %v6605, 3
      %v7304 = vsel %vm7229, %v7301, %v7303
      %v7305 = vrot.slane %v6737, 3
      %v7306 = vsel %vm7229, %v7303, %v7305
      %v7307 = vrot.slane %v6740, 3
      %v7308 = vsel %vm7229, %v7305, %v7307
      %v7309 = vrot.slane %v6743, 3
      %v7310 = vsel %vm7229, %v7307, %v7309
      %v7311 = vrot.slane %v6746, 3
      %v7312 = vsel %vm7229, %v7309, %v7311
      %v7313 = vrot.slane %v6749, 3
      %v7314 = vsel %vm7229, %v7311, %v7313
      %v7315 = vrot.slane %v6752, 3
      %v7316 = vsel %vm7229, %v7313, %v7315
      %v7317 = vrot.slane %v6755, 3
      %v7318 = vsel %vm7229, %v7315, %v7317
      %v7319 = vrot.slane %v6758, 3
      %v7320 = vsel %vm7229, %v7317, %v7319
      %v7321 = vrot.slane %v6761, 3
      %v7322 = vsel %vm7229, %v7319, %v7321
      %v7323 = vrot.slane %v6764, 3
      %v7324 = vsel %vm7229, %v7321, %v7323
      %v7325 = vrot.slane %v6767, 3
      %v7326 = vsel %vm7229, %v7323, %v7325
      %v7327 = vrot.slane %v6770, 3
      %v7328 = vsel %vm7229, %v7325, %v7327
      %v7329 = vrot.slane %v6773, 3
      %v7330 = vsel %vm7229, %v7327, %v7329
      %7331 = vrot.lane.b32.xlu0 %v7232, 64
      %v7332 = vpop.permute.xlu0 %7331
      %7333 = vrot.lane.b32.xlu0 %v7234, 64
      %v7334 = vpop.permute.xlu0 %7333
      %7335 = vrot.lane.b32.xlu0 %v7236, 64
      %v7336 = vpop.permute.xlu0 %7335
      %7337 = vrot.lane.b32.xlu0 %v7238, 64
      %v7338 = vpop.permute.xlu0 %7337
      %7339 = vrot.lane.b32.xlu0 %v7240, 64
      %v7340 = vpop.permute.xlu0 %7339
      %7341 = vrot.lane.b32.xlu0 %v7242, 64
      %v7342 = vpop.permute.xlu0 %7341
      %7343 = vrot.lane.b32.xlu0 %v7244, 64
      %v7344 = vpop.permute.xlu0 %7343
      %7345 = vrot.lane.b32.xlu0 %v7246, 64
      %v7346 = vpop.permute.xlu0 %7345
      %7347 = vrot.lane.b32.xlu0 %v7248, 64
      %v7348 = vpop.permute.xlu0 %7347
      %7349 = vrot.lane.b32.xlu0 %v7250, 64
      %v7350 = vpop.permute.xlu0 %7349
      %7351 = vrot.lane.b32.xlu0 %v7252, 64
      %v7352 = vpop.permute.xlu0 %7351
      %7353 = vrot.lane.b32.xlu0 %v7254, 64
      %v7354 = vpop.permute.xlu0 %7353
      %7355 = vrot.lane.b32.xlu0 %v7256, 64
      %v7356 = vpop.permute.xlu0 %7355
      %7357 = vrot.lane.b32.xlu0 %v7258, 64
      %v7358 = vpop.permute.xlu0 %7357
      %7359 = vrot.lane.b32.xlu0 %v7260, 64
      %v7360 = vpop.permute.xlu0 %7359
      %7361 = vrot.lane.b32.xlu0 %v7262, 64
      %v7362 = vpop.permute.xlu0 %7361
      %7363 = vrot.lane.b32.xlu0 %v7264, 64
      %v7364 = vpop.permute.xlu0 %7363
      %7365 = vrot.lane.b32.xlu0 %v7266, 64
      %v7366 = vpop.permute.xlu0 %7365
      %7367 = vrot.lane.b32.xlu0 %v7268, 64
      %v7368 = vpop.permute.xlu0 %7367
      %7369 = vrot.lane.b32.xlu0 %v7270, 64
      %v7370 = vpop.permute.xlu0 %7369
      %7371 = vrot.lane.b32.xlu0 %v7272, 64
      %v7372 = vpop.permute.xlu0 %7371
      %7373 = vrot.lane.b32.xlu0 %v7274, 64
      %v7374 = vpop.permute.xlu0 %7373
      %7375 = vrot.lane.b32.xlu0 %v7276, 64
      %v7376 = vpop.permute.xlu0 %7375
      %7377 = vrot.lane.b32.xlu0 %v7278, 64
      %v7378 = vpop.permute.xlu0 %7377
      %7379 = vrot.lane.b32.xlu0 %v7280, 64
      %v7380 = vpop.permute.xlu0 %7379
      %7381 = vrot.lane.b32.xlu0 %v7282, 64
      %v7382 = vpop.permute.xlu0 %7381
      %7383 = vrot.lane.b32.xlu0 %v7284, 64
      %v7384 = vpop.permute.xlu0 %7383
      %7385 = vrot.lane.b32.xlu0 %v7286, 64
      %v7386 = vpop.permute.xlu0 %7385
      %7387 = vrot.lane.b32.xlu0 %v7288, 64
      %v7388 = vpop.permute.xlu0 %7387
      %7389 = vrot.lane.b32.xlu0 %v7290, 64
      %v7390 = vpop.permute.xlu0 %7389
      %7391 = vrot.lane.b32.xlu0 %v7292, 64
      %v7392 = vpop.permute.xlu0 %7391
      %7393 = vrot.lane.b32.xlu0 %v7294, 64
      %v7394 = vpop.permute.xlu0 %7393
      %7395 = vrot.lane.b32.xlu0 %v7296, 64
      %v7396 = vpop.permute.xlu0 %7395
      %7397 = vrot.lane.b32.xlu0 %v7298, 64
      %v7398 = vpop.permute.xlu0 %7397
      %7399 = vrot.lane.b32.xlu0 %v7300, 64
      %v7400 = vpop.permute.xlu0 %7399
      %7401 = vrot.lane.b32.xlu0 %v7302, 64
      %v7402 = vpop.permute.xlu0 %7401
      %7403 = vrot.lane.b32.xlu0 %v7304, 64
      %v7404 = vpop.permute.xlu0 %7403
      %7405 = vrot.lane.b32.xlu0 %v7306, 64
      %v7406 = vpop.permute.xlu0 %7405
      %7407 = vrot.lane.b32.xlu0 %v7308, 64
      %v7408 = vpop.permute.xlu0 %7407
      %7409 = vrot.lane.b32.xlu0 %v7310, 64
      %v7410 = vpop.permute.xlu0 %7409
      %7411 = vrot.lane.b32.xlu0 %v7312, 64
      %v7412 = vpop.permute.xlu0 %7411
      %7413 = vrot.lane.b32.xlu0 %v7314, 64
      %v7414 = vpop.permute.xlu0 %7413
      %7415 = vrot.lane.b32.xlu0 %v7316, 64
      %v7416 = vpop.permute.xlu0 %7415
      %7417 = vrot.lane.b32.xlu0 %v7318, 64
      %v7418 = vpop.permute.xlu0 %7417
      %7419 = vrot.lane.b32.xlu0 %v7320, 64
      %v7420 = vpop.permute.xlu0 %7419
      %7421 = vrot.lane.b32.xlu0 %v7322, 64
      %v7422 = vpop.permute.xlu0 %7421
      %7423 = vrot.lane.b32.xlu0 %v7324, 64
      %v7424 = vpop.permute.xlu0 %7423
      %7425 = vrot.lane.b32.xlu0 %v7326, 64
      %v7426 = vpop.permute.xlu0 %7425
      %7427 = vrot.lane.b32.xlu0 %v7328, 64
      %v7428 = vpop.permute.xlu0 %7427
      %7429 = vrot.lane.b32.xlu0 %v7330, 64
      %v7430 = vpop.permute.xlu0 %7429
      %vm7481 = vcmask 523264
      %v7482 = vsel %vm7481, %v6233, %v6928
      %v7483 = vsel %vm7481, %v6236, %v6930
      %v7484 = vsel %vm7481, %v6239, %v6932
      %v7485 = vsel %vm7481, %v6242, %v6934
      %v7486 = vsel %vm7481, %v6245, %v6936
      %v7487 = vsel %vm7481, %v6248, %v6938
      %v7488 = vsel %vm7481, %v6251, %v6940
      %v7489 = vsel %vm7481, %v6254, %v6942
      %v7490 = vsel %vm7481, %v6257, %v6944
      %v7491 = vsel %vm7481, %v6260, %v6946
      %v7492 = vsel %vm7481, %v6263, %v6948
      %v7493 = vsel %vm7481, %v6266, %v6950
      %v7494 = vsel %vm7481, %v6269, %v6952
      %v7495 = vsel %vm7481, %v6401, %v6954
      %v7496 = vsel %vm7481, %v6404, %v6956
      %v7497 = vsel %vm7481, %v6407, %v6958
      %v7498 = vsel %vm7481, %v6410, %v6960
      %v7499 = vsel %vm7481, %v6413, %v6962
      %v7500 = vsel %vm7481, %v6416, %v6964
      %v7501 = vsel %vm7481, %v6419, %v6966
      %v7502 = vsel %vm7481, %v6422, %v6968
      %v7503 = vsel %vm7481, %v6425, %v6970
      %v7504 = vsel %vm7481, %v6428, %v6972
      %v7505 = vsel %vm7481, %v6431, %v6974
      %v7506 = vsel %vm7481, %v6434, %v6976
      %v7507 = vsel %vm7481, %v6437, %v6978
      %v7508 = vsel %vm7481, %v6569, %v6980
      %v7509 = vsel %vm7481, %v6572, %v6982
      %v7510 = vsel %vm7481, %v6575, %v6984
      %v7511 = vsel %vm7481, %v6578, %v6986
      %v7512 = vsel %vm7481, %v6581, %v6988
      %v7513 = vsel %vm7481, %v6584, %v6990
      %v7514 = vsel %vm7481, %v6587, %v6992
      %v7515 = vsel %vm7481, %v6590, %v6994
      %v7516 = vsel %vm7481, %v6593, %v6996
      %v7517 = vsel %vm7481, %v6596, %v6998
      %v7518 = vsel %vm7481, %v6599, %v7000
      %v7519 = vsel %vm7481, %v6602, %v7002
      %v7520 = vsel %vm7481, %v6605, %v7004
      %v7521 = vsel %vm7481, %v6737, %v7006
      %v7522 = vsel %vm7481, %v6740, %v7008
      %v7523 = vsel %vm7481, %v6743, %v7010
      %v7524 = vsel %vm7481, %v6746, %v7012
      %v7525 = vsel %vm7481, %v6749, %v7014
      %v7526 = vsel %vm7481, %v6752, %v7016
      %v7527 = vsel %vm7481, %v6755, %v7018
      %v7528 = vsel %vm7481, %v6758, %v7020
      %v7529 = vsel %vm7481, %v6761, %v7022
      %v7530 = vsel %vm7481, %v6764, %v7024
      %v7531 = vsel %vm7481, %v6767, %v7026
      %v7532 = vsel %vm7481, %v7080, %v7332
      %v7533 = vsel %vm7481, %v7082, %v7334
      %v7534 = vsel %vm7481, %v7084, %v7336
      %v7535 = vsel %vm7481, %v7086, %v7338
      %v7536 = vsel %vm7481, %v7088, %v7340
      %v7537 = vsel %vm7481, %v7090, %v7342
      %v7538 = vsel %vm7481, %v7092, %v7344
      %v7539 = vsel %vm7481, %v7094, %v7346
      %v7540 = vsel %vm7481, %v7096, %v7348
      %v7541 = vsel %vm7481, %v7098, %v7350
      %v7542 = vsel %vm7481, %v7100, %v7352
      %v7543 = vsel %vm7481, %v7102, %v7354
      %v7544 = vsel %vm7481, %v7104, %v7356
      %v7545 = vsel %vm7481, %v7106, %v7358
      %v7546 = vsel %vm7481, %v7108, %v7360
      %v7547 = vsel %vm7481, %v7110, %v7362
      %v7548 = vsel %vm7481, %v7112, %v7364
      %v7549 = vsel %vm7481, %v7114, %v7366
      %v7550 = vsel %vm7481, %v7116, %v7368
      %v7551 = vsel %vm7481, %v7118, %v7370
      %v7552 = vsel %vm7481, %v7120, %v7372
      %v7553 = vsel %vm7481, %v7122, %v7374
      %v7554 = vsel %vm7481, %v7124, %v7376
      %v7555 = vsel %vm7481, %v7126, %v7378
      %v7556 = vsel %vm7481, %v7128, %v7380
      %v7557 = vsel %vm7481, %v7130, %v7382
      %v7558 = vsel %vm7481, %v7132, %v7384
      %v7559 = vsel %vm7481, %v7134, %v7386
      %v7560 = vsel %vm7481, %v7136, %v7388
      %v7561 = vsel %vm7481, %v7138, %v7390
      %v7562 = vsel %vm7481, %v7140, %v7392
      %v7563 = vsel %vm7481, %v7142, %v7394
      %v7564 = vsel %vm7481, %v7144, %v7396
      %v7565 = vsel %vm7481, %v7146, %v7398
      %v7566 = vsel %vm7481, %v7148, %v7400
      %v7567 = vsel %vm7481, %v7150, %v7402
      %v7568 = vsel %vm7481, %v7152, %v7404
      %v7569 = vsel %vm7481, %v7154, %v7406
      %v7570 = vsel %vm7481, %v7156, %v7408
      %v7571 = vsel %vm7481, %v7158, %v7410
      %v7572 = vsel %vm7481, %v7160, %v7412
      %v7573 = vsel %vm7481, %v7162, %v7414
      %v7574 = vsel %vm7481, %v7164, %v7416
      %v7575 = vsel %vm7481, %v7166, %v7418
      %v7576 = vsel %vm7481, %v7168, %v7420
      %v7577 = vsel %vm7481, %v7170, %v7422
      %v7578 = vsel %vm7481, %v7172, %v7424
      %v7579 = vsel %vm7481, %v7174, %v7426
      %v7580 = vsel %vm7481, %v7176, %v7428
      %v7581 = vsel %vm7481, %v7178, %v7430
      %v7582 = vld [vmem:[%s4] sm:$0xff]
      %v7583 = vld [vmem:[%s4 + $0x8] sm:$0xff]
      %v7584 = vld [vmem:[%s4 + $0x10] sm:$0xff]
      %v7585 = vld [vmem:[%s4 + $0x18] sm:$0xff]
      %v7586 = vld [vmem:[%s4 + $0x20] sm:$0xff]
      %v7587 = vld [vmem:[%s4 + $0x28] sm:$0xff]
      %v7588 = vld [vmem:[%s4 + $0x30] sm:$0xff]
      %v7589 = vld [vmem:[%s4 + $0x38] sm:$0xff]
      %v7590 = vld [vmem:[%s4 + $0x40] sm:$0xff]
      %v7591 = vld [vmem:[%s4 + $0x48] sm:$0xff]
      %v7592 = vld [vmem:[%s4 + $0x50] sm:$0xff]
      %v7593 = vld [vmem:[%s4 + $0x58] sm:$0xff]
      %v7594 = vld [vmem:[%s4 + $0x60] sm:$0xff]
      %v7595 = vld [vmem:[%s4 + $0x68] sm:$0xff]
      %v7596 = vld [vmem:[%s4 + $0x70] sm:$0xff]
      %v7597 = vld [vmem:[%s4 + $0x78] sm:$0xff]
      %v7598 = vld [vmem:[%s4 + $0x80] sm:$0xff]
      %v7599 = vld [vmem:[%s4 + $0x88] sm:$0xff]
      %v7600 = vld [vmem:[%s4 + $0x90] sm:$0xff]
      %v7601 = vld [vmem:[%s4 + $0x98] sm:$0xff]
      %v7602 = vld [vmem:[%s4 + $0xa0] sm:$0xff]
      %v7603 = vld [vmem:[%s4 + $0xa8] sm:$0xff]
      %v7604 = vld [vmem:[%s4 + $0xb0] sm:$0xff]
      %v7605 = vld [vmem:[%s4 + $0xb8] sm:$0xff]
      %v7606 = vld [vmem:[%s4 + $0xc0] sm:$0xff]
      %v7607 = vld [vmem:[%s4 + $0xc8] sm:$0xff]
      %v7608 = vld [vmem:[%s4 + $0xd0] sm:$0xff]
      %v7609 = vld [vmem:[%s4 + $0xd8] sm:$0xff]
      %v7610 = vld [vmem:[%s4 + $0xe0] sm:$0xff]
      %v7611 = vld [vmem:[%s4 + $0xe8] sm:$0xff]
      %v7612 = vld [vmem:[%s4 + $0xf0] sm:$0xff]
      %v7613 = vld [vmem:[%s4 + $0xf8] sm:$0xff]
      %v7614 = vld [vmem:[%s5] sm:$0x1]
      %v7616 = vperm.slane %v7614, 0
      %7618 = vmatpush.msra.mxu0 %v7597
      %7619 = vmatpush.msra.mxu0 %v7596
      %7620 = vmatpush.msra.mxu0 %v7595
      %7621 = vmatpush.msra.mxu0 %v7594
      %7622 = vmatpush.msra.mxu0 %v7593
      %7623 = vmatpush.msra.mxu0 %v7592
      %7624 = vmatpush.msra.mxu0 %v7591
      %7625 = vmatpush.msra.mxu0 %v7590
      %7626 = vmatpush.msra.mxu0 %v7589
      %7627 = vmatpush.msra.mxu0 %v7588
      %7628 = vmatpush.msra.mxu0 %v7587
      %7629 = vmatpush.msra.mxu0 %v7586
      %7630 = vmatpush.msra.mxu0 %v7585
      %7631 = vmatpush.msra.mxu0 %v7584
      %7632 = vmatpush.msra.mxu0 %v7583
      %7633 = vmatpush.msra.mxu0 %v7582
      %7634 = vmatmul.f32.gmra.mxu0 %v7482
      %v7635 = vpop.f32.mrf.mxu0
      %v7636 = vadd.f32 %v7616, %v7635
      %7637 = vmatmul.f32.gmra.mxu0 %v7483
      %v7638 = vpop.f32.mrf.mxu0
      %v7639 = vadd.f32 %v7616, %v7638
      %7640 = vmatmul.f32.gmra.mxu0 %v7484
      %v7641 = vpop.f32.mrf.mxu0
      %v7642 = vadd.f32 %v7616, %v7641
      %7643 = vmatmul.f32.gmra.mxu0 %v7485
      %v7644 = vpop.f32.mrf.mxu0
      %v7645 = vadd.f32 %v7616, %v7644
      %7646 = vmatmul.f32.gmra.mxu0 %v7486
      %v7647 = vpop.f32.mrf.mxu0
      %v7648 = vadd.f32 %v7616, %v7647
      %7649 = vmatmul.f32.gmra.mxu0 %v7487
      %v7650 = vpop.f32.mrf.mxu0
      %v7651 = vadd.f32 %v7616, %v7650
      %7652 = vmatmul.f32.gmra.mxu0 %v7488
      %v7653 = vpop.f32.mrf.mxu0
      %v7654 = vadd.f32 %v7616, %v7653
      %7655 = vmatmul.f32.gmra.mxu0 %v7489
      %v7656 = vpop.f32.mrf.mxu0
      %v7657 = vadd.f32 %v7616, %v7656
      %7658 = vmatmul.f32.gmra.mxu0 %v7490
      %v7659 = vpop.f32.mrf.mxu0
      %v7660 = vadd.f32 %v7616, %v7659
      %7661 = vmatmul.f32.gmra.mxu0 %v7491
      %v7662 = vpop.f32.mrf.mxu0
      %v7663 = vadd.f32 %v7616, %v7662
      %7664 = vmatmul.f32.gmra.mxu0 %v7492
      %v7665 = vpop.f32.mrf.mxu0
      %v7666 = vadd.f32 %v7616, %v7665
      %7667 = vmatmul.f32.gmra.mxu0 %v7493
      %v7668 = vpop.f32.mrf.mxu0
      %v7669 = vadd.f32 %v7616, %v7668
      %7670 = vmatmul.f32.gmra.mxu0 %v7494
      %v7671 = vpop.f32.mrf.mxu0
      %v7672 = vadd.f32 %v7616, %v7671
      %7673 = vmatmul.f32.gmra.mxu0 %v7495
      %v7674 = vpop.f32.mrf.mxu0
      %v7675 = vadd.f32 %v7616, %v7674
      %7676 = vmatmul.f32.gmra.mxu0 %v7496
      %v7677 = vpop.f32.mrf.mxu0
      %v7678 = vadd.f32 %v7616, %v7677
      %7679 = vmatmul.f32.gmra.mxu0 %v7497
      %v7680 = vpop.f32.mrf.mxu0
      %v7681 = vadd.f32 %v7616, %v7680
      %7682 = vmatmul.f32.gmra.mxu0 %v7498
      %v7683 = vpop.f32.mrf.mxu0
      %v7684 = vadd.f32 %v7616, %v7683
      %7685 = vmatmul.f32.gmra.mxu0 %v7499
      %v7686 = vpop.f32.mrf.mxu0
      %v7687 = vadd.f32 %v7616, %v7686
      %7688 = vmatmul.f32.gmra.mxu0 %v7500
      %v7689 = vpop.f32.mrf.mxu0
      %v7690 = vadd.f32 %v7616, %v7689
      %7691 = vmatmul.f32.gmra.mxu0 %v7501
      %v7692 = vpop.f32.mrf.mxu0
      %v7693 = vadd.f32 %v7616, %v7692
      %7694 = vmatmul.f32.gmra.mxu0 %v7502
      %v7695 = vpop.f32.mrf.mxu0
      %v7696 = vadd.f32 %v7616, %v7695
      %7697 = vmatmul.f32.gmra.mxu0 %v7503
      %v7698 = vpop.f32.mrf.mxu0
      %v7699 = vadd.f32 %v7616, %v7698
      %7700 = vmatmul.f32.gmra.mxu0 %v7504
      %v7701 = vpop.f32.mrf.mxu0
      %v7702 = vadd.f32 %v7616, %v7701
      %7703 = vmatmul.f32.gmra.mxu0 %v7505
      %v7704 = vpop.f32.mrf.mxu0
      %v7705 = vadd.f32 %v7616, %v7704
      %7706 = vmatmul.f32.gmra.mxu0 %v7506
      %v7707 = vpop.f32.mrf.mxu0
      %v7708 = vadd.f32 %v7616, %v7707
      %7709 = vmatmul.f32.gmra.mxu0 %v7507
      %v7710 = vpop.f32.mrf.mxu0
      %v7711 = vadd.f32 %v7616, %v7710
      %7712 = vmatmul.f32.gmra.mxu0 %v7508
      %v7713 = vpop.f32.mrf.mxu0
      %v7714 = vadd.f32 %v7616, %v7713
      %7715 = vmatmul.f32.gmra.mxu0 %v7509
      %v7716 = vpop.f32.mrf.mxu0
      %v7717 = vadd.f32 %v7616, %v7716
      %7718 = vmatmul.f32.gmra.mxu0 %v7510
      %v7719 = vpop.f32.mrf.mxu0
      %v7720 = vadd.f32 %v7616, %v7719
      %7721 = vmatmul.f32.gmra.mxu0 %v7511
      %v7722 = vpop.f32.mrf.mxu0
      %v7723 = vadd.f32 %v7616, %v7722
      %7724 = vmatmul.f32.gmra.mxu0 %v7512
      %v7725 = vpop.f32.mrf.mxu0
      %v7726 = vadd.f32 %v7616, %v7725
      %7727 = vmatmul.f32.gmra.mxu0 %v7513
      %v7728 = vpop.f32.mrf.mxu0
      %v7729 = vadd.f32 %v7616, %v7728
      %7730 = vmatmul.f32.gmra.mxu0 %v7514
      %v7731 = vpop.f32.mrf.mxu0
      %v7732 = vadd.f32 %v7616, %v7731
      %7733 = vmatmul.f32.gmra.mxu0 %v7515
      %v7734 = vpop.f32.mrf.mxu0
      %v7735 = vadd.f32 %v7616, %v7734
      %7736 = vmatmul.f32.gmra.mxu0 %v7516
      %v7737 = vpop.f32.mrf.mxu0
      %v7738 = vadd.f32 %v7616, %v7737
      %7739 = vmatmul.f32.gmra.mxu0 %v7517
      %v7740 = vpop.f32.mrf.mxu0
      %v7741 = vadd.f32 %v7616, %v7740
      %7742 = vmatmul.f32.gmra.mxu0 %v7518
      %v7743 = vpop.f32.mrf.mxu0
      %v7744 = vadd.f32 %v7616, %v7743
      %7745 = vmatmul.f32.gmra.mxu0 %v7519
      %v7746 = vpop.f32.mrf.mxu0
      %v7747 = vadd.f32 %v7616, %v7746
      %7748 = vmatmul.f32.gmra.mxu0 %v7520
      %v7749 = vpop.f32.mrf.mxu0
      %v7750 = vadd.f32 %v7616, %v7749
      %7751 = vmatmul.f32.gmra.mxu0 %v7521
      %v7752 = vpop.f32.mrf.mxu0
      %v7753 = vadd.f32 %v7616, %v7752
      %7754 = vmatmul.f32.gmra.mxu0 %v7522
      %v7755 = vpop.f32.mrf.mxu0
      %v7756 = vadd.f32 %v7616, %v7755
      %7757 = vmatmul.f32.gmra.mxu0 %v7523
      %v7758 = vpop.f32.mrf.mxu0
      %v7759 = vadd.f32 %v7616, %v7758
      %7760 = vmatmul.f32.gmra.mxu0 %v7524
      %v7761 = vpop.f32.mrf.mxu0
      %v7762 = vadd.f32 %v7616, %v7761
      %7763 = vmatmul.f32.gmra.mxu0 %v7525
      %v7764 = vpop.f32.mrf.mxu0
      %v7765 = vadd.f32 %v7616, %v7764
      %7766 = vmatmul.f32.gmra.mxu0 %v7526
      %v7767 = vpop.f32.mrf.mxu0
      %v7768 = vadd.f32 %v7616, %v7767
      %7769 = vmatmul.f32.gmra.mxu0 %v7527
      %v7770 = vpop.f32.mrf.mxu0
      %v7771 = vadd.f32 %v7616, %v7770
      %7772 = vmatmul.f32.gmra.mxu0 %v7528
      %v7773 = vpop.f32.mrf.mxu0
      %v7774 = vadd.f32 %v7616, %v7773
      %7775 = vmatmul.f32.gmra.mxu0 %v7529
      %v7776 = vpop.f32.mrf.mxu0
      %v7777 = vadd.f32 %v7616, %v7776
      %7778 = vmatmul.f32.gmra.mxu0 %v7530
      %v7779 = vpop.f32.mrf.mxu0
      %v7780 = vadd.f32 %v7616, %v7779
      %7781 = vmatmul.f32.gmra.mxu0 %v7531
      %v7782 = vpop.f32.mrf.mxu0
      %v7783 = vadd.f32 %v7616, %v7782
      %7784 = vdwg.mxu0
      %7785 = vmatpush.msra.mxu0 %v7613
      %7786 = vmatpush.msra.mxu0 %v7612
      %7787 = vmatpush.msra.mxu0 %v7611
      %7788 = vmatpush.msra.mxu0 %v7610
      %7789 = vmatpush.msra.mxu0 %v7609
      %7790 = vmatpush.msra.mxu0 %v7608
      %7791 = vmatpush.msra.mxu0 %v7607
      %7792 = vmatpush.msra.mxu0 %v7606
      %7793 = vmatpush.msra.mxu0 %v7605
      %7794 = vmatpush.msra.mxu0 %v7604
      %7795 = vmatpush.msra.mxu0 %v7603
      %7796 = vmatpush.msra.mxu0 %v7602
      %7797 = vmatpush.msra.mxu0 %v7601
      %7798 = vmatpush.msra.mxu0 %v7600
      %7799 = vmatpush.msra.mxu0 %v7599
      %7800 = vmatpush.msra.mxu0 %v7598
      %7801 = vmatmul.f32.gmra.mxu0 %v7532
      %v7802 = vpop.f32.mrf.mxu0
      %v7803 = vadd.f32 %v7636, %v7802
      %7804 = vmatmul.f32.gmra.mxu0 %v7533
      %v7805 = vpop.f32.mrf.mxu0
      %v7806 = vadd.f32 %v7639, %v7805
      %7807 = vmatmul.f32.gmra.mxu0 %v7534
      %v7808 = vpop.f32.mrf.mxu0
      %v7809 = vadd.f32 %v7642, %v7808
      %7810 = vmatmul.f32.gmra.mxu0 %v7535
      %v7811 = vpop.f32.mrf.mxu0
      %v7812 = vadd.f32 %v7645, %v7811
      %7813 = vmatmul.f32.gmra.mxu0 %v7536
      %v7814 = vpop.f32.mrf.mxu0
      %v7815 = vadd.f32 %v7648, %v7814
      %7816 = vmatmul.f32.gmra.mxu0 %v7537
      %v7817 = vpop.f32.mrf.mxu0
      %v7818 = vadd.f32 %v7651, %v7817
      %7819 = vmatmul.f32.gmra.mxu0 %v7538
      %v7820 = vpop.f32.mrf.mxu0
      %v7821 = vadd.f32 %v7654, %v7820
      %7822 = vmatmul.f32.gmra.mxu0 %v7539
      %v7823 = vpop.f32.mrf.mxu0
      %v7824 = vadd.f32 %v7657, %v7823
      %7825 = vmatmul.f32.gmra.mxu0 %v7540
      %v7826 = vpop.f32.mrf.mxu0
      %v7827 = vadd.f32 %v7660, %v7826
      %7828 = vmatmul.f32.gmra.mxu0 %v7541
      %v7829 = vpop.f32.mrf.mxu0
      %v7830 = vadd.f32 %v7663, %v7829
      %7831 = vmatmul.f32.gmra.mxu0 %v7542
      %v7832 = vpop.f32.mrf.mxu0
      %v7833 = vadd.f32 %v7666, %v7832
      %7834 = vmatmul.f32.gmra.mxu0 %v7543
      %v7835 = vpop.f32.mrf.mxu0
      %v7836 = vadd.f32 %v7669, %v7835
      %7837 = vmatmul.f32.gmra.mxu0 %v7544
      %v7838 = vpop.f32.mrf.mxu0
      %v7839 = vadd.f32 %v7672, %v7838
      %7840 = vmatmul.f32.gmra.mxu0 %v7545
      %v7841 = vpop.f32.mrf.mxu0
      %v7842 = vadd.f32 %v7675, %v7841
      %7843 = vmatmul.f32.gmra.mxu0 %v7546
      %v7844 = vpop.f32.mrf.mxu0
      %v7845 = vadd.f32 %v7678, %v7844
      %7846 = vmatmul.f32.gmra.mxu0 %v7547
      %v7847 = vpop.f32.mrf.mxu0
      %v7848 = vadd.f32 %v7681, %v7847
      %7849 = vmatmul.f32.gmra.mxu0 %v7548
      %v7850 = vpop.f32.mrf.mxu0
      %v7851 = vadd.f32 %v7684, %v7850
      %7852 = vmatmul.f32.gmra.mxu0 %v7549
      %v7853 = vpop.f32.mrf.mxu0
      %v7854 = vadd.f32 %v7687, %v7853
      %7855 = vmatmul.f32.gmra.mxu0 %v7550
      %v7856 = vpop.f32.mrf.mxu0
      %v7857 = vadd.f32 %v7690, %v7856
      %7858 = vmatmul.f32.gmra.mxu0 %v7551
      %v7859 = vpop.f32.mrf.mxu0
      %v7860 = vadd.f32 %v7693, %v7859
      %7861 = vmatmul.f32.gmra.mxu0 %v7552
      %v7862 = vpop.f32.mrf.mxu0
      %v7863 = vadd.f32 %v7696, %v7862
      %7864 = vmatmul.f32.gmra.mxu0 %v7553
      %v7865 = vpop.f32.mrf.mxu0
      %v7866 = vadd.f32 %v7699, %v7865
      %7867 = vmatmul.f32.gmra.mxu0 %v7554
      %v7868 = vpop.f32.mrf.mxu0
      %v7869 = vadd.f32 %v7702, %v7868
      %7870 = vmatmul.f32.gmra.mxu0 %v7555
      %v7871 = vpop.f32.mrf.mxu0
      %v7872 = vadd.f32 %v7705, %v7871
      %7873 = vmatmul.f32.gmra.mxu0 %v7556
      %v7874 = vpop.f32.mrf.mxu0
      %v7875 = vadd.f32 %v7708, %v7874
      %7876 = vmatmul.f32.gmra.mxu0 %v7557
      %v7877 = vpop.f32.mrf.mxu0
      %v7878 = vadd.f32 %v7711, %v7877
      %7879 = vmatmul.f32.gmra.mxu0 %v7558
      %v7880 = vpop.f32.mrf.mxu0
      %v7881 = vadd.f32 %v7714, %v7880
      %7882 = vmatmul.f32.gmra.mxu0 %v7559
      %v7883 = vpop.f32.mrf.mxu0
      %v7884 = vadd.f32 %v7717, %v7883
      %7885 = vmatmul.f32.gmra.mxu0 %v7560
      %v7886 = vpop.f32.mrf.mxu0
      %v7887 = vadd.f32 %v7720, %v7886
      %7888 = vmatmul.f32.gmra.mxu0 %v7561
      %v7889 = vpop.f32.mrf.mxu0
      %v7890 = vadd.f32 %v7723, %v7889
      %7891 = vmatmul.f32.gmra.mxu0 %v7562
      %v7892 = vpop.f32.mrf.mxu0
      %v7893 = vadd.f32 %v7726, %v7892
      %7894 = vmatmul.f32.gmra.mxu0 %v7563
      %v7895 = vpop.f32.mrf.mxu0
      %v7896 = vadd.f32 %v7729, %v7895
      %7897 = vmatmul.f32.gmra.mxu0 %v7564
      %v7898 = vpop.f32.mrf.mxu0
      %v7899 = vadd.f32 %v7732, %v7898
      %7900 = vmatmul.f32.gmra.mxu0 %v7565
      %v7901 = vpop.f32.mrf.mxu0
      %v7902 = vadd.f32 %v7735, %v7901
      %7903 = vmatmul.f32.gmra.mxu0 %v7566
      %v7904 = vpop.f32.mrf.mxu0
      %v7905 = vadd.f32 %v7738, %v7904
      %7906 = vmatmul.f32.gmra.mxu0 %v7567
      %v7907 = vpop.f32.mrf.mxu0
      %v7908 = vadd.f32 %v7741, %v7907
      %7909 = vmatmul.f32.gmra.mxu0 %v7568
      %v7910 = vpop.f32.mrf.mxu0
      %v7911 = vadd.f32 %v7744, %v7910
      %7912 = vmatmul.f32.gmra.mxu0 %v7569
      %v7913 = vpop.f32.mrf.mxu0
      %v7914 = vadd.f32 %v7747, %v7913
      %7915 = vmatmul.f32.gmra.mxu0 %v7570
      %v7916 = vpop.f32.mrf.mxu0
      %v7917 = vadd.f32 %v7750, %v7916
      %7918 = vmatmul.f32.gmra.mxu0 %v7571
      %v7919 = vpop.f32.mrf.mxu0
      %v7920 = vadd.f32 %v7753, %v7919
      %7921 = vmatmul.f32.gmra.mxu0 %v7572
      %v7922 = vpop.f32.mrf.mxu0
      %v7923 = vadd.f32 %v7756, %v7922
      %7924 = vmatmul.f32.gmra.mxu0 %v7573
      %v7925 = vpop.f32.mrf.mxu0
      %v7926 = vadd.f32 %v7759, %v7925
      %7927 = vmatmul.f32.gmra.mxu0 %v7574
      %v7928 = vpop.f32.mrf.mxu0
      %v7929 = vadd.f32 %v7762, %v7928
      %7930 = vmatmul.f32.gmra.mxu0 %v7575
      %v7931 = vpop.f32.mrf.mxu0
      %v7932 = vadd.f32 %v7765, %v7931
      %7933 = vmatmul.f32.gmra.mxu0 %v7576
      %v7934 = vpop.f32.mrf.mxu0
      %v7935 = vadd.f32 %v7768, %v7934
      %7936 = vmatmul.f32.gmra.mxu0 %v7577
      %v7937 = vpop.f32.mrf.mxu0
      %v7938 = vadd.f32 %v7771, %v7937
      %7939 = vmatmul.f32.gmra.mxu0 %v7578
      %v7940 = vpop.f32.mrf.mxu0
      %v7941 = vadd.f32 %v7774, %v7940
      %7942 = vmatmul.f32.gmra.mxu0 %v7579
      %v7943 = vpop.f32.mrf.mxu0
      %v7944 = vadd.f32 %v7777, %v7943
      %7945 = vmatmul.f32.gmra.mxu0 %v7580
      %v7946 = vpop.f32.mrf.mxu0
      %v7947 = vadd.f32 %v7780, %v7946
      %7948 = vmatmul.f32.gmra.mxu0 %v7581
      %v7949 = vpop.f32.mrf.mxu0
      %v7950 = vadd.f32 %v7783, %v7949
      %7951 = vdwg.mxu0
      %v7952 = vmax.f32 %v7803, 0.0
      %v7953 = vmax.f32 %v7806, 0.0
      %v7954 = vmax.f32 %v7809, 0.0
      %v7955 = vmax.f32 %v7812, 0.0
      %v7956 = vmax.f32 %v7815, 0.0
      %v7957 = vmax.f32 %v7818, 0.0
      %v7958 = vmax.f32 %v7821, 0.0
      %v7959 = vmax.f32 %v7824, 0.0
      %v7960 = vmax.f32 %v7827, 0.0
      %v7961 = vmax.f32 %v7830, 0.0
      %v7962 = vmax.f32 %v7833, 0.0
      %v7963 = vmax.f32 %v7836, 0.0
      %v7964 = vmax.f32 %v7839, 0.0
      %v7965 = vmax.f32 %v7842, 0.0
      %v7966 = vmax.f32 %v7845, 0.0
      %v7967 = vmax.f32 %v7848, 0.0
      %v7968 = vmax.f32 %v7851, 0.0
      %v7969 = vmax.f32 %v7854, 0.0
      %v7970 = vmax.f32 %v7857, 0.0
      %v7971 = vmax.f32 %v7860, 0.0
      %v7972 = vmax.f32 %v7863, 0.0
      %v7973 = vmax.f32 %v7866, 0.0
      %v7974 = vmax.f32 %v7869, 0.0
      %v7975 = vmax.f32 %v7872, 0.0
      %v7976 = vmax.f32 %v7875, 0.0
      %v7977 = vmax.f32 %v7878, 0.0
      %v7978 = vmax.f32 %v7881, 0.0
      %v7979 = vmax.f32 %v7884, 0.0
      %v7980 = vmax.f32 %v7887, 0.0
      %v7981 = vmax.f32 %v7890, 0.0
      %v7982 = vmax.f32 %v7893, 0.0
      %v7983 = vmax.f32 %v7896, 0.0
      %v7984 = vmax.f32 %v7899, 0.0
      %v7985 = vmax.f32 %v7902, 0.0
      %v7986 = vmax.f32 %v7905, 0.0
      %v7987 = vmax.f32 %v7908, 0.0
      %v7988 = vmax.f32 %v7911, 0.0
      %v7989 = vmax.f32 %v7914, 0.0
      %v7990 = vmax.f32 %v7917, 0.0
      %v7991 = vmax.f32 %v7920, 0.0
      %v7992 = vmax.f32 %v7923, 0.0
      %v7993 = vmax.f32 %v7926, 0.0
      %v7994 = vmax.f32 %v7929, 0.0
      %v7995 = vmax.f32 %v7932, 0.0
      %v7996 = vmax.f32 %v7935, 0.0
      %v7997 = vmax.f32 %v7938, 0.0
      %v7998 = vmax.f32 %v7941, 0.0
      %v7999 = vmax.f32 %v7944, 0.0
      %v8000 = vmax.f32 %v7947, 0.0
      %v8001 = vmax.f32 %v7950, 0.0
      %v8051 = vrot.slane %v7952, 1
      %v8052 = vrot.slane %v7953, 1
      %v8053 = vsel %vm4726, %v8051, %v8052
      %v8054 = vrot.slane %v7954, 1
      %v8055 = vsel %vm4726, %v8052, %v8054
      %v8056 = vrot.slane %v7955, 1
      %v8057 = vsel %vm4726, %v8054, %v8056
      %v8058 = vrot.slane %v7956, 1
      %v8059 = vsel %vm4726, %v8056, %v8058
      %v8060 = vrot.slane %v7957, 1
      %v8061 = vsel %vm4726, %v8058, %v8060
      %v8062 = vrot.slane %v7958, 1
      %v8063 = vsel %vm4726, %v8060, %v8062
      %v8064 = vrot.slane %v7959, 1
      %v8065 = vsel %vm4726, %v8062, %v8064
      %v8066 = vrot.slane %v7960, 1
      %v8067 = vsel %vm4726, %v8064, %v8066
      %v8068 = vrot.slane %v7961, 1
      %v8069 = vsel %vm4726, %v8066, %v8068
      %v8070 = vrot.slane %v7962, 1
      %v8071 = vsel %vm4726, %v8068, %v8070
      %v8072 = vrot.slane %v7963, 1
      %v8073 = vsel %vm4726, %v8070, %v8072
      %v8074 = vrot.slane %v7964, 1
      %v8075 = vsel %vm4726, %v8072, %v8074
      %v8076 = vrot.slane %v7965, 1
      %v8077 = vsel %vm4726, %v8074, %v8076
      %v8078 = vrot.slane %v7966, 1
      %v8079 = vsel %vm4726, %v8076, %v8078
      %v8080 = vrot.slane %v7967, 1
      %v8081 = vsel %vm4726, %v8078, %v8080
      %v8082 = vrot.slane %v7968, 1
      %v8083 = vsel %vm4726, %v8080, %v8082
      %v8084 = vrot.slane %v7969, 1
      %v8085 = vsel %vm4726, %v8082, %v8084
      %v8086 = vrot.slane %v7970, 1
      %v8087 = vsel %vm4726, %v8084, %v8086
      %v8088 = vrot.slane %v7971, 1
      %v8089 = vsel %vm4726, %v8086, %v8088
      %v8090 = vrot.slane %v7972, 1
      %v8091 = vsel %vm4726, %v8088, %v8090
      %v8092 = vrot.slane %v7973, 1
      %v8093 = vsel %vm4726, %v8090, %v8092
      %v8094 = vrot.slane %v7974, 1
      %v8095 = vsel %vm4726, %v8092, %v8094
      %v8096 = vrot.slane %v7975, 1
      %v8097 = vsel %vm4726, %v8094, %v8096
      %v8098 = vrot.slane %v7976, 1
      %v8099 = vsel %vm4726, %v8096, %v8098
      %v8100 = vrot.slane %v7977, 1
      %v8101 = vsel %vm4726, %v8098, %v8100
      %v8102 = vrot.slane %v7978, 1
      %v8103 = vsel %vm4726, %v8100, %v8102
      %v8104 = vrot.slane %v7979, 1
      %v8105 = vsel %vm4726, %v8102, %v8104
      %v8106 = vrot.slane %v7980, 1
      %v8107 = vsel %vm4726, %v8104, %v8106
      %v8108 = vrot.slane %v7981, 1
      %v8109 = vsel %vm4726, %v8106, %v8108
      %v8110 = vrot.slane %v7982, 1
      %v8111 = vsel %vm4726, %v8108, %v8110
      %v8112 = vrot.slane %v7983, 1
      %v8113 = vsel %vm4726, %v8110, %v8112
      %v8114 = vrot.slane %v7984, 1
      %v8115 = vsel %vm4726, %v8112, %v8114
      %v8116 = vrot.slane %v7985, 1
      %v8117 = vsel %vm4726, %v8114, %v8116
      %v8118 = vrot.slane %v7986, 1
      %v8119 = vsel %vm4726, %v8116, %v8118
      %v8120 = vrot.slane %v7987, 1
      %v8121 = vsel %vm4726, %v8118, %v8120
      %v8122 = vrot.slane %v7988, 1
      %v8123 = vsel %vm4726, %v8120, %v8122
      %v8124 = vrot.slane %v7989, 1
      %v8125 = vsel %vm4726, %v8122, %v8124
      %v8126 = vrot.slane %v7990, 1
      %v8127 = vsel %vm4726, %v8124, %v8126
      %v8128 = vrot.slane %v7991, 1
      %v8129 = vsel %vm4726, %v8126, %v8128
      %v8130 = vrot.slane %v7992, 1
      %v8131 = vsel %vm4726, %v8128, %v8130
      %v8132 = vrot.slane %v7993, 1
      %v8133 = vsel %vm4726, %v8130, %v8132
      %v8134 = vrot.slane %v7994, 1
      %v8135 = vsel %vm4726, %v8132, %v8134
      %v8136 = vrot.slane %v7995, 1
      %v8137 = vsel %vm4726, %v8134, %v8136
      %v8138 = vrot.slane %v7996, 1
      %v8139 = vsel %vm4726, %v8136, %v8138
      %v8140 = vrot.slane %v7997, 1
      %v8141 = vsel %vm4726, %v8138, %v8140
      %v8142 = vrot.slane %v7998, 1
      %v8143 = vsel %vm4726, %v8140, %v8142
      %v8144 = vrot.slane %v7999, 1
      %v8145 = vsel %vm4726, %v8142, %v8144
      %v8146 = vrot.slane %v8000, 1
      %v8147 = vsel %vm4726, %v8144, %v8146
      %v8196 = vmax.f32 %v7952, %v8053
      %v8197 = vmax.f32 %v7953, %v8055
      %v8198 = vmax.f32 %v7954, %v8057
      %v8199 = vmax.f32 %v7955, %v8059
      %v8200 = vmax.f32 %v7956, %v8061
      %v8201 = vmax.f32 %v7957, %v8063
      %v8202 = vmax.f32 %v7958, %v8065
      %v8203 = vmax.f32 %v7959, %v8067
      %v8204 = vmax.f32 %v7960, %v8069
      %v8205 = vmax.f32 %v7961, %v8071
      %v8206 = vmax.f32 %v7962, %v8073
      %v8207 = vmax.f32 %v7963, %v8075
      %v8208 = vmax.f32 %v7964, %v8077
      %v8209 = vmax.f32 %v7965, %v8079
      %v8210 = vmax.f32 %v7966, %v8081
      %v8211 = vmax.f32 %v7967, %v8083
      %v8212 = vmax.f32 %v7968, %v8085
      %v8213 = vmax.f32 %v7969, %v8087
      %v8214 = vmax.f32 %v7970, %v8089
      %v8215 = vmax.f32 %v7971, %v8091
      %v8216 = vmax.f32 %v7972, %v8093
      %v8217 = vmax.f32 %v7973, %v8095
      %v8218 = vmax.f32 %v7974, %v8097
      %v8219 = vmax.f32 %v7975, %v8099
      %v8220 = vmax.f32 %v7976, %v8101
      %v8221 = vmax.f32 %v7977, %v8103
      %v8222 = vmax.f32 %v7978, %v8105
      %v8223 = vmax.f32 %v7979, %v8107
      %v8224 = vmax.f32 %v7980, %v8109
      %v8225 = vmax.f32 %v7981, %v8111
      %v8226 = vmax.f32 %v7982, %v8113
      %v8227 = vmax.f32 %v7983, %v8115
      %v8228 = vmax.f32 %v7984, %v8117
      %v8229 = vmax.f32 %v7985, %v8119
      %v8230 = vmax.f32 %v7986, %v8121
      %v8231 = vmax.f32 %v7987, %v8123
      %v8232 = vmax.f32 %v7988, %v8125
      %v8233 = vmax.f32 %v7989, %v8127
      %v8234 = vmax.f32 %v7990, %v8129
      %v8235 = vmax.f32 %v7991, %v8131
      %v8236 = vmax.f32 %v7992, %v8133
      %v8237 = vmax.f32 %v7993, %v8135
      %v8238 = vmax.f32 %v7994, %v8137
      %v8239 = vmax.f32 %v7995, %v8139
      %v8240 = vmax.f32 %v7996, %v8141
      %v8241 = vmax.f32 %v7997, %v8143
      %v8242 = vmax.f32 %v7998, %v8145
      %v8243 = vmax.f32 %v7999, %v8147
      %v8245 = vrot.slane %v8001, 1
      %v8246 = vsel %vm4726, %v8146, %v8245
      %v8249 = vmax.f32 %v8000, %v8246
      %v8250 = vmax.f32 %v8001, %v8245
      %v8300 = vrot.slane %v8197, 2
      %v8301 = vrot.slane %v8198, 2
      %v8302 = vsel %vm5475, %v8300, %v8301
      %v8303 = vrot.slane %v8199, 2
      %v8304 = vsel %vm5475, %v8301, %v8303
      %v8305 = vrot.slane %v8200, 2
      %v8306 = vsel %vm5475, %v8303, %v8305
      %v8307 = vrot.slane %v8201, 2
      %v8308 = vsel %vm5475, %v8305, %v8307
      %v8309 = vrot.slane %v8202, 2
      %v8310 = vsel %vm5475, %v8307, %v8309
      %v8311 = vrot.slane %v8203, 2
      %v8312 = vsel %vm5475, %v8309, %v8311
      %v8313 = vrot.slane %v8204, 2
      %v8314 = vsel %vm5475, %v8311, %v8313
      %v8315 = vrot.slane %v8205, 2
      %v8316 = vsel %vm5475, %v8313, %v8315
      %v8317 = vrot.slane %v8206, 2
      %v8318 = vsel %vm5475, %v8315, %v8317
      %v8319 = vrot.slane %v8207, 2
      %v8320 = vsel %vm5475, %v8317, %v8319
      %v8321 = vrot.slane %v8208, 2
      %v8322 = vsel %vm5475, %v8319, %v8321
      %v8323 = vrot.slane %v8209, 2
      %v8324 = vsel %vm5475, %v8321, %v8323
      %v8325 = vrot.slane %v8210, 2
      %v8326 = vsel %vm5475, %v8323, %v8325
      %v8327 = vrot.slane %v8211, 2
      %v8328 = vsel %vm5475, %v8325, %v8327
      %v8329 = vrot.slane %v8212, 2
      %v8330 = vsel %vm5475, %v8327, %v8329
      %v8331 = vrot.slane %v8213, 2
      %v8332 = vsel %vm5475, %v8329, %v8331
      %v8333 = vrot.slane %v8214, 2
      %v8334 = vsel %vm5475, %v8331, %v8333
      %v8335 = vrot.slane %v8215, 2
      %v8336 = vsel %vm5475, %v8333, %v8335
      %v8337 = vrot.slane %v8216, 2
      %v8338 = vsel %vm5475, %v8335, %v8337
      %v8339 = vrot.slane %v8217, 2
      %v8340 = vsel %vm5475, %v8337, %v8339
      %v8341 = vrot.slane %v8218, 2
      %v8342 = vsel %vm5475, %v8339, %v8341
      %v8343 = vrot.slane %v8219, 2
      %v8344 = vsel %vm5475, %v8341, %v8343
      %v8345 = vrot.slane %v8220, 2
      %v8346 = vsel %vm5475, %v8343, %v8345
      %v8347 = vrot.slane %v8221, 2
      %v8348 = vsel %vm5475, %v8345, %v8347
      %v8349 = vrot.slane %v8222, 2
      %v8350 = vsel %vm5475, %v8347, %v8349
      %v8351 = vrot.slane %v8223, 2
      %v8352 = vsel %vm5475, %v8349, %v8351
      %v8353 = vrot.slane %v8224, 2
      %v8354 = vsel %vm5475, %v8351, %v8353
      %v8355 = vrot.slane %v8225, 2
      %v8356 = vsel %vm5475, %v8353, %v8355
      %v8357 = vrot.slane %v8226, 2
      %v8358 = vsel %vm5475, %v8355, %v8357
      %v8359 = vrot.slane %v8227, 2
      %v8360 = vsel %vm5475, %v8357, %v8359
      %v8361 = vrot.slane %v8228, 2
      %v8362 = vsel %vm5475, %v8359, %v8361
      %v8363 = vrot.slane %v8229, 2
      %v8364 = vsel %vm5475, %v8361, %v8363
      %v8365 = vrot.slane %v8230, 2
      %v8366 = vsel %vm5475, %v8363, %v8365
      %v8367 = vrot.slane %v8231, 2
      %v8368 = vsel %vm5475, %v8365, %v8367
      %v8369 = vrot.slane %v8232, 2
      %v8370 = vsel %vm5475, %v8367, %v8369
      %v8371 = vrot.slane %v8233, 2
      %v8372 = vsel %vm5475, %v8369, %v8371
      %v8373 = vrot.slane %v8234, 2
      %v8374 = vsel %vm5475, %v8371, %v8373
      %v8375 = vrot.slane %v8235, 2
      %v8376 = vsel %vm5475, %v8373, %v8375
      %v8377 = vrot.slane %v8236, 2
      %v8378 = vsel %vm5475, %v8375, %v8377
      %v8379 = vrot.slane %v8237, 2
      %v8380 = vsel %vm5475, %v8377, %v8379
      %v8381 = vrot.slane %v8238, 2
      %v8382 = vsel %vm5475, %v8379, %v8381
      %v8383 = vrot.slane %v8239, 2
      %v8384 = vsel %vm5475, %v8381, %v8383
      %v8385 = vrot.slane %v8240, 2
      %v8386 = vsel %vm5475, %v8383, %v8385
      %v8387 = vrot.slane %v8241, 2
      %v8388 = vsel %vm5475, %v8385, %v8387
      %v8389 = vrot.slane %v8242, 2
      %v8390 = vsel %vm5475, %v8387, %v8389
      %v8391 = vrot.slane %v8243, 2
      %v8392 = vsel %vm5475, %v8389, %v8391
      %v8393 = vrot.slane %v8249, 2
      %v8394 = vsel %vm5475, %v8391, %v8393
      %v8395 = vrot.slane %v8250, 2
      %v8396 = vsel %vm5475, %v8393, %v8395
      %v8445 = vmax.f32 %v8196, %v8302
      %v8446 = vmax.f32 %v8197, %v8304
      %v8447 = vmax.f32 %v8198, %v8306
      %v8448 = vmax.f32 %v8199, %v8308
      %v8449 = vmax.f32 %v8200, %v8310
      %v8450 = vmax.f32 %v8201, %v8312
      %v8451 = vmax.f32 %v8202, %v8314
      %v8452 = vmax.f32 %v8203, %v8316
      %v8453 = vmax.f32 %v8204, %v8318
      %v8454 = vmax.f32 %v8205, %v8320
      %v8455 = vmax.f32 %v8206, %v8322
      %v8456 = vmax.f32 %v8207, %v8324
      %v8457 = vmax.f32 %v8208, %v8326
      %v8458 = vmax.f32 %v8209, %v8328
      %v8459 = vmax.f32 %v8210, %v8330
      %v8460 = vmax.f32 %v8211, %v8332
      %v8461 = vmax.f32 %v8212, %v8334
      %v8462 = vmax.f32 %v8213, %v8336
      %v8463 = vmax.f32 %v8214, %v8338
      %v8464 = vmax.f32 %v8215, %v8340
      %v8465 = vmax.f32 %v8216, %v8342
      %v8466 = vmax.f32 %v8217, %v8344
      %v8467 = vmax.f32 %v8218, %v8346
      %v8468 = vmax.f32 %v8219, %v8348
      %v8469 = vmax.f32 %v8220, %v8350
      %v8470 = vmax.f32 %v8221, %v8352
      %v8471 = vmax.f32 %v8222, %v8354
      %v8472 = vmax.f32 %v8223, %v8356
      %v8473 = vmax.f32 %v8224, %v8358
      %v8474 = vmax.f32 %v8225, %v8360
      %v8475 = vmax.f32 %v8226, %v8362
      %v8476 = vmax.f32 %v8227, %v8364
      %v8477 = vmax.f32 %v8228, %v8366
      %v8478 = vmax.f32 %v8229, %v8368
      %v8479 = vmax.f32 %v8230, %v8370
      %v8480 = vmax.f32 %v8231, %v8372
      %v8481 = vmax.f32 %v8232, %v8374
      %v8482 = vmax.f32 %v8233, %v8376
      %v8483 = vmax.f32 %v8234, %v8378
      %v8484 = vmax.f32 %v8235, %v8380
      %v8485 = vmax.f32 %v8236, %v8382
      %v8486 = vmax.f32 %v8237, %v8384
      %v8487 = vmax.f32 %v8238, %v8386
      %v8488 = vmax.f32 %v8239, %v8388
      %v8489 = vmax.f32 %v8240, %v8390
      %v8490 = vmax.f32 %v8241, %v8392
      %v8491 = vmax.f32 %v8242, %v8394
      %v8492 = vmax.f32 %v8243, %v8396
      %v8493 = vld [vmem:[%s6] sm:$0xff]
      %v8494 = vld [vmem:[%s6 + $0x8] sm:$0xf]
      %8497 = vst [vmem:[#allocation1] ss:$2 sm:$0xff] %v8493
      %s8498 = scalar_lea.vmem [#allocation1], 16
      %8499 = vst [vmem:[%s8498] ss:$2 sm:$0xff] %v8494
      %v8500 = vld.sshfl [vmem:[#allocation1] sm:$0xff pattern:$0x75316420]
      %v8501 = vld.sshfl [vmem:[#allocation1 + $0x8] sm:$0xff pattern:$0x75316420]
      %v8502 = vld.sshfl [vmem:[#allocation1 + $0x10] sm:$0xff pattern:$0x75316420]
      %8506 = vmatpush.msra.mxu0 %v8460
      %8507 = vmatpush.msra.mxu0 %v8459
      %8508 = vmatpush.msra.mxu0 %v8458
      %8509 = vmatpush.msra.mxu0 %v8457
      %8510 = vmatpush.msra.mxu0 %v8456
      %8511 = vmatpush.msra.mxu0 %v8455
      %8512 = vmatpush.msra.mxu0 %v8454
      %8513 = vmatpush.msra.mxu0 %v8453
      %8514 = vmatpush.msra.mxu0 %v8452
      %8515 = vmatpush.msra.mxu0 %v8451
      %8516 = vmatpush.msra.mxu0 %v8450
      %8517 = vmatpush.msra.mxu0 %v8449
      %8518 = vmatpush.msra.mxu0 %v8448
      %8519 = vmatpush.msra.mxu0 %v8447
      %8520 = vmatpush.msra.mxu0 %v8446
      %8521 = vmatpush.msra.mxu0 %v8445
      %8522 = vmatmul.f32.gmra.mxu0 %v8500
      %v8523 = vpop.f32.mrf.mxu0
      %v8524 = vadd.f32 0.0, %v8523
      %8525 = vdwg.mxu0
      %8526 = vmatpush.msra.mxu0 %v8476
      %8527 = vmatpush.msra.mxu0 %v8475
      %8528 = vmatpush.msra.mxu0 %v8474
      %8529 = vmatpush.msra.mxu0 %v8473
      %8530 = vmatpush.msra.mxu0 %v8472
      %8531 = vmatpush.msra.mxu0 %v8471
      %8532 = vmatpush.msra.mxu0 %v8470
      %8533 = vmatpush.msra.mxu0 %v8469
      %8534 = vmatpush.msra.mxu0 %v8468
      %8535 = vmatpush.msra.mxu0 %v8467
      %8536 = vmatpush.msra.mxu0 %v8466
      %8537 = vmatpush.msra.mxu0 %v8465
      %8538 = vmatpush.msra.mxu0 %v8464
      %8539 = vmatpush.msra.mxu0 %v8463
      %8540 = vmatpush.msra.mxu0 %v8462
      %8541 = vmatpush.msra.mxu0 %v8461
      %8542 = vmatmul.f32.gmra.mxu0 %v8501
      %v8543 = vpop.f32.mrf.mxu0
      %v8544 = vadd.f32 %v8524, %v8543
      %8545 = vdwg.mxu0
      %8546 = vmatpush.msra.mxu0 %v8492
      %8547 = vmatpush.msra.mxu0 %v8491
      %8548 = vmatpush.msra.mxu0 %v8490
      %8549 = vmatpush.msra.mxu0 %v8489
      %8550 = vmatpush.msra.mxu0 %v8488
      %8551 = vmatpush.msra.mxu0 %v8487
      %8552 = vmatpush.msra.mxu0 %v8486
      %8553 = vmatpush.msra.mxu0 %v8485
      %8554 = vmatpush.msra.mxu0 %v8484
      %8555 = vmatpush.msra.mxu0 %v8483
      %8556 = vmatpush.msra.mxu0 %v8482
      %8557 = vmatpush.msra.mxu0 %v8481
      %8558 = vmatpush.msra.mxu0 %v8480
      %8559 = vmatpush.msra.mxu0 %v8479
      %8560 = vmatpush.msra.mxu0 %v8478
      %8561 = vmatpush.msra.mxu0 %v8477
      %8562 = vmatmul.f32.gmra.mxu0 %v8502
      %v8563 = vpop.f32.mrf.mxu0
      %v8564 = vadd.f32 %v8544, %v8563
      %8565 = vdwg.mxu0
      %v8566 = vld [vmem:[%s7] sm:$0xff]
      %v8567 = vld [vmem:[%s7 + $0x8] sm:$0xff]
      %v8568 = vld [vmem:[%s7 + $0x10] sm:$0xff]
      %v8569 = vld [vmem:[%s7 + $0x18] sm:$0xff]
      %v8570 = vld [vmem:[%s7 + $0x20] sm:$0xff]
      %v8571 = vld [vmem:[%s7 + $0x28] sm:$0xff]
      %v8572 = vld [vmem:[%s7 + $0x30] sm:$0xff]
      %v8573 = vld [vmem:[%s7 + $0x38] sm:$0xff]
      %v8574 = vld [vmem:[%s8] sm:$0x1]
      %v8576 = vperm.slane %v8574, 0
      %v8579 = vsel %vm7481, %v8564, 0
      %8581 = vmatpush.msra.mxu0 0.0
      %8582 = vmatpush.msra.mxu0 0.0
      %8583 = vmatpush.msra.mxu0 0.0
      %8584 = vmatpush.msra.mxu0 0.0
      %8585 = vmatpush.msra.mxu0 0.0
      %8586 = vmatpush.msra.mxu0 0.0
      %8587 = vmatpush.msra.mxu0 0.0
      %8588 = vmatpush.msra.mxu0 0.0
      %8589 = vmatpush.msra.mxu0 %v8573
      %8590 = vmatpush.msra.mxu0 %v8572
      %8591 = vmatpush.msra.mxu0 %v8571
      %8592 = vmatpush.msra.mxu0 %v8570
      %8593 = vmatpush.msra.mxu0 %v8569
      %8594 = vmatpush.msra.mxu0 %v8568
      %8595 = vmatpush.msra.mxu0 %v8567
      %8596 = vmatpush.msra.mxu0 %v8566
      %8597 = vmatmul.f32.gmra.mxu0 %v8579
      %v8598 = vpop.f32.mrf.mxu0
      %v8599 = vadd.f32 %v8576, %v8598
      %8600 = vdwg.mxu0
      %v8602 = vrot.slane %v8599, 2
      %v8604 = vsub.f32 %v8599, %v8602
      %v8605 = vadd.f32 %v8604, 1e-06
      %v8606 = vmul.f32 %v8605, %v8605
      %vm8607 = vcmask 386048
      %v8608 = vsel %vm8607, %v8606, 0.0
      %8609 = vadd.xlane.f32.xlu0 %v8608
      %v8610 = vpop.xlane.xlu0 %8609
      %v8611 = vrsqrt.pop %v8610
      %v8612 = vmul.f32 %v8611, %v8610
      %v8613 = vmul.f32 %v8612, %v8611
      %v8614 = vmul.f32 0.5, %v8613
      %v8615 = vsub.f32 1.5, %v8614
      %v8616 = vmul.f32 %v8611, %v8615
      %v8617 = vmul.f32 %v8610, %v8616
      %vm8618 = vcmp.eq.f32.partialorder %v8610, inf
      %v8619 = vsel %vm8618, %v8610, %v8617
      %vm8620 = vcmp.eq.f32.partialorder %v8610, 0.0
      %v8621 = vand.u32 %v8610, 2147483648
      %v8622 = vsel %vm8620, %v8621, %v8619
      %v8623 = vld [vmem:[#allocation2] sm:$0x1]
      %v8625 = vperm.slane %v8623, 0
      %v8627 = vmul.f32 %v8622, %v8625
      %v8628 = vld [vmem:[#allocation3] sm:$0x1]
      %v8630 = vperm.slane %v8628, 0
      %v8632 = vadd.f32 %v8627, %v8630
      %v8633 = vsub.f32 0.0, %v8632
      %v8634 = vmul.f32 %v8633, 1.442695
      %v8635 = vpow.pop %v8634
      %v8636 = vadd.f32 %v8635, 1.0
      %v8637 = vrcp.pop %v8636
      %v8638 = vmul.f32 %v8636, %v8637
      %v8639 = vsub.f32 1.0, %v8638
      %v8640 = vmul.f32 %v8637, %v8639
      %v8641 = vadd.f32 %v8637, %v8640
      %vm8642 = vweird.f32 %v8636
      %vm8643 = vweird.f32 %v8637
      %vm8644 = vmor %vm8642, %vm8643
      %v8645 = vsel %vm8644, %v8637, %v8641
      %v8646 = vand.u32 2147483647, %v8636
      %vm8647 = vcmp.eq.f32.partialorder %v8646, 8.507059e+37
      %v8648 = vand.u32 %v8636, 2147483648
      %v8649 = vor.u32 1.1754944e-38, %v8648
      %v8650 = vsel %vm8647, %v8649, %v8645
      %v8651 = vmul.f32 1.0, %v8650
      %v8652 = vlaneseq
      %v8653 = vshrl.u32 %v8652, 7
      %v8654 = vlaneseq
      %v8655 = vand.u32 %v8654, 127
      %vm8656 = vcmp.eq.s32.totalorder %v8653, %v8655
      %v8657 = vsel %vm8656, 1, 0
      %v8658 = vcvt.s32.f32 %v8657
      %8660 = vset.pattern.permute.xlu0 0
      %8661 = vperm.xlu0 %8660, %v8651
      %v8662 = vpop.permute.xlu0 %8661
      %v8664 = vmul.f32 %v8662, %v8658
      %vm8665 = vcmask 9216
      %v8666 = vsel %vm8665, %v8664, 0.0
      %v8667 = vrot.slane %v8666, 4
      %v8668 = vadd.f32 %v8666, %v8667
      %v8669 = vrot.slane %v8668, 2
      %v8670 = vadd.f32 %v8668, %v8669
      %v8671 = vrot.slane %v8670, 1
      %v8672 = vadd.f32 %v8670, %v8671
      %vm8673 = vcmask 8192
      %8674 = vst.msk [vmem:[%s386] sm:$0x1] %vm8673, %v8672
      %p8675 = scmp.lt.s32.totalorder %s26, 1
      %s8676 = scalar_select %p8675, %s26, 1
      %s8677 = scalar_lea.vmem %s11, %s8676
      // Predicated region
      $region65: #{forward.1} parent=63 // pred_check
        %p8678 = pneg %p280
      $region66: #{forward.1} parent=63 // pred_check_branch
        %8680 = sbr.rel (%p8678) target = $region68
      $region67: #{forward.1} parent=63 // pred_region
        _
      $region68: #{forward.1} parent=63 // pred_fallthru
        _
    $region64: #{forward.1} parent=5 // pred_fallthru
      _
    %p8681 = scmp.le.s32.totalorder 2, %s21
    // Predicated region
    $region69: #{forward.1} parent=5 // pred_check
      %p8682 = pneg %p8681
    $region70: #{forward.1} parent=5 // pred_check_branch
      %8684 = sbr.rel (%p8682) target = $region72
    $region71: #{forward.1} parent=5 // pred_region
      %s8685 = ssub.s32 %s21, 2
      // Predicated region
      $region73: #{forward.1} parent=71 // pred_check
        %p8686 = pneg %p286
      $region74: #{forward.1} parent=71 // pred_check_branch
        %8688 = sbr.rel (%p8686) target = $region76
      $region75: #{forward.1} parent=71 // pred_region
        %p8689 = scmp.lt.s32.totalorder %s27, 1
        %s8690 = scalar_select %p8689, %s27, 1
        %s8691 = scalar_lea.vmem %s11, %s8690
      $region76: #{forward.1} parent=71 // pred_fallthru
        _
    $region72: #{forward.1} parent=5 // pred_fallthru
      _
  $region6: #{forward.1} parent=0 // loop_footer
    %s25 = sadd.s32 1, %s21
  $region7: #{forward.1} parent=0 // loop_footer_branch
    %20 = sbr.rel target = $region3
  $region8: #{forward.1} parent=0 // loop_exit
    _

</llo_original>
